<compile_context>
chip_gen: v7x
topology: tpu7x:2x2x1
jax: 0.10.0
libtpu: 0.0.40
codegen_flags: <defaults>
</compile_context>

<pallas_src>
import math

import jax
import jax.numpy as jnp
from jax.experimental import pallas as pl
from jax.experimental.pallas import tpu as pltpu

# ---------------- tiny-T5 config (small but structurally faithful) ----------------
VOCAB = 64
D_MODEL = 32
N_HEADS = 4
D_KV = 8                      # D_MODEL == N_HEADS * D_KV
D_FF = 64
N_LAYERS = 2
NUM_BUCKETS = 8
MAX_DISTANCE = 16
EPS = 1e-6
NEG_INF = -1e9


# ------------------------- in-kernel building blocks (traced inside pallas) -------------------------
def _mm(x, w):
    """MXU matmul: bf16 operands, f32 accumulation."""
    return jnp.dot(x.astype(jnp.bfloat16), w.astype(jnp.bfloat16),
                   preferred_element_type=jnp.float32)


def _rms(x, w_row):
    """T5 LayerNorm (RMSNorm): x (M, D) f32, w_row (1, D) f32."""
    var = jnp.mean(x * x, axis=-1, keepdims=True)
    return x * jax.lax.rsqrt(var + EPS) * w_row


def _mha(x_q, x_kv, wq, wk, wv, wo, bias, mask_add, batch, t_q, t_k):
    """Multi-head attention, fully in VMEM.

    x_q: (batch*t_q, D), x_kv: (batch*t_k, D).
    bias: (H, t_q, t_k) or None.  mask_add: (batch, 1, t_k) or (batch, t_q, t_k) additive.
    Returns the post-output-projection result (batch*t_q, D).
    """
    q = _mm(x_q, wq)
    k = _mm(x_kv, wk)
    v = _mm(x_kv, wv)
    out = jnp.zeros((batch * t_q, D_MODEL), jnp.float32)
    for h in range(N_HEADS):                      # static 4-way unroll; stays in registers
        lo, hi = h * D_KV, (h + 1) * D_KV
        qh = q[:, lo:hi].reshape(batch, t_q, D_KV)
        kh = k[:, lo:hi].reshape(batch, t_k, D_KV)
        vh = v[:, lo:hi].reshape(batch, t_k, D_KV)
        # T5 attention has NO 1/sqrt(d) scaling.
        s = jnp.einsum('bqd,bkd->bqk', qh.astype(jnp.bfloat16), kh.astype(jnp.bfloat16),
                       preferred_element_type=jnp.float32)
        s = s + mask_add
        if bias is not None:
            s = s + bias[h]
        m = jnp.max(s, axis=-1, keepdims=True)
        p = jnp.exp(s - m)
        p = p * pl.reciprocal(jnp.sum(p, axis=-1, keepdims=True), approx=True)
        ctx = jnp.einsum('bqk,bkd->bqd', p.astype(jnp.bfloat16), vh.astype(jnp.bfloat16),
                         preferred_element_type=jnp.float32)
        # output projection applied per-head slice and summed (== concat(heads) @ Wo)
        out = out + _mm(ctx.reshape(batch * t_q, D_KV), wo[lo:hi, :])
    return out


# ---------------------------------- the fused kernel ----------------------------------
def _t5_kernel(
    enc_ids_ref, dec_ids_ref, labels_ref,
    enc_mask_ref, dec_mask_ref,
    embed_ref, embed_t_ref, enc_bias_ref, dec_bias_ref,
    e_q_ref, e_k_ref, e_v_ref, e_o_ref, e_sa_ln_ref,
    e_wi_ref, e_wo_ref, e_ff_ln_ref, e_final_ln_ref,
    d_q_ref, d_k_ref, d_v_ref, d_o_ref, d_sa_ln_ref,
    c_q_ref, c_k_ref, c_v_ref, c_o_ref, d_ca_ln_ref,
    d_wi_ref, d_wo_ref, d_ff_ln_ref, d_final_ln_ref,
    loss_ref, logits_ref,
):
    B = enc_mask_ref.shape[0]
    T = enc_mask_ref.shape[2]
    M = B * T

    embed = embed_ref[...]          # (V, D)   bf16
    embed_t = embed_t_ref[...]      # (D, V)   bf16 (tied LM head)
    enc_bias = enc_bias_ref[...]    # (H, T, T) f32
    dec_bias = dec_bias_ref[...]    # (H, T, T) f32
    enc_mask = enc_mask_ref[...]    # (B, 1, T) additive
    dec_mask = dec_mask_ref[...]    # (B, T, T) additive (causal + padding)

    def lookup(ids):                # ids: (M, 1) int32 -> (M, D) f32 via one-hot @ embed
        iota = jax.lax.broadcasted_iota(jnp.int32, (M, VOCAB), 1)
        onehot = (ids == iota).astype(jnp.bfloat16)
        return jnp.dot(onehot, embed, preferred_element_type=jnp.float32)

    # ------------------------------ encoder ------------------------------
    e_q, e_k, e_v, e_o = e_q_ref[...], e_k_ref[...], e_v_ref[...], e_o_ref[...]
    e_sa_ln, e_wi, e_wo = e_sa_ln_ref[...], e_wi_ref[...], e_wo_ref[...]
    e_ff_ln, e_final_ln = e_ff_ln_ref[...], e_final_ln_ref[...]

    h = lookup(enc_ids_ref[...])
    for l in range(N_LAYERS):
        n = _rms(h, e_sa_ln[l:l + 1, :])
        h = h + _mha(n, n, e_q[l], e_k[l], e_v[l], e_o[l], enc_bias, enc_mask, B, T, T)
        n = _rms(h, e_ff_ln[l:l + 1, :])
        h = h + _mm(jnp.maximum(_mm(n, e_wi[l]), 0.0), e_wo[l])     # fused relu-FFN
    enc_out = _rms(h, e_final_ln)

    # ------------------------------ decoder ------------------------------
    d_q, d_k, d_v, d_o = d_q_ref[...], d_k_ref[...], d_v_ref[...], d_o_ref[...]
    c_q, c_k, c_v, c_o = c_q_ref[...], c_k_ref[...], c_v_ref[...], c_o_ref[...]
    d_sa_ln, d_ca_ln = d_sa_ln_ref[...], d_ca_ln_ref[...]
    d_wi, d_wo = d_wi_ref[...], d_wo_ref[...]
    d_ff_ln, d_final_ln = d_ff_ln_ref[...], d_final_ln_ref[...]

    h = lookup(dec_ids_ref[...])
    for l in range(N_LAYERS):
        n = _rms(h, d_sa_ln[l:l + 1, :])
        h = h + _mha(n, n, d_q[l], d_k[l], d_v[l], d_o[l], dec_bias, dec_mask, B, T, T)
        n = _rms(h, d_ca_ln[l:l + 1, :])
        h = h + _mha(n, enc_out, c_q[l], c_k[l], c_v[l], c_o[l], None, enc_mask, B, T, T)
        n = _rms(h, d_ff_ln[l:l + 1, :])
        h = h + _mm(jnp.maximum(_mm(n, d_wi[l]), 0.0), d_wo[l])
    dec_out = _rms(h, d_final_ln)

    # ---------------- tied-embedding LM head + cross entropy (ignore_index=-100) ----------------
    seq = dec_out * (D_MODEL ** -0.5)                 # T5 tied-embedding rescale
    logits = jnp.dot(seq.astype(jnp.bfloat16), embed_t,
                     preferred_element_type=jnp.float32)            # (M, V)
    logits_ref[...] = logits

    lab = labels_ref[...]                             # (M, 1) int32
    valid = (lab != -100).astype(jnp.float32)         # (M, 1)
    iota = jax.lax.broadcasted_iota(jnp.int32, (M, VOCAB), 1)
    mx = jnp.max(logits, axis=-1, keepdims=True)
    lse = jnp.log(jnp.sum(jnp.exp(logits - mx), axis=-1, keepdims=True)) + mx
    tgt = jnp.sum(jnp.where(lab == iota, logits, 0.0), axis=-1, keepdims=True)
    nll = (lse - tgt) * valid
    total = jnp.sum(nll, keepdims=True)                             # (1, 1)
    # NOTE: count clamped to >=1 (all-ignored batch gives 0 loss, not NaN like PyTorch).
    count = jnp.maximum(jnp.sum(valid, keepdims=True), 1.0)
    loss_ref[...] = total / count


# ---------------------------------- plain-JAX glue ----------------------------------
def _relative_position_bucket(relative_position, bidirectional, num_buckets, max_distance):
    relative_buckets = jnp.zeros_like(relative_position)
    if bidirectional:
        num_buckets = num_buckets // 2
        relative_buckets = relative_buckets + (relative_position > 0).astype(jnp.int32) * num_buckets
        relative_position = jnp.abs(relative_position)
    else:
        relative_position = -jnp.minimum(relative_position, jnp.zeros_like(relative_position))
    max_exact = num_buckets // 2
    is_small = relative_position < max_exact
    rel_f = jnp.maximum(relative_position.astype(jnp.float32), 1.0)
    rp_large = max_exact + (
        jnp.log(rel_f / max_exact) / math.log(max_distance / max_exact) * (num_buckets - max_exact)
    ).astype(jnp.int32)
    rp_large = jnp.minimum(rp_large, num_buckets - 1)
    return relative_buckets + jnp.where(is_small, relative_position, rp_large)


def compute_position_bias(rel_emb, q_len, k_len, bidirectional):
    ctx = jnp.arange(q_len)[:, None]
    mem = jnp.arange(k_len)[None, :]
    rel = mem - ctx
    buckets = _relative_position_bucket(rel, bidirectional, NUM_BUCKETS, MAX_DISTANCE)
    values = rel_emb[buckets]                                   # (q, k, H)
    return jnp.transpose(values, (2, 0, 1)).astype(jnp.float32)  # (H, q, k)


def t5_forward(params, input_ids, attention_mask, decoder_input_ids,
               decoder_attention_mask, labels):
    B, T = input_ids.shape
    M = B * T

    # relative-position bias (activation-independent) + additive masks, precomputed once
    enc_bias = compute_position_bias(params["enc_rel_emb"], T, T, bidirectional=True)
    dec_bias = compute_position_bias(params["dec_rel_emb"], T, T, bidirectional=False)
    enc_mask_add = ((1.0 - attention_mask[:, None, :]) * NEG_INF).astype(jnp.float32)      # (B,1,T)
    causal = (jnp.arange(T)[:, None] >= jnp.arange(T)[None, :]).astype(jnp.float32)
    dec_allowed = decoder_attention_mask[:, None, :] * causal[None, :, :]
    dec_mask_add = ((1.0 - dec_allowed) * NEG_INF).astype(jnp.float32)                     # (B,T,T)

    enc_ids = input_ids.reshape(M, 1).astype(jnp.int32)
    dec_ids = decoder_input_ids.reshape(M, 1).astype(jnp.int32)
    lab = labels.reshape(M, 1).astype(jnp.int32)

    loss, logits = pl.pallas_call(
        _t5_kernel,
        out_shape=(jax.ShapeDtypeStruct((1, 1), jnp.float32),
                   jax.ShapeDtypeStruct((M, VOCAB), jnp.float32)),
        compiler_params=pltpu.CompilerParams(vmem_limit_bytes=32 * 1024 * 1024),
    )(enc_ids, dec_ids, lab, enc_mask_add, dec_mask_add,
      params["embed"], params["embed"].T, enc_bias, dec_bias,
      params["e_q"], params["e_k"], params["e_v"], params["e_o"], params["e_sa_ln"],
      params["e_wi"], params["e_wo"], params["e_ff_ln"], params["e_final_ln"],
      params["d_q"], params["d_k"], params["d_v"], params["d_o"], params["d_sa_ln"],
      params["c_q"], params["c_k"], params["c_v"], params["c_o"], params["d_ca_ln"],
      params["d_wi"], params["d_wo"], params["d_ff_ln"], params["d_final_ln"])

    return loss[0, 0], logits.reshape(B, T, VOCAB)


# ---------------------------------- parameter init ----------------------------------
def init_params(key):
    keys = iter(jax.random.split(key, 64))

    def nrm(shape, scale=0.05, dtype=jnp.float32):
        return (jax.random.normal(next(keys), shape, jnp.float32) * scale).astype(dtype)

    bf = jnp.bfloat16
    L, D, F = N_LAYERS, D_MODEL, D_FF
    ones = lambda shape: jnp.ones(shape, jnp.float32)
    return {
        # tied embedding table — bf16 MXU operand (halves DMA bytes)
        "embed": nrm((VOCAB, D), 1.0, bf),
        "enc_rel_emb": nrm((NUM_BUCKETS, N_HEADS)),
        "dec_rel_emb": nrm((NUM_BUCKETS, N_HEADS)),
        # encoder (weights stacked over layers)
        "e_q": nrm((L, D, D), dtype=bf), "e_k": nrm((L, D, D), dtype=bf),
        "e_v": nrm((L, D, D), dtype=bf), "e_o": nrm((L, D, D), dtype=bf),
        "e_sa_ln": ones((L, D)),
        "e_wi": nrm((L, D, F), dtype=bf), "e_wo": nrm((L, F, D), dtype=bf),
        "e_ff_ln": ones((L, D)), "e_final_ln": ones((1, D)),
        # decoder
        "d_q": nrm((L, D, D), dtype=bf), "d_k": nrm((L, D, D), dtype=bf),
        "d_v": nrm((L, D, D), dtype=bf), "d_o": nrm((L, D, D), dtype=bf),
        "d_sa_ln": ones((L, D)),
        "c_q": nrm((L, D, D), dtype=bf), "c_k": nrm((L, D, D), dtype=bf),
        "c_v": nrm((L, D, D), dtype=bf), "c_o": nrm((L, D, D), dtype=bf),
        "d_ca_ln": ones((L, D)),
        "d_wi": nrm((L, D, F), dtype=bf), "d_wo": nrm((L, F, D), dtype=bf),
        "d_ff_ln": ones((L, D)), "d_final_ln": ones((1, D)),
    }


# ---------------------------------------- main ----------------------------------------
if __name__ == "__main__":
    key = jax.random.PRNGKey(0)
    pkey, ikey, dkey, lkey = jax.random.split(key, 4)
    params = init_params(pkey)

    B, T = 2, 8
    input_ids = jax.random.randint(ikey, (B, T), 0, VOCAB, dtype=jnp.int32)
    attention_mask = jnp.ones((B, T), jnp.float32)
    decoder_input_ids = jax.random.randint(dkey, (B, T), 0, VOCAB, dtype=jnp.int32)
    decoder_attention_mask = jnp.ones((B, T), jnp.float32)
    labels = jax.random.randint(lkey, (B, T), 0, VOCAB, dtype=jnp.int32)

    loss, logits = jax.jit(t5_forward)(params, input_ids, attention_mask,
                                       decoder_input_ids, decoder_attention_mask, labels)
    jax.block_until_ready((loss, logits))
    assert logits.shape == (B, T, VOCAB)
    assert jnp.isfinite(loss)
    print("KERNEL_OK")
</pallas_src>

<mosaic_0001>
module attributes {stable_mosaic.version = 11 : i64} {
  func.func @_t5_kernel(%arg0: memref<16x1xi32, #tpu.memory_space<vmem>>, %arg1: memref<16x1xi32, #tpu.memory_space<vmem>>, %arg2: memref<16x1xi32, #tpu.memory_space<vmem>>, %arg3: memref<2x1x8xf32, #tpu.memory_space<vmem>>, %arg4: memref<2x8x8xf32, #tpu.memory_space<vmem>>, %arg5: memref<64x32xbf16, #tpu.memory_space<vmem>>, %arg6: memref<32x64xbf16, #tpu.memory_space<vmem>>, %arg7: memref<4x8x8xf32, #tpu.memory_space<vmem>>, %arg8: memref<4x8x8xf32, #tpu.memory_space<vmem>>, %arg9: memref<2x32x32xbf16, #tpu.memory_space<vmem>>, %arg10: memref<2x32x32xbf16, #tpu.memory_space<vmem>>, %arg11: memref<2x32x32xbf16, #tpu.memory_space<vmem>>, %arg12: memref<2x32x32xbf16, #tpu.memory_space<vmem>>, %arg13: memref<2x32xf32, #tpu.memory_space<vmem>>, %arg14: memref<2x32x64xbf16, #tpu.memory_space<vmem>>, %arg15: memref<2x64x32xbf16, #tpu.memory_space<vmem>>, %arg16: memref<2x32xf32, #tpu.memory_space<vmem>>, %arg17: memref<1x32xf32, #tpu.memory_space<vmem>>, %arg18: memref<2x32x32xbf16, #tpu.memory_space<vmem>>, %arg19: memref<2x32x32xbf16, #tpu.memory_space<vmem>>, %arg20: memref<2x32x32xbf16, #tpu.memory_space<vmem>>, %arg21: memref<2x32x32xbf16, #tpu.memory_space<vmem>>, %arg22: memref<2x32xf32, #tpu.memory_space<vmem>>, %arg23: memref<2x32x32xbf16, #tpu.memory_space<vmem>>, %arg24: memref<2x32x32xbf16, #tpu.memory_space<vmem>>, %arg25: memref<2x32x32xbf16, #tpu.memory_space<vmem>>, %arg26: memref<2x32x32xbf16, #tpu.memory_space<vmem>>, %arg27: memref<2x32xf32, #tpu.memory_space<vmem>>, %arg28: memref<2x32x64xbf16, #tpu.memory_space<vmem>>, %arg29: memref<2x64x32xbf16, #tpu.memory_space<vmem>>, %arg30: memref<2x32xf32, #tpu.memory_space<vmem>>, %arg31: memref<1x32xf32, #tpu.memory_space<vmem>>, %arg32: memref<1x1xf32, #tpu.memory_space<vmem>>, %arg33: memref<16x64xf32, #tpu.memory_space<vmem>>) attributes {dimension_semantics = [], scalar_prefetch = 0 : i64, scratch_operands = 0 : i64, tpu.core_type = #tpu.core_type<tc>} {
    %c0 = arith.constant 0 : index
    %c0_0 = arith.constant 0 : index
    %0 = vector.load %arg5[%c0, %c0_0] : memref<64x32xbf16, #tpu.memory_space<vmem>>, vector<64x32xbf16>
    %c0_1 = arith.constant 0 : index
    %c0_2 = arith.constant 0 : index
    %1 = vector.load %arg6[%c0_1, %c0_2] : memref<32x64xbf16, #tpu.memory_space<vmem>>, vector<32x64xbf16>
    %c0_3 = arith.constant 0 : index
    %c0_4 = arith.constant 0 : index
    %c0_5 = arith.constant 0 : index
    %2 = vector.load %arg7[%c0_3, %c0_4, %c0_5] : memref<4x8x8xf32, #tpu.memory_space<vmem>>, vector<4x8x8xf32>
    %c0_6 = arith.constant 0 : index
    %c0_7 = arith.constant 0 : index
    %c0_8 = arith.constant 0 : index
    %3 = vector.load %arg8[%c0_6, %c0_7, %c0_8] : memref<4x8x8xf32, #tpu.memory_space<vmem>>, vector<4x8x8xf32>
    %c0_9 = arith.constant 0 : index
    %c0_10 = arith.constant 0 : index
    %c0_11 = arith.constant 0 : index
    %4 = vector.load %arg3[%c0_9, %c0_10, %c0_11] : memref<2x1x8xf32, #tpu.memory_space<vmem>>, vector<2x1x8xf32>
    %c0_12 = arith.constant 0 : index
    %c0_13 = arith.constant 0 : index
    %c0_14 = arith.constant 0 : index
    %5 = vector.load %arg4[%c0_12, %c0_13, %c0_14] : memref<2x8x8xf32, #tpu.memory_space<vmem>>, vector<2x8x8xf32>
    %c0_15 = arith.constant 0 : index
    %c0_16 = arith.constant 0 : index
    %c0_17 = arith.constant 0 : index
    %6 = vector.load %arg9[%c0_15, %c0_16, %c0_17] : memref<2x32x32xbf16, #tpu.memory_space<vmem>>, vector<2x32x32xbf16>
    %c0_18 = arith.constant 0 : index
    %c0_19 = arith.constant 0 : index
    %c0_20 = arith.constant 0 : index
    %7 = vector.load %arg10[%c0_18, %c0_19, %c0_20] : memref<2x32x32xbf16, #tpu.memory_space<vmem>>, vector<2x32x32xbf16>
    %c0_21 = arith.constant 0 : index
    %c0_22 = arith.constant 0 : index
    %c0_23 = arith.constant 0 : index
    %8 = vector.load %arg11[%c0_21, %c0_22, %c0_23] : memref<2x32x32xbf16, #tpu.memory_space<vmem>>, vector<2x32x32xbf16>
    %c0_24 = arith.constant 0 : index
    %c0_25 = arith.constant 0 : index
    %c0_26 = arith.constant 0 : index
    %9 = vector.load %arg12[%c0_24, %c0_25, %c0_26] : memref<2x32x32xbf16, #tpu.memory_space<vmem>>, vector<2x32x32xbf16>
    %c0_27 = arith.constant 0 : index
    %c0_28 = arith.constant 0 : index
    %10 = vector.load %arg13[%c0_27, %c0_28] : memref<2x32xf32, #tpu.memory_space<vmem>>, vector<2x32xf32>
    %c0_29 = arith.constant 0 : index
    %c0_30 = arith.constant 0 : index
    %c0_31 = arith.constant 0 : index
    %11 = vector.load %arg14[%c0_29, %c0_30, %c0_31] : memref<2x32x64xbf16, #tpu.memory_space<vmem>>, vector<2x32x64xbf16>
    %c0_32 = arith.constant 0 : index
    %c0_33 = arith.constant 0 : index
    %c0_34 = arith.constant 0 : index
    %12 = vector.load %arg15[%c0_32, %c0_33, %c0_34] : memref<2x64x32xbf16, #tpu.memory_space<vmem>>, vector<2x64x32xbf16>
    %c0_35 = arith.constant 0 : index
    %c0_36 = arith.constant 0 : index
    %13 = vector.load %arg16[%c0_35, %c0_36] : memref<2x32xf32, #tpu.memory_space<vmem>>, vector<2x32xf32>
    %c0_37 = arith.constant 0 : index
    %c0_38 = arith.constant 0 : index
    %14 = vector.load %arg17[%c0_37, %c0_38] : memref<1x32xf32, #tpu.memory_space<vmem>>, vector<1x32xf32>
    %c0_39 = arith.constant 0 : index
    %c0_40 = arith.constant 0 : index
    %15 = vector.load %arg0[%c0_39, %c0_40] : memref<16x1xi32, #tpu.memory_space<vmem>>, vector<16x1xi32>
    %16 = tpu.iota {dimensions = array<i32: 1>} : vector<16x64xi32>
    %17 = vector.broadcast %15 : vector<16x1xi32> to vector<16x64xi32>
    %18 = arith.cmpi eq, %17, %16 : vector<16x64xi32>
    %19 = arith.extui %18 : vector<16x64xi1> to vector<16x64xi32>
    %20 = arith.sitofp %19 : vector<16x64xi32> to vector<16x64xf32>
    %21 = arith.truncf %20 : vector<16x64xf32> to vector<16x64xbf16>
    %cst = arith.constant dense<0.000000e+00> : vector<16x32xf32>
    %22 = tpu.matmul %21, %0, %cst {dimension_numbers = #tpu.dot_dimension_numbers<[1], [0], [0], [1], [0, 0, 1, 1], [], []>} : vector<16x64xbf16>, vector<64x32xbf16>, vector<16x32xf32> -> vector<16x32xf32>
    %23 = vector.extract_strided_slice %10 {offsets = [0, 0], sizes = [1, 32], strides = [1, 1]} : vector<2x32xf32> to vector<1x32xf32>
    %24 = arith.mulf %22, %22 : vector<16x32xf32>
    %cst_41 = arith.constant dense<0.000000e+00> : vector<16xf32>
    %25 = vector.multi_reduction <add>, %24, %cst_41 [1] : vector<16x32xf32> to vector<16xf32>
    %26 = vector.shape_cast %25 : vector<16xf32> to vector<16x1xf32>
    %cst_42 = arith.constant 3.200000e+01 : f32
    %27 = vector.broadcast %cst_42 : f32 to vector<16x1xf32>
    %28 = arith.divf %26, %27 : vector<16x1xf32>
    %cst_43 = arith.constant 9.99999997E-7 : f32
    %29 = vector.broadcast %cst_43 : f32 to vector<16x1xf32>
    %30 = arith.addf %28, %29 : vector<16x1xf32>
    %31 = math.rsqrt %30 : vector<16x1xf32>
    %32 = vector.broadcast %31 : vector<16x1xf32> to vector<16x32xf32>
    %33 = arith.mulf %22, %32 : vector<16x32xf32>
    %34 = vector.broadcast %23 : vector<1x32xf32> to vector<16x32xf32>
    %35 = arith.mulf %33, %34 : vector<16x32xf32>
    %36 = vector.extract_strided_slice %6 {offsets = [0, 0, 0], sizes = [1, 32, 32], strides = [1, 1, 1]} : vector<2x32x32xbf16> to vector<1x32x32xbf16>
    %37 = vector.shape_cast %36 : vector<1x32x32xbf16> to vector<32x32xbf16>
    %38 = vector.extract_strided_slice %7 {offsets = [0, 0, 0], sizes = [1, 32, 32], strides = [1, 1, 1]} : vector<2x32x32xbf16> to vector<1x32x32xbf16>
    %39 = vector.shape_cast %38 : vector<1x32x32xbf16> to vector<32x32xbf16>
    %40 = vector.extract_strided_slice %8 {offsets = [0, 0, 0], sizes = [1, 32, 32], strides = [1, 1, 1]} : vector<2x32x32xbf16> to vector<1x32x32xbf16>
    %41 = vector.shape_cast %40 : vector<1x32x32xbf16> to vector<32x32xbf16>
    %42 = vector.extract_strided_slice %9 {offsets = [0, 0, 0], sizes = [1, 32, 32], strides = [1, 1, 1]} : vector<2x32x32xbf16> to vector<1x32x32xbf16>
    %43 = vector.shape_cast %42 : vector<1x32x32xbf16> to vector<32x32xbf16>
    %44 = arith.truncf %35 : vector<16x32xf32> to vector<16x32xbf16>
    %cst_44 = arith.constant dense<0.000000e+00> : vector<16x32xf32>
    %45 = tpu.matmul %44, %37, %cst_44 {dimension_numbers = #tpu.dot_dimension_numbers<[1], [0], [0], [1], [0, 0, 1, 1], [], []>} : vector<16x32xbf16>, vector<32x32xbf16>, vector<16x32xf32> -> vector<16x32xf32>
    %46 = arith.truncf %35 : vector<16x32xf32> to vector<16x32xbf16>
    %cst_45 = arith.constant dense<0.000000e+00> : vector<16x32xf32>
    %47 = tpu.matmul %46, %39, %cst_45 {dimension_numbers = #tpu.dot_dimension_numbers<[1], [0], [0], [1], [0, 0, 1, 1], [], []>} : vector<16x32xbf16>, vector<32x32xbf16>, vector<16x32xf32> -> vector<16x32xf32>
    %48 = arith.truncf %35 : vector<16x32xf32> to vector<16x32xbf16>
    %cst_46 = arith.constant dense<0.000000e+00> : vector<16x32xf32>
    %49 = tpu.matmul %48, %41, %cst_46 {dimension_numbers = #tpu.dot_dimension_numbers<[1], [0], [0], [1], [0, 0, 1, 1], [], []>} : vector<16x32xbf16>, vector<32x32xbf16>, vector<16x32xf32> -> vector<16x32xf32>
    %cst_47 = arith.constant 0.000000e+00 : f32
    %50 = vector.broadcast %cst_47 : f32 to vector<16x32xf32>
    %51 = vector.extract_strided_slice %45 {offsets = [0, 0], sizes = [16, 8], strides = [1, 1]} : vector<16x32xf32> to vector<16x8xf32>
    %52 = vector.shape_cast %51 : vector<16x8xf32> to vector<2x8x8xf32>
    %53 = vector.extract_strided_slice %47 {offsets = [0, 0], sizes = [16, 8], strides = [1, 1]} : vector<16x32xf32> to vector<16x8xf32>
    %54 = vector.shape_cast %53 : vector<16x8xf32> to vector<2x8x8xf32>
    %55 = vector.extract_strided_slice %49 {offsets = [0, 0], sizes = [16, 8], strides = [1, 1]} : vector<16x32xf32> to vector<16x8xf32>
    %56 = vector.shape_cast %55 : vector<16x8xf32> to vector<2x8x8xf32>
    %57 = arith.truncf %52 : vector<2x8x8xf32> to vector<2x8x8xbf16>
    %58 = arith.truncf %54 : vector<2x8x8xf32> to vector<2x8x8xbf16>
    "tpu.trace_start"() <{level = 10 : i32, message = "bqd,bkd->bqk"}> : () -> ()
    %cst_48 = arith.constant dense<0.000000e+00> : vector<2x8x8xf32>
    %59 = tpu.matmul %57, %58, %cst_48 {dimension_numbers = #tpu.dot_dimension_numbers<[2], [2], [1], [1], [0, 0, 0, 1, 1, 1], [0], [0]>} : vector<2x8x8xbf16>, vector<2x8x8xbf16>, vector<2x8x8xf32> -> vector<2x8x8xf32>
    "tpu.trace_stop"() : () -> ()
    %60 = vector.broadcast %4 : vector<2x1x8xf32> to vector<2x8x8xf32>
    %61 = arith.addf %59, %60 : vector<2x8x8xf32>
    %62 = vector.extract_strided_slice %2 {offsets = [0, 0, 0], sizes = [1, 8, 8], strides = [1, 1, 1]} : vector<4x8x8xf32> to vector<1x8x8xf32>
    %63 = vector.shape_cast %62 : vector<1x8x8xf32> to vector<8x8xf32>
    %64 = vector.shape_cast %63 : vector<8x8xf32> to vector<1x8x8xf32>
    %65 = vector.broadcast %64 : vector<1x8x8xf32> to vector<2x8x8xf32>
    %66 = arith.addf %61, %65 : vector<2x8x8xf32>
    %cst_49 = arith.constant dense<0xFF800000> : vector<2x8xf32>
    %67 = vector.multi_reduction <maximumf>, %66, %cst_49 [2] : vector<2x8x8xf32> to vector<2x8xf32>
    %68 = vector.shape_cast %67 : vector<2x8xf32> to vector<2x8x1xf32>
    %69 = vector.broadcast %68 : vector<2x8x1xf32> to vector<2x8x8xf32>
    %70 = arith.subf %66, %69 : vector<2x8x8xf32>
    %71 = math.exp %70 : vector<2x8x8xf32>
    %cst_50 = arith.constant dense<0.000000e+00> : vector<2x8xf32>
    %72 = vector.multi_reduction <add>, %71, %cst_50 [2] : vector<2x8x8xf32> to vector<2x8xf32>
    %73 = vector.shape_cast %72 : vector<2x8xf32> to vector<2x8x1xf32>
    %74 = tpu.reciprocal %73 {approx = true} : vector<2x8x1xf32> -> vector<2x8x1xf32>
    %75 = vector.broadcast %74 : vector<2x8x1xf32> to vector<2x8x8xf32>
    %76 = arith.mulf %71, %75 : vector<2x8x8xf32>
    %77 = arith.truncf %76 : vector<2x8x8xf32> to vector<2x8x8xbf16>
    %78 = arith.truncf %56 : vector<2x8x8xf32> to vector<2x8x8xbf16>
    "tpu.trace_start"() <{level = 10 : i32, message = "bqk,bkd->bqd"}> : () -> ()
    %cst_51 = arith.constant dense<0.000000e+00> : vector<2x8x8xf32>
    %79 = tpu.matmul %77, %78, %cst_51 {dimension_numbers = #tpu.dot_dimension_numbers<[2], [1], [1], [2], [0, 0, 0, 1, 1, 2], [0], [0]>} : vector<2x8x8xbf16>, vector<2x8x8xbf16>, vector<2x8x8xf32> -> vector<2x8x8xf32>
    "tpu.trace_stop"() : () -> ()
    %80 = vector.shape_cast %79 : vector<2x8x8xf32> to vector<16x8xf32>
    %81 = vector.extract_strided_slice %43 {offsets = [0, 0], sizes = [8, 32], strides = [1, 1]} : vector<32x32xbf16> to vector<8x32xbf16>
    %82 = arith.truncf %80 : vector<16x8xf32> to vector<16x8xbf16>
    %cst_52 = arith.constant dense<0.000000e+00> : vector<16x32xf32>
    %83 = tpu.matmul %82, %81, %cst_52 {dimension_numbers = #tpu.dot_dimension_numbers<[1], [0], [0], [1], [0, 0, 1, 1], [], []>} : vector<16x8xbf16>, vector<8x32xbf16>, vector<16x32xf32> -> vector<16x32xf32>
    %84 = arith.addf %50, %83 : vector<16x32xf32>
    %85 = vector.extract_strided_slice %45 {offsets = [0, 8], sizes = [16, 8], strides = [1, 1]} : vector<16x32xf32> to vector<16x8xf32>
    %86 = vector.shape_cast %85 : vector<16x8xf32> to vector<2x8x8xf32>
    %87 = vector.extract_strided_slice %47 {offsets = [0, 8], sizes = [16, 8], strides = [1, 1]} : vector<16x32xf32> to vector<16x8xf32>
    %88 = vector.shape_cast %87 : vector<16x8xf32> to vector<2x8x8xf32>
    %89 = vector.extract_strided_slice %49 {offsets = [0, 8], sizes = [16, 8], strides = [1, 1]} : vector<16x32xf32> to vector<16x8xf32>
    %90 = vector.shape_cast %89 : vector<16x8xf32> to vector<2x8x8xf32>
    %91 = arith.truncf %86 : vector<2x8x8xf32> to vector<2x8x8xbf16>
    %92 = arith.truncf %88 : vector<2x8x8xf32> to vector<2x8x8xbf16>
    "tpu.trace_start"() <{level = 10 : i32, message = "bqd,bkd->bqk"}> : () -> ()
    %cst_53 = arith.constant dense<0.000000e+00> : vector<2x8x8xf32>
    %93 = tpu.matmul %91, %92, %cst_53 {dimension_numbers = #tpu.dot_dimension_numbers<[2], [2], [1], [1], [0, 0, 0, 1, 1, 1], [0], [0]>} : vector<2x8x8xbf16>, vector<2x8x8xbf16>, vector<2x8x8xf32> -> vector<2x8x8xf32>
    "tpu.trace_stop"() : () -> ()
    %94 = vector.broadcast %4 : vector<2x1x8xf32> to vector<2x8x8xf32>
    %95 = arith.addf %93, %94 : vector<2x8x8xf32>
    %96 = vector.extract_strided_slice %2 {offsets = [1, 0, 0], sizes = [1, 8, 8], strides = [1, 1, 1]} : vector<4x8x8xf32> to vector<1x8x8xf32>
    %97 = vector.shape_cast %96 : vector<1x8x8xf32> to vector<8x8xf32>
    %98 = vector.shape_cast %97 : vector<8x8xf32> to vector<1x8x8xf32>
    %99 = vector.broadcast %98 : vector<1x8x8xf32> to vector<2x8x8xf32>
    %100 = arith.addf %95, %99 : vector<2x8x8xf32>
    %cst_54 = arith.constant dense<0xFF800000> : vector<2x8xf32>
    %101 = vector.multi_reduction <maximumf>, %100, %cst_54 [2] : vector<2x8x8xf32> to vector<2x8xf32>
    %102 = vector.shape_cast %101 : vector<2x8xf32> to vector<2x8x1xf32>
    %103 = vector.broadcast %102 : vector<2x8x1xf32> to vector<2x8x8xf32>
    %104 = arith.subf %100, %103 : vector<2x8x8xf32>
    %105 = math.exp %104 : vector<2x8x8xf32>
    %cst_55 = arith.constant dense<0.000000e+00> : vector<2x8xf32>
    %106 = vector.multi_reduction <add>, %105, %cst_55 [2] : vector<2x8x8xf32> to vector<2x8xf32>
    %107 = vector.shape_cast %106 : vector<2x8xf32> to vector<2x8x1xf32>
    %108 = tpu.reciprocal %107 {approx = true} : vector<2x8x1xf32> -> vector<2x8x1xf32>
    %109 = vector.broadcast %108 : vector<2x8x1xf32> to vector<2x8x8xf32>
    %110 = arith.mulf %105, %109 : vector<2x8x8xf32>
    %111 = arith.truncf %110 : vector<2x8x8xf32> to vector<2x8x8xbf16>
    %112 = arith.truncf %90 : vector<2x8x8xf32> to vector<2x8x8xbf16>
    "tpu.trace_start"() <{level = 10 : i32, message = "bqk,bkd->bqd"}> : () -> ()
    %cst_56 = arith.constant dense<0.000000e+00> : vector<2x8x8xf32>
    %113 = tpu.matmul %111, %112, %cst_56 {dimension_numbers = #tpu.dot_dimension_numbers<[2], [1], [1], [2], [0, 0, 0, 1, 1, 2], [0], [0]>} : vector<2x8x8xbf16>, vector<2x8x8xbf16>, vector<2x8x8xf32> -> vector<2x8x8xf32>
    "tpu.trace_stop"() : () -> ()
    %114 = vector.shape_cast %113 : vector<2x8x8xf32> to vector<16x8xf32>
    %115 = vector.extract_strided_slice %43 {offsets = [8, 0], sizes = [8, 32], strides = [1, 1]} : vector<32x32xbf16> to vector<8x32xbf16>
    %116 = arith.truncf %114 : vector<16x8xf32> to vector<16x8xbf16>
    %cst_57 = arith.constant dense<0.000000e+00> : vector<16x32xf32>
    %117 = tpu.matmul %116, %115, %cst_57 {dimension_numbers = #tpu.dot_dimension_numbers<[1], [0], [0], [1], [0, 0, 1, 1], [], []>} : vector<16x8xbf16>, vector<8x32xbf16>, vector<16x32xf32> -> vector<16x32xf32>
    %118 = arith.addf %84, %117 : vector<16x32xf32>
    %119 = vector.extract_strided_slice %45 {offsets = [0, 16], sizes = [16, 8], strides = [1, 1]} : vector<16x32xf32> to vector<16x8xf32>
    %120 = vector.shape_cast %119 : vector<16x8xf32> to vector<2x8x8xf32>
    %121 = vector.extract_strided_slice %47 {offsets = [0, 16], sizes = [16, 8], strides = [1, 1]} : vector<16x32xf32> to vector<16x8xf32>
    %122 = vector.shape_cast %121 : vector<16x8xf32> to vector<2x8x8xf32>
    %123 = vector.extract_strided_slice %49 {offsets = [0, 16], sizes = [16, 8], strides = [1, 1]} : vector<16x32xf32> to vector<16x8xf32>
    %124 = vector.shape_cast %123 : vector<16x8xf32> to vector<2x8x8xf32>
    %125 = arith.truncf %120 : vector<2x8x8xf32> to vector<2x8x8xbf16>
    %126 = arith.truncf %122 : vector<2x8x8xf32> to vector<2x8x8xbf16>
    "tpu.trace_start"() <{level = 10 : i32, message = "bqd,bkd->bqk"}> : () -> ()
    %cst_58 = arith.constant dense<0.000000e+00> : vector<2x8x8xf32>
    %127 = tpu.matmul %125, %126, %cst_58 {dimension_numbers = #tpu.dot_dimension_numbers<[2], [2], [1], [1], [0, 0, 0, 1, 1, 1], [0], [0]>} : vector<2x8x8xbf16>, vector<2x8x8xbf16>, vector<2x8x8xf32> -> vector<2x8x8xf32>
    "tpu.trace_stop"() : () -> ()
    %128 = vector.broadcast %4 : vector<2x1x8xf32> to vector<2x8x8xf32>
    %129 = arith.addf %127, %128 : vector<2x8x8xf32>
    %130 = vector.extract_strided_slice %2 {offsets = [2, 0, 0], sizes = [1, 8, 8], strides = [1, 1, 1]} : vector<4x8x8xf32> to vector<1x8x8xf32>
    %131 = vector.shape_cast %130 : vector<1x8x8xf32> to vector<8x8xf32>
    %132 = vector.shape_cast %131 : vector<8x8xf32> to vector<1x8x8xf32>
    %133 = vector.broadcast %132 : vector<1x8x8xf32> to vector<2x8x8xf32>
    %134 = arith.addf %129, %133 : vector<2x8x8xf32>
    %cst_59 = arith.constant dense<0xFF800000> : vector<2x8xf32>
    %135 = vector.multi_reduction <maximumf>, %134, %cst_59 [2] : vector<2x8x8xf32> to vector<2x8xf32>
    %136 = vector.shape_cast %135 : vector<2x8xf32> to vector<2x8x1xf32>
    %137 = vector.broadcast %136 : vector<2x8x1xf32> to vector<2x8x8xf32>
    %138 = arith.subf %134, %137 : vector<2x8x8xf32>
    %139 = math.exp %138 : vector<2x8x8xf32>
    %cst_60 = arith.constant dense<0.000000e+00> : vector<2x8xf32>
    %140 = vector.multi_reduction <add>, %139, %cst_60 [2] : vector<2x8x8xf32> to vector<2x8xf32>
    %141 = vector.shape_cast %140 : vector<2x8xf32> to vector<2x8x1xf32>
    %142 = tpu.reciprocal %141 {approx = true} : vector<2x8x1xf32> -> vector<2x8x1xf32>
    %143 = vector.broadcast %142 : vector<2x8x1xf32> to vector<2x8x8xf32>
    %144 = arith.mulf %139, %143 : vector<2x8x8xf32>
    %145 = arith.truncf %144 : vector<2x8x8xf32> to vector<2x8x8xbf16>
    %146 = arith.truncf %124 : vector<2x8x8xf32> to vector<2x8x8xbf16>
    "tpu.trace_start"() <{level = 10 : i32, message = "bqk,bkd->bqd"}> : () -> ()
    %cst_61 = arith.constant dense<0.000000e+00> : vector<2x8x8xf32>
    %147 = tpu.matmul %145, %146, %cst_61 {dimension_numbers = #tpu.dot_dimension_numbers<[2], [1], [1], [2], [0, 0, 0, 1, 1, 2], [0], [0]>} : vector<2x8x8xbf16>, vector<2x8x8xbf16>, vector<2x8x8xf32> -> vector<2x8x8xf32>
    "tpu.trace_stop"() : () -> ()
    %148 = vector.shape_cast %147 : vector<2x8x8xf32> to vector<16x8xf32>
    %149 = vector.extract_strided_slice %43 {offsets = [16, 0], sizes = [8, 32], strides = [1, 1]} : vector<32x32xbf16> to vector<8x32xbf16>
    %150 = arith.truncf %148 : vector<16x8xf32> to vector<16x8xbf16>
    %cst_62 = arith.constant dense<0.000000e+00> : vector<16x32xf32>
    %151 = tpu.matmul %150, %149, %cst_62 {dimension_numbers = #tpu.dot_dimension_numbers<[1], [0], [0], [1], [0, 0, 1, 1], [], []>} : vector<16x8xbf16>, vector<8x32xbf16>, vector<16x32xf32> -> vector<16x32xf32>
    %152 = arith.addf %118, %151 : vector<16x32xf32>
    %153 = vector.extract_strided_slice %45 {offsets = [0, 24], sizes = [16, 8], strides = [1, 1]} : vector<16x32xf32> to vector<16x8xf32>
    %154 = vector.shape_cast %153 : vector<16x8xf32> to vector<2x8x8xf32>
    %155 = vector.extract_strided_slice %47 {offsets = [0, 24], sizes = [16, 8], strides = [1, 1]} : vector<16x32xf32> to vector<16x8xf32>
    %156 = vector.shape_cast %155 : vector<16x8xf32> to vector<2x8x8xf32>
    %157 = vector.extract_strided_slice %49 {offsets = [0, 24], sizes = [16, 8], strides = [1, 1]} : vector<16x32xf32> to vector<16x8xf32>
    %158 = vector.shape_cast %157 : vector<16x8xf32> to vector<2x8x8xf32>
    %159 = arith.truncf %154 : vector<2x8x8xf32> to vector<2x8x8xbf16>
    %160 = arith.truncf %156 : vector<2x8x8xf32> to vector<2x8x8xbf16>
    "tpu.trace_start"() <{level = 10 : i32, message = "bqd,bkd->bqk"}> : () -> ()
    %cst_63 = arith.constant dense<0.000000e+00> : vector<2x8x8xf32>
    %161 = tpu.matmul %159, %160, %cst_63 {dimension_numbers = #tpu.dot_dimension_numbers<[2], [2], [1], [1], [0, 0, 0, 1, 1, 1], [0], [0]>} : vector<2x8x8xbf16>, vector<2x8x8xbf16>, vector<2x8x8xf32> -> vector<2x8x8xf32>
    "tpu.trace_stop"() : () -> ()
    %162 = vector.broadcast %4 : vector<2x1x8xf32> to vector<2x8x8xf32>
    %163 = arith.addf %161, %162 : vector<2x8x8xf32>
    %164 = vector.extract_strided_slice %2 {offsets = [3, 0, 0], sizes = [1, 8, 8], strides = [1, 1, 1]} : vector<4x8x8xf32> to vector<1x8x8xf32>
    %165 = vector.shape_cast %164 : vector<1x8x8xf32> to vector<8x8xf32>
    %166 = vector.shape_cast %165 : vector<8x8xf32> to vector<1x8x8xf32>
    %167 = vector.broadcast %166 : vector<1x8x8xf32> to vector<2x8x8xf32>
    %168 = arith.addf %163, %167 : vector<2x8x8xf32>
    %cst_64 = arith.constant dense<0xFF800000> : vector<2x8xf32>
    %169 = vector.multi_reduction <maximumf>, %168, %cst_64 [2] : vector<2x8x8xf32> to vector<2x8xf32>
    %170 = vector.shape_cast %169 : vector<2x8xf32> to vector<2x8x1xf32>
    %171 = vector.broadcast %170 : vector<2x8x1xf32> to vector<2x8x8xf32>
    %172 = arith.subf %168, %171 : vector<2x8x8xf32>
    %173 = math.exp %172 : vector<2x8x8xf32>
    %cst_65 = arith.constant dense<0.000000e+00> : vector<2x8xf32>
    %174 = vector.multi_reduction <add>, %173, %cst_65 [2] : vector<2x8x8xf32> to vector<2x8xf32>
    %175 = vector.shape_cast %174 : vector<2x8xf32> to vector<2x8x1xf32>
    %176 = tpu.reciprocal %175 {approx = true} : vector<2x8x1xf32> -> vector<2x8x1xf32>
    %177 = vector.broadcast %176 : vector<2x8x1xf32> to vector<2x8x8xf32>
    %178 = arith.mulf %173, %177 : vector<2x8x8xf32>
    %179 = arith.truncf %178 : vector<2x8x8xf32> to vector<2x8x8xbf16>
    %180 = arith.truncf %158 : vector<2x8x8xf32> to vector<2x8x8xbf16>
    "tpu.trace_start"() <{level = 10 : i32, message = "bqk,bkd->bqd"}> : () -> ()
    %cst_66 = arith.constant dense<0.000000e+00> : vector<2x8x8xf32>
    %181 = tpu.matmul %179, %180, %cst_66 {dimension_numbers = #tpu.dot_dimension_numbers<[2], [1], [1], [2], [0, 0, 0, 1, 1, 2], [0], [0]>} : vector<2x8x8xbf16>, vector<2x8x8xbf16>, vector<2x8x8xf32> -> vector<2x8x8xf32>
    "tpu.trace_stop"() : () -> ()
    %182 = vector.shape_cast %181 : vector<2x8x8xf32> to vector<16x8xf32>
    %183 = vector.extract_strided_slice %43 {offsets = [24, 0], sizes = [8, 32], strides = [1, 1]} : vector<32x32xbf16> to vector<8x32xbf16>
    %184 = arith.truncf %182 : vector<16x8xf32> to vector<16x8xbf16>
    %cst_67 = arith.constant dense<0.000000e+00> : vector<16x32xf32>
    %185 = tpu.matmul %184, %183, %cst_67 {dimension_numbers = #tpu.dot_dimension_numbers<[1], [0], [0], [1], [0, 0, 1, 1], [], []>} : vector<16x8xbf16>, vector<8x32xbf16>, vector<16x32xf32> -> vector<16x32xf32>
    %186 = arith.addf %152, %185 : vector<16x32xf32>
    %187 = arith.addf %22, %186 : vector<16x32xf32>
    %188 = vector.extract_strided_slice %13 {offsets = [0, 0], sizes = [1, 32], strides = [1, 1]} : vector<2x32xf32> to vector<1x32xf32>
    %189 = arith.mulf %187, %187 : vector<16x32xf32>
    %cst_68 = arith.constant dense<0.000000e+00> : vector<16xf32>
    %190 = vector.multi_reduction <add>, %189, %cst_68 [1] : vector<16x32xf32> to vector<16xf32>
    %191 = vector.shape_cast %190 : vector<16xf32> to vector<16x1xf32>
    %cst_69 = arith.constant 3.200000e+01 : f32
    %192 = vector.broadcast %cst_69 : f32 to vector<16x1xf32>
    %193 = arith.divf %191, %192 : vector<16x1xf32>
    %cst_70 = arith.constant 9.99999997E-7 : f32
    %194 = vector.broadcast %cst_70 : f32 to vector<16x1xf32>
    %195 = arith.addf %193, %194 : vector<16x1xf32>
    %196 = math.rsqrt %195 : vector<16x1xf32>
    %197 = vector.broadcast %196 : vector<16x1xf32> to vector<16x32xf32>
    %198 = arith.mulf %187, %197 : vector<16x32xf32>
    %199 = vector.broadcast %188 : vector<1x32xf32> to vector<16x32xf32>
    %200 = arith.mulf %198, %199 : vector<16x32xf32>
    %201 = vector.extract_strided_slice %11 {offsets = [0, 0, 0], sizes = [1, 32, 64], strides = [1, 1, 1]} : vector<2x32x64xbf16> to vector<1x32x64xbf16>
    %202 = vector.shape_cast %201 : vector<1x32x64xbf16> to vector<32x64xbf16>
    %203 = arith.truncf %200 : vector<16x32xf32> to vector<16x32xbf16>
    %cst_71 = arith.constant dense<0.000000e+00> : vector<16x64xf32>
    %204 = tpu.matmul %203, %202, %cst_71 {dimension_numbers = #tpu.dot_dimension_numbers<[1], [0], [0], [1], [0, 0, 1, 1], [], []>} : vector<16x32xbf16>, vector<32x64xbf16>, vector<16x64xf32> -> vector<16x64xf32>
    %cst_72 = arith.constant 0.000000e+00 : f32
    %205 = vector.broadcast %cst_72 : f32 to vector<16x64xf32>
    %206 = arith.maximumf %204, %205 : vector<16x64xf32>
    %207 = vector.extract_strided_slice %12 {offsets = [0, 0, 0], sizes = [1, 64, 32], strides = [1, 1, 1]} : vector<2x64x32xbf16> to vector<1x64x32xbf16>
    %208 = vector.shape_cast %207 : vector<1x64x32xbf16> to vector<64x32xbf16>
    %209 = arith.truncf %206 : vector<16x64xf32> to vector<16x64xbf16>
    %cst_73 = arith.constant dense<0.000000e+00> : vector<16x32xf32>
    %210 = tpu.matmul %209, %208, %cst_73 {dimension_numbers = #tpu.dot_dimension_numbers<[1], [0], [0], [1], [0, 0, 1, 1], [], []>} : vector<16x64xbf16>, vector<64x32xbf16>, vector<16x32xf32> -> vector<16x32xf32>
    %211 = arith.addf %187, %210 : vector<16x32xf32>
    %212 = vector.extract_strided_slice %10 {offsets = [1, 0], sizes = [1, 32], strides = [1, 1]} : vector<2x32xf32> to vector<1x32xf32>
    %213 = arith.mulf %211, %211 : vector<16x32xf32>
    %cst_74 = arith.constant dense<0.000000e+00> : vector<16xf32>
    %214 = vector.multi_reduction <add>, %213, %cst_74 [1] : vector<16x32xf32> to vector<16xf32>
    %215 = vector.shape_cast %214 : vector<16xf32> to vector<16x1xf32>
    %cst_75 = arith.constant 3.200000e+01 : f32
    %216 = vector.broadcast %cst_75 : f32 to vector<16x1xf32>
    %217 = arith.divf %215, %216 : vector<16x1xf32>
    %cst_76 = arith.constant 9.99999997E-7 : f32
    %218 = vector.broadcast %cst_76 : f32 to vector<16x1xf32>
    %219 = arith.addf %217, %218 : vector<16x1xf32>
    %220 = math.rsqrt %219 : vector<16x1xf32>
    %221 = vector.broadcast %220 : vector<16x1xf32> to vector<16x32xf32>
    %222 = arith.mulf %211, %221 : vector<16x32xf32>
    %223 = vector.broadcast %212 : vector<1x32xf32> to vector<16x32xf32>
    %224 = arith.mulf %222, %223 : vector<16x32xf32>
    %225 = vector.extract_strided_slice %6 {offsets = [1, 0, 0], sizes = [1, 32, 32], strides = [1, 1, 1]} : vector<2x32x32xbf16> to vector<1x32x32xbf16>
    %226 = vector.shape_cast %225 : vector<1x32x32xbf16> to vector<32x32xbf16>
    %227 = vector.extract_strided_slice %7 {offsets = [1, 0, 0], sizes = [1, 32, 32], strides = [1, 1, 1]} : vector<2x32x32xbf16> to vector<1x32x32xbf16>
    %228 = vector.shape_cast %227 : vector<1x32x32xbf16> to vector<32x32xbf16>
    %229 = vector.extract_strided_slice %8 {offsets = [1, 0, 0], sizes = [1, 32, 32], strides = [1, 1, 1]} : vector<2x32x32xbf16> to vector<1x32x32xbf16>
    %230 = vector.shape_cast %229 : vector<1x32x32xbf16> to vector<32x32xbf16>
    %231 = vector.extract_strided_slice %9 {offsets = [1, 0, 0], sizes = [1, 32, 32], strides = [1, 1, 1]} : vector<2x32x32xbf16> to vector<1x32x32xbf16>
    %232 = vector.shape_cast %231 : vector<1x32x32xbf16> to vector<32x32xbf16>
    %233 = arith.truncf %224 : vector<16x32xf32> to vector<16x32xbf16>
    %cst_77 = arith.constant dense<0.000000e+00> : vector<16x32xf32>
    %234 = tpu.matmul %233, %226, %cst_77 {dimension_numbers = #tpu.dot_dimension_numbers<[1], [0], [0], [1], [0, 0, 1, 1], [], []>} : vector<16x32xbf16>, vector<32x32xbf16>, vector<16x32xf32> -> vector<16x32xf32>
    %235 = arith.truncf %224 : vector<16x32xf32> to vector<16x32xbf16>
    %cst_78 = arith.constant dense<0.000000e+00> : vector<16x32xf32>
    %236 = tpu.matmul %235, %228, %cst_78 {dimension_numbers = #tpu.dot_dimension_numbers<[1], [0], [0], [1], [0, 0, 1, 1], [], []>} : vector<16x32xbf16>, vector<32x32xbf16>, vector<16x32xf32> -> vector<16x32xf32>
    %237 = arith.truncf %224 : vector<16x32xf32> to vector<16x32xbf16>
    %cst_79 = arith.constant dense<0.000000e+00> : vector<16x32xf32>
    %238 = tpu.matmul %237, %230, %cst_79 {dimension_numbers = #tpu.dot_dimension_numbers<[1], [0], [0], [1], [0, 0, 1, 1], [], []>} : vector<16x32xbf16>, vector<32x32xbf16>, vector<16x32xf32> -> vector<16x32xf32>
    %cst_80 = arith.constant 0.000000e+00 : f32
    %239 = vector.broadcast %cst_80 : f32 to vector<16x32xf32>
    %240 = vector.extract_strided_slice %234 {offsets = [0, 0], sizes = [16, 8], strides = [1, 1]} : vector<16x32xf32> to vector<16x8xf32>
    %241 = vector.shape_cast %240 : vector<16x8xf32> to vector<2x8x8xf32>
    %242 = vector.extract_strided_slice %236 {offsets = [0, 0], sizes = [16, 8], strides = [1, 1]} : vector<16x32xf32> to vector<16x8xf32>
    %243 = vector.shape_cast %242 : vector<16x8xf32> to vector<2x8x8xf32>
    %244 = vector.extract_strided_slice %238 {offsets = [0, 0], sizes = [16, 8], strides = [1, 1]} : vector<16x32xf32> to vector<16x8xf32>
    %245 = vector.shape_cast %244 : vector<16x8xf32> to vector<2x8x8xf32>
    %246 = arith.truncf %241 : vector<2x8x8xf32> to vector<2x8x8xbf16>
    %247 = arith.truncf %243 : vector<2x8x8xf32> to vector<2x8x8xbf16>
    "tpu.trace_start"() <{level = 10 : i32, message = "bqd,bkd->bqk"}> : () -> ()
    %cst_81 = arith.constant dense<0.000000e+00> : vector<2x8x8xf32>
    %248 = tpu.matmul %246, %247, %cst_81 {dimension_numbers = #tpu.dot_dimension_numbers<[2], [2], [1], [1], [0, 0, 0, 1, 1, 1], [0], [0]>} : vector<2x8x8xbf16>, vector<2x8x8xbf16>, vector<2x8x8xf32> -> vector<2x8x8xf32>
    "tpu.trace_stop"() : () -> ()
    %249 = vector.broadcast %4 : vector<2x1x8xf32> to vector<2x8x8xf32>
    %250 = arith.addf %248, %249 : vector<2x8x8xf32>
    %251 = vector.extract_strided_slice %2 {offsets = [0, 0, 0], sizes = [1, 8, 8], strides = [1, 1, 1]} : vector<4x8x8xf32> to vector<1x8x8xf32>
    %252 = vector.shape_cast %251 : vector<1x8x8xf32> to vector<8x8xf32>
    %253 = vector.shape_cast %252 : vector<8x8xf32> to vector<1x8x8xf32>
    %254 = vector.broadcast %253 : vector<1x8x8xf32> to vector<2x8x8xf32>
    %255 = arith.addf %250, %254 : vector<2x8x8xf32>
    %cst_82 = arith.constant dense<0xFF800000> : vector<2x8xf32>
    %256 = vector.multi_reduction <maximumf>, %255, %cst_82 [2] : vector<2x8x8xf32> to vector<2x8xf32>
    %257 = vector.shape_cast %256 : vector<2x8xf32> to vector<2x8x1xf32>
    %258 = vector.broadcast %257 : vector<2x8x1xf32> to vector<2x8x8xf32>
    %259 = arith.subf %255, %258 : vector<2x8x8xf32>
    %260 = math.exp %259 : vector<2x8x8xf32>
    %cst_83 = arith.constant dense<0.000000e+00> : vector<2x8xf32>
    %261 = vector.multi_reduction <add>, %260, %cst_83 [2] : vector<2x8x8xf32> to vector<2x8xf32>
    %262 = vector.shape_cast %261 : vector<2x8xf32> to vector<2x8x1xf32>
    %263 = tpu.reciprocal %262 {approx = true} : vector<2x8x1xf32> -> vector<2x8x1xf32>
    %264 = vector.broadcast %263 : vector<2x8x1xf32> to vector<2x8x8xf32>
    %265 = arith.mulf %260, %264 : vector<2x8x8xf32>
    %266 = arith.truncf %265 : vector<2x8x8xf32> to vector<2x8x8xbf16>
    %267 = arith.truncf %245 : vector<2x8x8xf32> to vector<2x8x8xbf16>
    "tpu.trace_start"() <{level = 10 : i32, message = "bqk,bkd->bqd"}> : () -> ()
    %cst_84 = arith.constant dense<0.000000e+00> : vector<2x8x8xf32>
    %268 = tpu.matmul %266, %267, %cst_84 {dimension_numbers = #tpu.dot_dimension_numbers<[2], [1], [1], [2], [0, 0, 0, 1, 1, 2], [0], [0]>} : vector<2x8x8xbf16>, vector<2x8x8xbf16>, vector<2x8x8xf32> -> vector<2x8x8xf32>
    "tpu.trace_stop"() : () -> ()
    %269 = vector.shape_cast %268 : vector<2x8x8xf32> to vector<16x8xf32>
    %270 = vector.extract_strided_slice %232 {offsets = [0, 0], sizes = [8, 32], strides = [1, 1]} : vector<32x32xbf16> to vector<8x32xbf16>
    %271 = arith.truncf %269 : vector<16x8xf32> to vector<16x8xbf16>
    %cst_85 = arith.constant dense<0.000000e+00> : vector<16x32xf32>
    %272 = tpu.matmul %271, %270, %cst_85 {dimension_numbers = #tpu.dot_dimension_numbers<[1], [0], [0], [1], [0, 0, 1, 1], [], []>} : vector<16x8xbf16>, vector<8x32xbf16>, vector<16x32xf32> -> vector<16x32xf32>
    %273 = arith.addf %239, %272 : vector<16x32xf32>
    %274 = vector.extract_strided_slice %234 {offsets = [0, 8], sizes = [16, 8], strides = [1, 1]} : vector<16x32xf32> to vector<16x8xf32>
    %275 = vector.shape_cast %274 : vector<16x8xf32> to vector<2x8x8xf32>
    %276 = vector.extract_strided_slice %236 {offsets = [0, 8], sizes = [16, 8], strides = [1, 1]} : vector<16x32xf32> to vector<16x8xf32>
    %277 = vector.shape_cast %276 : vector<16x8xf32> to vector<2x8x8xf32>
    %278 = vector.extract_strided_slice %238 {offsets = [0, 8], sizes = [16, 8], strides = [1, 1]} : vector<16x32xf32> to vector<16x8xf32>
    %279 = vector.shape_cast %278 : vector<16x8xf32> to vector<2x8x8xf32>
    %280 = arith.truncf %275 : vector<2x8x8xf32> to vector<2x8x8xbf16>
    %281 = arith.truncf %277 : vector<2x8x8xf32> to vector<2x8x8xbf16>
    "tpu.trace_start"() <{level = 10 : i32, message = "bqd,bkd->bqk"}> : () -> ()
    %cst_86 = arith.constant dense<0.000000e+00> : vector<2x8x8xf32>
    %282 = tpu.matmul %280, %281, %cst_86 {dimension_numbers = #tpu.dot_dimension_numbers<[2], [2], [1], [1], [0, 0, 0, 1, 1, 1], [0], [0]>} : vector<2x8x8xbf16>, vector<2x8x8xbf16>, vector<2x8x8xf32> -> vector<2x8x8xf32>
    "tpu.trace_stop"() : () -> ()
    %283 = vector.broadcast %4 : vector<2x1x8xf32> to vector<2x8x8xf32>
    %284 = arith.addf %282, %283 : vector<2x8x8xf32>
    %285 = vector.extract_strided_slice %2 {offsets = [1, 0, 0], sizes = [1, 8, 8], strides = [1, 1, 1]} : vector<4x8x8xf32> to vector<1x8x8xf32>
    %286 = vector.shape_cast %285 : vector<1x8x8xf32> to vector<8x8xf32>
    %287 = vector.shape_cast %286 : vector<8x8xf32> to vector<1x8x8xf32>
    %288 = vector.broadcast %287 : vector<1x8x8xf32> to vector<2x8x8xf32>
    %289 = arith.addf %284, %288 : vector<2x8x8xf32>
    %cst_87 = arith.constant dense<0xFF800000> : vector<2x8xf32>
    %290 = vector.multi_reduction <maximumf>, %289, %cst_87 [2] : vector<2x8x8xf32> to vector<2x8xf32>
    %291 = vector.shape_cast %290 : vector<2x8xf32> to vector<2x8x1xf32>
    %292 = vector.broadcast %291 : vector<2x8x1xf32> to vector<2x8x8xf32>
    %293 = arith.subf %289, %292 : vector<2x8x8xf32>
    %294 = math.exp %293 : vector<2x8x8xf32>
    %cst_88 = arith.constant dense<0.000000e+00> : vector<2x8xf32>
    %295 = vector.multi_reduction <add>, %294, %cst_88 [2] : vector<2x8x8xf32> to vector<2x8xf32>
    %296 = vector.shape_cast %295 : vector<2x8xf32> to vector<2x8x1xf32>
    %297 = tpu.reciprocal %296 {approx = true} : vector<2x8x1xf32> -> vector<2x8x1xf32>
    %298 = vector.broadcast %297 : vector<2x8x1xf32> to vector<2x8x8xf32>
    %299 = arith.mulf %294, %298 : vector<2x8x8xf32>
    %300 = arith.truncf %299 : vector<2x8x8xf32> to vector<2x8x8xbf16>
    %301 = arith.truncf %279 : vector<2x8x8xf32> to vector<2x8x8xbf16>
    "tpu.trace_start"() <{level = 10 : i32, message = "bqk,bkd->bqd"}> : () -> ()
    %cst_89 = arith.constant dense<0.000000e+00> : vector<2x8x8xf32>
    %302 = tpu.matmul %300, %301, %cst_89 {dimension_numbers = #tpu.dot_dimension_numbers<[2], [1], [1], [2], [0, 0, 0, 1, 1, 2], [0], [0]>} : vector<2x8x8xbf16>, vector<2x8x8xbf16>, vector<2x8x8xf32> -> vector<2x8x8xf32>
    "tpu.trace_stop"() : () -> ()
    %303 = vector.shape_cast %302 : vector<2x8x8xf32> to vector<16x8xf32>
    %304 = vector.extract_strided_slice %232 {offsets = [8, 0], sizes = [8, 32], strides = [1, 1]} : vector<32x32xbf16> to vector<8x32xbf16>
    %305 = arith.truncf %303 : vector<16x8xf32> to vector<16x8xbf16>
    %cst_90 = arith.constant dense<0.000000e+00> : vector<16x32xf32>
    %306 = tpu.matmul %305, %304, %cst_90 {dimension_numbers = #tpu.dot_dimension_numbers<[1], [0], [0], [1], [0, 0, 1, 1], [], []>} : vector<16x8xbf16>, vector<8x32xbf16>, vector<16x32xf32> -> vector<16x32xf32>
    %307 = arith.addf %273, %306 : vector<16x32xf32>
    %308 = vector.extract_strided_slice %234 {offsets = [0, 16], sizes = [16, 8], strides = [1, 1]} : vector<16x32xf32> to vector<16x8xf32>
    %309 = vector.shape_cast %308 : vector<16x8xf32> to vector<2x8x8xf32>
    %310 = vector.extract_strided_slice %236 {offsets = [0, 16], sizes = [16, 8], strides = [1, 1]} : vector<16x32xf32> to vector<16x8xf32>
    %311 = vector.shape_cast %310 : vector<16x8xf32> to vector<2x8x8xf32>
    %312 = vector.extract_strided_slice %238 {offsets = [0, 16], sizes = [16, 8], strides = [1, 1]} : vector<16x32xf32> to vector<16x8xf32>
    %313 = vector.shape_cast %312 : vector<16x8xf32> to vector<2x8x8xf32>
    %314 = arith.truncf %309 : vector<2x8x8xf32> to vector<2x8x8xbf16>
    %315 = arith.truncf %311 : vector<2x8x8xf32> to vector<2x8x8xbf16>
    "tpu.trace_start"() <{level = 10 : i32, message = "bqd,bkd->bqk"}> : () -> ()
    %cst_91 = arith.constant dense<0.000000e+00> : vector<2x8x8xf32>
    %316 = tpu.matmul %314, %315, %cst_91 {dimension_numbers = #tpu.dot_dimension_numbers<[2], [2], [1], [1], [0, 0, 0, 1, 1, 1], [0], [0]>} : vector<2x8x8xbf16>, vector<2x8x8xbf16>, vector<2x8x8xf32> -> vector<2x8x8xf32>
    "tpu.trace_stop"() : () -> ()
    %317 = vector.broadcast %4 : vector<2x1x8xf32> to vector<2x8x8xf32>
    %318 = arith.addf %316, %317 : vector<2x8x8xf32>
    %319 = vector.extract_strided_slice %2 {offsets = [2, 0, 0], sizes = [1, 8, 8], strides = [1, 1, 1]} : vector<4x8x8xf32> to vector<1x8x8xf32>
    %320 = vector.shape_cast %319 : vector<1x8x8xf32> to vector<8x8xf32>
    %321 = vector.shape_cast %320 : vector<8x8xf32> to vector<1x8x8xf32>
    %322 = vector.broadcast %321 : vector<1x8x8xf32> to vector<2x8x8xf32>
    %323 = arith.addf %318, %322 : vector<2x8x8xf32>
    %cst_92 = arith.constant dense<0xFF800000> : vector<2x8xf32>
    %324 = vector.multi_reduction <maximumf>, %323, %cst_92 [2] : vector<2x8x8xf32> to vector<2x8xf32>
    %325 = vector.shape_cast %324 : vector<2x8xf32> to vector<2x8x1xf32>
    %326 = vector.broadcast %325 : vector<2x8x1xf32> to vector<2x8x8xf32>
    %327 = arith.subf %323, %326 : vector<2x8x8xf32>
    %328 = math.exp %327 : vector<2x8x8xf32>
    %cst_93 = arith.constant dense<0.000000e+00> : vector<2x8xf32>
    %329 = vector.multi_reduction <add>, %328, %cst_93 [2] : vector<2x8x8xf32> to vector<2x8xf32>
    %330 = vector.shape_cast %329 : vector<2x8xf32> to vector<2x8x1xf32>
    %331 = tpu.reciprocal %330 {approx = true} : vector<2x8x1xf32> -> vector<2x8x1xf32>
    %332 = vector.broadcast %331 : vector<2x8x1xf32> to vector<2x8x8xf32>
    %333 = arith.mulf %328, %332 : vector<2x8x8xf32>
    %334 = arith.truncf %333 : vector<2x8x8xf32> to vector<2x8x8xbf16>
    %335 = arith.truncf %313 : vector<2x8x8xf32> to vector<2x8x8xbf16>
    "tpu.trace_start"() <{level = 10 : i32, message = "bqk,bkd->bqd"}> : () -> ()
    %cst_94 = arith.constant dense<0.000000e+00> : vector<2x8x8xf32>
    %336 = tpu.matmul %334, %335, %cst_94 {dimension_numbers = #tpu.dot_dimension_numbers<[2], [1], [1], [2], [0, 0, 0, 1, 1, 2], [0], [0]>} : vector<2x8x8xbf16>, vector<2x8x8xbf16>, vector<2x8x8xf32> -> vector<2x8x8xf32>
    "tpu.trace_stop"() : () -> ()
    %337 = vector.shape_cast %336 : vector<2x8x8xf32> to vector<16x8xf32>
    %338 = vector.extract_strided_slice %232 {offsets = [16, 0], sizes = [8, 32], strides = [1, 1]} : vector<32x32xbf16> to vector<8x32xbf16>
    %339 = arith.truncf %337 : vector<16x8xf32> to vector<16x8xbf16>
    %cst_95 = arith.constant dense<0.000000e+00> : vector<16x32xf32>
    %340 = tpu.matmul %339, %338, %cst_95 {dimension_numbers = #tpu.dot_dimension_numbers<[1], [0], [0], [1], [0, 0, 1, 1], [], []>} : vector<16x8xbf16>, vector<8x32xbf16>, vector<16x32xf32> -> vector<16x32xf32>
    %341 = arith.addf %307, %340 : vector<16x32xf32>
    %342 = vector.extract_strided_slice %234 {offsets = [0, 24], sizes = [16, 8], strides = [1, 1]} : vector<16x32xf32> to vector<16x8xf32>
    %343 = vector.shape_cast %342 : vector<16x8xf32> to vector<2x8x8xf32>
    %344 = vector.extract_strided_slice %236 {offsets = [0, 24], sizes = [16, 8], strides = [1, 1]} : vector<16x32xf32> to vector<16x8xf32>
    %345 = vector.shape_cast %344 : vector<16x8xf32> to vector<2x8x8xf32>
    %346 = vector.extract_strided_slice %238 {offsets = [0, 24], sizes = [16, 8], strides = [1, 1]} : vector<16x32xf32> to vector<16x8xf32>
    %347 = vector.shape_cast %346 : vector<16x8xf32> to vector<2x8x8xf32>
    %348 = arith.truncf %343 : vector<2x8x8xf32> to vector<2x8x8xbf16>
    %349 = arith.truncf %345 : vector<2x8x8xf32> to vector<2x8x8xbf16>
    "tpu.trace_start"() <{level = 10 : i32, message = "bqd,bkd->bqk"}> : () -> ()
    %cst_96 = arith.constant dense<0.000000e+00> : vector<2x8x8xf32>
    %350 = tpu.matmul %348, %349, %cst_96 {dimension_numbers = #tpu.dot_dimension_numbers<[2], [2], [1], [1], [0, 0, 0, 1, 1, 1], [0], [0]>} : vector<2x8x8xbf16>, vector<2x8x8xbf16>, vector<2x8x8xf32> -> vector<2x8x8xf32>
    "tpu.trace_stop"() : () -> ()
    %351 = vector.broadcast %4 : vector<2x1x8xf32> to vector<2x8x8xf32>
    %352 = arith.addf %350, %351 : vector<2x8x8xf32>
    %353 = vector.extract_strided_slice %2 {offsets = [3, 0, 0], sizes = [1, 8, 8], strides = [1, 1, 1]} : vector<4x8x8xf32> to vector<1x8x8xf32>
    %354 = vector.shape_cast %353 : vector<1x8x8xf32> to vector<8x8xf32>
    %355 = vector.shape_cast %354 : vector<8x8xf32> to vector<1x8x8xf32>
    %356 = vector.broadcast %355 : vector<1x8x8xf32> to vector<2x8x8xf32>
    %357 = arith.addf %352, %356 : vector<2x8x8xf32>
    %cst_97 = arith.constant dense<0xFF800000> : vector<2x8xf32>
    %358 = vector.multi_reduction <maximumf>, %357, %cst_97 [2] : vector<2x8x8xf32> to vector<2x8xf32>
    %359 = vector.shape_cast %358 : vector<2x8xf32> to vector<2x8x1xf32>
    %360 = vector.broadcast %359 : vector<2x8x1xf32> to vector<2x8x8xf32>
    %361 = arith.subf %357, %360 : vector<2x8x8xf32>
    %362 = math.exp %361 : vector<2x8x8xf32>
    %cst_98 = arith.constant dense<0.000000e+00> : vector<2x8xf32>
    %363 = vector.multi_reduction <add>, %362, %cst_98 [2] : vector<2x8x8xf32> to vector<2x8xf32>
    %364 = vector.shape_cast %363 : vector<2x8xf32> to vector<2x8x1xf32>
    %365 = tpu.reciprocal %364 {approx = true} : vector<2x8x1xf32> -> vector<2x8x1xf32>
    %366 = vector.broadcast %365 : vector<2x8x1xf32> to vector<2x8x8xf32>
    %367 = arith.mulf %362, %366 : vector<2x8x8xf32>
    %368 = arith.truncf %367 : vector<2x8x8xf32> to vector<2x8x8xbf16>
    %369 = arith.truncf %347 : vector<2x8x8xf32> to vector<2x8x8xbf16>
    "tpu.trace_start"() <{level = 10 : i32, message = "bqk,bkd->bqd"}> : () -> ()
    %cst_99 = arith.constant dense<0.000000e+00> : vector<2x8x8xf32>
    %370 = tpu.matmul %368, %369, %cst_99 {dimension_numbers = #tpu.dot_dimension_numbers<[2], [1], [1], [2], [0, 0, 0, 1, 1, 2], [0], [0]>} : vector<2x8x8xbf16>, vector<2x8x8xbf16>, vector<2x8x8xf32> -> vector<2x8x8xf32>
    "tpu.trace_stop"() : () -> ()
    %371 = vector.shape_cast %370 : vector<2x8x8xf32> to vector<16x8xf32>
    %372 = vector.extract_strided_slice %232 {offsets = [24, 0], sizes = [8, 32], strides = [1, 1]} : vector<32x32xbf16> to vector<8x32xbf16>
    %373 = arith.truncf %371 : vector<16x8xf32> to vector<16x8xbf16>
    %cst_100 = arith.constant dense<0.000000e+00> : vector<16x32xf32>
    %374 = tpu.matmul %373, %372, %cst_100 {dimension_numbers = #tpu.dot_dimension_numbers<[1], [0], [0], [1], [0, 0, 1, 1], [], []>} : vector<16x8xbf16>, vector<8x32xbf16>, vector<16x32xf32> -> vector<16x32xf32>
    %375 = arith.addf %341, %374 : vector<16x32xf32>
    %376 = arith.addf %211, %375 : vector<16x32xf32>
    %377 = vector.extract_strided_slice %13 {offsets = [1, 0], sizes = [1, 32], strides = [1, 1]} : vector<2x32xf32> to vector<1x32xf32>
    %378 = arith.mulf %376, %376 : vector<16x32xf32>
    %cst_101 = arith.constant dense<0.000000e+00> : vector<16xf32>
    %379 = vector.multi_reduction <add>, %378, %cst_101 [1] : vector<16x32xf32> to vector<16xf32>
    %380 = vector.shape_cast %379 : vector<16xf32> to vector<16x1xf32>
    %cst_102 = arith.constant 3.200000e+01 : f32
    %381 = vector.broadcast %cst_102 : f32 to vector<16x1xf32>
    %382 = arith.divf %380, %381 : vector<16x1xf32>
    %cst_103 = arith.constant 9.99999997E-7 : f32
    %383 = vector.broadcast %cst_103 : f32 to vector<16x1xf32>
    %384 = arith.addf %382, %383 : vector<16x1xf32>
    %385 = math.rsqrt %384 : vector<16x1xf32>
    %386 = vector.broadcast %385 : vector<16x1xf32> to vector<16x32xf32>
    %387 = arith.mulf %376, %386 : vector<16x32xf32>
    %388 = vector.broadcast %377 : vector<1x32xf32> to vector<16x32xf32>
    %389 = arith.mulf %387, %388 : vector<16x32xf32>
    %390 = vector.extract_strided_slice %11 {offsets = [1, 0, 0], sizes = [1, 32, 64], strides = [1, 1, 1]} : vector<2x32x64xbf16> to vector<1x32x64xbf16>
    %391 = vector.shape_cast %390 : vector<1x32x64xbf16> to vector<32x64xbf16>
    %392 = arith.truncf %389 : vector<16x32xf32> to vector<16x32xbf16>
    %cst_104 = arith.constant dense<0.000000e+00> : vector<16x64xf32>
    %393 = tpu.matmul %392, %391, %cst_104 {dimension_numbers = #tpu.dot_dimension_numbers<[1], [0], [0], [1], [0, 0, 1, 1], [], []>} : vector<16x32xbf16>, vector<32x64xbf16>, vector<16x64xf32> -> vector<16x64xf32>
    %cst_105 = arith.constant 0.000000e+00 : f32
    %394 = vector.broadcast %cst_105 : f32 to vector<16x64xf32>
    %395 = arith.maximumf %393, %394 : vector<16x64xf32>
    %396 = vector.extract_strided_slice %12 {offsets = [1, 0, 0], sizes = [1, 64, 32], strides = [1, 1, 1]} : vector<2x64x32xbf16> to vector<1x64x32xbf16>
    %397 = vector.shape_cast %396 : vector<1x64x32xbf16> to vector<64x32xbf16>
    %398 = arith.truncf %395 : vector<16x64xf32> to vector<16x64xbf16>
    %cst_106 = arith.constant dense<0.000000e+00> : vector<16x32xf32>
    %399 = tpu.matmul %398, %397, %cst_106 {dimension_numbers = #tpu.dot_dimension_numbers<[1], [0], [0], [1], [0, 0, 1, 1], [], []>} : vector<16x64xbf16>, vector<64x32xbf16>, vector<16x32xf32> -> vector<16x32xf32>
    %400 = arith.addf %376, %399 : vector<16x32xf32>
    %401 = arith.mulf %400, %400 : vector<16x32xf32>
    %cst_107 = arith.constant dense<0.000000e+00> : vector<16xf32>
    %402 = vector.multi_reduction <add>, %401, %cst_107 [1] : vector<16x32xf32> to vector<16xf32>
    %403 = vector.shape_cast %402 : vector<16xf32> to vector<16x1xf32>
    %cst_108 = arith.constant 3.200000e+01 : f32
    %404 = vector.broadcast %cst_108 : f32 to vector<16x1xf32>
    %405 = arith.divf %403, %404 : vector<16x1xf32>
    %cst_109 = arith.constant 9.99999997E-7 : f32
    %406 = vector.broadcast %cst_109 : f32 to vector<16x1xf32>
    %407 = arith.addf %405, %406 : vector<16x1xf32>
    %408 = math.rsqrt %407 : vector<16x1xf32>
    %409 = vector.broadcast %408 : vector<16x1xf32> to vector<16x32xf32>
    %410 = arith.mulf %400, %409 : vector<16x32xf32>
    %411 = vector.broadcast %14 : vector<1x32xf32> to vector<16x32xf32>
    %412 = arith.mulf %410, %411 : vector<16x32xf32>
    %c0_110 = arith.constant 0 : index
    %c0_111 = arith.constant 0 : index
    %c0_112 = arith.constant 0 : index
    %413 = vector.load %arg18[%c0_110, %c0_111, %c0_112] : memref<2x32x32xbf16, #tpu.memory_space<vmem>>, vector<2x32x32xbf16>
    %c0_113 = arith.constant 0 : index
    %c0_114 = arith.constant 0 : index
    %c0_115 = arith.constant 0 : index
    %414 = vector.load %arg19[%c0_113, %c0_114, %c0_115] : memref<2x32x32xbf16, #tpu.memory_space<vmem>>, vector<2x32x32xbf16>
    %c0_116 = arith.constant 0 : index
    %c0_117 = arith.constant 0 : index
    %c0_118 = arith.constant 0 : index
    %415 = vector.load %arg20[%c0_116, %c0_117, %c0_118] : memref<2x32x32xbf16, #tpu.memory_space<vmem>>, vector<2x32x32xbf16>
    %c0_119 = arith.constant 0 : index
    %c0_120 = arith.constant 0 : index
    %c0_121 = arith.constant 0 : index
    %416 = vector.load %arg21[%c0_119, %c0_120, %c0_121] : memref<2x32x32xbf16, #tpu.memory_space<vmem>>, vector<2x32x32xbf16>
    %c0_122 = arith.constant 0 : index
    %c0_123 = arith.constant 0 : index
    %c0_124 = arith.constant 0 : index
    %417 = vector.load %arg23[%c0_122, %c0_123, %c0_124] : memref<2x32x32xbf16, #tpu.memory_space<vmem>>, vector<2x32x32xbf16>
    %c0_125 = arith.constant 0 : index
    %c0_126 = arith.constant 0 : index
    %c0_127 = arith.constant 0 : index
    %418 = vector.load %arg24[%c0_125, %c0_126, %c0_127] : memref<2x32x32xbf16, #tpu.memory_space<vmem>>, vector<2x32x32xbf16>
    %c0_128 = arith.constant 0 : index
    %c0_129 = arith.constant 0 : index
    %c0_130 = arith.constant 0 : index
    %419 = vector.load %arg25[%c0_128, %c0_129, %c0_130] : memref<2x32x32xbf16, #tpu.memory_space<vmem>>, vector<2x32x32xbf16>
    %c0_131 = arith.constant 0 : index
    %c0_132 = arith.constant 0 : index
    %c0_133 = arith.constant 0 : index
    %420 = vector.load %arg26[%c0_131, %c0_132, %c0_133] : memref<2x32x32xbf16, #tpu.memory_space<vmem>>, vector<2x32x32xbf16>
    %c0_134 = arith.constant 0 : index
    %c0_135 = arith.constant 0 : index
    %421 = vector.load %arg22[%c0_134, %c0_135] : memref<2x32xf32, #tpu.memory_space<vmem>>, vector<2x32xf32>
    %c0_136 = arith.constant 0 : index
    %c0_137 = arith.constant 0 : index
    %422 = vector.load %arg27[%c0_136, %c0_137] : memref<2x32xf32, #tpu.memory_space<vmem>>, vector<2x32xf32>
    %c0_138 = arith.constant 0 : index
    %c0_139 = arith.constant 0 : index
    %c0_140 = arith.constant 0 : index
    %423 = vector.load %arg28[%c0_138, %c0_139, %c0_140] : memref<2x32x64xbf16, #tpu.memory_space<vmem>>, vector<2x32x64xbf16>
    %c0_141 = arith.constant 0 : index
    %c0_142 = arith.constant 0 : index
    %c0_143 = arith.constant 0 : index
    %424 = vector.load %arg29[%c0_141, %c0_142, %c0_143] : memref<2x64x32xbf16, #tpu.memory_space<vmem>>, vector<2x64x32xbf16>
    %c0_144 = arith.constant 0 : index
    %c0_145 = arith.constant 0 : index
    %425 = vector.load %arg30[%c0_144, %c0_145] : memref<2x32xf32, #tpu.memory_space<vmem>>, vector<2x32xf32>
    %c0_146 = arith.constant 0 : index
    %c0_147 = arith.constant 0 : index
    %426 = vector.load %arg31[%c0_146, %c0_147] : memref<1x32xf32, #tpu.memory_space<vmem>>, vector<1x32xf32>
    %c0_148 = arith.constant 0 : index
    %c0_149 = arith.constant 0 : index
    %427 = vector.load %arg1[%c0_148, %c0_149] : memref<16x1xi32, #tpu.memory_space<vmem>>, vector<16x1xi32>
    %428 = tpu.iota {dimensions = array<i32: 1>} : vector<16x64xi32>
    %429 = vector.broadcast %427 : vector<16x1xi32> to vector<16x64xi32>
    %430 = arith.cmpi eq, %429, %428 : vector<16x64xi32>
    %431 = arith.extui %430 : vector<16x64xi1> to vector<16x64xi32>
    %432 = arith.sitofp %431 : vector<16x64xi32> to vector<16x64xf32>
    %433 = arith.truncf %432 : vector<16x64xf32> to vector<16x64xbf16>
    %cst_150 = arith.constant dense<0.000000e+00> : vector<16x32xf32>
    %434 = tpu.matmul %433, %0, %cst_150 {dimension_numbers = #tpu.dot_dimension_numbers<[1], [0], [0], [1], [0, 0, 1, 1], [], []>} : vector<16x64xbf16>, vector<64x32xbf16>, vector<16x32xf32> -> vector<16x32xf32>
    %435 = vector.extract_strided_slice %421 {offsets = [0, 0], sizes = [1, 32], strides = [1, 1]} : vector<2x32xf32> to vector<1x32xf32>
    %436 = arith.mulf %434, %434 : vector<16x32xf32>
    %cst_151 = arith.constant dense<0.000000e+00> : vector<16xf32>
    %437 = vector.multi_reduction <add>, %436, %cst_151 [1] : vector<16x32xf32> to vector<16xf32>
    %438 = vector.shape_cast %437 : vector<16xf32> to vector<16x1xf32>
    %cst_152 = arith.constant 3.200000e+01 : f32
    %439 = vector.broadcast %cst_152 : f32 to vector<16x1xf32>
    %440 = arith.divf %438, %439 : vector<16x1xf32>
    %cst_153 = arith.constant 9.99999997E-7 : f32
    %441 = vector.broadcast %cst_153 : f32 to vector<16x1xf32>
    %442 = arith.addf %440, %441 : vector<16x1xf32>
    %443 = math.rsqrt %442 : vector<16x1xf32>
    %444 = vector.broadcast %443 : vector<16x1xf32> to vector<16x32xf32>
    %445 = arith.mulf %434, %444 : vector<16x32xf32>
    %446 = vector.broadcast %435 : vector<1x32xf32> to vector<16x32xf32>
    %447 = arith.mulf %445, %446 : vector<16x32xf32>
    %448 = vector.extract_strided_slice %413 {offsets = [0, 0, 0], sizes = [1, 32, 32], strides = [1, 1, 1]} : vector<2x32x32xbf16> to vector<1x32x32xbf16>
    %449 = vector.shape_cast %448 : vector<1x32x32xbf16> to vector<32x32xbf16>
    %450 = vector.extract_strided_slice %414 {offsets = [0, 0, 0], sizes = [1, 32, 32], strides = [1, 1, 1]} : vector<2x32x32xbf16> to vector<1x32x32xbf16>
    %451 = vector.shape_cast %450 : vector<1x32x32xbf16> to vector<32x32xbf16>
    %452 = vector.extract_strided_slice %415 {offsets = [0, 0, 0], sizes = [1, 32, 32], strides = [1, 1, 1]} : vector<2x32x32xbf16> to vector<1x32x32xbf16>
    %453 = vector.shape_cast %452 : vector<1x32x32xbf16> to vector<32x32xbf16>
    %454 = vector.extract_strided_slice %416 {offsets = [0, 0, 0], sizes = [1, 32, 32], strides = [1, 1, 1]} : vector<2x32x32xbf16> to vector<1x32x32xbf16>
    %455 = vector.shape_cast %454 : vector<1x32x32xbf16> to vector<32x32xbf16>
    %456 = arith.truncf %447 : vector<16x32xf32> to vector<16x32xbf16>
    %cst_154 = arith.constant dense<0.000000e+00> : vector<16x32xf32>
    %457 = tpu.matmul %456, %449, %cst_154 {dimension_numbers = #tpu.dot_dimension_numbers<[1], [0], [0], [1], [0, 0, 1, 1], [], []>} : vector<16x32xbf16>, vector<32x32xbf16>, vector<16x32xf32> -> vector<16x32xf32>
    %458 = arith.truncf %447 : vector<16x32xf32> to vector<16x32xbf16>
    %cst_155 = arith.constant dense<0.000000e+00> : vector<16x32xf32>
    %459 = tpu.matmul %458, %451, %cst_155 {dimension_numbers = #tpu.dot_dimension_numbers<[1], [0], [0], [1], [0, 0, 1, 1], [], []>} : vector<16x32xbf16>, vector<32x32xbf16>, vector<16x32xf32> -> vector<16x32xf32>
    %460 = arith.truncf %447 : vector<16x32xf32> to vector<16x32xbf16>
    %cst_156 = arith.constant dense<0.000000e+00> : vector<16x32xf32>
    %461 = tpu.matmul %460, %453, %cst_156 {dimension_numbers = #tpu.dot_dimension_numbers<[1], [0], [0], [1], [0, 0, 1, 1], [], []>} : vector<16x32xbf16>, vector<32x32xbf16>, vector<16x32xf32> -> vector<16x32xf32>
    %cst_157 = arith.constant 0.000000e+00 : f32
    %462 = vector.broadcast %cst_157 : f32 to vector<16x32xf32>
    %463 = vector.extract_strided_slice %457 {offsets = [0, 0], sizes = [16, 8], strides = [1, 1]} : vector<16x32xf32> to vector<16x8xf32>
    %464 = vector.shape_cast %463 : vector<16x8xf32> to vector<2x8x8xf32>
    %465 = vector.extract_strided_slice %459 {offsets = [0, 0], sizes = [16, 8], strides = [1, 1]} : vector<16x32xf32> to vector<16x8xf32>
    %466 = vector.shape_cast %465 : vector<16x8xf32> to vector<2x8x8xf32>
    %467 = vector.extract_strided_slice %461 {offsets = [0, 0], sizes = [16, 8], strides = [1, 1]} : vector<16x32xf32> to vector<16x8xf32>
    %468 = vector.shape_cast %467 : vector<16x8xf32> to vector<2x8x8xf32>
    %469 = arith.truncf %464 : vector<2x8x8xf32> to vector<2x8x8xbf16>
    %470 = arith.truncf %466 : vector<2x8x8xf32> to vector<2x8x8xbf16>
    "tpu.trace_start"() <{level = 10 : i32, message = "bqd,bkd->bqk"}> : () -> ()
    %cst_158 = arith.constant dense<0.000000e+00> : vector<2x8x8xf32>
    %471 = tpu.matmul %469, %470, %cst_158 {dimension_numbers = #tpu.dot_dimension_numbers<[2], [2], [1], [1], [0, 0, 0, 1, 1, 1], [0], [0]>} : vector<2x8x8xbf16>, vector<2x8x8xbf16>, vector<2x8x8xf32> -> vector<2x8x8xf32>
    "tpu.trace_stop"() : () -> ()
    %472 = arith.addf %471, %5 : vector<2x8x8xf32>
    %473 = vector.extract_strided_slice %3 {offsets = [0, 0, 0], sizes = [1, 8, 8], strides = [1, 1, 1]} : vector<4x8x8xf32> to vector<1x8x8xf32>
    %474 = vector.shape_cast %473 : vector<1x8x8xf32> to vector<8x8xf32>
    %475 = vector.shape_cast %474 : vector<8x8xf32> to vector<1x8x8xf32>
    %476 = vector.broadcast %475 : vector<1x8x8xf32> to vector<2x8x8xf32>
    %477 = arith.addf %472, %476 : vector<2x8x8xf32>
    %cst_159 = arith.constant dense<0xFF800000> : vector<2x8xf32>
    %478 = vector.multi_reduction <maximumf>, %477, %cst_159 [2] : vector<2x8x8xf32> to vector<2x8xf32>
    %479 = vector.shape_cast %478 : vector<2x8xf32> to vector<2x8x1xf32>
    %480 = vector.broadcast %479 : vector<2x8x1xf32> to vector<2x8x8xf32>
    %481 = arith.subf %477, %480 : vector<2x8x8xf32>
    %482 = math.exp %481 : vector<2x8x8xf32>
    %cst_160 = arith.constant dense<0.000000e+00> : vector<2x8xf32>
    %483 = vector.multi_reduction <add>, %482, %cst_160 [2] : vector<2x8x8xf32> to vector<2x8xf32>
    %484 = vector.shape_cast %483 : vector<2x8xf32> to vector<2x8x1xf32>
    %485 = tpu.reciprocal %484 {approx = true} : vector<2x8x1xf32> -> vector<2x8x1xf32>
    %486 = vector.broadcast %485 : vector<2x8x1xf32> to vector<2x8x8xf32>
    %487 = arith.mulf %482, %486 : vector<2x8x8xf32>
    %488 = arith.truncf %487 : vector<2x8x8xf32> to vector<2x8x8xbf16>
    %489 = arith.truncf %468 : vector<2x8x8xf32> to vector<2x8x8xbf16>
    "tpu.trace_start"() <{level = 10 : i32, message = "bqk,bkd->bqd"}> : () -> ()
    %cst_161 = arith.constant dense<0.000000e+00> : vector<2x8x8xf32>
    %490 = tpu.matmul %488, %489, %cst_161 {dimension_numbers = #tpu.dot_dimension_numbers<[2], [1], [1], [2], [0, 0, 0, 1, 1, 2], [0], [0]>} : vector<2x8x8xbf16>, vector<2x8x8xbf16>, vector<2x8x8xf32> -> vector<2x8x8xf32>
    "tpu.trace_stop"() : () -> ()
    %491 = vector.shape_cast %490 : vector<2x8x8xf32> to vector<16x8xf32>
    %492 = vector.extract_strided_slice %455 {offsets = [0, 0], sizes = [8, 32], strides = [1, 1]} : vector<32x32xbf16> to vector<8x32xbf16>
    %493 = arith.truncf %491 : vector<16x8xf32> to vector<16x8xbf16>
    %cst_162 = arith.constant dense<0.000000e+00> : vector<16x32xf32>
    %494 = tpu.matmul %493, %492, %cst_162 {dimension_numbers = #tpu.dot_dimension_numbers<[1], [0], [0], [1], [0, 0, 1, 1], [], []>} : vector<16x8xbf16>, vector<8x32xbf16>, vector<16x32xf32> -> vector<16x32xf32>
    %495 = arith.addf %462, %494 : vector<16x32xf32>
    %496 = vector.extract_strided_slice %457 {offsets = [0, 8], sizes = [16, 8], strides = [1, 1]} : vector<16x32xf32> to vector<16x8xf32>
    %497 = vector.shape_cast %496 : vector<16x8xf32> to vector<2x8x8xf32>
    %498 = vector.extract_strided_slice %459 {offsets = [0, 8], sizes = [16, 8], strides = [1, 1]} : vector<16x32xf32> to vector<16x8xf32>
    %499 = vector.shape_cast %498 : vector<16x8xf32> to vector<2x8x8xf32>
    %500 = vector.extract_strided_slice %461 {offsets = [0, 8], sizes = [16, 8], strides = [1, 1]} : vector<16x32xf32> to vector<16x8xf32>
    %501 = vector.shape_cast %500 : vector<16x8xf32> to vector<2x8x8xf32>
    %502 = arith.truncf %497 : vector<2x8x8xf32> to vector<2x8x8xbf16>
    %503 = arith.truncf %499 : vector<2x8x8xf32> to vector<2x8x8xbf16>
    "tpu.trace_start"() <{level = 10 : i32, message = "bqd,bkd->bqk"}> : () -> ()
    %cst_163 = arith.constant dense<0.000000e+00> : vector<2x8x8xf32>
    %504 = tpu.matmul %502, %503, %cst_163 {dimension_numbers = #tpu.dot_dimension_numbers<[2], [2], [1], [1], [0, 0, 0, 1, 1, 1], [0], [0]>} : vector<2x8x8xbf16>, vector<2x8x8xbf16>, vector<2x8x8xf32> -> vector<2x8x8xf32>
    "tpu.trace_stop"() : () -> ()
    %505 = arith.addf %504, %5 : vector<2x8x8xf32>
    %506 = vector.extract_strided_slice %3 {offsets = [1, 0, 0], sizes = [1, 8, 8], strides = [1, 1, 1]} : vector<4x8x8xf32> to vector<1x8x8xf32>
    %507 = vector.shape_cast %506 : vector<1x8x8xf32> to vector<8x8xf32>
    %508 = vector.shape_cast %507 : vector<8x8xf32> to vector<1x8x8xf32>
    %509 = vector.broadcast %508 : vector<1x8x8xf32> to vector<2x8x8xf32>
    %510 = arith.addf %505, %509 : vector<2x8x8xf32>
    %cst_164 = arith.constant dense<0xFF800000> : vector<2x8xf32>
    %511 = vector.multi_reduction <maximumf>, %510, %cst_164 [2] : vector<2x8x8xf32> to vector<2x8xf32>
    %512 = vector.shape_cast %511 : vector<2x8xf32> to vector<2x8x1xf32>
    %513 = vector.broadcast %512 : vector<2x8x1xf32> to vector<2x8x8xf32>
    %514 = arith.subf %510, %513 : vector<2x8x8xf32>
    %515 = math.exp %514 : vector<2x8x8xf32>
    %cst_165 = arith.constant dense<0.000000e+00> : vector<2x8xf32>
    %516 = vector.multi_reduction <add>, %515, %cst_165 [2] : vector<2x8x8xf32> to vector<2x8xf32>
    %517 = vector.shape_cast %516 : vector<2x8xf32> to vector<2x8x1xf32>
    %518 = tpu.reciprocal %517 {approx = true} : vector<2x8x1xf32> -> vector<2x8x1xf32>
    %519 = vector.broadcast %518 : vector<2x8x1xf32> to vector<2x8x8xf32>
    %520 = arith.mulf %515, %519 : vector<2x8x8xf32>
    %521 = arith.truncf %520 : vector<2x8x8xf32> to vector<2x8x8xbf16>
    %522 = arith.truncf %501 : vector<2x8x8xf32> to vector<2x8x8xbf16>
    "tpu.trace_start"() <{level = 10 : i32, message = "bqk,bkd->bqd"}> : () -> ()
    %cst_166 = arith.constant dense<0.000000e+00> : vector<2x8x8xf32>
    %523 = tpu.matmul %521, %522, %cst_166 {dimension_numbers = #tpu.dot_dimension_numbers<[2], [1], [1], [2], [0, 0, 0, 1, 1, 2], [0], [0]>} : vector<2x8x8xbf16>, vector<2x8x8xbf16>, vector<2x8x8xf32> -> vector<2x8x8xf32>
    "tpu.trace_stop"() : () -> ()
    %524 = vector.shape_cast %523 : vector<2x8x8xf32> to vector<16x8xf32>
    %525 = vector.extract_strided_slice %455 {offsets = [8, 0], sizes = [8, 32], strides = [1, 1]} : vector<32x32xbf16> to vector<8x32xbf16>
    %526 = arith.truncf %524 : vector<16x8xf32> to vector<16x8xbf16>
    %cst_167 = arith.constant dense<0.000000e+00> : vector<16x32xf32>
    %527 = tpu.matmul %526, %525, %cst_167 {dimension_numbers = #tpu.dot_dimension_numbers<[1], [0], [0], [1], [0, 0, 1, 1], [], []>} : vector<16x8xbf16>, vector<8x32xbf16>, vector<16x32xf32> -> vector<16x32xf32>
    %528 = arith.addf %495, %527 : vector<16x32xf32>
    %529 = vector.extract_strided_slice %457 {offsets = [0, 16], sizes = [16, 8], strides = [1, 1]} : vector<16x32xf32> to vector<16x8xf32>
    %530 = vector.shape_cast %529 : vector<16x8xf32> to vector<2x8x8xf32>
    %531 = vector.extract_strided_slice %459 {offsets = [0, 16], sizes = [16, 8], strides = [1, 1]} : vector<16x32xf32> to vector<16x8xf32>
    %532 = vector.shape_cast %531 : vector<16x8xf32> to vector<2x8x8xf32>
    %533 = vector.extract_strided_slice %461 {offsets = [0, 16], sizes = [16, 8], strides = [1, 1]} : vector<16x32xf32> to vector<16x8xf32>
    %534 = vector.shape_cast %533 : vector<16x8xf32> to vector<2x8x8xf32>
    %535 = arith.truncf %530 : vector<2x8x8xf32> to vector<2x8x8xbf16>
    %536 = arith.truncf %532 : vector<2x8x8xf32> to vector<2x8x8xbf16>
    "tpu.trace_start"() <{level = 10 : i32, message = "bqd,bkd->bqk"}> : () -> ()
    %cst_168 = arith.constant dense<0.000000e+00> : vector<2x8x8xf32>
    %537 = tpu.matmul %535, %536, %cst_168 {dimension_numbers = #tpu.dot_dimension_numbers<[2], [2], [1], [1], [0, 0, 0, 1, 1, 1], [0], [0]>} : vector<2x8x8xbf16>, vector<2x8x8xbf16>, vector<2x8x8xf32> -> vector<2x8x8xf32>
    "tpu.trace_stop"() : () -> ()
    %538 = arith.addf %537, %5 : vector<2x8x8xf32>
    %539 = vector.extract_strided_slice %3 {offsets = [2, 0, 0], sizes = [1, 8, 8], strides = [1, 1, 1]} : vector<4x8x8xf32> to vector<1x8x8xf32>
    %540 = vector.shape_cast %539 : vector<1x8x8xf32> to vector<8x8xf32>
    %541 = vector.shape_cast %540 : vector<8x8xf32> to vector<1x8x8xf32>
    %542 = vector.broadcast %541 : vector<1x8x8xf32> to vector<2x8x8xf32>
    %543 = arith.addf %538, %542 : vector<2x8x8xf32>
    %cst_169 = arith.constant dense<0xFF800000> : vector<2x8xf32>
    %544 = vector.multi_reduction <maximumf>, %543, %cst_169 [2] : vector<2x8x8xf32> to vector<2x8xf32>
    %545 = vector.shape_cast %544 : vector<2x8xf32> to vector<2x8x1xf32>
    %546 = vector.broadcast %545 : vector<2x8x1xf32> to vector<2x8x8xf32>
    %547 = arith.subf %543, %546 : vector<2x8x8xf32>
    %548 = math.exp %547 : vector<2x8x8xf32>
    %cst_170 = arith.constant dense<0.000000e+00> : vector<2x8xf32>
    %549 = vector.multi_reduction <add>, %548, %cst_170 [2] : vector<2x8x8xf32> to vector<2x8xf32>
    %550 = vector.shape_cast %549 : vector<2x8xf32> to vector<2x8x1xf32>
    %551 = tpu.reciprocal %550 {approx = true} : vector<2x8x1xf32> -> vector<2x8x1xf32>
    %552 = vector.broadcast %551 : vector<2x8x1xf32> to vector<2x8x8xf32>
    %553 = arith.mulf %548, %552 : vector<2x8x8xf32>
    %554 = arith.truncf %553 : vector<2x8x8xf32> to vector<2x8x8xbf16>
    %555 = arith.truncf %534 : vector<2x8x8xf32> to vector<2x8x8xbf16>
    "tpu.trace_start"() <{level = 10 : i32, message = "bqk,bkd->bqd"}> : () -> ()
    %cst_171 = arith.constant dense<0.000000e+00> : vector<2x8x8xf32>
    %556 = tpu.matmul %554, %555, %cst_171 {dimension_numbers = #tpu.dot_dimension_numbers<[2], [1], [1], [2], [0, 0, 0, 1, 1, 2], [0], [0]>} : vector<2x8x8xbf16>, vector<2x8x8xbf16>, vector<2x8x8xf32> -> vector<2x8x8xf32>
    "tpu.trace_stop"() : () -> ()
    %557 = vector.shape_cast %556 : vector<2x8x8xf32> to vector<16x8xf32>
    %558 = vector.extract_strided_slice %455 {offsets = [16, 0], sizes = [8, 32], strides = [1, 1]} : vector<32x32xbf16> to vector<8x32xbf16>
    %559 = arith.truncf %557 : vector<16x8xf32> to vector<16x8xbf16>
    %cst_172 = arith.constant dense<0.000000e+00> : vector<16x32xf32>
    %560 = tpu.matmul %559, %558, %cst_172 {dimension_numbers = #tpu.dot_dimension_numbers<[1], [0], [0], [1], [0, 0, 1, 1], [], []>} : vector<16x8xbf16>, vector<8x32xbf16>, vector<16x32xf32> -> vector<16x32xf32>
    %561 = arith.addf %528, %560 : vector<16x32xf32>
    %562 = vector.extract_strided_slice %457 {offsets = [0, 24], sizes = [16, 8], strides = [1, 1]} : vector<16x32xf32> to vector<16x8xf32>
    %563 = vector.shape_cast %562 : vector<16x8xf32> to vector<2x8x8xf32>
    %564 = vector.extract_strided_slice %459 {offsets = [0, 24], sizes = [16, 8], strides = [1, 1]} : vector<16x32xf32> to vector<16x8xf32>
    %565 = vector.shape_cast %564 : vector<16x8xf32> to vector<2x8x8xf32>
    %566 = vector.extract_strided_slice %461 {offsets = [0, 24], sizes = [16, 8], strides = [1, 1]} : vector<16x32xf32> to vector<16x8xf32>
    %567 = vector.shape_cast %566 : vector<16x8xf32> to vector<2x8x8xf32>
    %568 = arith.truncf %563 : vector<2x8x8xf32> to vector<2x8x8xbf16>
    %569 = arith.truncf %565 : vector<2x8x8xf32> to vector<2x8x8xbf16>
    "tpu.trace_start"() <{level = 10 : i32, message = "bqd,bkd->bqk"}> : () -> ()
    %cst_173 = arith.constant dense<0.000000e+00> : vector<2x8x8xf32>
    %570 = tpu.matmul %568, %569, %cst_173 {dimension_numbers = #tpu.dot_dimension_numbers<[2], [2], [1], [1], [0, 0, 0, 1, 1, 1], [0], [0]>} : vector<2x8x8xbf16>, vector<2x8x8xbf16>, vector<2x8x8xf32> -> vector<2x8x8xf32>
    "tpu.trace_stop"() : () -> ()
    %571 = arith.addf %570, %5 : vector<2x8x8xf32>
    %572 = vector.extract_strided_slice %3 {offsets = [3, 0, 0], sizes = [1, 8, 8], strides = [1, 1, 1]} : vector<4x8x8xf32> to vector<1x8x8xf32>
    %573 = vector.shape_cast %572 : vector<1x8x8xf32> to vector<8x8xf32>
    %574 = vector.shape_cast %573 : vector<8x8xf32> to vector<1x8x8xf32>
    %575 = vector.broadcast %574 : vector<1x8x8xf32> to vector<2x8x8xf32>
    %576 = arith.addf %571, %575 : vector<2x8x8xf32>
    %cst_174 = arith.constant dense<0xFF800000> : vector<2x8xf32>
    %577 = vector.multi_reduction <maximumf>, %576, %cst_174 [2] : vector<2x8x8xf32> to vector<2x8xf32>
    %578 = vector.shape_cast %577 : vector<2x8xf32> to vector<2x8x1xf32>
    %579 = vector.broadcast %578 : vector<2x8x1xf32> to vector<2x8x8xf32>
    %580 = arith.subf %576, %579 : vector<2x8x8xf32>
    %581 = math.exp %580 : vector<2x8x8xf32>
    %cst_175 = arith.constant dense<0.000000e+00> : vector<2x8xf32>
    %582 = vector.multi_reduction <add>, %581, %cst_175 [2] : vector<2x8x8xf32> to vector<2x8xf32>
    %583 = vector.shape_cast %582 : vector<2x8xf32> to vector<2x8x1xf32>
    %584 = tpu.reciprocal %583 {approx = true} : vector<2x8x1xf32> -> vector<2x8x1xf32>
    %585 = vector.broadcast %584 : vector<2x8x1xf32> to vector<2x8x8xf32>
    %586 = arith.mulf %581, %585 : vector<2x8x8xf32>
    %587 = arith.truncf %586 : vector<2x8x8xf32> to vector<2x8x8xbf16>
    %588 = arith.truncf %567 : vector<2x8x8xf32> to vector<2x8x8xbf16>
    "tpu.trace_start"() <{level = 10 : i32, message = "bqk,bkd->bqd"}> : () -> ()
    %cst_176 = arith.constant dense<0.000000e+00> : vector<2x8x8xf32>
    %589 = tpu.matmul %587, %588, %cst_176 {dimension_numbers = #tpu.dot_dimension_numbers<[2], [1], [1], [2], [0, 0, 0, 1, 1, 2], [0], [0]>} : vector<2x8x8xbf16>, vector<2x8x8xbf16>, vector<2x8x8xf32> -> vector<2x8x8xf32>
    "tpu.trace_stop"() : () -> ()
    %590 = vector.shape_cast %589 : vector<2x8x8xf32> to vector<16x8xf32>
    %591 = vector.extract_strided_slice %455 {offsets = [24, 0], sizes = [8, 32], strides = [1, 1]} : vector<32x32xbf16> to vector<8x32xbf16>
    %592 = arith.truncf %590 : vector<16x8xf32> to vector<16x8xbf16>
    %cst_177 = arith.constant dense<0.000000e+00> : vector<16x32xf32>
    %593 = tpu.matmul %592, %591, %cst_177 {dimension_numbers = #tpu.dot_dimension_numbers<[1], [0], [0], [1], [0, 0, 1, 1], [], []>} : vector<16x8xbf16>, vector<8x32xbf16>, vector<16x32xf32> -> vector<16x32xf32>
    %594 = arith.addf %561, %593 : vector<16x32xf32>
    %595 = arith.addf %434, %594 : vector<16x32xf32>
    %596 = vector.extract_strided_slice %422 {offsets = [0, 0], sizes = [1, 32], strides = [1, 1]} : vector<2x32xf32> to vector<1x32xf32>
    %597 = arith.mulf %595, %595 : vector<16x32xf32>
    %cst_178 = arith.constant dense<0.000000e+00> : vector<16xf32>
    %598 = vector.multi_reduction <add>, %597, %cst_178 [1] : vector<16x32xf32> to vector<16xf32>
    %599 = vector.shape_cast %598 : vector<16xf32> to vector<16x1xf32>
    %cst_179 = arith.constant 3.200000e+01 : f32
    %600 = vector.broadcast %cst_179 : f32 to vector<16x1xf32>
    %601 = arith.divf %599, %600 : vector<16x1xf32>
    %cst_180 = arith.constant 9.99999997E-7 : f32
    %602 = vector.broadcast %cst_180 : f32 to vector<16x1xf32>
    %603 = arith.addf %601, %602 : vector<16x1xf32>
    %604 = math.rsqrt %603 : vector<16x1xf32>
    %605 = vector.broadcast %604 : vector<16x1xf32> to vector<16x32xf32>
    %606 = arith.mulf %595, %605 : vector<16x32xf32>
    %607 = vector.broadcast %596 : vector<1x32xf32> to vector<16x32xf32>
    %608 = arith.mulf %606, %607 : vector<16x32xf32>
    %609 = vector.extract_strided_slice %417 {offsets = [0, 0, 0], sizes = [1, 32, 32], strides = [1, 1, 1]} : vector<2x32x32xbf16> to vector<1x32x32xbf16>
    %610 = vector.shape_cast %609 : vector<1x32x32xbf16> to vector<32x32xbf16>
    %611 = vector.extract_strided_slice %418 {offsets = [0, 0, 0], sizes = [1, 32, 32], strides = [1, 1, 1]} : vector<2x32x32xbf16> to vector<1x32x32xbf16>
    %612 = vector.shape_cast %611 : vector<1x32x32xbf16> to vector<32x32xbf16>
    %613 = vector.extract_strided_slice %419 {offsets = [0, 0, 0], sizes = [1, 32, 32], strides = [1, 1, 1]} : vector<2x32x32xbf16> to vector<1x32x32xbf16>
    %614 = vector.shape_cast %613 : vector<1x32x32xbf16> to vector<32x32xbf16>
    %615 = vector.extract_strided_slice %420 {offsets = [0, 0, 0], sizes = [1, 32, 32], strides = [1, 1, 1]} : vector<2x32x32xbf16> to vector<1x32x32xbf16>
    %616 = vector.shape_cast %615 : vector<1x32x32xbf16> to vector<32x32xbf16>
    %617 = arith.truncf %608 : vector<16x32xf32> to vector<16x32xbf16>
    %cst_181 = arith.constant dense<0.000000e+00> : vector<16x32xf32>
    %618 = tpu.matmul %617, %610, %cst_181 {dimension_numbers = #tpu.dot_dimension_numbers<[1], [0], [0], [1], [0, 0, 1, 1], [], []>} : vector<16x32xbf16>, vector<32x32xbf16>, vector<16x32xf32> -> vector<16x32xf32>
    %619 = arith.truncf %412 : vector<16x32xf32> to vector<16x32xbf16>
    %cst_182 = arith.constant dense<0.000000e+00> : vector<16x32xf32>
    %620 = tpu.matmul %619, %612, %cst_182 {dimension_numbers = #tpu.dot_dimension_numbers<[1], [0], [0], [1], [0, 0, 1, 1], [], []>} : vector<16x32xbf16>, vector<32x32xbf16>, vector<16x32xf32> -> vector<16x32xf32>
    %621 = arith.truncf %412 : vector<16x32xf32> to vector<16x32xbf16>
    %cst_183 = arith.constant dense<0.000000e+00> : vector<16x32xf32>
    %622 = tpu.matmul %621, %614, %cst_183 {dimension_numbers = #tpu.dot_dimension_numbers<[1], [0], [0], [1], [0, 0, 1, 1], [], []>} : vector<16x32xbf16>, vector<32x32xbf16>, vector<16x32xf32> -> vector<16x32xf32>
    %cst_184 = arith.constant 0.000000e+00 : f32
    %623 = vector.broadcast %cst_184 : f32 to vector<16x32xf32>
    %624 = vector.extract_strided_slice %618 {offsets = [0, 0], sizes = [16, 8], strides = [1, 1]} : vector<16x32xf32> to vector<16x8xf32>
    %625 = vector.shape_cast %624 : vector<16x8xf32> to vector<2x8x8xf32>
    %626 = vector.extract_strided_slice %620 {offsets = [0, 0], sizes = [16, 8], strides = [1, 1]} : vector<16x32xf32> to vector<16x8xf32>
    %627 = vector.shape_cast %626 : vector<16x8xf32> to vector<2x8x8xf32>
    %628 = vector.extract_strided_slice %622 {offsets = [0, 0], sizes = [16, 8], strides = [1, 1]} : vector<16x32xf32> to vector<16x8xf32>
    %629 = vector.shape_cast %628 : vector<16x8xf32> to vector<2x8x8xf32>
    %630 = arith.truncf %625 : vector<2x8x8xf32> to vector<2x8x8xbf16>
    %631 = arith.truncf %627 : vector<2x8x8xf32> to vector<2x8x8xbf16>
    "tpu.trace_start"() <{level = 10 : i32, message = "bqd,bkd->bqk"}> : () -> ()
    %cst_185 = arith.constant dense<0.000000e+00> : vector<2x8x8xf32>
    %632 = tpu.matmul %630, %631, %cst_185 {dimension_numbers = #tpu.dot_dimension_numbers<[2], [2], [1], [1], [0, 0, 0, 1, 1, 1], [0], [0]>} : vector<2x8x8xbf16>, vector<2x8x8xbf16>, vector<2x8x8xf32> -> vector<2x8x8xf32>
    "tpu.trace_stop"() : () -> ()
    %633 = vector.broadcast %4 : vector<2x1x8xf32> to vector<2x8x8xf32>
    %634 = arith.addf %632, %633 : vector<2x8x8xf32>
    %cst_186 = arith.constant dense<0xFF800000> : vector<2x8xf32>
    %635 = vector.multi_reduction <maximumf>, %634, %cst_186 [2] : vector<2x8x8xf32> to vector<2x8xf32>
    %636 = vector.shape_cast %635 : vector<2x8xf32> to vector<2x8x1xf32>
    %637 = vector.broadcast %636 : vector<2x8x1xf32> to vector<2x8x8xf32>
    %638 = arith.subf %634, %637 : vector<2x8x8xf32>
    %639 = math.exp %638 : vector<2x8x8xf32>
    %cst_187 = arith.constant dense<0.000000e+00> : vector<2x8xf32>
    %640 = vector.multi_reduction <add>, %639, %cst_187 [2] : vector<2x8x8xf32> to vector<2x8xf32>
    %641 = vector.shape_cast %640 : vector<2x8xf32> to vector<2x8x1xf32>
    %642 = tpu.reciprocal %641 {approx = true} : vector<2x8x1xf32> -> vector<2x8x1xf32>
    %643 = vector.broadcast %642 : vector<2x8x1xf32> to vector<2x8x8xf32>
    %644 = arith.mulf %639, %643 : vector<2x8x8xf32>
    %645 = arith.truncf %644 : vector<2x8x8xf32> to vector<2x8x8xbf16>
    %646 = arith.truncf %629 : vector<2x8x8xf32> to vector<2x8x8xbf16>
    "tpu.trace_start"() <{level = 10 : i32, message = "bqk,bkd->bqd"}> : () -> ()
    %cst_188 = arith.constant dense<0.000000e+00> : vector<2x8x8xf32>
    %647 = tpu.matmul %645, %646, %cst_188 {dimension_numbers = #tpu.dot_dimension_numbers<[2], [1], [1], [2], [0, 0, 0, 1, 1, 2], [0], [0]>} : vector<2x8x8xbf16>, vector<2x8x8xbf16>, vector<2x8x8xf32> -> vector<2x8x8xf32>
    "tpu.trace_stop"() : () -> ()
    %648 = vector.shape_cast %647 : vector<2x8x8xf32> to vector<16x8xf32>
    %649 = vector.extract_strided_slice %616 {offsets = [0, 0], sizes = [8, 32], strides = [1, 1]} : vector<32x32xbf16> to vector<8x32xbf16>
    %650 = arith.truncf %648 : vector<16x8xf32> to vector<16x8xbf16>
    %cst_189 = arith.constant dense<0.000000e+00> : vector<16x32xf32>
    %651 = tpu.matmul %650, %649, %cst_189 {dimension_numbers = #tpu.dot_dimension_numbers<[1], [0], [0], [1], [0, 0, 1, 1], [], []>} : vector<16x8xbf16>, vector<8x32xbf16>, vector<16x32xf32> -> vector<16x32xf32>
    %652 = arith.addf %623, %651 : vector<16x32xf32>
    %653 = vector.extract_strided_slice %618 {offsets = [0, 8], sizes = [16, 8], strides = [1, 1]} : vector<16x32xf32> to vector<16x8xf32>
    %654 = vector.shape_cast %653 : vector<16x8xf32> to vector<2x8x8xf32>
    %655 = vector.extract_strided_slice %620 {offsets = [0, 8], sizes = [16, 8], strides = [1, 1]} : vector<16x32xf32> to vector<16x8xf32>
    %656 = vector.shape_cast %655 : vector<16x8xf32> to vector<2x8x8xf32>
    %657 = vector.extract_strided_slice %622 {offsets = [0, 8], sizes = [16, 8], strides = [1, 1]} : vector<16x32xf32> to vector<16x8xf32>
    %658 = vector.shape_cast %657 : vector<16x8xf32> to vector<2x8x8xf32>
    %659 = arith.truncf %654 : vector<2x8x8xf32> to vector<2x8x8xbf16>
    %660 = arith.truncf %656 : vector<2x8x8xf32> to vector<2x8x8xbf16>
    "tpu.trace_start"() <{level = 10 : i32, message = "bqd,bkd->bqk"}> : () -> ()
    %cst_190 = arith.constant dense<0.000000e+00> : vector<2x8x8xf32>
    %661 = tpu.matmul %659, %660, %cst_190 {dimension_numbers = #tpu.dot_dimension_numbers<[2], [2], [1], [1], [0, 0, 0, 1, 1, 1], [0], [0]>} : vector<2x8x8xbf16>, vector<2x8x8xbf16>, vector<2x8x8xf32> -> vector<2x8x8xf32>
    "tpu.trace_stop"() : () -> ()
    %662 = vector.broadcast %4 : vector<2x1x8xf32> to vector<2x8x8xf32>
    %663 = arith.addf %661, %662 : vector<2x8x8xf32>
    %cst_191 = arith.constant dense<0xFF800000> : vector<2x8xf32>
    %664 = vector.multi_reduction <maximumf>, %663, %cst_191 [2] : vector<2x8x8xf32> to vector<2x8xf32>
    %665 = vector.shape_cast %664 : vector<2x8xf32> to vector<2x8x1xf32>
    %666 = vector.broadcast %665 : vector<2x8x1xf32> to vector<2x8x8xf32>
    %667 = arith.subf %663, %666 : vector<2x8x8xf32>
    %668 = math.exp %667 : vector<2x8x8xf32>
    %cst_192 = arith.constant dense<0.000000e+00> : vector<2x8xf32>
    %669 = vector.multi_reduction <add>, %668, %cst_192 [2] : vector<2x8x8xf32> to vector<2x8xf32>
    %670 = vector.shape_cast %669 : vector<2x8xf32> to vector<2x8x1xf32>
    %671 = tpu.reciprocal %670 {approx = true} : vector<2x8x1xf32> -> vector<2x8x1xf32>
    %672 = vector.broadcast %671 : vector<2x8x1xf32> to vector<2x8x8xf32>
    %673 = arith.mulf %668, %672 : vector<2x8x8xf32>
    %674 = arith.truncf %673 : vector<2x8x8xf32> to vector<2x8x8xbf16>
    %675 = arith.truncf %658 : vector<2x8x8xf32> to vector<2x8x8xbf16>
    "tpu.trace_start"() <{level = 10 : i32, message = "bqk,bkd->bqd"}> : () -> ()
    %cst_193 = arith.constant dense<0.000000e+00> : vector<2x8x8xf32>
    %676 = tpu.matmul %674, %675, %cst_193 {dimension_numbers = #tpu.dot_dimension_numbers<[2], [1], [1], [2], [0, 0, 0, 1, 1, 2], [0], [0]>} : vector<2x8x8xbf16>, vector<2x8x8xbf16>, vector<2x8x8xf32> -> vector<2x8x8xf32>
    "tpu.trace_stop"() : () -> ()
    %677 = vector.shape_cast %676 : vector<2x8x8xf32> to vector<16x8xf32>
    %678 = vector.extract_strided_slice %616 {offsets = [8, 0], sizes = [8, 32], strides = [1, 1]} : vector<32x32xbf16> to vector<8x32xbf16>
    %679 = arith.truncf %677 : vector<16x8xf32> to vector<16x8xbf16>
    %cst_194 = arith.constant dense<0.000000e+00> : vector<16x32xf32>
    %680 = tpu.matmul %679, %678, %cst_194 {dimension_numbers = #tpu.dot_dimension_numbers<[1], [0], [0], [1], [0, 0, 1, 1], [], []>} : vector<16x8xbf16>, vector<8x32xbf16>, vector<16x32xf32> -> vector<16x32xf32>
    %681 = arith.addf %652, %680 : vector<16x32xf32>
    %682 = vector.extract_strided_slice %618 {offsets = [0, 16], sizes = [16, 8], strides = [1, 1]} : vector<16x32xf32> to vector<16x8xf32>
    %683 = vector.shape_cast %682 : vector<16x8xf32> to vector<2x8x8xf32>
    %684 = vector.extract_strided_slice %620 {offsets = [0, 16], sizes = [16, 8], strides = [1, 1]} : vector<16x32xf32> to vector<16x8xf32>
    %685 = vector.shape_cast %684 : vector<16x8xf32> to vector<2x8x8xf32>
    %686 = vector.extract_strided_slice %622 {offsets = [0, 16], sizes = [16, 8], strides = [1, 1]} : vector<16x32xf32> to vector<16x8xf32>
    %687 = vector.shape_cast %686 : vector<16x8xf32> to vector<2x8x8xf32>
    %688 = arith.truncf %683 : vector<2x8x8xf32> to vector<2x8x8xbf16>
    %689 = arith.truncf %685 : vector<2x8x8xf32> to vector<2x8x8xbf16>
    "tpu.trace_start"() <{level = 10 : i32, message = "bqd,bkd->bqk"}> : () -> ()
    %cst_195 = arith.constant dense<0.000000e+00> : vector<2x8x8xf32>
    %690 = tpu.matmul %688, %689, %cst_195 {dimension_numbers = #tpu.dot_dimension_numbers<[2], [2], [1], [1], [0, 0, 0, 1, 1, 1], [0], [0]>} : vector<2x8x8xbf16>, vector<2x8x8xbf16>, vector<2x8x8xf32> -> vector<2x8x8xf32>
    "tpu.trace_stop"() : () -> ()
    %691 = vector.broadcast %4 : vector<2x1x8xf32> to vector<2x8x8xf32>
    %692 = arith.addf %690, %691 : vector<2x8x8xf32>
    %cst_196 = arith.constant dense<0xFF800000> : vector<2x8xf32>
    %693 = vector.multi_reduction <maximumf>, %692, %cst_196 [2] : vector<2x8x8xf32> to vector<2x8xf32>
    %694 = vector.shape_cast %693 : vector<2x8xf32> to vector<2x8x1xf32>
    %695 = vector.broadcast %694 : vector<2x8x1xf32> to vector<2x8x8xf32>
    %696 = arith.subf %692, %695 : vector<2x8x8xf32>
    %697 = math.exp %696 : vector<2x8x8xf32>
    %cst_197 = arith.constant dense<0.000000e+00> : vector<2x8xf32>
    %698 = vector.multi_reduction <add>, %697, %cst_197 [2] : vector<2x8x8xf32> to vector<2x8xf32>
    %699 = vector.shape_cast %698 : vector<2x8xf32> to vector<2x8x1xf32>
    %700 = tpu.reciprocal %699 {approx = true} : vector<2x8x1xf32> -> vector<2x8x1xf32>
    %701 = vector.broadcast %700 : vector<2x8x1xf32> to vector<2x8x8xf32>
    %702 = arith.mulf %697, %701 : vector<2x8x8xf32>
    %703 = arith.truncf %702 : vector<2x8x8xf32> to vector<2x8x8xbf16>
    %704 = arith.truncf %687 : vector<2x8x8xf32> to vector<2x8x8xbf16>
    "tpu.trace_start"() <{level = 10 : i32, message = "bqk,bkd->bqd"}> : () -> ()
    %cst_198 = arith.constant dense<0.000000e+00> : vector<2x8x8xf32>
    %705 = tpu.matmul %703, %704, %cst_198 {dimension_numbers = #tpu.dot_dimension_numbers<[2], [1], [1], [2], [0, 0, 0, 1, 1, 2], [0], [0]>} : vector<2x8x8xbf16>, vector<2x8x8xbf16>, vector<2x8x8xf32> -> vector<2x8x8xf32>
    "tpu.trace_stop"() : () -> ()
    %706 = vector.shape_cast %705 : vector<2x8x8xf32> to vector<16x8xf32>
    %707 = vector.extract_strided_slice %616 {offsets = [16, 0], sizes = [8, 32], strides = [1, 1]} : vector<32x32xbf16> to vector<8x32xbf16>
    %708 = arith.truncf %706 : vector<16x8xf32> to vector<16x8xbf16>
    %cst_199 = arith.constant dense<0.000000e+00> : vector<16x32xf32>
    %709 = tpu.matmul %708, %707, %cst_199 {dimension_numbers = #tpu.dot_dimension_numbers<[1], [0], [0], [1], [0, 0, 1, 1], [], []>} : vector<16x8xbf16>, vector<8x32xbf16>, vector<16x32xf32> -> vector<16x32xf32>
    %710 = arith.addf %681, %709 : vector<16x32xf32>
    %711 = vector.extract_strided_slice %618 {offsets = [0, 24], sizes = [16, 8], strides = [1, 1]} : vector<16x32xf32> to vector<16x8xf32>
    %712 = vector.shape_cast %711 : vector<16x8xf32> to vector<2x8x8xf32>
    %713 = vector.extract_strided_slice %620 {offsets = [0, 24], sizes = [16, 8], strides = [1, 1]} : vector<16x32xf32> to vector<16x8xf32>
    %714 = vector.shape_cast %713 : vector<16x8xf32> to vector<2x8x8xf32>
    %715 = vector.extract_strided_slice %622 {offsets = [0, 24], sizes = [16, 8], strides = [1, 1]} : vector<16x32xf32> to vector<16x8xf32>
    %716 = vector.shape_cast %715 : vector<16x8xf32> to vector<2x8x8xf32>
    %717 = arith.truncf %712 : vector<2x8x8xf32> to vector<2x8x8xbf16>
    %718 = arith.truncf %714 : vector<2x8x8xf32> to vector<2x8x8xbf16>
    "tpu.trace_start"() <{level = 10 : i32, message = "bqd,bkd->bqk"}> : () -> ()
    %cst_200 = arith.constant dense<0.000000e+00> : vector<2x8x8xf32>
    %719 = tpu.matmul %717, %718, %cst_200 {dimension_numbers = #tpu.dot_dimension_numbers<[2], [2], [1], [1], [0, 0, 0, 1, 1, 1], [0], [0]>} : vector<2x8x8xbf16>, vector<2x8x8xbf16>, vector<2x8x8xf32> -> vector<2x8x8xf32>
    "tpu.trace_stop"() : () -> ()
    %720 = vector.broadcast %4 : vector<2x1x8xf32> to vector<2x8x8xf32>
    %721 = arith.addf %719, %720 : vector<2x8x8xf32>
    %cst_201 = arith.constant dense<0xFF800000> : vector<2x8xf32>
    %722 = vector.multi_reduction <maximumf>, %721, %cst_201 [2] : vector<2x8x8xf32> to vector<2x8xf32>
    %723 = vector.shape_cast %722 : vector<2x8xf32> to vector<2x8x1xf32>
    %724 = vector.broadcast %723 : vector<2x8x1xf32> to vector<2x8x8xf32>
    %725 = arith.subf %721, %724 : vector<2x8x8xf32>
    %726 = math.exp %725 : vector<2x8x8xf32>
    %cst_202 = arith.constant dense<0.000000e+00> : vector<2x8xf32>
    %727 = vector.multi_reduction <add>, %726, %cst_202 [2] : vector<2x8x8xf32> to vector<2x8xf32>
    %728 = vector.shape_cast %727 : vector<2x8xf32> to vector<2x8x1xf32>
    %729 = tpu.reciprocal %728 {approx = true} : vector<2x8x1xf32> -> vector<2x8x1xf32>
    %730 = vector.broadcast %729 : vector<2x8x1xf32> to vector<2x8x8xf32>
    %731 = arith.mulf %726, %730 : vector<2x8x8xf32>
    %732 = arith.truncf %731 : vector<2x8x8xf32> to vector<2x8x8xbf16>
    %733 = arith.truncf %716 : vector<2x8x8xf32> to vector<2x8x8xbf16>
    "tpu.trace_start"() <{level = 10 : i32, message = "bqk,bkd->bqd"}> : () -> ()
    %cst_203 = arith.constant dense<0.000000e+00> : vector<2x8x8xf32>
    %734 = tpu.matmul %732, %733, %cst_203 {dimension_numbers = #tpu.dot_dimension_numbers<[2], [1], [1], [2], [0, 0, 0, 1, 1, 2], [0], [0]>} : vector<2x8x8xbf16>, vector<2x8x8xbf16>, vector<2x8x8xf32> -> vector<2x8x8xf32>
    "tpu.trace_stop"() : () -> ()
    %735 = vector.shape_cast %734 : vector<2x8x8xf32> to vector<16x8xf32>
    %736 = vector.extract_strided_slice %616 {offsets = [24, 0], sizes = [8, 32], strides = [1, 1]} : vector<32x32xbf16> to vector<8x32xbf16>
    %737 = arith.truncf %735 : vector<16x8xf32> to vector<16x8xbf16>
    %cst_204 = arith.constant dense<0.000000e+00> : vector<16x32xf32>
    %738 = tpu.matmul %737, %736, %cst_204 {dimension_numbers = #tpu.dot_dimension_numbers<[1], [0], [0], [1], [0, 0, 1, 1], [], []>} : vector<16x8xbf16>, vector<8x32xbf16>, vector<16x32xf32> -> vector<16x32xf32>
    %739 = arith.addf %710, %738 : vector<16x32xf32>
    %740 = arith.addf %595, %739 : vector<16x32xf32>
    %741 = vector.extract_strided_slice %425 {offsets = [0, 0], sizes = [1, 32], strides = [1, 1]} : vector<2x32xf32> to vector<1x32xf32>
    %742 = arith.mulf %740, %740 : vector<16x32xf32>
    %cst_205 = arith.constant dense<0.000000e+00> : vector<16xf32>
    %743 = vector.multi_reduction <add>, %742, %cst_205 [1] : vector<16x32xf32> to vector<16xf32>
    %744 = vector.shape_cast %743 : vector<16xf32> to vector<16x1xf32>
    %cst_206 = arith.constant 3.200000e+01 : f32
    %745 = vector.broadcast %cst_206 : f32 to vector<16x1xf32>
    %746 = arith.divf %744, %745 : vector<16x1xf32>
    %cst_207 = arith.constant 9.99999997E-7 : f32
    %747 = vector.broadcast %cst_207 : f32 to vector<16x1xf32>
    %748 = arith.addf %746, %747 : vector<16x1xf32>
    %749 = math.rsqrt %748 : vector<16x1xf32>
    %750 = vector.broadcast %749 : vector<16x1xf32> to vector<16x32xf32>
    %751 = arith.mulf %740, %750 : vector<16x32xf32>
    %752 = vector.broadcast %741 : vector<1x32xf32> to vector<16x32xf32>
    %753 = arith.mulf %751, %752 : vector<16x32xf32>
    %754 = vector.extract_strided_slice %423 {offsets = [0, 0, 0], sizes = [1, 32, 64], strides = [1, 1, 1]} : vector<2x32x64xbf16> to vector<1x32x64xbf16>
    %755 = vector.shape_cast %754 : vector<1x32x64xbf16> to vector<32x64xbf16>
    %756 = arith.truncf %753 : vector<16x32xf32> to vector<16x32xbf16>
    %cst_208 = arith.constant dense<0.000000e+00> : vector<16x64xf32>
    %757 = tpu.matmul %756, %755, %cst_208 {dimension_numbers = #tpu.dot_dimension_numbers<[1], [0], [0], [1], [0, 0, 1, 1], [], []>} : vector<16x32xbf16>, vector<32x64xbf16>, vector<16x64xf32> -> vector<16x64xf32>
    %cst_209 = arith.constant 0.000000e+00 : f32
    %758 = vector.broadcast %cst_209 : f32 to vector<16x64xf32>
    %759 = arith.maximumf %757, %758 : vector<16x64xf32>
    %760 = vector.extract_strided_slice %424 {offsets = [0, 0, 0], sizes = [1, 64, 32], strides = [1, 1, 1]} : vector<2x64x32xbf16> to vector<1x64x32xbf16>
    %761 = vector.shape_cast %760 : vector<1x64x32xbf16> to vector<64x32xbf16>
    %762 = arith.truncf %759 : vector<16x64xf32> to vector<16x64xbf16>
    %cst_210 = arith.constant dense<0.000000e+00> : vector<16x32xf32>
    %763 = tpu.matmul %762, %761, %cst_210 {dimension_numbers = #tpu.dot_dimension_numbers<[1], [0], [0], [1], [0, 0, 1, 1], [], []>} : vector<16x64xbf16>, vector<64x32xbf16>, vector<16x32xf32> -> vector<16x32xf32>
    %764 = arith.addf %740, %763 : vector<16x32xf32>
    %765 = vector.extract_strided_slice %421 {offsets = [1, 0], sizes = [1, 32], strides = [1, 1]} : vector<2x32xf32> to vector<1x32xf32>
    %766 = arith.mulf %764, %764 : vector<16x32xf32>
    %cst_211 = arith.constant dense<0.000000e+00> : vector<16xf32>
    %767 = vector.multi_reduction <add>, %766, %cst_211 [1] : vector<16x32xf32> to vector<16xf32>
    %768 = vector.shape_cast %767 : vector<16xf32> to vector<16x1xf32>
    %cst_212 = arith.constant 3.200000e+01 : f32
    %769 = vector.broadcast %cst_212 : f32 to vector<16x1xf32>
    %770 = arith.divf %768, %769 : vector<16x1xf32>
    %cst_213 = arith.constant 9.99999997E-7 : f32
    %771 = vector.broadcast %cst_213 : f32 to vector<16x1xf32>
    %772 = arith.addf %770, %771 : vector<16x1xf32>
    %773 = math.rsqrt %772 : vector<16x1xf32>
    %774 = vector.broadcast %773 : vector<16x1xf32> to vector<16x32xf32>
    %775 = arith.mulf %764, %774 : vector<16x32xf32>
    %776 = vector.broadcast %765 : vector<1x32xf32> to vector<16x32xf32>
    %777 = arith.mulf %775, %776 : vector<16x32xf32>
    %778 = vector.extract_strided_slice %413 {offsets = [1, 0, 0], sizes = [1, 32, 32], strides = [1, 1, 1]} : vector<2x32x32xbf16> to vector<1x32x32xbf16>
    %779 = vector.shape_cast %778 : vector<1x32x32xbf16> to vector<32x32xbf16>
    %780 = vector.extract_strided_slice %414 {offsets = [1, 0, 0], sizes = [1, 32, 32], strides = [1, 1, 1]} : vector<2x32x32xbf16> to vector<1x32x32xbf16>
    %781 = vector.shape_cast %780 : vector<1x32x32xbf16> to vector<32x32xbf16>
    %782 = vector.extract_strided_slice %415 {offsets = [1, 0, 0], sizes = [1, 32, 32], strides = [1, 1, 1]} : vector<2x32x32xbf16> to vector<1x32x32xbf16>
    %783 = vector.shape_cast %782 : vector<1x32x32xbf16> to vector<32x32xbf16>
    %784 = vector.extract_strided_slice %416 {offsets = [1, 0, 0], sizes = [1, 32, 32], strides = [1, 1, 1]} : vector<2x32x32xbf16> to vector<1x32x32xbf16>
    %785 = vector.shape_cast %784 : vector<1x32x32xbf16> to vector<32x32xbf16>
    %786 = arith.truncf %777 : vector<16x32xf32> to vector<16x32xbf16>
    %cst_214 = arith.constant dense<0.000000e+00> : vector<16x32xf32>
    %787 = tpu.matmul %786, %779, %cst_214 {dimension_numbers = #tpu.dot_dimension_numbers<[1], [0], [0], [1], [0, 0, 1, 1], [], []>} : vector<16x32xbf16>, vector<32x32xbf16>, vector<16x32xf32> -> vector<16x32xf32>
    %788 = arith.truncf %777 : vector<16x32xf32> to vector<16x32xbf16>
    %cst_215 = arith.constant dense<0.000000e+00> : vector<16x32xf32>
    %789 = tpu.matmul %788, %781, %cst_215 {dimension_numbers = #tpu.dot_dimension_numbers<[1], [0], [0], [1], [0, 0, 1, 1], [], []>} : vector<16x32xbf16>, vector<32x32xbf16>, vector<16x32xf32> -> vector<16x32xf32>
    %790 = arith.truncf %777 : vector<16x32xf32> to vector<16x32xbf16>
    %cst_216 = arith.constant dense<0.000000e+00> : vector<16x32xf32>
    %791 = tpu.matmul %790, %783, %cst_216 {dimension_numbers = #tpu.dot_dimension_numbers<[1], [0], [0], [1], [0, 0, 1, 1], [], []>} : vector<16x32xbf16>, vector<32x32xbf16>, vector<16x32xf32> -> vector<16x32xf32>
    %cst_217 = arith.constant 0.000000e+00 : f32
    %792 = vector.broadcast %cst_217 : f32 to vector<16x32xf32>
    %793 = vector.extract_strided_slice %787 {offsets = [0, 0], sizes = [16, 8], strides = [1, 1]} : vector<16x32xf32> to vector<16x8xf32>
    %794 = vector.shape_cast %793 : vector<16x8xf32> to vector<2x8x8xf32>
    %795 = vector.extract_strided_slice %789 {offsets = [0, 0], sizes = [16, 8], strides = [1, 1]} : vector<16x32xf32> to vector<16x8xf32>
    %796 = vector.shape_cast %795 : vector<16x8xf32> to vector<2x8x8xf32>
    %797 = vector.extract_strided_slice %791 {offsets = [0, 0], sizes = [16, 8], strides = [1, 1]} : vector<16x32xf32> to vector<16x8xf32>
    %798 = vector.shape_cast %797 : vector<16x8xf32> to vector<2x8x8xf32>
    %799 = arith.truncf %794 : vector<2x8x8xf32> to vector<2x8x8xbf16>
    %800 = arith.truncf %796 : vector<2x8x8xf32> to vector<2x8x8xbf16>
    "tpu.trace_start"() <{level = 10 : i32, message = "bqd,bkd->bqk"}> : () -> ()
    %cst_218 = arith.constant dense<0.000000e+00> : vector<2x8x8xf32>
    %801 = tpu.matmul %799, %800, %cst_218 {dimension_numbers = #tpu.dot_dimension_numbers<[2], [2], [1], [1], [0, 0, 0, 1, 1, 1], [0], [0]>} : vector<2x8x8xbf16>, vector<2x8x8xbf16>, vector<2x8x8xf32> -> vector<2x8x8xf32>
    "tpu.trace_stop"() : () -> ()
    %802 = arith.addf %801, %5 : vector<2x8x8xf32>
    %803 = vector.extract_strided_slice %3 {offsets = [0, 0, 0], sizes = [1, 8, 8], strides = [1, 1, 1]} : vector<4x8x8xf32> to vector<1x8x8xf32>
    %804 = vector.shape_cast %803 : vector<1x8x8xf32> to vector<8x8xf32>
    %805 = vector.shape_cast %804 : vector<8x8xf32> to vector<1x8x8xf32>
    %806 = vector.broadcast %805 : vector<1x8x8xf32> to vector<2x8x8xf32>
    %807 = arith.addf %802, %806 : vector<2x8x8xf32>
    %cst_219 = arith.constant dense<0xFF800000> : vector<2x8xf32>
    %808 = vector.multi_reduction <maximumf>, %807, %cst_219 [2] : vector<2x8x8xf32> to vector<2x8xf32>
    %809 = vector.shape_cast %808 : vector<2x8xf32> to vector<2x8x1xf32>
    %810 = vector.broadcast %809 : vector<2x8x1xf32> to vector<2x8x8xf32>
    %811 = arith.subf %807, %810 : vector<2x8x8xf32>
    %812 = math.exp %811 : vector<2x8x8xf32>
    %cst_220 = arith.constant dense<0.000000e+00> : vector<2x8xf32>
    %813 = vector.multi_reduction <add>, %812, %cst_220 [2] : vector<2x8x8xf32> to vector<2x8xf32>
    %814 = vector.shape_cast %813 : vector<2x8xf32> to vector<2x8x1xf32>
    %815 = tpu.reciprocal %814 {approx = true} : vector<2x8x1xf32> -> vector<2x8x1xf32>
    %816 = vector.broadcast %815 : vector<2x8x1xf32> to vector<2x8x8xf32>
    %817 = arith.mulf %812, %816 : vector<2x8x8xf32>
    %818 = arith.truncf %817 : vector<2x8x8xf32> to vector<2x8x8xbf16>
    %819 = arith.truncf %798 : vector<2x8x8xf32> to vector<2x8x8xbf16>
    "tpu.trace_start"() <{level = 10 : i32, message = "bqk,bkd->bqd"}> : () -> ()
    %cst_221 = arith.constant dense<0.000000e+00> : vector<2x8x8xf32>
    %820 = tpu.matmul %818, %819, %cst_221 {dimension_numbers = #tpu.dot_dimension_numbers<[2], [1], [1], [2], [0, 0, 0, 1, 1, 2], [0], [0]>} : vector<2x8x8xbf16>, vector<2x8x8xbf16>, vector<2x8x8xf32> -> vector<2x8x8xf32>
    "tpu.trace_stop"() : () -> ()
    %821 = vector.shape_cast %820 : vector<2x8x8xf32> to vector<16x8xf32>
    %822 = vector.extract_strided_slice %785 {offsets = [0, 0], sizes = [8, 32], strides = [1, 1]} : vector<32x32xbf16> to vector<8x32xbf16>
    %823 = arith.truncf %821 : vector<16x8xf32> to vector<16x8xbf16>
    %cst_222 = arith.constant dense<0.000000e+00> : vector<16x32xf32>
    %824 = tpu.matmul %823, %822, %cst_222 {dimension_numbers = #tpu.dot_dimension_numbers<[1], [0], [0], [1], [0, 0, 1, 1], [], []>} : vector<16x8xbf16>, vector<8x32xbf16>, vector<16x32xf32> -> vector<16x32xf32>
    %825 = arith.addf %792, %824 : vector<16x32xf32>
    %826 = vector.extract_strided_slice %787 {offsets = [0, 8], sizes = [16, 8], strides = [1, 1]} : vector<16x32xf32> to vector<16x8xf32>
    %827 = vector.shape_cast %826 : vector<16x8xf32> to vector<2x8x8xf32>
    %828 = vector.extract_strided_slice %789 {offsets = [0, 8], sizes = [16, 8], strides = [1, 1]} : vector<16x32xf32> to vector<16x8xf32>
    %829 = vector.shape_cast %828 : vector<16x8xf32> to vector<2x8x8xf32>
    %830 = vector.extract_strided_slice %791 {offsets = [0, 8], sizes = [16, 8], strides = [1, 1]} : vector<16x32xf32> to vector<16x8xf32>
    %831 = vector.shape_cast %830 : vector<16x8xf32> to vector<2x8x8xf32>
    %832 = arith.truncf %827 : vector<2x8x8xf32> to vector<2x8x8xbf16>
    %833 = arith.truncf %829 : vector<2x8x8xf32> to vector<2x8x8xbf16>
    "tpu.trace_start"() <{level = 10 : i32, message = "bqd,bkd->bqk"}> : () -> ()
    %cst_223 = arith.constant dense<0.000000e+00> : vector<2x8x8xf32>
    %834 = tpu.matmul %832, %833, %cst_223 {dimension_numbers = #tpu.dot_dimension_numbers<[2], [2], [1], [1], [0, 0, 0, 1, 1, 1], [0], [0]>} : vector<2x8x8xbf16>, vector<2x8x8xbf16>, vector<2x8x8xf32> -> vector<2x8x8xf32>
    "tpu.trace_stop"() : () -> ()
    %835 = arith.addf %834, %5 : vector<2x8x8xf32>
    %836 = vector.extract_strided_slice %3 {offsets = [1, 0, 0], sizes = [1, 8, 8], strides = [1, 1, 1]} : vector<4x8x8xf32> to vector<1x8x8xf32>
    %837 = vector.shape_cast %836 : vector<1x8x8xf32> to vector<8x8xf32>
    %838 = vector.shape_cast %837 : vector<8x8xf32> to vector<1x8x8xf32>
    %839 = vector.broadcast %838 : vector<1x8x8xf32> to vector<2x8x8xf32>
    %840 = arith.addf %835, %839 : vector<2x8x8xf32>
    %cst_224 = arith.constant dense<0xFF800000> : vector<2x8xf32>
    %841 = vector.multi_reduction <maximumf>, %840, %cst_224 [2] : vector<2x8x8xf32> to vector<2x8xf32>
    %842 = vector.shape_cast %841 : vector<2x8xf32> to vector<2x8x1xf32>
    %843 = vector.broadcast %842 : vector<2x8x1xf32> to vector<2x8x8xf32>
    %844 = arith.subf %840, %843 : vector<2x8x8xf32>
    %845 = math.exp %844 : vector<2x8x8xf32>
    %cst_225 = arith.constant dense<0.000000e+00> : vector<2x8xf32>
    %846 = vector.multi_reduction <add>, %845, %cst_225 [2] : vector<2x8x8xf32> to vector<2x8xf32>
    %847 = vector.shape_cast %846 : vector<2x8xf32> to vector<2x8x1xf32>
    %848 = tpu.reciprocal %847 {approx = true} : vector<2x8x1xf32> -> vector<2x8x1xf32>
    %849 = vector.broadcast %848 : vector<2x8x1xf32> to vector<2x8x8xf32>
    %850 = arith.mulf %845, %849 : vector<2x8x8xf32>
    %851 = arith.truncf %850 : vector<2x8x8xf32> to vector<2x8x8xbf16>
    %852 = arith.truncf %831 : vector<2x8x8xf32> to vector<2x8x8xbf16>
    "tpu.trace_start"() <{level = 10 : i32, message = "bqk,bkd->bqd"}> : () -> ()
    %cst_226 = arith.constant dense<0.000000e+00> : vector<2x8x8xf32>
    %853 = tpu.matmul %851, %852, %cst_226 {dimension_numbers = #tpu.dot_dimension_numbers<[2], [1], [1], [2], [0, 0, 0, 1, 1, 2], [0], [0]>} : vector<2x8x8xbf16>, vector<2x8x8xbf16>, vector<2x8x8xf32> -> vector<2x8x8xf32>
    "tpu.trace_stop"() : () -> ()
    %854 = vector.shape_cast %853 : vector<2x8x8xf32> to vector<16x8xf32>
    %855 = vector.extract_strided_slice %785 {offsets = [8, 0], sizes = [8, 32], strides = [1, 1]} : vector<32x32xbf16> to vector<8x32xbf16>
    %856 = arith.truncf %854 : vector<16x8xf32> to vector<16x8xbf16>
    %cst_227 = arith.constant dense<0.000000e+00> : vector<16x32xf32>
    %857 = tpu.matmul %856, %855, %cst_227 {dimension_numbers = #tpu.dot_dimension_numbers<[1], [0], [0], [1], [0, 0, 1, 1], [], []>} : vector<16x8xbf16>, vector<8x32xbf16>, vector<16x32xf32> -> vector<16x32xf32>
    %858 = arith.addf %825, %857 : vector<16x32xf32>
    %859 = vector.extract_strided_slice %787 {offsets = [0, 16], sizes = [16, 8], strides = [1, 1]} : vector<16x32xf32> to vector<16x8xf32>
    %860 = vector.shape_cast %859 : vector<16x8xf32> to vector<2x8x8xf32>
    %861 = vector.extract_strided_slice %789 {offsets = [0, 16], sizes = [16, 8], strides = [1, 1]} : vector<16x32xf32> to vector<16x8xf32>
    %862 = vector.shape_cast %861 : vector<16x8xf32> to vector<2x8x8xf32>
    %863 = vector.extract_strided_slice %791 {offsets = [0, 16], sizes = [16, 8], strides = [1, 1]} : vector<16x32xf32> to vector<16x8xf32>
    %864 = vector.shape_cast %863 : vector<16x8xf32> to vector<2x8x8xf32>
    %865 = arith.truncf %860 : vector<2x8x8xf32> to vector<2x8x8xbf16>
    %866 = arith.truncf %862 : vector<2x8x8xf32> to vector<2x8x8xbf16>
    "tpu.trace_start"() <{level = 10 : i32, message = "bqd,bkd->bqk"}> : () -> ()
    %cst_228 = arith.constant dense<0.000000e+00> : vector<2x8x8xf32>
    %867 = tpu.matmul %865, %866, %cst_228 {dimension_numbers = #tpu.dot_dimension_numbers<[2], [2], [1], [1], [0, 0, 0, 1, 1, 1], [0], [0]>} : vector<2x8x8xbf16>, vector<2x8x8xbf16>, vector<2x8x8xf32> -> vector<2x8x8xf32>
    "tpu.trace_stop"() : () -> ()
    %868 = arith.addf %867, %5 : vector<2x8x8xf32>
    %869 = vector.extract_strided_slice %3 {offsets = [2, 0, 0], sizes = [1, 8, 8], strides = [1, 1, 1]} : vector<4x8x8xf32> to vector<1x8x8xf32>
    %870 = vector.shape_cast %869 : vector<1x8x8xf32> to vector<8x8xf32>
    %871 = vector.shape_cast %870 : vector<8x8xf32> to vector<1x8x8xf32>
    %872 = vector.broadcast %871 : vector<1x8x8xf32> to vector<2x8x8xf32>
    %873 = arith.addf %868, %872 : vector<2x8x8xf32>
    %cst_229 = arith.constant dense<0xFF800000> : vector<2x8xf32>
    %874 = vector.multi_reduction <maximumf>, %873, %cst_229 [2] : vector<2x8x8xf32> to vector<2x8xf32>
    %875 = vector.shape_cast %874 : vector<2x8xf32> to vector<2x8x1xf32>
    %876 = vector.broadcast %875 : vector<2x8x1xf32> to vector<2x8x8xf32>
    %877 = arith.subf %873, %876 : vector<2x8x8xf32>
    %878 = math.exp %877 : vector<2x8x8xf32>
    %cst_230 = arith.constant dense<0.000000e+00> : vector<2x8xf32>
    %879 = vector.multi_reduction <add>, %878, %cst_230 [2] : vector<2x8x8xf32> to vector<2x8xf32>
    %880 = vector.shape_cast %879 : vector<2x8xf32> to vector<2x8x1xf32>
    %881 = tpu.reciprocal %880 {approx = true} : vector<2x8x1xf32> -> vector<2x8x1xf32>
    %882 = vector.broadcast %881 : vector<2x8x1xf32> to vector<2x8x8xf32>
    %883 = arith.mulf %878, %882 : vector<2x8x8xf32>
    %884 = arith.truncf %883 : vector<2x8x8xf32> to vector<2x8x8xbf16>
    %885 = arith.truncf %864 : vector<2x8x8xf32> to vector<2x8x8xbf16>
    "tpu.trace_start"() <{level = 10 : i32, message = "bqk,bkd->bqd"}> : () -> ()
    %cst_231 = arith.constant dense<0.000000e+00> : vector<2x8x8xf32>
    %886 = tpu.matmul %884, %885, %cst_231 {dimension_numbers = #tpu.dot_dimension_numbers<[2], [1], [1], [2], [0, 0, 0, 1, 1, 2], [0], [0]>} : vector<2x8x8xbf16>, vector<2x8x8xbf16>, vector<2x8x8xf32> -> vector<2x8x8xf32>
    "tpu.trace_stop"() : () -> ()
    %887 = vector.shape_cast %886 : vector<2x8x8xf32> to vector<16x8xf32>
    %888 = vector.extract_strided_slice %785 {offsets = [16, 0], sizes = [8, 32], strides = [1, 1]} : vector<32x32xbf16> to vector<8x32xbf16>
    %889 = arith.truncf %887 : vector<16x8xf32> to vector<16x8xbf16>
    %cst_232 = arith.constant dense<0.000000e+00> : vector<16x32xf32>
    %890 = tpu.matmul %889, %888, %cst_232 {dimension_numbers = #tpu.dot_dimension_numbers<[1], [0], [0], [1], [0, 0, 1, 1], [], []>} : vector<16x8xbf16>, vector<8x32xbf16>, vector<16x32xf32> -> vector<16x32xf32>
    %891 = arith.addf %858, %890 : vector<16x32xf32>
    %892 = vector.extract_strided_slice %787 {offsets = [0, 24], sizes = [16, 8], strides = [1, 1]} : vector<16x32xf32> to vector<16x8xf32>
    %893 = vector.shape_cast %892 : vector<16x8xf32> to vector<2x8x8xf32>
    %894 = vector.extract_strided_slice %789 {offsets = [0, 24], sizes = [16, 8], strides = [1, 1]} : vector<16x32xf32> to vector<16x8xf32>
    %895 = vector.shape_cast %894 : vector<16x8xf32> to vector<2x8x8xf32>
    %896 = vector.extract_strided_slice %791 {offsets = [0, 24], sizes = [16, 8], strides = [1, 1]} : vector<16x32xf32> to vector<16x8xf32>
    %897 = vector.shape_cast %896 : vector<16x8xf32> to vector<2x8x8xf32>
    %898 = arith.truncf %893 : vector<2x8x8xf32> to vector<2x8x8xbf16>
    %899 = arith.truncf %895 : vector<2x8x8xf32> to vector<2x8x8xbf16>
    "tpu.trace_start"() <{level = 10 : i32, message = "bqd,bkd->bqk"}> : () -> ()
    %cst_233 = arith.constant dense<0.000000e+00> : vector<2x8x8xf32>
    %900 = tpu.matmul %898, %899, %cst_233 {dimension_numbers = #tpu.dot_dimension_numbers<[2], [2], [1], [1], [0, 0, 0, 1, 1, 1], [0], [0]>} : vector<2x8x8xbf16>, vector<2x8x8xbf16>, vector<2x8x8xf32> -> vector<2x8x8xf32>
    "tpu.trace_stop"() : () -> ()
    %901 = arith.addf %900, %5 : vector<2x8x8xf32>
    %902 = vector.extract_strided_slice %3 {offsets = [3, 0, 0], sizes = [1, 8, 8], strides = [1, 1, 1]} : vector<4x8x8xf32> to vector<1x8x8xf32>
    %903 = vector.shape_cast %902 : vector<1x8x8xf32> to vector<8x8xf32>
    %904 = vector.shape_cast %903 : vector<8x8xf32> to vector<1x8x8xf32>
    %905 = vector.broadcast %904 : vector<1x8x8xf32> to vector<2x8x8xf32>
    %906 = arith.addf %901, %905 : vector<2x8x8xf32>
    %cst_234 = arith.constant dense<0xFF800000> : vector<2x8xf32>
    %907 = vector.multi_reduction <maximumf>, %906, %cst_234 [2] : vector<2x8x8xf32> to vector<2x8xf32>
    %908 = vector.shape_cast %907 : vector<2x8xf32> to vector<2x8x1xf32>
    %909 = vector.broadcast %908 : vector<2x8x1xf32> to vector<2x8x8xf32>
    %910 = arith.subf %906, %909 : vector<2x8x8xf32>
    %911 = math.exp %910 : vector<2x8x8xf32>
    %cst_235 = arith.constant dense<0.000000e+00> : vector<2x8xf32>
    %912 = vector.multi_reduction <add>, %911, %cst_235 [2] : vector<2x8x8xf32> to vector<2x8xf32>
    %913 = vector.shape_cast %912 : vector<2x8xf32> to vector<2x8x1xf32>
    %914 = tpu.reciprocal %913 {approx = true} : vector<2x8x1xf32> -> vector<2x8x1xf32>
    %915 = vector.broadcast %914 : vector<2x8x1xf32> to vector<2x8x8xf32>
    %916 = arith.mulf %911, %915 : vector<2x8x8xf32>
    %917 = arith.truncf %916 : vector<2x8x8xf32> to vector<2x8x8xbf16>
    %918 = arith.truncf %897 : vector<2x8x8xf32> to vector<2x8x8xbf16>
    "tpu.trace_start"() <{level = 10 : i32, message = "bqk,bkd->bqd"}> : () -> ()
    %cst_236 = arith.constant dense<0.000000e+00> : vector<2x8x8xf32>
    %919 = tpu.matmul %917, %918, %cst_236 {dimension_numbers = #tpu.dot_dimension_numbers<[2], [1], [1], [2], [0, 0, 0, 1, 1, 2], [0], [0]>} : vector<2x8x8xbf16>, vector<2x8x8xbf16>, vector<2x8x8xf32> -> vector<2x8x8xf32>
    "tpu.trace_stop"() : () -> ()
    %920 = vector.shape_cast %919 : vector<2x8x8xf32> to vector<16x8xf32>
    %921 = vector.extract_strided_slice %785 {offsets = [24, 0], sizes = [8, 32], strides = [1, 1]} : vector<32x32xbf16> to vector<8x32xbf16>
    %922 = arith.truncf %920 : vector<16x8xf32> to vector<16x8xbf16>
    %cst_237 = arith.constant dense<0.000000e+00> : vector<16x32xf32>
    %923 = tpu.matmul %922, %921, %cst_237 {dimension_numbers = #tpu.dot_dimension_numbers<[1], [0], [0], [1], [0, 0, 1, 1], [], []>} : vector<16x8xbf16>, vector<8x32xbf16>, vector<16x32xf32> -> vector<16x32xf32>
    %924 = arith.addf %891, %923 : vector<16x32xf32>
    %925 = arith.addf %764, %924 : vector<16x32xf32>
    %926 = vector.extract_strided_slice %422 {offsets = [1, 0], sizes = [1, 32], strides = [1, 1]} : vector<2x32xf32> to vector<1x32xf32>
    %927 = arith.mulf %925, %925 : vector<16x32xf32>
    %cst_238 = arith.constant dense<0.000000e+00> : vector<16xf32>
    %928 = vector.multi_reduction <add>, %927, %cst_238 [1] : vector<16x32xf32> to vector<16xf32>
    %929 = vector.shape_cast %928 : vector<16xf32> to vector<16x1xf32>
    %cst_239 = arith.constant 3.200000e+01 : f32
    %930 = vector.broadcast %cst_239 : f32 to vector<16x1xf32>
    %931 = arith.divf %929, %930 : vector<16x1xf32>
    %cst_240 = arith.constant 9.99999997E-7 : f32
    %932 = vector.broadcast %cst_240 : f32 to vector<16x1xf32>
    %933 = arith.addf %931, %932 : vector<16x1xf32>
    %934 = math.rsqrt %933 : vector<16x1xf32>
    %935 = vector.broadcast %934 : vector<16x1xf32> to vector<16x32xf32>
    %936 = arith.mulf %925, %935 : vector<16x32xf32>
    %937 = vector.broadcast %926 : vector<1x32xf32> to vector<16x32xf32>
    %938 = arith.mulf %936, %937 : vector<16x32xf32>
    %939 = vector.extract_strided_slice %417 {offsets = [1, 0, 0], sizes = [1, 32, 32], strides = [1, 1, 1]} : vector<2x32x32xbf16> to vector<1x32x32xbf16>
    %940 = vector.shape_cast %939 : vector<1x32x32xbf16> to vector<32x32xbf16>
    %941 = vector.extract_strided_slice %418 {offsets = [1, 0, 0], sizes = [1, 32, 32], strides = [1, 1, 1]} : vector<2x32x32xbf16> to vector<1x32x32xbf16>
    %942 = vector.shape_cast %941 : vector<1x32x32xbf16> to vector<32x32xbf16>
    %943 = vector.extract_strided_slice %419 {offsets = [1, 0, 0], sizes = [1, 32, 32], strides = [1, 1, 1]} : vector<2x32x32xbf16> to vector<1x32x32xbf16>
    %944 = vector.shape_cast %943 : vector<1x32x32xbf16> to vector<32x32xbf16>
    %945 = vector.extract_strided_slice %420 {offsets = [1, 0, 0], sizes = [1, 32, 32], strides = [1, 1, 1]} : vector<2x32x32xbf16> to vector<1x32x32xbf16>
    %946 = vector.shape_cast %945 : vector<1x32x32xbf16> to vector<32x32xbf16>
    %947 = arith.truncf %938 : vector<16x32xf32> to vector<16x32xbf16>
    %cst_241 = arith.constant dense<0.000000e+00> : vector<16x32xf32>
    %948 = tpu.matmul %947, %940, %cst_241 {dimension_numbers = #tpu.dot_dimension_numbers<[1], [0], [0], [1], [0, 0, 1, 1], [], []>} : vector<16x32xbf16>, vector<32x32xbf16>, vector<16x32xf32> -> vector<16x32xf32>
    %949 = arith.truncf %412 : vector<16x32xf32> to vector<16x32xbf16>
    %cst_242 = arith.constant dense<0.000000e+00> : vector<16x32xf32>
    %950 = tpu.matmul %949, %942, %cst_242 {dimension_numbers = #tpu.dot_dimension_numbers<[1], [0], [0], [1], [0, 0, 1, 1], [], []>} : vector<16x32xbf16>, vector<32x32xbf16>, vector<16x32xf32> -> vector<16x32xf32>
    %951 = arith.truncf %412 : vector<16x32xf32> to vector<16x32xbf16>
    %cst_243 = arith.constant dense<0.000000e+00> : vector<16x32xf32>
    %952 = tpu.matmul %951, %944, %cst_243 {dimension_numbers = #tpu.dot_dimension_numbers<[1], [0], [0], [1], [0, 0, 1, 1], [], []>} : vector<16x32xbf16>, vector<32x32xbf16>, vector<16x32xf32> -> vector<16x32xf32>
    %cst_244 = arith.constant 0.000000e+00 : f32
    %953 = vector.broadcast %cst_244 : f32 to vector<16x32xf32>
    %954 = vector.extract_strided_slice %948 {offsets = [0, 0], sizes = [16, 8], strides = [1, 1]} : vector<16x32xf32> to vector<16x8xf32>
    %955 = vector.shape_cast %954 : vector<16x8xf32> to vector<2x8x8xf32>
    %956 = vector.extract_strided_slice %950 {offsets = [0, 0], sizes = [16, 8], strides = [1, 1]} : vector<16x32xf32> to vector<16x8xf32>
    %957 = vector.shape_cast %956 : vector<16x8xf32> to vector<2x8x8xf32>
    %958 = vector.extract_strided_slice %952 {offsets = [0, 0], sizes = [16, 8], strides = [1, 1]} : vector<16x32xf32> to vector<16x8xf32>
    %959 = vector.shape_cast %958 : vector<16x8xf32> to vector<2x8x8xf32>
    %960 = arith.truncf %955 : vector<2x8x8xf32> to vector<2x8x8xbf16>
    %961 = arith.truncf %957 : vector<2x8x8xf32> to vector<2x8x8xbf16>
    "tpu.trace_start"() <{level = 10 : i32, message = "bqd,bkd->bqk"}> : () -> ()
    %cst_245 = arith.constant dense<0.000000e+00> : vector<2x8x8xf32>
    %962 = tpu.matmul %960, %961, %cst_245 {dimension_numbers = #tpu.dot_dimension_numbers<[2], [2], [1], [1], [0, 0, 0, 1, 1, 1], [0], [0]>} : vector<2x8x8xbf16>, vector<2x8x8xbf16>, vector<2x8x8xf32> -> vector<2x8x8xf32>
    "tpu.trace_stop"() : () -> ()
    %963 = vector.broadcast %4 : vector<2x1x8xf32> to vector<2x8x8xf32>
    %964 = arith.addf %962, %963 : vector<2x8x8xf32>
    %cst_246 = arith.constant dense<0xFF800000> : vector<2x8xf32>
    %965 = vector.multi_reduction <maximumf>, %964, %cst_246 [2] : vector<2x8x8xf32> to vector<2x8xf32>
    %966 = vector.shape_cast %965 : vector<2x8xf32> to vector<2x8x1xf32>
    %967 = vector.broadcast %966 : vector<2x8x1xf32> to vector<2x8x8xf32>
    %968 = arith.subf %964, %967 : vector<2x8x8xf32>
    %969 = math.exp %968 : vector<2x8x8xf32>
    %cst_247 = arith.constant dense<0.000000e+00> : vector<2x8xf32>
    %970 = vector.multi_reduction <add>, %969, %cst_247 [2] : vector<2x8x8xf32> to vector<2x8xf32>
    %971 = vector.shape_cast %970 : vector<2x8xf32> to vector<2x8x1xf32>
    %972 = tpu.reciprocal %971 {approx = true} : vector<2x8x1xf32> -> vector<2x8x1xf32>
    %973 = vector.broadcast %972 : vector<2x8x1xf32> to vector<2x8x8xf32>
    %974 = arith.mulf %969, %973 : vector<2x8x8xf32>
    %975 = arith.truncf %974 : vector<2x8x8xf32> to vector<2x8x8xbf16>
    %976 = arith.truncf %959 : vector<2x8x8xf32> to vector<2x8x8xbf16>
    "tpu.trace_start"() <{level = 10 : i32, message = "bqk,bkd->bqd"}> : () -> ()
    %cst_248 = arith.constant dense<0.000000e+00> : vector<2x8x8xf32>
    %977 = tpu.matmul %975, %976, %cst_248 {dimension_numbers = #tpu.dot_dimension_numbers<[2], [1], [1], [2], [0, 0, 0, 1, 1, 2], [0], [0]>} : vector<2x8x8xbf16>, vector<2x8x8xbf16>, vector<2x8x8xf32> -> vector<2x8x8xf32>
    "tpu.trace_stop"() : () -> ()
    %978 = vector.shape_cast %977 : vector<2x8x8xf32> to vector<16x8xf32>
    %979 = vector.extract_strided_slice %946 {offsets = [0, 0], sizes = [8, 32], strides = [1, 1]} : vector<32x32xbf16> to vector<8x32xbf16>
    %980 = arith.truncf %978 : vector<16x8xf32> to vector<16x8xbf16>
    %cst_249 = arith.constant dense<0.000000e+00> : vector<16x32xf32>
    %981 = tpu.matmul %980, %979, %cst_249 {dimension_numbers = #tpu.dot_dimension_numbers<[1], [0], [0], [1], [0, 0, 1, 1], [], []>} : vector<16x8xbf16>, vector<8x32xbf16>, vector<16x32xf32> -> vector<16x32xf32>
    %982 = arith.addf %953, %981 : vector<16x32xf32>
    %983 = vector.extract_strided_slice %948 {offsets = [0, 8], sizes = [16, 8], strides = [1, 1]} : vector<16x32xf32> to vector<16x8xf32>
    %984 = vector.shape_cast %983 : vector<16x8xf32> to vector<2x8x8xf32>
    %985 = vector.extract_strided_slice %950 {offsets = [0, 8], sizes = [16, 8], strides = [1, 1]} : vector<16x32xf32> to vector<16x8xf32>
    %986 = vector.shape_cast %985 : vector<16x8xf32> to vector<2x8x8xf32>
    %987 = vector.extract_strided_slice %952 {offsets = [0, 8], sizes = [16, 8], strides = [1, 1]} : vector<16x32xf32> to vector<16x8xf32>
    %988 = vector.shape_cast %987 : vector<16x8xf32> to vector<2x8x8xf32>
    %989 = arith.truncf %984 : vector<2x8x8xf32> to vector<2x8x8xbf16>
    %990 = arith.truncf %986 : vector<2x8x8xf32> to vector<2x8x8xbf16>
    "tpu.trace_start"() <{level = 10 : i32, message = "bqd,bkd->bqk"}> : () -> ()
    %cst_250 = arith.constant dense<0.000000e+00> : vector<2x8x8xf32>
    %991 = tpu.matmul %989, %990, %cst_250 {dimension_numbers = #tpu.dot_dimension_numbers<[2], [2], [1], [1], [0, 0, 0, 1, 1, 1], [0], [0]>} : vector<2x8x8xbf16>, vector<2x8x8xbf16>, vector<2x8x8xf32> -> vector<2x8x8xf32>
    "tpu.trace_stop"() : () -> ()
    %992 = vector.broadcast %4 : vector<2x1x8xf32> to vector<2x8x8xf32>
    %993 = arith.addf %991, %992 : vector<2x8x8xf32>
    %cst_251 = arith.constant dense<0xFF800000> : vector<2x8xf32>
    %994 = vector.multi_reduction <maximumf>, %993, %cst_251 [2] : vector<2x8x8xf32> to vector<2x8xf32>
    %995 = vector.shape_cast %994 : vector<2x8xf32> to vector<2x8x1xf32>
    %996 = vector.broadcast %995 : vector<2x8x1xf32> to vector<2x8x8xf32>
    %997 = arith.subf %993, %996 : vector<2x8x8xf32>
    %998 = math.exp %997 : vector<2x8x8xf32>
    %cst_252 = arith.constant dense<0.000000e+00> : vector<2x8xf32>
    %999 = vector.multi_reduction <add>, %998, %cst_252 [2] : vector<2x8x8xf32> to vector<2x8xf32>
    %1000 = vector.shape_cast %999 : vector<2x8xf32> to vector<2x8x1xf32>
    %1001 = tpu.reciprocal %1000 {approx = true} : vector<2x8x1xf32> -> vector<2x8x1xf32>
    %1002 = vector.broadcast %1001 : vector<2x8x1xf32> to vector<2x8x8xf32>
    %1003 = arith.mulf %998, %1002 : vector<2x8x8xf32>
    %1004 = arith.truncf %1003 : vector<2x8x8xf32> to vector<2x8x8xbf16>
    %1005 = arith.truncf %988 : vector<2x8x8xf32> to vector<2x8x8xbf16>
    "tpu.trace_start"() <{level = 10 : i32, message = "bqk,bkd->bqd"}> : () -> ()
    %cst_253 = arith.constant dense<0.000000e+00> : vector<2x8x8xf32>
    %1006 = tpu.matmul %1004, %1005, %cst_253 {dimension_numbers = #tpu.dot_dimension_numbers<[2], [1], [1], [2], [0, 0, 0, 1, 1, 2], [0], [0]>} : vector<2x8x8xbf16>, vector<2x8x8xbf16>, vector<2x8x8xf32> -> vector<2x8x8xf32>
    "tpu.trace_stop"() : () -> ()
    %1007 = vector.shape_cast %1006 : vector<2x8x8xf32> to vector<16x8xf32>
    %1008 = vector.extract_strided_slice %946 {offsets = [8, 0], sizes = [8, 32], strides = [1, 1]} : vector<32x32xbf16> to vector<8x32xbf16>
    %1009 = arith.truncf %1007 : vector<16x8xf32> to vector<16x8xbf16>
    %cst_254 = arith.constant dense<0.000000e+00> : vector<16x32xf32>
    %1010 = tpu.matmul %1009, %1008, %cst_254 {dimension_numbers = #tpu.dot_dimension_numbers<[1], [0], [0], [1], [0, 0, 1, 1], [], []>} : vector<16x8xbf16>, vector<8x32xbf16>, vector<16x32xf32> -> vector<16x32xf32>
    %1011 = arith.addf %982, %1010 : vector<16x32xf32>
    %1012 = vector.extract_strided_slice %948 {offsets = [0, 16], sizes = [16, 8], strides = [1, 1]} : vector<16x32xf32> to vector<16x8xf32>
    %1013 = vector.shape_cast %1012 : vector<16x8xf32> to vector<2x8x8xf32>
    %1014 = vector.extract_strided_slice %950 {offsets = [0, 16], sizes = [16, 8], strides = [1, 1]} : vector<16x32xf32> to vector<16x8xf32>
    %1015 = vector.shape_cast %1014 : vector<16x8xf32> to vector<2x8x8xf32>
    %1016 = vector.extract_strided_slice %952 {offsets = [0, 16], sizes = [16, 8], strides = [1, 1]} : vector<16x32xf32> to vector<16x8xf32>
    %1017 = vector.shape_cast %1016 : vector<16x8xf32> to vector<2x8x8xf32>
    %1018 = arith.truncf %1013 : vector<2x8x8xf32> to vector<2x8x8xbf16>
    %1019 = arith.truncf %1015 : vector<2x8x8xf32> to vector<2x8x8xbf16>
    "tpu.trace_start"() <{level = 10 : i32, message = "bqd,bkd->bqk"}> : () -> ()
    %cst_255 = arith.constant dense<0.000000e+00> : vector<2x8x8xf32>
    %1020 = tpu.matmul %1018, %1019, %cst_255 {dimension_numbers = #tpu.dot_dimension_numbers<[2], [2], [1], [1], [0, 0, 0, 1, 1, 1], [0], [0]>} : vector<2x8x8xbf16>, vector<2x8x8xbf16>, vector<2x8x8xf32> -> vector<2x8x8xf32>
    "tpu.trace_stop"() : () -> ()
    %1021 = vector.broadcast %4 : vector<2x1x8xf32> to vector<2x8x8xf32>
    %1022 = arith.addf %1020, %1021 : vector<2x8x8xf32>
    %cst_256 = arith.constant dense<0xFF800000> : vector<2x8xf32>
    %1023 = vector.multi_reduction <maximumf>, %1022, %cst_256 [2] : vector<2x8x8xf32> to vector<2x8xf32>
    %1024 = vector.shape_cast %1023 : vector<2x8xf32> to vector<2x8x1xf32>
    %1025 = vector.broadcast %1024 : vector<2x8x1xf32> to vector<2x8x8xf32>
    %1026 = arith.subf %1022, %1025 : vector<2x8x8xf32>
    %1027 = math.exp %1026 : vector<2x8x8xf32>
    %cst_257 = arith.constant dense<0.000000e+00> : vector<2x8xf32>
    %1028 = vector.multi_reduction <add>, %1027, %cst_257 [2] : vector<2x8x8xf32> to vector<2x8xf32>
    %1029 = vector.shape_cast %1028 : vector<2x8xf32> to vector<2x8x1xf32>
    %1030 = tpu.reciprocal %1029 {approx = true} : vector<2x8x1xf32> -> vector<2x8x1xf32>
    %1031 = vector.broadcast %1030 : vector<2x8x1xf32> to vector<2x8x8xf32>
    %1032 = arith.mulf %1027, %1031 : vector<2x8x8xf32>
    %1033 = arith.truncf %1032 : vector<2x8x8xf32> to vector<2x8x8xbf16>
    %1034 = arith.truncf %1017 : vector<2x8x8xf32> to vector<2x8x8xbf16>
    "tpu.trace_start"() <{level = 10 : i32, message = "bqk,bkd->bqd"}> : () -> ()
    %cst_258 = arith.constant dense<0.000000e+00> : vector<2x8x8xf32>
    %1035 = tpu.matmul %1033, %1034, %cst_258 {dimension_numbers = #tpu.dot_dimension_numbers<[2], [1], [1], [2], [0, 0, 0, 1, 1, 2], [0], [0]>} : vector<2x8x8xbf16>, vector<2x8x8xbf16>, vector<2x8x8xf32> -> vector<2x8x8xf32>
    "tpu.trace_stop"() : () -> ()
    %1036 = vector.shape_cast %1035 : vector<2x8x8xf32> to vector<16x8xf32>
    %1037 = vector.extract_strided_slice %946 {offsets = [16, 0], sizes = [8, 32], strides = [1, 1]} : vector<32x32xbf16> to vector<8x32xbf16>
    %1038 = arith.truncf %1036 : vector<16x8xf32> to vector<16x8xbf16>
    %cst_259 = arith.constant dense<0.000000e+00> : vector<16x32xf32>
    %1039 = tpu.matmul %1038, %1037, %cst_259 {dimension_numbers = #tpu.dot_dimension_numbers<[1], [0], [0], [1], [0, 0, 1, 1], [], []>} : vector<16x8xbf16>, vector<8x32xbf16>, vector<16x32xf32> -> vector<16x32xf32>
    %1040 = arith.addf %1011, %1039 : vector<16x32xf32>
    %1041 = vector.extract_strided_slice %948 {offsets = [0, 24], sizes = [16, 8], strides = [1, 1]} : vector<16x32xf32> to vector<16x8xf32>
    %1042 = vector.shape_cast %1041 : vector<16x8xf32> to vector<2x8x8xf32>
    %1043 = vector.extract_strided_slice %950 {offsets = [0, 24], sizes = [16, 8], strides = [1, 1]} : vector<16x32xf32> to vector<16x8xf32>
    %1044 = vector.shape_cast %1043 : vector<16x8xf32> to vector<2x8x8xf32>
    %1045 = vector.extract_strided_slice %952 {offsets = [0, 24], sizes = [16, 8], strides = [1, 1]} : vector<16x32xf32> to vector<16x8xf32>
    %1046 = vector.shape_cast %1045 : vector<16x8xf32> to vector<2x8x8xf32>
    %1047 = arith.truncf %1042 : vector<2x8x8xf32> to vector<2x8x8xbf16>
    %1048 = arith.truncf %1044 : vector<2x8x8xf32> to vector<2x8x8xbf16>
    "tpu.trace_start"() <{level = 10 : i32, message = "bqd,bkd->bqk"}> : () -> ()
    %cst_260 = arith.constant dense<0.000000e+00> : vector<2x8x8xf32>
    %1049 = tpu.matmul %1047, %1048, %cst_260 {dimension_numbers = #tpu.dot_dimension_numbers<[2], [2], [1], [1], [0, 0, 0, 1, 1, 1], [0], [0]>} : vector<2x8x8xbf16>, vector<2x8x8xbf16>, vector<2x8x8xf32> -> vector<2x8x8xf32>
    "tpu.trace_stop"() : () -> ()
    %1050 = vector.broadcast %4 : vector<2x1x8xf32> to vector<2x8x8xf32>
    %1051 = arith.addf %1049, %1050 : vector<2x8x8xf32>
    %cst_261 = arith.constant dense<0xFF800000> : vector<2x8xf32>
    %1052 = vector.multi_reduction <maximumf>, %1051, %cst_261 [2] : vector<2x8x8xf32> to vector<2x8xf32>
    %1053 = vector.shape_cast %1052 : vector<2x8xf32> to vector<2x8x1xf32>
    %1054 = vector.broadcast %1053 : vector<2x8x1xf32> to vector<2x8x8xf32>
    %1055 = arith.subf %1051, %1054 : vector<2x8x8xf32>
    %1056 = math.exp %1055 : vector<2x8x8xf32>
    %cst_262 = arith.constant dense<0.000000e+00> : vector<2x8xf32>
    %1057 = vector.multi_reduction <add>, %1056, %cst_262 [2] : vector<2x8x8xf32> to vector<2x8xf32>
    %1058 = vector.shape_cast %1057 : vector<2x8xf32> to vector<2x8x1xf32>
    %1059 = tpu.reciprocal %1058 {approx = true} : vector<2x8x1xf32> -> vector<2x8x1xf32>
    %1060 = vector.broadcast %1059 : vector<2x8x1xf32> to vector<2x8x8xf32>
    %1061 = arith.mulf %1056, %1060 : vector<2x8x8xf32>
    %1062 = arith.truncf %1061 : vector<2x8x8xf32> to vector<2x8x8xbf16>
    %1063 = arith.truncf %1046 : vector<2x8x8xf32> to vector<2x8x8xbf16>
    "tpu.trace_start"() <{level = 10 : i32, message = "bqk,bkd->bqd"}> : () -> ()
    %cst_263 = arith.constant dense<0.000000e+00> : vector<2x8x8xf32>
    %1064 = tpu.matmul %1062, %1063, %cst_263 {dimension_numbers = #tpu.dot_dimension_numbers<[2], [1], [1], [2], [0, 0, 0, 1, 1, 2], [0], [0]>} : vector<2x8x8xbf16>, vector<2x8x8xbf16>, vector<2x8x8xf32> -> vector<2x8x8xf32>
    "tpu.trace_stop"() : () -> ()
    %1065 = vector.shape_cast %1064 : vector<2x8x8xf32> to vector<16x8xf32>
    %1066 = vector.extract_strided_slice %946 {offsets = [24, 0], sizes = [8, 32], strides = [1, 1]} : vector<32x32xbf16> to vector<8x32xbf16>
    %1067 = arith.truncf %1065 : vector<16x8xf32> to vector<16x8xbf16>
    %cst_264 = arith.constant dense<0.000000e+00> : vector<16x32xf32>
    %1068 = tpu.matmul %1067, %1066, %cst_264 {dimension_numbers = #tpu.dot_dimension_numbers<[1], [0], [0], [1], [0, 0, 1, 1], [], []>} : vector<16x8xbf16>, vector<8x32xbf16>, vector<16x32xf32> -> vector<16x32xf32>
    %1069 = arith.addf %1040, %1068 : vector<16x32xf32>
    %1070 = arith.addf %925, %1069 : vector<16x32xf32>
    %1071 = vector.extract_strided_slice %425 {offsets = [1, 0], sizes = [1, 32], strides = [1, 1]} : vector<2x32xf32> to vector<1x32xf32>
    %1072 = arith.mulf %1070, %1070 : vector<16x32xf32>
    %cst_265 = arith.constant dense<0.000000e+00> : vector<16xf32>
    %1073 = vector.multi_reduction <add>, %1072, %cst_265 [1] : vector<16x32xf32> to vector<16xf32>
    %1074 = vector.shape_cast %1073 : vector<16xf32> to vector<16x1xf32>
    %cst_266 = arith.constant 3.200000e+01 : f32
    %1075 = vector.broadcast %cst_266 : f32 to vector<16x1xf32>
    %1076 = arith.divf %1074, %1075 : vector<16x1xf32>
    %cst_267 = arith.constant 9.99999997E-7 : f32
    %1077 = vector.broadcast %cst_267 : f32 to vector<16x1xf32>
    %1078 = arith.addf %1076, %1077 : vector<16x1xf32>
    %1079 = math.rsqrt %1078 : vector<16x1xf32>
    %1080 = vector.broadcast %1079 : vector<16x1xf32> to vector<16x32xf32>
    %1081 = arith.mulf %1070, %1080 : vector<16x32xf32>
    %1082 = vector.broadcast %1071 : vector<1x32xf32> to vector<16x32xf32>
    %1083 = arith.mulf %1081, %1082 : vector<16x32xf32>
    %1084 = vector.extract_strided_slice %423 {offsets = [1, 0, 0], sizes = [1, 32, 64], strides = [1, 1, 1]} : vector<2x32x64xbf16> to vector<1x32x64xbf16>
    %1085 = vector.shape_cast %1084 : vector<1x32x64xbf16> to vector<32x64xbf16>
    %1086 = arith.truncf %1083 : vector<16x32xf32> to vector<16x32xbf16>
    %cst_268 = arith.constant dense<0.000000e+00> : vector<16x64xf32>
    %1087 = tpu.matmul %1086, %1085, %cst_268 {dimension_numbers = #tpu.dot_dimension_numbers<[1], [0], [0], [1], [0, 0, 1, 1], [], []>} : vector<16x32xbf16>, vector<32x64xbf16>, vector<16x64xf32> -> vector<16x64xf32>
    %cst_269 = arith.constant 0.000000e+00 : f32
    %1088 = vector.broadcast %cst_269 : f32 to vector<16x64xf32>
    %1089 = arith.maximumf %1087, %1088 : vector<16x64xf32>
    %1090 = vector.extract_strided_slice %424 {offsets = [1, 0, 0], sizes = [1, 64, 32], strides = [1, 1, 1]} : vector<2x64x32xbf16> to vector<1x64x32xbf16>
    %1091 = vector.shape_cast %1090 : vector<1x64x32xbf16> to vector<64x32xbf16>
    %1092 = arith.truncf %1089 : vector<16x64xf32> to vector<16x64xbf16>
    %cst_270 = arith.constant dense<0.000000e+00> : vector<16x32xf32>
    %1093 = tpu.matmul %1092, %1091, %cst_270 {dimension_numbers = #tpu.dot_dimension_numbers<[1], [0], [0], [1], [0, 0, 1, 1], [], []>} : vector<16x64xbf16>, vector<64x32xbf16>, vector<16x32xf32> -> vector<16x32xf32>
    %1094 = arith.addf %1070, %1093 : vector<16x32xf32>
    %1095 = arith.mulf %1094, %1094 : vector<16x32xf32>
    %cst_271 = arith.constant dense<0.000000e+00> : vector<16xf32>
    %1096 = vector.multi_reduction <add>, %1095, %cst_271 [1] : vector<16x32xf32> to vector<16xf32>
    %1097 = vector.shape_cast %1096 : vector<16xf32> to vector<16x1xf32>
    %cst_272 = arith.constant 3.200000e+01 : f32
    %1098 = vector.broadcast %cst_272 : f32 to vector<16x1xf32>
    %1099 = arith.divf %1097, %1098 : vector<16x1xf32>
    %cst_273 = arith.constant 9.99999997E-7 : f32
    %1100 = vector.broadcast %cst_273 : f32 to vector<16x1xf32>
    %1101 = arith.addf %1099, %1100 : vector<16x1xf32>
    %1102 = math.rsqrt %1101 : vector<16x1xf32>
    %1103 = vector.broadcast %1102 : vector<16x1xf32> to vector<16x32xf32>
    %1104 = arith.mulf %1094, %1103 : vector<16x32xf32>
    %1105 = vector.broadcast %426 : vector<1x32xf32> to vector<16x32xf32>
    %1106 = arith.mulf %1104, %1105 : vector<16x32xf32>
    %cst_274 = arith.constant 0.176776692 : f32
    %1107 = vector.broadcast %cst_274 : f32 to vector<16x32xf32>
    %1108 = arith.mulf %1106, %1107 : vector<16x32xf32>
    %1109 = arith.truncf %1108 : vector<16x32xf32> to vector<16x32xbf16>
    %cst_275 = arith.constant dense<0.000000e+00> : vector<16x64xf32>
    %1110 = tpu.matmul %1109, %1, %cst_275 {dimension_numbers = #tpu.dot_dimension_numbers<[1], [0], [0], [1], [0, 0, 1, 1], [], []>} : vector<16x32xbf16>, vector<32x64xbf16>, vector<16x64xf32> -> vector<16x64xf32>
    %c0_276 = arith.constant 0 : index
    %c0_277 = arith.constant 0 : index
    %1111 = vector.load %arg33[%c0_276, %c0_277] : memref<16x64xf32, #tpu.memory_space<vmem>>, vector<16x64xf32>
    tpu.vector_store %arg33[%c0_276, %c0_277], %1110 {strides = array<i32>} : memref<16x64xf32, #tpu.memory_space<vmem>>, vector<16x64xf32>,
    %c0_278 = arith.constant 0 : index
    %c0_279 = arith.constant 0 : index
    %1112 = vector.load %arg2[%c0_278, %c0_279] : memref<16x1xi32, #tpu.memory_space<vmem>>, vector<16x1xi32>
    %c-100_i32 = arith.constant -100 : i32
    %1113 = vector.broadcast %c-100_i32 : i32 to vector<16x1xi32>
    %1114 = arith.cmpi ne, %1112, %1113 : vector<16x1xi32>
    %1115 = arith.extui %1114 : vector<16x1xi1> to vector<16x1xi32>
    %1116 = arith.sitofp %1115 : vector<16x1xi32> to vector<16x1xf32>
    %1117 = tpu.iota {dimensions = array<i32: 1>} : vector<16x64xi32>
    %cst_280 = arith.constant dense<0xFF800000> : vector<16xf32>
    %1118 = vector.multi_reduction <maximumf>, %1110, %cst_280 [1] : vector<16x64xf32> to vector<16xf32>
    %1119 = vector.shape_cast %1118 : vector<16xf32> to vector<16x1xf32>
    %1120 = vector.broadcast %1119 : vector<16x1xf32> to vector<16x64xf32>
    %1121 = arith.subf %1110, %1120 : vector<16x64xf32>
    %1122 = math.exp %1121 : vector<16x64xf32>
    %cst_281 = arith.constant dense<0.000000e+00> : vector<16xf32>
    %1123 = vector.multi_reduction <add>, %1122, %cst_281 [1] : vector<16x64xf32> to vector<16xf32>
    %1124 = vector.shape_cast %1123 : vector<16xf32> to vector<16x1xf32>
    %1125 = math.log %1124 : vector<16x1xf32>
    %1126 = arith.addf %1125, %1119 : vector<16x1xf32>
    %1127 = vector.broadcast %1112 : vector<16x1xi32> to vector<16x64xi32>
    %1128 = arith.cmpi eq, %1127, %1117 : vector<16x64xi32>
    %cst_282 = arith.constant 0.000000e+00 : f32
    %1129 = vector.broadcast %cst_282 : f32 to vector<16x64xf32>
    %1130 = arith.select %1128, %1110, %1129 : vector<16x64xi1>, vector<16x64xf32>
    %cst_283 = arith.constant dense<0.000000e+00> : vector<16xf32>
    %1131 = vector.multi_reduction <add>, %1130, %cst_283 [1] : vector<16x64xf32> to vector<16xf32>
    %1132 = vector.shape_cast %1131 : vector<16xf32> to vector<16x1xf32>
    %1133 = arith.subf %1126, %1132 : vector<16x1xf32>
    %1134 = arith.mulf %1133, %1116 : vector<16x1xf32>
    %1135 = vector.shape_cast %1134 : vector<16x1xf32> to vector<1x16x1xf32>
    %cst_284 = arith.constant dense<0.000000e+00> : vector<1xf32>
    %1136 = vector.multi_reduction <add>, %1135, %cst_284 [1, 2] : vector<1x16x1xf32> to vector<1xf32>
    %1137 = vector.shape_cast %1136 : vector<1xf32> to vector<1x1x1xf32>
    %1138 = vector.extract %1137[0, 0, 0] : f32 from vector<1x1x1xf32>
    %1139 = vector.broadcast %1138 : f32 to vector<1x1xf32>
    %1140 = vector.shape_cast %1116 : vector<16x1xf32> to vector<1x16x1xf32>
    %cst_285 = arith.constant dense<0.000000e+00> : vector<1xf32>
    %1141 = vector.multi_reduction <add>, %1140, %cst_285 [1, 2] : vector<1x16x1xf32> to vector<1xf32>
    %1142 = vector.shape_cast %1141 : vector<1xf32> to vector<1x1x1xf32>
    %1143 = vector.extract %1142[0, 0, 0] : f32 from vector<1x1x1xf32>
    %1144 = vector.broadcast %1143 : f32 to vector<1x1xf32>
    %cst_286 = arith.constant 1.000000e+00 : f32
    %1145 = vector.broadcast %cst_286 : f32 to vector<1x1xf32>
    %1146 = arith.maximumf %1144, %1145 : vector<1x1xf32>
    %1147 = arith.divf %1139, %1146 : vector<1x1xf32>
    %c0_287 = arith.constant 0 : index
    %c0_288 = arith.constant 0 : index
    %1148 = vector.load %arg32[%c0_287, %c0_288] : memref<1x1xf32, #tpu.memory_space<vmem>>, vector<1x1xf32>
    tpu.vector_store %arg32[%c0_287, %c0_288], %1147 {strides = array<i32>} : memref<1x1xf32, #tpu.memory_space<vmem>>, vector<1x1xf32>,
    return
  }
}

</mosaic_0001>

<llo_original>
// kernel: t5_forward.1
$region0: #{t5_forward.1}
  #allocation0 [shape = 'u32[]', space=smem, size = 0x4, offset = 0x4, fixed_abs, tag = 'smem constant byte address 0x4 - core index']
  #allocation1 [shape = 'u32[144,128]{1,0:T(1,128)}', space=vmem, size = 0x12000, scoped, tag = 'internal scratch']
  %s0 = inlined_call_operand.smem [shape: u32[34], index: -1, kind: input, shape index: {}]
  %s1 = sld [smem:[%s0]]
  %s2 = scalar_lea.smem %s0, 1
  %s3 = sld [smem:[%s2]]
  %s4 = scalar_lea.smem %s0, 2
  %s5 = sld [smem:[%s4]]
  %s6 = scalar_lea.smem %s0, 3
  %s7 = sld [smem:[%s6]]
  %s8 = scalar_lea.smem %s0, 4
  %s9 = sld [smem:[%s8]]
  %s10 = scalar_lea.smem %s0, 5
  %s11 = sld [smem:[%s10]]
  %s12 = scalar_lea.smem %s0, 6
  %s13 = sld [smem:[%s12]]
  %s14 = scalar_lea.smem %s0, 7
  %s15 = sld [smem:[%s14]]
  %s16 = scalar_lea.smem %s0, 8
  %s17 = sld [smem:[%s16]]
  %s18 = scalar_lea.smem %s0, 9
  %s19 = sld [smem:[%s18]]
  %s20 = scalar_lea.smem %s0, 10
  %s21 = sld [smem:[%s20]]
  %s22 = scalar_lea.smem %s0, 11
  %s23 = sld [smem:[%s22]]
  %s24 = scalar_lea.smem %s0, 12
  %s25 = sld [smem:[%s24]]
  %s26 = scalar_lea.smem %s0, 13
  %s27 = sld [smem:[%s26]]
  %s28 = scalar_lea.smem %s0, 14
  %s29 = sld [smem:[%s28]]
  %s30 = scalar_lea.smem %s0, 15
  %s31 = sld [smem:[%s30]]
  %s32 = scalar_lea.smem %s0, 16
  %s33 = sld [smem:[%s32]]
  %s34 = scalar_lea.smem %s0, 17
  %s35 = sld [smem:[%s34]]
  %s36 = scalar_lea.smem %s0, 18
  %s37 = sld [smem:[%s36]]
  %s38 = scalar_lea.smem %s0, 19
  %s39 = sld [smem:[%s38]]
  %s40 = scalar_lea.smem %s0, 20
  %s41 = sld [smem:[%s40]]
  %s42 = scalar_lea.smem %s0, 21
  %s43 = sld [smem:[%s42]]
  %s44 = scalar_lea.smem %s0, 22
  %s45 = sld [smem:[%s44]]
  %s46 = scalar_lea.smem %s0, 23
  %s47 = sld [smem:[%s46]]
  %s48 = scalar_lea.smem %s0, 24
  %s49 = sld [smem:[%s48]]
  %s50 = scalar_lea.smem %s0, 25
  %s51 = sld [smem:[%s50]]
  %s52 = scalar_lea.smem %s0, 26
  %s53 = sld [smem:[%s52]]
  %s54 = scalar_lea.smem %s0, 27
  %s55 = sld [smem:[%s54]]
  %s56 = scalar_lea.smem %s0, 28
  %s57 = sld [smem:[%s56]]
  %s58 = scalar_lea.smem %s0, 29
  %s59 = sld [smem:[%s58]]
  %s60 = scalar_lea.smem %s0, 30
  %s61 = sld [smem:[%s60]]
  %s62 = scalar_lea.smem %s0, 31
  %s63 = sld [smem:[%s62]]
  %s64 = scalar_lea.smem %s0, 32
  %s65 = sld [smem:[%s64]]
  %s66 = scalar_lea.smem %s0, 33
  %s67 = sld [smem:[%s66]]
  %68 = xla_tuple %s65, %s67
  %s69 = sld [smem:[#allocation0]]
  $region146: #{t5_forward.1} parent=0
    _
  %s71 = ssub.s32 1, %s69
  %s72 = scalar_select 0, %s71, %s69
  $region1: #{t5_forward.1} parent=0
    #allocation2 [shape = 'u8[512]{0}', space=vmem, size = 0x400, scoped, tag = 'output window, operand 0, single buffered']
    #allocation3 [shape = 's32[1]{0}', space=sflag, size = 0x4, scoped, tag = 'scoped memory for t5_forward.1']
    #allocation4 [shape = 'u8[8192]{0}', space=vmem, size = 0x2000, scoped, tag = 'output window, operand 1, single buffered']
    #allocation5 [shape = 's32[1]{0}', space=sflag, size = 0x4, scoped, tag = 'scoped memory for t5_forward.1']
    %73 = vsyncpa [#allocation3], 0
    %74 = vsyncpa [#allocation5], 0
    // Predicated region
    $region2: #{t5_forward.1} parent=1 // pred_check
      _
    $region3: #{t5_forward.1} parent=1 // pred_check_branch
      %76 = sbr.rel (0) target = $region5
    $region4: #{t5_forward.1} parent=1 // pred_region
      _
    $region5: #{t5_forward.1} parent=1 // pred_fallthru
      _
    // Predicated region
    $region6: #{t5_forward.1} parent=1 // pred_check
      _
    $region7: #{t5_forward.1} parent=1 // pred_check_branch
      %78 = sbr.rel (0) target = $region9
    $region8: #{t5_forward.1} parent=1 // pred_region
      _
    $region9: #{t5_forward.1} parent=1 // pred_fallthru
      _
    // Predicated region
    $region10: #{t5_forward.1} parent=1 // pred_check
      _
    $region11: #{t5_forward.1} parent=1 // pred_check_branch
      %80 = sbr.rel (0) target = $region13
    $region12: #{t5_forward.1} parent=1 // pred_region
      _
    $region13: #{t5_forward.1} parent=1 // pred_fallthru
      _
    // Predicated region
    $region14: #{t5_forward.1} parent=1 // pred_check
      _
    $region15: #{t5_forward.1} parent=1 // pred_check_branch
      %82 = sbr.rel (0) target = $region17
    $region16: #{t5_forward.1} parent=1 // pred_region
      _
    $region17: #{t5_forward.1} parent=1 // pred_fallthru
      _
    // Predicated region
    $region18: #{t5_forward.1} parent=1 // pred_check
      _
    $region19: #{t5_forward.1} parent=1 // pred_check_branch
      %84 = sbr.rel (0) target = $region21
    $region20: #{t5_forward.1} parent=1 // pred_region
      _
    $region21: #{t5_forward.1} parent=1 // pred_fallthru
      _
    // Predicated region
    $region22: #{t5_forward.1} parent=1 // pred_check
      _
    $region23: #{t5_forward.1} parent=1 // pred_check_branch
      %86 = sbr.rel (0) target = $region25
    $region24: #{t5_forward.1} parent=1 // pred_region
      _
    $region25: #{t5_forward.1} parent=1 // pred_fallthru
      _
    // Predicated region
    $region26: #{t5_forward.1} parent=1 // pred_check
      _
    $region27: #{t5_forward.1} parent=1 // pred_check_branch
      %88 = sbr.rel (0) target = $region29
    $region28: #{t5_forward.1} parent=1 // pred_region
      _
    $region29: #{t5_forward.1} parent=1 // pred_fallthru
      _
    // Predicated region
    $region30: #{t5_forward.1} parent=1 // pred_check
      _
    $region31: #{t5_forward.1} parent=1 // pred_check_branch
      %90 = sbr.rel (0) target = $region33
    $region32: #{t5_forward.1} parent=1 // pred_region
      _
    $region33: #{t5_forward.1} parent=1 // pred_fallthru
      _
    // Predicated region
    $region34: #{t5_forward.1} parent=1 // pred_check
      _
    $region35: #{t5_forward.1} parent=1 // pred_check_branch
      %92 = sbr.rel (0) target = $region37
    $region36: #{t5_forward.1} parent=1 // pred_region
      _
    $region37: #{t5_forward.1} parent=1 // pred_fallthru
      _
    // Predicated region
    $region38: #{t5_forward.1} parent=1 // pred_check
      _
    $region39: #{t5_forward.1} parent=1 // pred_check_branch
      %94 = sbr.rel (0) target = $region41
    $region40: #{t5_forward.1} parent=1 // pred_region
      _
    $region41: #{t5_forward.1} parent=1 // pred_fallthru
      _
    // Predicated region
    $region42: #{t5_forward.1} parent=1 // pred_check
      _
    $region43: #{t5_forward.1} parent=1 // pred_check_branch
      %96 = sbr.rel (0) target = $region45
    $region44: #{t5_forward.1} parent=1 // pred_region
      _
    $region45: #{t5_forward.1} parent=1 // pred_fallthru
      _
    // Predicated region
    $region46: #{t5_forward.1} parent=1 // pred_check
      _
    $region47: #{t5_forward.1} parent=1 // pred_check_branch
      %98 = sbr.rel (0) target = $region49
    $region48: #{t5_forward.1} parent=1 // pred_region
      _
    $region49: #{t5_forward.1} parent=1 // pred_fallthru
      _
    // Predicated region
    $region50: #{t5_forward.1} parent=1 // pred_check
      _
    $region51: #{t5_forward.1} parent=1 // pred_check_branch
      %100 = sbr.rel (0) target = $region53
    $region52: #{t5_forward.1} parent=1 // pred_region
      _
    $region53: #{t5_forward.1} parent=1 // pred_fallthru
      _
    // Predicated region
    $region54: #{t5_forward.1} parent=1 // pred_check
      _
    $region55: #{t5_forward.1} parent=1 // pred_check_branch
      %102 = sbr.rel (0) target = $region57
    $region56: #{t5_forward.1} parent=1 // pred_region
      _
    $region57: #{t5_forward.1} parent=1 // pred_fallthru
      _
    // Predicated region
    $region58: #{t5_forward.1} parent=1 // pred_check
      _
    $region59: #{t5_forward.1} parent=1 // pred_check_branch
      %104 = sbr.rel (0) target = $region61
    $region60: #{t5_forward.1} parent=1 // pred_region
      _
    $region61: #{t5_forward.1} parent=1 // pred_fallthru
      _
    // Predicated region
    $region62: #{t5_forward.1} parent=1 // pred_check
      _
    $region63: #{t5_forward.1} parent=1 // pred_check_branch
      %106 = sbr.rel (0) target = $region65
    $region64: #{t5_forward.1} parent=1 // pred_region
      _
    $region65: #{t5_forward.1} parent=1 // pred_fallthru
      _
    // Predicated region
    $region66: #{t5_forward.1} parent=1 // pred_check
      _
    $region67: #{t5_forward.1} parent=1 // pred_check_branch
      %108 = sbr.rel (0) target = $region69
    $region68: #{t5_forward.1} parent=1 // pred_region
      _
    $region69: #{t5_forward.1} parent=1 // pred_fallthru
      _
    // Predicated region
    $region70: #{t5_forward.1} parent=1 // pred_check
      _
    $region71: #{t5_forward.1} parent=1 // pred_check_branch
      %110 = sbr.rel (0) target = $region73
    $region72: #{t5_forward.1} parent=1 // pred_region
      _
    $region73: #{t5_forward.1} parent=1 // pred_fallthru
      _
    // Predicated region
    $region74: #{t5_forward.1} parent=1 // pred_check
      _
    $region75: #{t5_forward.1} parent=1 // pred_check_branch
      %112 = sbr.rel (0) target = $region77
    $region76: #{t5_forward.1} parent=1 // pred_region
      _
    $region77: #{t5_forward.1} parent=1 // pred_fallthru
      _
    // Predicated region
    $region78: #{t5_forward.1} parent=1 // pred_check
      _
    $region79: #{t5_forward.1} parent=1 // pred_check_branch
      %114 = sbr.rel (0) target = $region81
    $region80: #{t5_forward.1} parent=1 // pred_region
      _
    $region81: #{t5_forward.1} parent=1 // pred_fallthru
      _
    // Predicated region
    $region82: #{t5_forward.1} parent=1 // pred_check
      _
    $region83: #{t5_forward.1} parent=1 // pred_check_branch
      %116 = sbr.rel (0) target = $region85
    $region84: #{t5_forward.1} parent=1 // pred_region
      _
    $region85: #{t5_forward.1} parent=1 // pred_fallthru
      _
    // Predicated region
    $region86: #{t5_forward.1} parent=1 // pred_check
      _
    $region87: #{t5_forward.1} parent=1 // pred_check_branch
      %118 = sbr.rel (0) target = $region89
    $region88: #{t5_forward.1} parent=1 // pred_region
      _
    $region89: #{t5_forward.1} parent=1 // pred_fallthru
      _
    // Predicated region
    $region90: #{t5_forward.1} parent=1 // pred_check
      _
    $region91: #{t5_forward.1} parent=1 // pred_check_branch
      %120 = sbr.rel (0) target = $region93
    $region92: #{t5_forward.1} parent=1 // pred_region
      _
    $region93: #{t5_forward.1} parent=1 // pred_fallthru
      _
    // Predicated region
    $region94: #{t5_forward.1} parent=1 // pred_check
      _
    $region95: #{t5_forward.1} parent=1 // pred_check_branch
      %122 = sbr.rel (0) target = $region97
    $region96: #{t5_forward.1} parent=1 // pred_region
      _
    $region97: #{t5_forward.1} parent=1 // pred_fallthru
      _
    // Predicated region
    $region98: #{t5_forward.1} parent=1 // pred_check
      _
    $region99: #{t5_forward.1} parent=1 // pred_check_branch
      %124 = sbr.rel (0) target = $region101
    $region100: #{t5_forward.1} parent=1 // pred_region
      _
    $region101: #{t5_forward.1} parent=1 // pred_fallthru
      _
    // Predicated region
    $region102: #{t5_forward.1} parent=1 // pred_check
      _
    $region103: #{t5_forward.1} parent=1 // pred_check_branch
      %126 = sbr.rel (0) target = $region105
    $region104: #{t5_forward.1} parent=1 // pred_region
      _
    $region105: #{t5_forward.1} parent=1 // pred_fallthru
      _
    // Predicated region
    $region106: #{t5_forward.1} parent=1 // pred_check
      _
    $region107: #{t5_forward.1} parent=1 // pred_check_branch
      %128 = sbr.rel (0) target = $region109
    $region108: #{t5_forward.1} parent=1 // pred_region
      _
    $region109: #{t5_forward.1} parent=1 // pred_fallthru
      _
    // Predicated region
    $region110: #{t5_forward.1} parent=1 // pred_check
      _
    $region111: #{t5_forward.1} parent=1 // pred_check_branch
      %130 = sbr.rel (0) target = $region113
    $region112: #{t5_forward.1} parent=1 // pred_region
      _
    $region113: #{t5_forward.1} parent=1 // pred_fallthru
      _
    // Predicated region
    $region114: #{t5_forward.1} parent=1 // pred_check
      _
    $region115: #{t5_forward.1} parent=1 // pred_check_branch
      %132 = sbr.rel (0) target = $region117
    $region116: #{t5_forward.1} parent=1 // pred_region
      _
    $region117: #{t5_forward.1} parent=1 // pred_fallthru
      _
    // Predicated region
    $region118: #{t5_forward.1} parent=1 // pred_check
      _
    $region119: #{t5_forward.1} parent=1 // pred_check_branch
      %134 = sbr.rel (0) target = $region121
    $region120: #{t5_forward.1} parent=1 // pred_region
      _
    $region121: #{t5_forward.1} parent=1 // pred_fallthru
      _
    // Predicated region
    $region122: #{t5_forward.1} parent=1 // pred_check
      _
    $region123: #{t5_forward.1} parent=1 // pred_check_branch
      %136 = sbr.rel (0) target = $region125
    $region124: #{t5_forward.1} parent=1 // pred_region
      _
    $region125: #{t5_forward.1} parent=1 // pred_fallthru
      _
    // Predicated region
    $region126: #{t5_forward.1} parent=1 // pred_check
      _
    $region127: #{t5_forward.1} parent=1 // pred_check_branch
      %138 = sbr.rel (0) target = $region129
    $region128: #{t5_forward.1} parent=1 // pred_region
      _
    $region129: #{t5_forward.1} parent=1 // pred_fallthru
      _
    %v140 = vld [vmem:[%s11] sm:$0xf]
    %v141 = vld [vmem:[%s11 + $0x4] sm:$0xf]
    %v142 = vld [vmem:[%s11 + $0x8] sm:$0xf]
    %v143 = vld [vmem:[%s11 + $0xc] sm:$0xf]
    %v144 = vld [vmem:[%s11 + $0x10] sm:$0xf]
    %v145 = vld [vmem:[%s11 + $0x14] sm:$0xf]
    %v146 = vld [vmem:[%s11 + $0x18] sm:$0xf]
    %v147 = vld [vmem:[%s11 + $0x1c] sm:$0xf]
    %v148 = vld [vmem:[%s13] sm:$0xf]
    %v149 = vld [vmem:[%s13 + $0x4] sm:$0xf]
    %v150 = vld [vmem:[%s13 + $0x8] sm:$0xf]
    %v151 = vld [vmem:[%s13 + $0xc] sm:$0xf]
    %v152 = vld [vmem:[%s15] sm:$0xff]
    %v153 = vld [vmem:[%s15 + $0x8] sm:$0xff]
    %v154 = vld [vmem:[%s15 + $0x10] sm:$0xff]
    %v155 = vld [vmem:[%s15 + $0x18] sm:$0xff]
    %v156 = vld [vmem:[%s17] sm:$0xff]
    %v157 = vld [vmem:[%s17 + $0x8] sm:$0xff]
    %v158 = vld [vmem:[%s17 + $0x10] sm:$0xff]
    %v159 = vld [vmem:[%s17 + $0x18] sm:$0xff]
    %v160 = vld [vmem:[%s7] sm:$0x1]
    %v161 = vld [vmem:[%s7 + $0x1] sm:$0x1]
    %v162 = vld [vmem:[%s9] sm:$0xff]
    %v163 = vld [vmem:[%s9 + $0x8] sm:$0xff]
    %v164 = vld [vmem:[%s19] sm:$0xf]
    %v165 = vld [vmem:[%s19 + $0x4] sm:$0xf]
    %v166 = vld [vmem:[%s19 + $0x8] sm:$0xf]
    %v167 = vld [vmem:[%s19 + $0xc] sm:$0xf]
    %v168 = vld [vmem:[%s19 + $0x10] sm:$0xf]
    %v169 = vld [vmem:[%s19 + $0x14] sm:$0xf]
    %v170 = vld [vmem:[%s19 + $0x18] sm:$0xf]
    %v171 = vld [vmem:[%s19 + $0x1c] sm:$0xf]
    %v172 = vld [vmem:[%s21] sm:$0xf]
    %v173 = vld [vmem:[%s21 + $0x4] sm:$0xf]
    %v174 = vld [vmem:[%s21 + $0x8] sm:$0xf]
    %v175 = vld [vmem:[%s21 + $0xc] sm:$0xf]
    %v176 = vld [vmem:[%s21 + $0x10] sm:$0xf]
    %v177 = vld [vmem:[%s21 + $0x14] sm:$0xf]
    %v178 = vld [vmem:[%s21 + $0x18] sm:$0xf]
    %v179 = vld [vmem:[%s21 + $0x1c] sm:$0xf]
    %v180 = vld [vmem:[%s23] sm:$0xf]
    %v181 = vld [vmem:[%s23 + $0x4] sm:$0xf]
    %v182 = vld [vmem:[%s23 + $0x8] sm:$0xf]
    %v183 = vld [vmem:[%s23 + $0xc] sm:$0xf]
    %v184 = vld [vmem:[%s23 + $0x10] sm:$0xf]
    %v185 = vld [vmem:[%s23 + $0x14] sm:$0xf]
    %v186 = vld [vmem:[%s23 + $0x18] sm:$0xf]
    %v187 = vld [vmem:[%s23 + $0x1c] sm:$0xf]
    %v188 = vld [vmem:[%s25] sm:$0xf]
    %v189 = vld [vmem:[%s25 + $0x4] sm:$0xf]
    %v190 = vld [vmem:[%s25 + $0x8] sm:$0xf]
    %v191 = vld [vmem:[%s25 + $0xc] sm:$0xf]
    %v192 = vld [vmem:[%s25 + $0x10] sm:$0xf]
    %v193 = vld [vmem:[%s25 + $0x14] sm:$0xf]
    %v194 = vld [vmem:[%s25 + $0x18] sm:$0xf]
    %v195 = vld [vmem:[%s25 + $0x1c] sm:$0xf]
    %v196 = vld [vmem:[%s27] sm:$0x3]
    %v197 = vld [vmem:[%s29] sm:$0xf]
    %v198 = vld [vmem:[%s29 + $0x4] sm:$0xf]
    %v199 = vld [vmem:[%s29 + $0x8] sm:$0xf]
    %v200 = vld [vmem:[%s29 + $0xc] sm:$0xf]
    %v201 = vld [vmem:[%s29 + $0x10] sm:$0xf]
    %v202 = vld [vmem:[%s29 + $0x14] sm:$0xf]
    %v203 = vld [vmem:[%s29 + $0x18] sm:$0xf]
    %v204 = vld [vmem:[%s29 + $0x1c] sm:$0xf]
    %v205 = vld [vmem:[%s31] sm:$0xf]
    %v206 = vld [vmem:[%s31 + $0x4] sm:$0xf]
    %v207 = vld [vmem:[%s31 + $0x8] sm:$0xf]
    %v208 = vld [vmem:[%s31 + $0xc] sm:$0xf]
    %v209 = vld [vmem:[%s31 + $0x10] sm:$0xf]
    %v210 = vld [vmem:[%s31 + $0x14] sm:$0xf]
    %v211 = vld [vmem:[%s31 + $0x18] sm:$0xf]
    %v212 = vld [vmem:[%s31 + $0x1c] sm:$0xf]
    %v213 = vld [vmem:[%s31 + $0x20] sm:$0xf]
    %v214 = vld [vmem:[%s31 + $0x24] sm:$0xf]
    %v215 = vld [vmem:[%s31 + $0x28] sm:$0xf]
    %v216 = vld [vmem:[%s31 + $0x2c] sm:$0xf]
    %v217 = vld [vmem:[%s31 + $0x30] sm:$0xf]
    %v218 = vld [vmem:[%s31 + $0x34] sm:$0xf]
    %v219 = vld [vmem:[%s31 + $0x38] sm:$0xf]
    %v220 = vld [vmem:[%s31 + $0x3c] sm:$0xf]
    %v221 = vld [vmem:[%s33] sm:$0x3]
    %v222 = vld [vmem:[%s35] sm:$0x1]
    %v223 = vld [vmem:[%s1] sm:$0xff]
    %v224 = vld [vmem:[%s1 + $0x8] sm:$0xff]
    %v225 = vlaneseq
    %v226 = vand.u32 %v225, 127
    %227 = vset.pattern.permute.xlu0 0
    %228 = vperm.xlu0 %227, %v223
    %v229 = vpop.permute.xlu0 %228
    %230 = vset.pattern.permute.xlu0 0
    %231 = vperm.xlu0 %230, %v224
    %v232 = vpop.permute.xlu0 %231
    %vm233 = vcmp.eq.s32.totalorder %v229, %v226
    %vm234 = vcmp.eq.s32.totalorder %v232, %v226
    %v235 = vsel %vm233, 1, 0
    %v236 = vsel %vm234, 1, 0
    %v237 = vcvt.s32.f32 %v235
    %v238 = vcvt.s32.f32 %v236
    %v239 = vpack.c.bf16 %v238, %v237
    %v248 = vunpack.c.l.b16 %v140
    %v249 = vunpack.c.l.b16 %v141
    %v250 = vunpack.c.l.b16 %v142
    %v251 = vunpack.c.l.b16 %v143
    %v252 = vunpack.c.l.b16 %v144
    %v253 = vunpack.c.l.b16 %v145
    %v254 = vunpack.c.l.b16 %v146
    %v255 = vunpack.c.l.b16 %v147
    %v256 = vpack.c.b16 %v249, %v248
    %v257 = vpack.c.b16 %v251, %v250
    %v258 = vpack.c.b16 %v253, %v252
    %v259 = vpack.c.b16 %v255, %v254
    %vm264 = vcmask 523264
    %v266 = vsel %vm264, %v239, 0
    %268 = vmatprep.subr.bf16.mxu0 0
    %269 = vmatpush1.bf16.msra.mxu0 %v256
    %270 = vmatprep.subr.bf16.mxu0 0
    %271 = vmatpush1.bf16.msra.mxu0 %v257
    %272 = vmatprep.subr.bf16.mxu0 0
    %273 = vmatpush1.bf16.msra.mxu0 %v258
    %274 = vmatprep.subr.bf16.mxu0 0
    %275 = vmatpush1.bf16.msra.mxu0 %v259
    %276 = vmatprep.subr.bf16.mxu0 0
    %277 = vmatpush1.bf16.msra.mxu0 0
    %278 = vmatprep.subr.bf16.mxu0 0
    %279 = vmatpush1.bf16.msra.mxu0 0
    %280 = vmatprep.subr.bf16.mxu0 0
    %281 = vmatpush1.bf16.msra.mxu0 0
    %282 = vmatprep.subr.bf16.mxu0 0
    %283 = vmatpush1.bf16.msra.mxu0 0
    %284 = vmatprep.subr.bf16.mxu0 0
    %285 = vmatpush1.bf16.msra.mxu0 0
    %286 = vmatprep.subr.bf16.mxu0 0
    %287 = vmatpush1.bf16.msra.mxu0 0
    %288 = vmatprep.subr.bf16.mxu0 0
    %289 = vmatpush1.bf16.msra.mxu0 0
    %290 = vmatprep.subr.bf16.mxu0 0
    %291 = vmatpush1.bf16.msra.mxu0 0
    %292 = vmatprep.subr.bf16.mxu0 0
    %293 = vmatpush1.bf16.msra.mxu0 0
    %294 = vmatprep.subr.bf16.mxu0 0
    %295 = vmatpush1.bf16.msra.mxu0 0
    %296 = vmatprep.subr.bf16.mxu0 0
    %297 = vmatpush1.bf16.msra.mxu0 0
    %298 = vmatprep.subr.bf16.mxu0 0
    %299 = vmatpush1.bf16.msra.mxu0 0
    %300 = vmatprep.mubr.bf16.mxu0 0
    %301 = vmatmul.mubr.bf16.gmra.mrb[0].mxu0 %v266
    %v302 = vpop.f32.mrb[0].mxu0
    %v303 = vadd.f32 0.0, %v302
    %v304 = vpop.f32.mrb[0].mxu0
    %v305 = vpop.f32.mrb[0].mxu0
    %v306 = vadd.f32 0.0, %v305
    %v307 = vpop.f32.mrb[0].mxu0
    %308 = vdwg.mxu0
    %v309 = vmul.f32 %v303, %v303
    %v310 = vmul.f32 %v306, %v306
    %vm311 = vcmask 261120
    %v312 = vsel %vm311, %v309, 0.0
    %313 = vadd.xlane.f32.xlu0 %v312
    %v314 = vpop.xlane.xlu0 %313
    %v315 = vsel %vm311, %v310, 0.0
    %316 = vadd.xlane.f32.xlu0 %v315
    %v317 = vpop.xlane.xlu0 %316
    %v318 = vrcp.pop 32.0
    %v319 = vmul.f32 %v314, %v318
    %v320 = vmul.f32 %v317, %v318
    %v321 = vadd.f32 %v319, 1e-06
    %v322 = vadd.f32 %v320, 1e-06
    %v323 = vrsqrt.pop %v321
    %v324 = vrsqrt.pop %v322
    %v325 = vmul.f32 %v303, %v323
    %v326 = vmul.f32 %v306, %v324
    %v327 = vlaneseq
    %v328 = vshrl.u32 %v327, 7
    %v329 = vsub.s32 0, %v328
    %v330 = vrot.slane %v196, %v329
    %v331 = vmul.f32 %v325, %v330
    %v332 = vmul.f32 %v326, %v330
    %v333 = vpack.c.bf16 %v332, %v331
    %v338 = vunpack.c.l.b16 %v164
    %v339 = vunpack.c.l.b16 %v165
    %v340 = vunpack.c.l.b16 %v166
    %v341 = vunpack.c.l.b16 %v167
    %v342 = vpack.c.b16 %v339, %v338
    %v343 = vpack.c.b16 %v341, %v340
    %v347 = vsel %vm311, %v333, 0
    %349 = vmatprep.subr.bf16.mxu0 0
    %350 = vmatpush1.bf16.msra.mxu0 %v342
    %351 = vmatprep.subr.bf16.mxu0 0
    %352 = vmatpush1.bf16.msra.mxu0 %v343
    %353 = vmatprep.subr.bf16.mxu0 0
    %354 = vmatpush1.bf16.msra.mxu0 0
    %355 = vmatprep.subr.bf16.mxu0 0
    %356 = vmatpush1.bf16.msra.mxu0 0
    %357 = vmatprep.subr.bf16.mxu0 0
    %358 = vmatpush1.bf16.msra.mxu0 0
    %359 = vmatprep.subr.bf16.mxu0 0
    %360 = vmatpush1.bf16.msra.mxu0 0
    %361 = vmatprep.subr.bf16.mxu0 0
    %362 = vmatpush1.bf16.msra.mxu0 0
    %363 = vmatprep.subr.bf16.mxu0 0
    %364 = vmatpush1.bf16.msra.mxu0 0
    %365 = vmatprep.subr.bf16.mxu0 0
    %366 = vmatpush1.bf16.msra.mxu0 0
    %367 = vmatprep.subr.bf16.mxu0 0
    %368 = vmatpush1.bf16.msra.mxu0 0
    %369 = vmatprep.subr.bf16.mxu0 0
    %370 = vmatpush1.bf16.msra.mxu0 0
    %371 = vmatprep.subr.bf16.mxu0 0
    %372 = vmatpush1.bf16.msra.mxu0 0
    %373 = vmatprep.subr.bf16.mxu0 0
    %374 = vmatpush1.bf16.msra.mxu0 0
    %375 = vmatprep.subr.bf16.mxu0 0
    %376 = vmatpush1.bf16.msra.mxu0 0
    %377 = vmatprep.subr.bf16.mxu0 0
    %378 = vmatpush1.bf16.msra.mxu0 0
    %379 = vmatprep.subr.bf16.mxu0 0
    %380 = vmatpush1.bf16.msra.mxu0 0
    %381 = vmatprep.mubr.bf16.mxu0 0
    %382 = vmatmul.mubr.bf16.gmra.mrb[0].mxu0 %v347
    %v383 = vpop.f32.mrb[0].mxu0
    %v384 = vadd.f32 0.0, %v383
    %v385 = vpop.f32.mrb[0].mxu0
    %v386 = vpop.f32.mrb[0].mxu0
    %v387 = vadd.f32 0.0, %v386
    %v388 = vpop.f32.mrb[0].mxu0
    %389 = vdwg.mxu0
    %v394 = vunpack.c.l.b16 %v172
    %v395 = vunpack.c.l.b16 %v173
    %v396 = vunpack.c.l.b16 %v174
    %v397 = vunpack.c.l.b16 %v175
    %v398 = vpack.c.b16 %v395, %v394
    %v399 = vpack.c.b16 %v397, %v396
    %402 = vmatprep.subr.bf16.mxu0 0
    %403 = vmatpush1.bf16.msra.mxu0 %v398
    %404 = vmatprep.subr.bf16.mxu0 0
    %405 = vmatpush1.bf16.msra.mxu0 %v399
    %406 = vmatprep.subr.bf16.mxu0 0
    %407 = vmatpush1.bf16.msra.mxu0 0
    %408 = vmatprep.subr.bf16.mxu0 0
    %409 = vmatpush1.bf16.msra.mxu0 0
    %410 = vmatprep.subr.bf16.mxu0 0
    %411 = vmatpush1.bf16.msra.mxu0 0
    %412 = vmatprep.subr.bf16.mxu0 0
    %413 = vmatpush1.bf16.msra.mxu0 0
    %414 = vmatprep.subr.bf16.mxu0 0
    %415 = vmatpush1.bf16.msra.mxu0 0
    %416 = vmatprep.subr.bf16.mxu0 0
    %417 = vmatpush1.bf16.msra.mxu0 0
    %418 = vmatprep.subr.bf16.mxu0 0
    %419 = vmatpush1.bf16.msra.mxu0 0
    %420 = vmatprep.subr.bf16.mxu0 0
    %421 = vmatpush1.bf16.msra.mxu0 0
    %422 = vmatprep.subr.bf16.mxu0 0
    %423 = vmatpush1.bf16.msra.mxu0 0
    %424 = vmatprep.subr.bf16.mxu0 0
    %425 = vmatpush1.bf16.msra.mxu0 0
    %426 = vmatprep.subr.bf16.mxu0 0
    %427 = vmatpush1.bf16.msra.mxu0 0
    %428 = vmatprep.subr.bf16.mxu0 0
    %429 = vmatpush1.bf16.msra.mxu0 0
    %430 = vmatprep.subr.bf16.mxu0 0
    %431 = vmatpush1.bf16.msra.mxu0 0
    %432 = vmatprep.subr.bf16.mxu0 0
    %433 = vmatpush1.bf16.msra.mxu0 0
    %434 = vmatprep.mubr.bf16.mxu0 0
    %435 = vmatmul.mubr.bf16.gmra.mrb[0].mxu0 %v347
    %v436 = vpop.f32.mrb[0].mxu0
    %v437 = vadd.f32 0.0, %v436
    %v438 = vpop.f32.mrb[0].mxu0
    %v439 = vpop.f32.mrb[0].mxu0
    %v440 = vadd.f32 0.0, %v439
    %v441 = vpop.f32.mrb[0].mxu0
    %442 = vdwg.mxu0
    %v447 = vunpack.c.l.b16 %v180
    %v448 = vunpack.c.l.b16 %v181
    %v449 = vunpack.c.l.b16 %v182
    %v450 = vunpack.c.l.b16 %v183
    %v451 = vpack.c.b16 %v448, %v447
    %v452 = vpack.c.b16 %v450, %v449
    %455 = vmatprep.subr.bf16.mxu0 0
    %456 = vmatpush1.bf16.msra.mxu0 %v451
    %457 = vmatprep.subr.bf16.mxu0 0
    %458 = vmatpush1.bf16.msra.mxu0 %v452
    %459 = vmatprep.subr.bf16.mxu0 0
    %460 = vmatpush1.bf16.msra.mxu0 0
    %461 = vmatprep.subr.bf16.mxu0 0
    %462 = vmatpush1.bf16.msra.mxu0 0
    %463 = vmatprep.subr.bf16.mxu0 0
    %464 = vmatpush1.bf16.msra.mxu0 0
    %465 = vmatprep.subr.bf16.mxu0 0
    %466 = vmatpush1.bf16.msra.mxu0 0
    %467 = vmatprep.subr.bf16.mxu0 0
    %468 = vmatpush1.bf16.msra.mxu0 0
    %469 = vmatprep.subr.bf16.mxu0 0
    %470 = vmatpush1.bf16.msra.mxu0 0
    %471 = vmatprep.subr.bf16.mxu0 0
    %472 = vmatpush1.bf16.msra.mxu0 0
    %473 = vmatprep.subr.bf16.mxu0 0
    %474 = vmatpush1.bf16.msra.mxu0 0
    %475 = vmatprep.subr.bf16.mxu0 0
    %476 = vmatpush1.bf16.msra.mxu0 0
    %477 = vmatprep.subr.bf16.mxu0 0
    %478 = vmatpush1.bf16.msra.mxu0 0
    %479 = vmatprep.subr.bf16.mxu0 0
    %480 = vmatpush1.bf16.msra.mxu0 0
    %481 = vmatprep.subr.bf16.mxu0 0
    %482 = vmatpush1.bf16.msra.mxu0 0
    %483 = vmatprep.subr.bf16.mxu0 0
    %484 = vmatpush1.bf16.msra.mxu0 0
    %485 = vmatprep.subr.bf16.mxu0 0
    %486 = vmatpush1.bf16.msra.mxu0 0
    %487 = vmatprep.mubr.bf16.mxu0 0
    %488 = vmatmul.mubr.bf16.gmra.mrb[0].mxu0 %v347
    %v489 = vpop.f32.mrb[0].mxu0
    %v490 = vadd.f32 0.0, %v489
    %v491 = vpop.f32.mrb[0].mxu0
    %v492 = vpop.f32.mrb[0].mxu0
    %v493 = vadd.f32 0.0, %v492
    %v494 = vpop.f32.mrb[0].mxu0
    %495 = vdwg.mxu0
    %v496 = vpack.c.bf16 %v384, %v384
    %v497 = vpack.c.bf16 %v387, %v387
    %v498 = vpack.c.bf16 %v437, %v437
    %v499 = vpack.c.bf16 %v440, %v440
    %v502 = vlaneseq
    %v503 = vshrl.u32 %v502, 7
    %v504 = vsub.s32 0, %v503
    %v505 = vrot.slane %v160, %v504
    %v506 = vlaneseq
    %v507 = vshrl.u32 %v506, 7
    %v508 = vsub.s32 0, %v507
    %v509 = vrot.slane %v161, %v508
    %vm512 = vcmask 64512
    %v514 = vsel %vm512, %v496, 0
    %v517 = vsel %vm512, %v498, 0
    %519 = vmatprep.subr.bf16.mxu0 0
    %520 = vmatpush1.bf16.xpose.msra.mxu0 %v517
    %521 = vmatprep.subr.bf16.mxu0 0
    %522 = vmatpush1.bf16.xpose.msra.mxu0 0
    %523 = vmatprep.subr.bf16.mxu0 0
    %524 = vmatpush1.bf16.xpose.msra.mxu0 0
    %525 = vmatprep.subr.bf16.mxu0 0
    %526 = vmatpush1.bf16.xpose.msra.mxu0 0
    %527 = vmatprep.subr.bf16.mxu0 0
    %528 = vmatpush1.bf16.xpose.msra.mxu0 0
    %529 = vmatprep.subr.bf16.mxu0 0
    %530 = vmatpush1.bf16.xpose.msra.mxu0 0
    %531 = vmatprep.subr.bf16.mxu0 0
    %532 = vmatpush1.bf16.xpose.msra.mxu0 0
    %533 = vmatprep.subr.bf16.mxu0 0
    %534 = vmatpush1.bf16.xpose.msra.mxu0 0
    %535 = vmatprep.subr.bf16.mxu0 0
    %536 = vmatpush1.bf16.xpose.msra.mxu0 0
    %537 = vmatprep.subr.bf16.mxu0 0
    %538 = vmatpush1.bf16.xpose.msra.mxu0 0
    %539 = vmatprep.subr.bf16.mxu0 0
    %540 = vmatpush1.bf16.xpose.msra.mxu0 0
    %541 = vmatprep.subr.bf16.mxu0 0
    %542 = vmatpush1.bf16.xpose.msra.mxu0 0
    %543 = vmatprep.subr.bf16.mxu0 0
    %544 = vmatpush1.bf16.xpose.msra.mxu0 0
    %545 = vmatprep.subr.bf16.mxu0 0
    %546 = vmatpush1.bf16.xpose.msra.mxu0 0
    %547 = vmatprep.subr.bf16.mxu0 0
    %548 = vmatpush1.bf16.xpose.msra.mxu0 0
    %549 = vmatprep.subr.bf16.mxu0 0
    %550 = vmatpush1.bf16.xpose.msra.mxu0 0
    %551 = vmatprep.mubr.bf16.mxu0 0
    %552 = vmatmul.mubr.bf16.gmra.mrb[0].mxu0 %v514
    %v553 = vpop.f32.mrb[0].mxu0
    %v554 = vadd.f32 %v505, %v553
    %v555 = vpop.f32.mrb[0].mxu0
    %v556 = vpop.f32.mrb[0].mxu0
    %v557 = vpop.f32.mrb[0].mxu0
    %558 = vdwg.mxu0
    %v560 = vsel %vm512, %v497, 0
    %v563 = vsel %vm512, %v499, 0
    %565 = vmatprep.subr.bf16.mxu0 0
    %566 = vmatpush1.bf16.xpose.msra.mxu0 %v563
    %567 = vmatprep.subr.bf16.mxu0 0
    %568 = vmatpush1.bf16.xpose.msra.mxu0 0
    %569 = vmatprep.subr.bf16.mxu0 0
    %570 = vmatpush1.bf16.xpose.msra.mxu0 0
    %571 = vmatprep.subr.bf16.mxu0 0
    %572 = vmatpush1.bf16.xpose.msra.mxu0 0
    %573 = vmatprep.subr.bf16.mxu0 0
    %574 = vmatpush1.bf16.xpose.msra.mxu0 0
    %575 = vmatprep.subr.bf16.mxu0 0
    %576 = vmatpush1.bf16.xpose.msra.mxu0 0
    %577 = vmatprep.subr.bf16.mxu0 0
    %578 = vmatpush1.bf16.xpose.msra.mxu0 0
    %579 = vmatprep.subr.bf16.mxu0 0
    %580 = vmatpush1.bf16.xpose.msra.mxu0 0
    %581 = vmatprep.subr.bf16.mxu0 0
    %582 = vmatpush1.bf16.xpose.msra.mxu0 0
    %583 = vmatprep.subr.bf16.mxu0 0
    %584 = vmatpush1.bf16.xpose.msra.mxu0 0
    %585 = vmatprep.subr.bf16.mxu0 0
    %586 = vmatpush1.bf16.xpose.msra.mxu0 0
    %587 = vmatprep.subr.bf16.mxu0 0
    %588 = vmatpush1.bf16.xpose.msra.mxu0 0
    %589 = vmatprep.subr.bf16.mxu0 0
    %590 = vmatpush1.bf16.xpose.msra.mxu0 0
    %591 = vmatprep.subr.bf16.mxu0 0
    %592 = vmatpush1.bf16.xpose.msra.mxu0 0
    %593 = vmatprep.subr.bf16.mxu0 0
    %594 = vmatpush1.bf16.xpose.msra.mxu0 0
    %595 = vmatprep.subr.bf16.mxu0 0
    %596 = vmatpush1.bf16.xpose.msra.mxu0 0
    %597 = vmatprep.mubr.bf16.mxu0 0
    %598 = vmatmul.mubr.bf16.gmra.mrb[0].mxu0 %v560
    %v599 = vpop.f32.mrb[0].mxu0
    %v600 = vadd.f32 %v509, %v599
    %v601 = vpop.f32.mrb[0].mxu0
    %v602 = vpop.f32.mrb[0].mxu0
    %v603 = vpop.f32.mrb[0].mxu0
    %604 = vdwg.mxu0
    %v605 = vadd.f32 %v554, %v152
    %v606 = vadd.f32 %v600, %v152
    %v607 = vsel %vm512, %v605, -inf
    %608 = vmax.xlane.f32.xlu0 %v607
    %v609 = vpop.xlane.xlu0 %608
    %v610 = vsel %vm512, %v606, -inf
    %611 = vmax.xlane.f32.xlu0 %v610
    %v612 = vpop.xlane.xlu0 %611
    %v613 = vsub.f32 %v605, %v609
    %v614 = vsub.f32 %v606, %v612
    %v615 = vmul.f32 %v613, 1.442695
    %v616 = vpow.pop %v615
    %v617 = vmul.f32 %v614, 1.442695
    %v618 = vpow.pop %v617
    %v619 = vsel %vm512, %v616, 0.0
    %620 = vadd.xlane.f32.xlu0 %v619
    %v621 = vpop.xlane.xlu0 %620
    %v622 = vsel %vm512, %v618, 0.0
    %623 = vadd.xlane.f32.xlu0 %v622
    %v624 = vpop.xlane.xlu0 %623
    %v625 = vrcp.pop %v621
    %v626 = vrcp.pop %v624
    %v627 = vmul.f32 %v616, %v625
    %v628 = vmul.f32 %v618, %v626
    %v629 = vpack.c.bf16 %v627, %v627
    %v630 = vpack.c.bf16 %v628, %v628
    %v631 = vpack.c.bf16 %v490, %v490
    %v632 = vpack.c.bf16 %v493, %v493
    %v634 = vsel %vm512, %v629, 0
    %vm636 = vcmask 1043456
    %v638 = vsel %vm636, %v631, 0
    %640 = vmatprep.subr.bf16.mxu0 0
    %641 = vmatpush1.bf16.msra.mxu0 %v638
    %642 = vmatprep.subr.bf16.mxu0 0
    %643 = vmatpush1.bf16.msra.mxu0 0
    %644 = vmatprep.subr.bf16.mxu0 0
    %645 = vmatpush1.bf16.msra.mxu0 0
    %646 = vmatprep.subr.bf16.mxu0 0
    %647 = vmatpush1.bf16.msra.mxu0 0
    %648 = vmatprep.subr.bf16.mxu0 0
    %649 = vmatpush1.bf16.msra.mxu0 0
    %650 = vmatprep.subr.bf16.mxu0 0
    %651 = vmatpush1.bf16.msra.mxu0 0
    %652 = vmatprep.subr.bf16.mxu0 0
    %653 = vmatpush1.bf16.msra.mxu0 0
    %654 = vmatprep.subr.bf16.mxu0 0
    %655 = vmatpush1.bf16.msra.mxu0 0
    %656 = vmatprep.subr.bf16.mxu0 0
    %657 = vmatpush1.bf16.msra.mxu0 0
    %658 = vmatprep.subr.bf16.mxu0 0
    %659 = vmatpush1.bf16.msra.mxu0 0
    %660 = vmatprep.subr.bf16.mxu0 0
    %661 = vmatpush1.bf16.msra.mxu0 0
    %662 = vmatprep.subr.bf16.mxu0 0
    %663 = vmatpush1.bf16.msra.mxu0 0
    %664 = vmatprep.subr.bf16.mxu0 0
    %665 = vmatpush1.bf16.msra.mxu0 0
    %666 = vmatprep.subr.bf16.mxu0 0
    %667 = vmatpush1.bf16.msra.mxu0 0
    %668 = vmatprep.subr.bf16.mxu0 0
    %669 = vmatpush1.bf16.msra.mxu0 0
    %670 = vmatprep.subr.bf16.mxu0 0
    %671 = vmatpush1.bf16.msra.mxu0 0
    %672 = vmatprep.mubr.bf16.mxu0 0
    %673 = vmatmul.mubr.bf16.gmra.mrb[0].mxu0 %v634
    %v674 = vpop.f32.mrb[0].mxu0
    %v675 = vadd.f32 0.0, %v674
    %v676 = vpop.f32.mrb[0].mxu0
    %v677 = vpop.f32.mrb[0].mxu0
    %v678 = vpop.f32.mrb[0].mxu0
    %679 = vdwg.mxu0
    %v681 = vsel %vm512, %v630, 0
    %v684 = vsel %vm636, %v632, 0
    %686 = vmatprep.subr.bf16.mxu0 0
    %687 = vmatpush1.bf16.msra.mxu0 %v684
    %688 = vmatprep.subr.bf16.mxu0 0
    %689 = vmatpush1.bf16.msra.mxu0 0
    %690 = vmatprep.subr.bf16.mxu0 0
    %691 = vmatpush1.bf16.msra.mxu0 0
    %692 = vmatprep.subr.bf16.mxu0 0
    %693 = vmatpush1.bf16.msra.mxu0 0
    %694 = vmatprep.subr.bf16.mxu0 0
    %695 = vmatpush1.bf16.msra.mxu0 0
    %696 = vmatprep.subr.bf16.mxu0 0
    %697 = vmatpush1.bf16.msra.mxu0 0
    %698 = vmatprep.subr.bf16.mxu0 0
    %699 = vmatpush1.bf16.msra.mxu0 0
    %700 = vmatprep.subr.bf16.mxu0 0
    %701 = vmatpush1.bf16.msra.mxu0 0
    %702 = vmatprep.subr.bf16.mxu0 0
    %703 = vmatpush1.bf16.msra.mxu0 0
    %704 = vmatprep.subr.bf16.mxu0 0
    %705 = vmatpush1.bf16.msra.mxu0 0
    %706 = vmatprep.subr.bf16.mxu0 0
    %707 = vmatpush1.bf16.msra.mxu0 0
    %708 = vmatprep.subr.bf16.mxu0 0
    %709 = vmatpush1.bf16.msra.mxu0 0
    %710 = vmatprep.subr.bf16.mxu0 0
    %711 = vmatpush1.bf16.msra.mxu0 0
    %712 = vmatprep.subr.bf16.mxu0 0
    %713 = vmatpush1.bf16.msra.mxu0 0
    %714 = vmatprep.subr.bf16.mxu0 0
    %715 = vmatpush1.bf16.msra.mxu0 0
    %716 = vmatprep.subr.bf16.mxu0 0
    %717 = vmatpush1.bf16.msra.mxu0 0
    %718 = vmatprep.mubr.bf16.mxu0 0
    %719 = vmatmul.mubr.bf16.gmra.mrb[0].mxu0 %v681
    %v720 = vpop.f32.mrb[0].mxu0
    %v721 = vadd.f32 0.0, %v720
    %v722 = vpop.f32.mrb[0].mxu0
    %v723 = vpop.f32.mrb[0].mxu0
    %v724 = vpop.f32.mrb[0].mxu0
    %725 = vdwg.mxu0
    %v726 = vpack.c.bf16 %v721, %v675
    %728 = vrot.lane.b32.xlu0 %v496, 120
    %v729 = vpop.permute.xlu0 %728
    %731 = vrot.lane.b32.xlu0 %v498, 120
    %v732 = vpop.permute.xlu0 %731
    %v734 = vsel %vm512, %v729, 0
    %v737 = vsel %vm512, %v732, 0
    %739 = vmatprep.subr.bf16.mxu0 0
    %740 = vmatpush1.bf16.xpose.msra.mxu0 %v737
    %741 = vmatprep.subr.bf16.mxu0 0
    %742 = vmatpush1.bf16.xpose.msra.mxu0 0
    %743 = vmatprep.subr.bf16.mxu0 0
    %744 = vmatpush1.bf16.xpose.msra.mxu0 0
    %745 = vmatprep.subr.bf16.mxu0 0
    %746 = vmatpush1.bf16.xpose.msra.mxu0 0
    %747 = vmatprep.subr.bf16.mxu0 0
    %748 = vmatpush1.bf16.xpose.msra.mxu0 0
    %749 = vmatprep.subr.bf16.mxu0 0
    %750 = vmatpush1.bf16.xpose.msra.mxu0 0
    %751 = vmatprep.subr.bf16.mxu0 0
    %752 = vmatpush1.bf16.xpose.msra.mxu0 0
    %753 = vmatprep.subr.bf16.mxu0 0
    %754 = vmatpush1.bf16.xpose.msra.mxu0 0
    %755 = vmatprep.subr.bf16.mxu0 0
    %756 = vmatpush1.bf16.xpose.msra.mxu0 0
    %757 = vmatprep.subr.bf16.mxu0 0
    %758 = vmatpush1.bf16.xpose.msra.mxu0 0
    %759 = vmatprep.subr.bf16.mxu0 0
    %760 = vmatpush1.bf16.xpose.msra.mxu0 0
    %761 = vmatprep.subr.bf16.mxu0 0
    %762 = vmatpush1.bf16.xpose.msra.mxu0 0
    %763 = vmatprep.subr.bf16.mxu0 0
    %764 = vmatpush1.bf16.xpose.msra.mxu0 0
    %765 = vmatprep.subr.bf16.mxu0 0
    %766 = vmatpush1.bf16.xpose.msra.mxu0 0
    %767 = vmatprep.subr.bf16.mxu0 0
    %768 = vmatpush1.bf16.xpose.msra.mxu0 0
    %769 = vmatprep.subr.bf16.mxu0 0
    %770 = vmatpush1.bf16.xpose.msra.mxu0 0
    %771 = vmatprep.mubr.bf16.mxu0 0
    %772 = vmatmul.mubr.bf16.gmra.mrb[0].mxu0 %v734
    %v773 = vpop.f32.mrb[0].mxu0
    %v774 = vadd.f32 %v505, %v773
    %v775 = vpop.f32.mrb[0].mxu0
    %v776 = vpop.f32.mrb[0].mxu0
    %v777 = vpop.f32.mrb[0].mxu0
    %778 = vdwg.mxu0
    %780 = vrot.lane.b32.xlu0 %v497, 120
    %v781 = vpop.permute.xlu0 %780
    %783 = vrot.lane.b32.xlu0 %v499, 120
    %v784 = vpop.permute.xlu0 %783
    %v786 = vsel %vm512, %v781, 0
    %v789 = vsel %vm512, %v784, 0
    %791 = vmatprep.subr.bf16.mxu0 0
    %792 = vmatpush1.bf16.xpose.msra.mxu0 %v789
    %793 = vmatprep.subr.bf16.mxu0 0
    %794 = vmatpush1.bf16.xpose.msra.mxu0 0
    %795 = vmatprep.subr.bf16.mxu0 0
    %796 = vmatpush1.bf16.xpose.msra.mxu0 0
    %797 = vmatprep.subr.bf16.mxu0 0
    %798 = vmatpush1.bf16.xpose.msra.mxu0 0
    %799 = vmatprep.subr.bf16.mxu0 0
    %800 = vmatpush1.bf16.xpose.msra.mxu0 0
    %801 = vmatprep.subr.bf16.mxu0 0
    %802 = vmatpush1.bf16.xpose.msra.mxu0 0
    %803 = vmatprep.subr.bf16.mxu0 0
    %804 = vmatpush1.bf16.xpose.msra.mxu0 0
    %805 = vmatprep.subr.bf16.mxu0 0
    %806 = vmatpush1.bf16.xpose.msra.mxu0 0
    %807 = vmatprep.subr.bf16.mxu0 0
    %808 = vmatpush1.bf16.xpose.msra.mxu0 0
    %809 = vmatprep.subr.bf16.mxu0 0
    %810 = vmatpush1.bf16.xpose.msra.mxu0 0
    %811 = vmatprep.subr.bf16.mxu0 0
    %812 = vmatpush1.bf16.xpose.msra.mxu0 0
    %813 = vmatprep.subr.bf16.mxu0 0
    %814 = vmatpush1.bf16.xpose.msra.mxu0 0
    %815 = vmatprep.subr.bf16.mxu0 0
    %816 = vmatpush1.bf16.xpose.msra.mxu0 0
    %817 = vmatprep.subr.bf16.mxu0 0
    %818 = vmatpush1.bf16.xpose.msra.mxu0 0
    %819 = vmatprep.subr.bf16.mxu0 0
    %820 = vmatpush1.bf16.xpose.msra.mxu0 0
    %821 = vmatprep.subr.bf16.mxu0 0
    %822 = vmatpush1.bf16.xpose.msra.mxu0 0
    %823 = vmatprep.mubr.bf16.mxu0 0
    %824 = vmatmul.mubr.bf16.gmra.mrb[0].mxu0 %v786
    %v825 = vpop.f32.mrb[0].mxu0
    %v826 = vadd.f32 %v509, %v825
    %v827 = vpop.f32.mrb[0].mxu0
    %v828 = vpop.f32.mrb[0].mxu0
    %v829 = vpop.f32.mrb[0].mxu0
    %830 = vdwg.mxu0
    %v831 = vadd.f32 %v774, %v153
    %v832 = vadd.f32 %v826, %v153
    %v833 = vsel %vm512, %v831, -inf
    %834 = vmax.xlane.f32.xlu0 %v833
    %v835 = vpop.xlane.xlu0 %834
    %v836 = vsel %vm512, %v832, -inf
    %837 = vmax.xlane.f32.xlu0 %v836
    %v838 = vpop.xlane.xlu0 %837
    %v839 = vsub.f32 %v831, %v835
    %v840 = vsub.f32 %v832, %v838
    %v841 = vmul.f32 %v839, 1.442695
    %v842 = vpow.pop %v841
    %v843 = vmul.f32 %v840, 1.442695
    %v844 = vpow.pop %v843
    %v845 = vsel %vm512, %v842, 0.0
    %846 = vadd.xlane.f32.xlu0 %v845
    %v847 = vpop.xlane.xlu0 %846
    %v848 = vsel %vm512, %v844, 0.0
    %849 = vadd.xlane.f32.xlu0 %v848
    %v850 = vpop.xlane.xlu0 %849
    %v851 = vrcp.pop %v847
    %v852 = vrcp.pop %v850
    %v853 = vmul.f32 %v842, %v851
    %v854 = vmul.f32 %v844, %v852
    %v855 = vpack.c.bf16 %v853, %v853
    %v856 = vpack.c.bf16 %v854, %v854
    %858 = vrot.lane.b32.xlu0 %v631, 120
    %v859 = vpop.permute.xlu0 %858
    %v861 = vsel %vm512, %v855, 0
    %v864 = vsel %vm636, %v859, 0
    %866 = vmatprep.subr.bf16.mxu0 0
    %867 = vmatpush1.bf16.msra.mxu0 %v864
    %868 = vmatprep.subr.bf16.mxu0 0
    %869 = vmatpush1.bf16.msra.mxu0 0
    %870 = vmatprep.subr.bf16.mxu0 0
    %871 = vmatpush1.bf16.msra.mxu0 0
    %872 = vmatprep.subr.bf16.mxu0 0
    %873 = vmatpush1.bf16.msra.mxu0 0
    %874 = vmatprep.subr.bf16.mxu0 0
    %875 = vmatpush1.bf16.msra.mxu0 0
    %876 = vmatprep.subr.bf16.mxu0 0
    %877 = vmatpush1.bf16.msra.mxu0 0
    %878 = vmatprep.subr.bf16.mxu0 0
    %879 = vmatpush1.bf16.msra.mxu0 0
    %880 = vmatprep.subr.bf16.mxu0 0
    %881 = vmatpush1.bf16.msra.mxu0 0
    %882 = vmatprep.subr.bf16.mxu0 0
    %883 = vmatpush1.bf16.msra.mxu0 0
    %884 = vmatprep.subr.bf16.mxu0 0
    %885 = vmatpush1.bf16.msra.mxu0 0
    %886 = vmatprep.subr.bf16.mxu0 0
    %887 = vmatpush1.bf16.msra.mxu0 0
    %888 = vmatprep.subr.bf16.mxu0 0
    %889 = vmatpush1.bf16.msra.mxu0 0
    %890 = vmatprep.subr.bf16.mxu0 0
    %891 = vmatpush1.bf16.msra.mxu0 0
    %892 = vmatprep.subr.bf16.mxu0 0
    %893 = vmatpush1.bf16.msra.mxu0 0
    %894 = vmatprep.subr.bf16.mxu0 0
    %895 = vmatpush1.bf16.msra.mxu0 0
    %896 = vmatprep.subr.bf16.mxu0 0
    %897 = vmatpush1.bf16.msra.mxu0 0
    %898 = vmatprep.mubr.bf16.mxu0 0
    %899 = vmatmul.mubr.bf16.gmra.mrb[0].mxu0 %v861
    %v900 = vpop.f32.mrb[0].mxu0
    %v901 = vadd.f32 0.0, %v900
    %v902 = vpop.f32.mrb[0].mxu0
    %v903 = vpop.f32.mrb[0].mxu0
    %v904 = vpop.f32.mrb[0].mxu0
    %905 = vdwg.mxu0
    %907 = vrot.lane.b32.xlu0 %v632, 120
    %v908 = vpop.permute.xlu0 %907
    %v910 = vsel %vm512, %v856, 0
    %v913 = vsel %vm636, %v908, 0
    %915 = vmatprep.subr.bf16.mxu0 0
    %916 = vmatpush1.bf16.msra.mxu0 %v913
    %917 = vmatprep.subr.bf16.mxu0 0
    %918 = vmatpush1.bf16.msra.mxu0 0
    %919 = vmatprep.subr.bf16.mxu0 0
    %920 = vmatpush1.bf16.msra.mxu0 0
    %921 = vmatprep.subr.bf16.mxu0 0
    %922 = vmatpush1.bf16.msra.mxu0 0
    %923 = vmatprep.subr.bf16.mxu0 0
    %924 = vmatpush1.bf16.msra.mxu0 0
    %925 = vmatprep.subr.bf16.mxu0 0
    %926 = vmatpush1.bf16.msra.mxu0 0
    %927 = vmatprep.subr.bf16.mxu0 0
    %928 = vmatpush1.bf16.msra.mxu0 0
    %929 = vmatprep.subr.bf16.mxu0 0
    %930 = vmatpush1.bf16.msra.mxu0 0
    %931 = vmatprep.subr.bf16.mxu0 0
    %932 = vmatpush1.bf16.msra.mxu0 0
    %933 = vmatprep.subr.bf16.mxu0 0
    %934 = vmatpush1.bf16.msra.mxu0 0
    %935 = vmatprep.subr.bf16.mxu0 0
    %936 = vmatpush1.bf16.msra.mxu0 0
    %937 = vmatprep.subr.bf16.mxu0 0
    %938 = vmatpush1.bf16.msra.mxu0 0
    %939 = vmatprep.subr.bf16.mxu0 0
    %940 = vmatpush1.bf16.msra.mxu0 0
    %941 = vmatprep.subr.bf16.mxu0 0
    %942 = vmatpush1.bf16.msra.mxu0 0
    %943 = vmatprep.subr.bf16.mxu0 0
    %944 = vmatpush1.bf16.msra.mxu0 0
    %945 = vmatprep.subr.bf16.mxu0 0
    %946 = vmatpush1.bf16.msra.mxu0 0
    %947 = vmatprep.mubr.bf16.mxu0 0
    %948 = vmatmul.mubr.bf16.gmra.mrb[0].mxu0 %v910
    %v949 = vpop.f32.mrb[0].mxu0
    %v950 = vadd.f32 0.0, %v949
    %v951 = vpop.f32.mrb[0].mxu0
    %v952 = vpop.f32.mrb[0].mxu0
    %v953 = vpop.f32.mrb[0].mxu0
    %954 = vdwg.mxu0
    %v955 = vpack.c.bf16 %v950, %v901
    %v957 = vsel %vm512, %v955, 0
    %v960 = vsel %vm636, %v189, 0
    %962 = vmatprep.subr.bf16.mxu0 0
    %963 = vmatpush1.bf16.msra.mxu0 %v960
    %964 = vmatprep.subr.bf16.mxu0 0
    %965 = vmatpush1.bf16.msra.mxu0 0
    %966 = vmatprep.subr.bf16.mxu0 0
    %967 = vmatpush1.bf16.msra.mxu0 0
    %968 = vmatprep.subr.bf16.mxu0 0
    %969 = vmatpush1.bf16.msra.mxu0 0
    %970 = vmatprep.subr.bf16.mxu0 0
    %971 = vmatpush1.bf16.msra.mxu0 0
    %972 = vmatprep.subr.bf16.mxu0 0
    %973 = vmatpush1.bf16.msra.mxu0 0
    %974 = vmatprep.subr.bf16.mxu0 0
    %975 = vmatpush1.bf16.msra.mxu0 0
    %976 = vmatprep.subr.bf16.mxu0 0
    %977 = vmatpush1.bf16.msra.mxu0 0
    %978 = vmatprep.subr.bf16.mxu0 0
    %979 = vmatpush1.bf16.msra.mxu0 0
    %980 = vmatprep.subr.bf16.mxu0 0
    %981 = vmatpush1.bf16.msra.mxu0 0
    %982 = vmatprep.subr.bf16.mxu0 0
    %983 = vmatpush1.bf16.msra.mxu0 0
    %984 = vmatprep.subr.bf16.mxu0 0
    %985 = vmatpush1.bf16.msra.mxu0 0
    %986 = vmatprep.subr.bf16.mxu0 0
    %987 = vmatpush1.bf16.msra.mxu0 0
    %988 = vmatprep.subr.bf16.mxu0 0
    %989 = vmatpush1.bf16.msra.mxu0 0
    %990 = vmatprep.subr.bf16.mxu0 0
    %991 = vmatpush1.bf16.msra.mxu0 0
    %992 = vmatprep.subr.bf16.mxu0 0
    %993 = vmatpush1.bf16.msra.mxu0 0
    %994 = vmatprep.mubr.bf16.mxu0 0
    %995 = vmatmul.mubr.bf16.gmra.mrb[0].mxu0 %v957
    %v996 = vpop.f32.mrb[0].mxu0
    %v997 = vadd.f32 0.0, %v996
    %v998 = vpop.f32.mrb[0].mxu0
    %v999 = vpop.f32.mrb[0].mxu0
    %v1000 = vadd.f32 0.0, %v999
    %v1001 = vpop.f32.mrb[0].mxu0
    %1002 = vdwg.mxu0
    %v1004 = vsel %vm512, %v726, 0
    %v1007 = vsel %vm636, %v188, 0
    %1009 = vmatprep.subr.bf16.mxu0 0
    %1010 = vmatpush1.bf16.msra.mxu0 %v1007
    %1011 = vmatprep.subr.bf16.mxu0 0
    %1012 = vmatpush1.bf16.msra.mxu0 0
    %1013 = vmatprep.subr.bf16.mxu0 0
    %1014 = vmatpush1.bf16.msra.mxu0 0
    %1015 = vmatprep.subr.bf16.mxu0 0
    %1016 = vmatpush1.bf16.msra.mxu0 0
    %1017 = vmatprep.subr.bf16.mxu0 0
    %1018 = vmatpush1.bf16.msra.mxu0 0
    %1019 = vmatprep.subr.bf16.mxu0 0
    %1020 = vmatpush1.bf16.msra.mxu0 0
    %1021 = vmatprep.subr.bf16.mxu0 0
    %1022 = vmatpush1.bf16.msra.mxu0 0
    %1023 = vmatprep.subr.bf16.mxu0 0
    %1024 = vmatpush1.bf16.msra.mxu0 0
    %1025 = vmatprep.subr.bf16.mxu0 0
    %1026 = vmatpush1.bf16.msra.mxu0 0
    %1027 = vmatprep.subr.bf16.mxu0 0
    %1028 = vmatpush1.bf16.msra.mxu0 0
    %1029 = vmatprep.subr.bf16.mxu0 0
    %1030 = vmatpush1.bf16.msra.mxu0 0
    %1031 = vmatprep.subr.bf16.mxu0 0
    %1032 = vmatpush1.bf16.msra.mxu0 0
    %1033 = vmatprep.subr.bf16.mxu0 0
    %1034 = vmatpush1.bf16.msra.mxu0 0
    %1035 = vmatprep.subr.bf16.mxu0 0
    %1036 = vmatpush1.bf16.msra.mxu0 0
    %1037 = vmatprep.subr.bf16.mxu0 0
    %1038 = vmatpush1.bf16.msra.mxu0 0
    %1039 = vmatprep.subr.bf16.mxu0 0
    %1040 = vmatpush1.bf16.msra.mxu0 0
    %1041 = vmatprep.mubr.bf16.mxu0 0
    %1042 = vmatmul.mubr.bf16.gmra.mrb[0].mxu0 %v1004
    %v1043 = vpop.f32.mrb[0].mxu0
    %v1044 = vadd.f32 %v997, %v1043
    %v1045 = vpop.f32.mrb[0].mxu0
    %v1046 = vpop.f32.mrb[0].mxu0
    %v1047 = vadd.f32 %v1000, %v1046
    %v1048 = vpop.f32.mrb[0].mxu0
    %1049 = vdwg.mxu0
    %1050 = vrot.lane.b32.xlu0 %v496, 112
    %v1051 = vpop.permute.xlu0 %1050
    %1052 = vrot.lane.b32.xlu0 %v498, 112
    %v1053 = vpop.permute.xlu0 %1052
    %v1055 = vsel %vm512, %v1051, 0
    %v1058 = vsel %vm512, %v1053, 0
    %1060 = vmatprep.subr.bf16.mxu0 0
    %1061 = vmatpush1.bf16.xpose.msra.mxu0 %v1058
    %1062 = vmatprep.subr.bf16.mxu0 0
    %1063 = vmatpush1.bf16.xpose.msra.mxu0 0
    %1064 = vmatprep.subr.bf16.mxu0 0
    %1065 = vmatpush1.bf16.xpose.msra.mxu0 0
    %1066 = vmatprep.subr.bf16.mxu0 0
    %1067 = vmatpush1.bf16.xpose.msra.mxu0 0
    %1068 = vmatprep.subr.bf16.mxu0 0
    %1069 = vmatpush1.bf16.xpose.msra.mxu0 0
    %1070 = vmatprep.subr.bf16.mxu0 0
    %1071 = vmatpush1.bf16.xpose.msra.mxu0 0
    %1072 = vmatprep.subr.bf16.mxu0 0
    %1073 = vmatpush1.bf16.xpose.msra.mxu0 0
    %1074 = vmatprep.subr.bf16.mxu0 0
    %1075 = vmatpush1.bf16.xpose.msra.mxu0 0
    %1076 = vmatprep.subr.bf16.mxu0 0
    %1077 = vmatpush1.bf16.xpose.msra.mxu0 0
    %1078 = vmatprep.subr.bf16.mxu0 0
    %1079 = vmatpush1.bf16.xpose.msra.mxu0 0
    %1080 = vmatprep.subr.bf16.mxu0 0
    %1081 = vmatpush1.bf16.xpose.msra.mxu0 0
    %1082 = vmatprep.subr.bf16.mxu0 0
    %1083 = vmatpush1.bf16.xpose.msra.mxu0 0
    %1084 = vmatprep.subr.bf16.mxu0 0
    %1085 = vmatpush1.bf16.xpose.msra.mxu0 0
    %1086 = vmatprep.subr.bf16.mxu0 0
    %1087 = vmatpush1.bf16.xpose.msra.mxu0 0
    %1088 = vmatprep.subr.bf16.mxu0 0
    %1089 = vmatpush1.bf16.xpose.msra.mxu0 0
    %1090 = vmatprep.subr.bf16.mxu0 0
    %1091 = vmatpush1.bf16.xpose.msra.mxu0 0
    %1092 = vmatprep.mubr.bf16.mxu0 0
    %1093 = vmatmul.mubr.bf16.gmra.mrb[0].mxu0 %v1055
    %v1094 = vpop.f32.mrb[0].mxu0
    %v1095 = vadd.f32 %v505, %v1094
    %v1096 = vpop.f32.mrb[0].mxu0
    %v1097 = vpop.f32.mrb[0].mxu0
    %v1098 = vpop.f32.mrb[0].mxu0
    %1099 = vdwg.mxu0
    %1100 = vrot.lane.b32.xlu0 %v497, 112
    %v1101 = vpop.permute.xlu0 %1100
    %1102 = vrot.lane.b32.xlu0 %v499, 112
    %v1103 = vpop.permute.xlu0 %1102
    %v1105 = vsel %vm512, %v1101, 0
    %v1108 = vsel %vm512, %v1103, 0
    %1110 = vmatprep.subr.bf16.mxu0 0
    %1111 = vmatpush1.bf16.xpose.msra.mxu0 %v1108
    %1112 = vmatprep.subr.bf16.mxu0 0
    %1113 = vmatpush1.bf16.xpose.msra.mxu0 0
    %1114 = vmatprep.subr.bf16.mxu0 0
    %1115 = vmatpush1.bf16.xpose.msra.mxu0 0
    %1116 = vmatprep.subr.bf16.mxu0 0
    %1117 = vmatpush1.bf16.xpose.msra.mxu0 0
    %1118 = vmatprep.subr.bf16.mxu0 0
    %1119 = vmatpush1.bf16.xpose.msra.mxu0 0
    %1120 = vmatprep.subr.bf16.mxu0 0
    %1121 = vmatpush1.bf16.xpose.msra.mxu0 0
    %1122 = vmatprep.subr.bf16.mxu0 0
    %1123 = vmatpush1.bf16.xpose.msra.mxu0 0
    %1124 = vmatprep.subr.bf16.mxu0 0
    %1125 = vmatpush1.bf16.xpose.msra.mxu0 0
    %1126 = vmatprep.subr.bf16.mxu0 0
    %1127 = vmatpush1.bf16.xpose.msra.mxu0 0
    %1128 = vmatprep.subr.bf16.mxu0 0
    %1129 = vmatpush1.bf16.xpose.msra.mxu0 0
    %1130 = vmatprep.subr.bf16.mxu0 0
    %1131 = vmatpush1.bf16.xpose.msra.mxu0 0
    %1132 = vmatprep.subr.bf16.mxu0 0
    %1133 = vmatpush1.bf16.xpose.msra.mxu0 0
    %1134 = vmatprep.subr.bf16.mxu0 0
    %1135 = vmatpush1.bf16.xpose.msra.mxu0 0
    %1136 = vmatprep.subr.bf16.mxu0 0
    %1137 = vmatpush1.bf16.xpose.msra.mxu0 0
    %1138 = vmatprep.subr.bf16.mxu0 0
    %1139 = vmatpush1.bf16.xpose.msra.mxu0 0
    %1140 = vmatprep.subr.bf16.mxu0 0
    %1141 = vmatpush1.bf16.xpose.msra.mxu0 0
    %1142 = vmatprep.mubr.bf16.mxu0 0
    %1143 = vmatmul.mubr.bf16.gmra.mrb[0].mxu0 %v1105
    %v1144 = vpop.f32.mrb[0].mxu0
    %v1145 = vadd.f32 %v509, %v1144
    %v1146 = vpop.f32.mrb[0].mxu0
    %v1147 = vpop.f32.mrb[0].mxu0
    %v1148 = vpop.f32.mrb[0].mxu0
    %1149 = vdwg.mxu0
    %v1150 = vadd.f32 %v1095, %v154
    %v1151 = vadd.f32 %v1145, %v154
    %v1152 = vsel %vm512, %v1150, -inf
    %1153 = vmax.xlane.f32.xlu0 %v1152
    %v1154 = vpop.xlane.xlu0 %1153
    %v1155 = vsel %vm512, %v1151, -inf
    %1156 = vmax.xlane.f32.xlu0 %v1155
    %v1157 = vpop.xlane.xlu0 %1156
    %v1158 = vsub.f32 %v1150, %v1154
    %v1159 = vsub.f32 %v1151, %v1157
    %v1160 = vmul.f32 %v1158, 1.442695
    %v1161 = vpow.pop %v1160
    %v1162 = vmul.f32 %v1159, 1.442695
    %v1163 = vpow.pop %v1162
    %v1164 = vsel %vm512, %v1161, 0.0
    %1165 = vadd.xlane.f32.xlu0 %v1164
    %v1166 = vpop.xlane.xlu0 %1165
    %v1167 = vsel %vm512, %v1163, 0.0
    %1168 = vadd.xlane.f32.xlu0 %v1167
    %v1169 = vpop.xlane.xlu0 %1168
    %v1170 = vrcp.pop %v1166
    %v1171 = vrcp.pop %v1169
    %v1172 = vmul.f32 %v1161, %v1170
    %v1173 = vmul.f32 %v1163, %v1171
    %v1174 = vpack.c.bf16 %v1172, %v1172
    %v1175 = vpack.c.bf16 %v1173, %v1173
    %1176 = vrot.lane.b32.xlu0 %v631, 112
    %v1177 = vpop.permute.xlu0 %1176
    %v1179 = vsel %vm512, %v1174, 0
    %v1182 = vsel %vm636, %v1177, 0
    %1184 = vmatprep.subr.bf16.mxu0 0
    %1185 = vmatpush1.bf16.msra.mxu0 %v1182
    %1186 = vmatprep.subr.bf16.mxu0 0
    %1187 = vmatpush1.bf16.msra.mxu0 0
    %1188 = vmatprep.subr.bf16.mxu0 0
    %1189 = vmatpush1.bf16.msra.mxu0 0
    %1190 = vmatprep.subr.bf16.mxu0 0
    %1191 = vmatpush1.bf16.msra.mxu0 0
    %1192 = vmatprep.subr.bf16.mxu0 0
    %1193 = vmatpush1.bf16.msra.mxu0 0
    %1194 = vmatprep.subr.bf16.mxu0 0
    %1195 = vmatpush1.bf16.msra.mxu0 0
    %1196 = vmatprep.subr.bf16.mxu0 0
    %1197 = vmatpush1.bf16.msra.mxu0 0
    %1198 = vmatprep.subr.bf16.mxu0 0
    %1199 = vmatpush1.bf16.msra.mxu0 0
    %1200 = vmatprep.subr.bf16.mxu0 0
    %1201 = vmatpush1.bf16.msra.mxu0 0
    %1202 = vmatprep.subr.bf16.mxu0 0
    %1203 = vmatpush1.bf16.msra.mxu0 0
    %1204 = vmatprep.subr.bf16.mxu0 0
    %1205 = vmatpush1.bf16.msra.mxu0 0
    %1206 = vmatprep.subr.bf16.mxu0 0
    %1207 = vmatpush1.bf16.msra.mxu0 0
    %1208 = vmatprep.subr.bf16.mxu0 0
    %1209 = vmatpush1.bf16.msra.mxu0 0
    %1210 = vmatprep.subr.bf16.mxu0 0
    %1211 = vmatpush1.bf16.msra.mxu0 0
    %1212 = vmatprep.subr.bf16.mxu0 0
    %1213 = vmatpush1.bf16.msra.mxu0 0
    %1214 = vmatprep.subr.bf16.mxu0 0
    %1215 = vmatpush1.bf16.msra.mxu0 0
    %1216 = vmatprep.mubr.bf16.mxu0 0
    %1217 = vmatmul.mubr.bf16.gmra.mrb[0].mxu0 %v1179
    %v1218 = vpop.f32.mrb[0].mxu0
    %v1219 = vadd.f32 0.0, %v1218
    %v1220 = vpop.f32.mrb[0].mxu0
    %v1221 = vpop.f32.mrb[0].mxu0
    %v1222 = vpop.f32.mrb[0].mxu0
    %1223 = vdwg.mxu0
    %1224 = vrot.lane.b32.xlu0 %v632, 112
    %v1225 = vpop.permute.xlu0 %1224
    %v1227 = vsel %vm512, %v1175, 0
    %v1230 = vsel %vm636, %v1225, 0
    %1232 = vmatprep.subr.bf16.mxu0 0
    %1233 = vmatpush1.bf16.msra.mxu0 %v1230
    %1234 = vmatprep.subr.bf16.mxu0 0
    %1235 = vmatpush1.bf16.msra.mxu0 0
    %1236 = vmatprep.subr.bf16.mxu0 0
    %1237 = vmatpush1.bf16.msra.mxu0 0
    %1238 = vmatprep.subr.bf16.mxu0 0
    %1239 = vmatpush1.bf16.msra.mxu0 0
    %1240 = vmatprep.subr.bf16.mxu0 0
    %1241 = vmatpush1.bf16.msra.mxu0 0
    %1242 = vmatprep.subr.bf16.mxu0 0
    %1243 = vmatpush1.bf16.msra.mxu0 0
    %1244 = vmatprep.subr.bf16.mxu0 0
    %1245 = vmatpush1.bf16.msra.mxu0 0
    %1246 = vmatprep.subr.bf16.mxu0 0
    %1247 = vmatpush1.bf16.msra.mxu0 0
    %1248 = vmatprep.subr.bf16.mxu0 0
    %1249 = vmatpush1.bf16.msra.mxu0 0
    %1250 = vmatprep.subr.bf16.mxu0 0
    %1251 = vmatpush1.bf16.msra.mxu0 0
    %1252 = vmatprep.subr.bf16.mxu0 0
    %1253 = vmatpush1.bf16.msra.mxu0 0
    %1254 = vmatprep.subr.bf16.mxu0 0
    %1255 = vmatpush1.bf16.msra.mxu0 0
    %1256 = vmatprep.subr.bf16.mxu0 0
    %1257 = vmatpush1.bf16.msra.mxu0 0
    %1258 = vmatprep.subr.bf16.mxu0 0
    %1259 = vmatpush1.bf16.msra.mxu0 0
    %1260 = vmatprep.subr.bf16.mxu0 0
    %1261 = vmatpush1.bf16.msra.mxu0 0
    %1262 = vmatprep.subr.bf16.mxu0 0
    %1263 = vmatpush1.bf16.msra.mxu0 0
    %1264 = vmatprep.mubr.bf16.mxu0 0
    %1265 = vmatmul.mubr.bf16.gmra.mrb[0].mxu0 %v1227
    %v1266 = vpop.f32.mrb[0].mxu0
    %v1267 = vadd.f32 0.0, %v1266
    %v1268 = vpop.f32.mrb[0].mxu0
    %v1269 = vpop.f32.mrb[0].mxu0
    %v1270 = vpop.f32.mrb[0].mxu0
    %1271 = vdwg.mxu0
    %v1272 = vpack.c.bf16 %v1267, %v1219
    %v1274 = vsel %vm512, %v1272, 0
    %v1277 = vsel %vm636, %v190, 0
    %1279 = vmatprep.subr.bf16.mxu0 0
    %1280 = vmatpush1.bf16.msra.mxu0 %v1277
    %1281 = vmatprep.subr.bf16.mxu0 0
    %1282 = vmatpush1.bf16.msra.mxu0 0
    %1283 = vmatprep.subr.bf16.mxu0 0
    %1284 = vmatpush1.bf16.msra.mxu0 0
    %1285 = vmatprep.subr.bf16.mxu0 0
    %1286 = vmatpush1.bf16.msra.mxu0 0
    %1287 = vmatprep.subr.bf16.mxu0 0
    %1288 = vmatpush1.bf16.msra.mxu0 0
    %1289 = vmatprep.subr.bf16.mxu0 0
    %1290 = vmatpush1.bf16.msra.mxu0 0
    %1291 = vmatprep.subr.bf16.mxu0 0
    %1292 = vmatpush1.bf16.msra.mxu0 0
    %1293 = vmatprep.subr.bf16.mxu0 0
    %1294 = vmatpush1.bf16.msra.mxu0 0
    %1295 = vmatprep.subr.bf16.mxu0 0
    %1296 = vmatpush1.bf16.msra.mxu0 0
    %1297 = vmatprep.subr.bf16.mxu0 0
    %1298 = vmatpush1.bf16.msra.mxu0 0
    %1299 = vmatprep.subr.bf16.mxu0 0
    %1300 = vmatpush1.bf16.msra.mxu0 0
    %1301 = vmatprep.subr.bf16.mxu0 0
    %1302 = vmatpush1.bf16.msra.mxu0 0
    %1303 = vmatprep.subr.bf16.mxu0 0
    %1304 = vmatpush1.bf16.msra.mxu0 0
    %1305 = vmatprep.subr.bf16.mxu0 0
    %1306 = vmatpush1.bf16.msra.mxu0 0
    %1307 = vmatprep.subr.bf16.mxu0 0
    %1308 = vmatpush1.bf16.msra.mxu0 0
    %1309 = vmatprep.subr.bf16.mxu0 0
    %1310 = vmatpush1.bf16.msra.mxu0 0
    %1311 = vmatprep.mubr.bf16.mxu0 0
    %1312 = vmatmul.mubr.bf16.gmra.mrb[0].mxu0 %v1274
    %v1313 = vpop.f32.mrb[0].mxu0
    %v1314 = vadd.f32 0.0, %v1313
    %v1315 = vpop.f32.mrb[0].mxu0
    %v1316 = vpop.f32.mrb[0].mxu0
    %v1317 = vadd.f32 0.0, %v1316
    %v1318 = vpop.f32.mrb[0].mxu0
    %1319 = vdwg.mxu0
    %v1320 = vadd.f32 %v1044, %v1314
    %v1321 = vadd.f32 %v1047, %v1317
    %1322 = vrot.lane.b32.xlu0 %v496, 104
    %v1323 = vpop.permute.xlu0 %1322
    %1324 = vrot.lane.b32.xlu0 %v498, 104
    %v1325 = vpop.permute.xlu0 %1324
    %v1327 = vsel %vm512, %v1323, 0
    %v1330 = vsel %vm512, %v1325, 0
    %1332 = vmatprep.subr.bf16.mxu0 0
    %1333 = vmatpush1.bf16.xpose.msra.mxu0 %v1330
    %1334 = vmatprep.subr.bf16.mxu0 0
    %1335 = vmatpush1.bf16.xpose.msra.mxu0 0
    %1336 = vmatprep.subr.bf16.mxu0 0
    %1337 = vmatpush1.bf16.xpose.msra.mxu0 0
    %1338 = vmatprep.subr.bf16.mxu0 0
    %1339 = vmatpush1.bf16.xpose.msra.mxu0 0
    %1340 = vmatprep.subr.bf16.mxu0 0
    %1341 = vmatpush1.bf16.xpose.msra.mxu0 0
    %1342 = vmatprep.subr.bf16.mxu0 0
    %1343 = vmatpush1.bf16.xpose.msra.mxu0 0
    %1344 = vmatprep.subr.bf16.mxu0 0
    %1345 = vmatpush1.bf16.xpose.msra.mxu0 0
    %1346 = vmatprep.subr.bf16.mxu0 0
    %1347 = vmatpush1.bf16.xpose.msra.mxu0 0
    %1348 = vmatprep.subr.bf16.mxu0 0
    %1349 = vmatpush1.bf16.xpose.msra.mxu0 0
    %1350 = vmatprep.subr.bf16.mxu0 0
    %1351 = vmatpush1.bf16.xpose.msra.mxu0 0
    %1352 = vmatprep.subr.bf16.mxu0 0
    %1353 = vmatpush1.bf16.xpose.msra.mxu0 0
    %1354 = vmatprep.subr.bf16.mxu0 0
    %1355 = vmatpush1.bf16.xpose.msra.mxu0 0
    %1356 = vmatprep.subr.bf16.mxu0 0
    %1357 = vmatpush1.bf16.xpose.msra.mxu0 0
    %1358 = vmatprep.subr.bf16.mxu0 0
    %1359 = vmatpush1.bf16.xpose.msra.mxu0 0
    %1360 = vmatprep.subr.bf16.mxu0 0
    %1361 = vmatpush1.bf16.xpose.msra.mxu0 0
    %1362 = vmatprep.subr.bf16.mxu0 0
    %1363 = vmatpush1.bf16.xpose.msra.mxu0 0
    %1364 = vmatprep.mubr.bf16.mxu0 0
    %1365 = vmatmul.mubr.bf16.gmra.mrb[0].mxu0 %v1327
    %v1366 = vpop.f32.mrb[0].mxu0
    %v1367 = vadd.f32 %v505, %v1366
    %v1368 = vpop.f32.mrb[0].mxu0
    %v1369 = vpop.f32.mrb[0].mxu0
    %v1370 = vpop.f32.mrb[0].mxu0
    %1371 = vdwg.mxu0
    %1372 = vrot.lane.b32.xlu0 %v497, 104
    %v1373 = vpop.permute.xlu0 %1372
    %1374 = vrot.lane.b32.xlu0 %v499, 104
    %v1375 = vpop.permute.xlu0 %1374
    %v1377 = vsel %vm512, %v1373, 0
    %v1380 = vsel %vm512, %v1375, 0
    %1382 = vmatprep.subr.bf16.mxu0 0
    %1383 = vmatpush1.bf16.xpose.msra.mxu0 %v1380
    %1384 = vmatprep.subr.bf16.mxu0 0
    %1385 = vmatpush1.bf16.xpose.msra.mxu0 0
    %1386 = vmatprep.subr.bf16.mxu0 0
    %1387 = vmatpush1.bf16.xpose.msra.mxu0 0
    %1388 = vmatprep.subr.bf16.mxu0 0
    %1389 = vmatpush1.bf16.xpose.msra.mxu0 0
    %1390 = vmatprep.subr.bf16.mxu0 0
    %1391 = vmatpush1.bf16.xpose.msra.mxu0 0
    %1392 = vmatprep.subr.bf16.mxu0 0
    %1393 = vmatpush1.bf16.xpose.msra.mxu0 0
    %1394 = vmatprep.subr.bf16.mxu0 0
    %1395 = vmatpush1.bf16.xpose.msra.mxu0 0
    %1396 = vmatprep.subr.bf16.mxu0 0
    %1397 = vmatpush1.bf16.xpose.msra.mxu0 0
    %1398 = vmatprep.subr.bf16.mxu0 0
    %1399 = vmatpush1.bf16.xpose.msra.mxu0 0
    %1400 = vmatprep.subr.bf16.mxu0 0
    %1401 = vmatpush1.bf16.xpose.msra.mxu0 0
    %1402 = vmatprep.subr.bf16.mxu0 0
    %1403 = vmatpush1.bf16.xpose.msra.mxu0 0
    %1404 = vmatprep.subr.bf16.mxu0 0
    %1405 = vmatpush1.bf16.xpose.msra.mxu0 0
    %1406 = vmatprep.subr.bf16.mxu0 0
    %1407 = vmatpush1.bf16.xpose.msra.mxu0 0
    %1408 = vmatprep.subr.bf16.mxu0 0
    %1409 = vmatpush1.bf16.xpose.msra.mxu0 0
    %1410 = vmatprep.subr.bf16.mxu0 0
    %1411 = vmatpush1.bf16.xpose.msra.mxu0 0
    %1412 = vmatprep.subr.bf16.mxu0 0
    %1413 = vmatpush1.bf16.xpose.msra.mxu0 0
    %1414 = vmatprep.mubr.bf16.mxu0 0
    %1415 = vmatmul.mubr.bf16.gmra.mrb[0].mxu0 %v1377
    %v1416 = vpop.f32.mrb[0].mxu0
    %v1417 = vadd.f32 %v509, %v1416
    %v1418 = vpop.f32.mrb[0].mxu0
    %v1419 = vpop.f32.mrb[0].mxu0
    %v1420 = vpop.f32.mrb[0].mxu0
    %1421 = vdwg.mxu0
    %v1422 = vadd.f32 %v1367, %v155
    %v1423 = vadd.f32 %v1417, %v155
    %v1424 = vsel %vm512, %v1422, -inf
    %1425 = vmax.xlane.f32.xlu0 %v1424
    %v1426 = vpop.xlane.xlu0 %1425
    %v1427 = vsel %vm512, %v1423, -inf
    %1428 = vmax.xlane.f32.xlu0 %v1427
    %v1429 = vpop.xlane.xlu0 %1428
    %v1430 = vsub.f32 %v1422, %v1426
    %v1431 = vsub.f32 %v1423, %v1429
    %v1432 = vmul.f32 %v1430, 1.442695
    %v1433 = vpow.pop %v1432
    %v1434 = vmul.f32 %v1431, 1.442695
    %v1435 = vpow.pop %v1434
    %v1436 = vsel %vm512, %v1433, 0.0
    %1437 = vadd.xlane.f32.xlu0 %v1436
    %v1438 = vpop.xlane.xlu0 %1437
    %v1439 = vsel %vm512, %v1435, 0.0
    %1440 = vadd.xlane.f32.xlu0 %v1439
    %v1441 = vpop.xlane.xlu0 %1440
    %v1442 = vrcp.pop %v1438
    %v1443 = vrcp.pop %v1441
    %v1444 = vmul.f32 %v1433, %v1442
    %v1445 = vmul.f32 %v1435, %v1443
    %v1446 = vpack.c.bf16 %v1444, %v1444
    %v1447 = vpack.c.bf16 %v1445, %v1445
    %1448 = vrot.lane.b32.xlu0 %v631, 104
    %v1449 = vpop.permute.xlu0 %1448
    %v1451 = vsel %vm512, %v1446, 0
    %v1454 = vsel %vm636, %v1449, 0
    %1456 = vmatprep.subr.bf16.mxu0 0
    %1457 = vmatpush1.bf16.msra.mxu0 %v1454
    %1458 = vmatprep.subr.bf16.mxu0 0
    %1459 = vmatpush1.bf16.msra.mxu0 0
    %1460 = vmatprep.subr.bf16.mxu0 0
    %1461 = vmatpush1.bf16.msra.mxu0 0
    %1462 = vmatprep.subr.bf16.mxu0 0
    %1463 = vmatpush1.bf16.msra.mxu0 0
    %1464 = vmatprep.subr.bf16.mxu0 0
    %1465 = vmatpush1.bf16.msra.mxu0 0
    %1466 = vmatprep.subr.bf16.mxu0 0
    %1467 = vmatpush1.bf16.msra.mxu0 0
    %1468 = vmatprep.subr.bf16.mxu0 0
    %1469 = vmatpush1.bf16.msra.mxu0 0
    %1470 = vmatprep.subr.bf16.mxu0 0
    %1471 = vmatpush1.bf16.msra.mxu0 0
    %1472 = vmatprep.subr.bf16.mxu0 0
    %1473 = vmatpush1.bf16.msra.mxu0 0
    %1474 = vmatprep.subr.bf16.mxu0 0
    %1475 = vmatpush1.bf16.msra.mxu0 0
    %1476 = vmatprep.subr.bf16.mxu0 0
    %1477 = vmatpush1.bf16.msra.mxu0 0
    %1478 = vmatprep.subr.bf16.mxu0 0
    %1479 = vmatpush1.bf16.msra.mxu0 0
    %1480 = vmatprep.subr.bf16.mxu0 0
    %1481 = vmatpush1.bf16.msra.mxu0 0
    %1482 = vmatprep.subr.bf16.mxu0 0
    %1483 = vmatpush1.bf16.msra.mxu0 0
    %1484 = vmatprep.subr.bf16.mxu0 0
    %1485 = vmatpush1.bf16.msra.mxu0 0
    %1486 = vmatprep.subr.bf16.mxu0 0
    %1487 = vmatpush1.bf16.msra.mxu0 0
    %1488 = vmatprep.mubr.bf16.mxu0 0
    %1489 = vmatmul.mubr.bf16.gmra.mrb[0].mxu0 %v1451
    %v1490 = vpop.f32.mrb[0].mxu0
    %v1491 = vadd.f32 0.0, %v1490
    %v1492 = vpop.f32.mrb[0].mxu0
    %v1493 = vpop.f32.mrb[0].mxu0
    %v1494 = vpop.f32.mrb[0].mxu0
    %1495 = vdwg.mxu0
    %1496 = vrot.lane.b32.xlu0 %v632, 104
    %v1497 = vpop.permute.xlu0 %1496
    %v1499 = vsel %vm512, %v1447, 0
    %v1502 = vsel %vm636, %v1497, 0
    %1504 = vmatprep.subr.bf16.mxu0 0
    %1505 = vmatpush1.bf16.msra.mxu0 %v1502
    %1506 = vmatprep.subr.bf16.mxu0 0
    %1507 = vmatpush1.bf16.msra.mxu0 0
    %1508 = vmatprep.subr.bf16.mxu0 0
    %1509 = vmatpush1.bf16.msra.mxu0 0
    %1510 = vmatprep.subr.bf16.mxu0 0
    %1511 = vmatpush1.bf16.msra.mxu0 0
    %1512 = vmatprep.subr.bf16.mxu0 0
    %1513 = vmatpush1.bf16.msra.mxu0 0
    %1514 = vmatprep.subr.bf16.mxu0 0
    %1515 = vmatpush1.bf16.msra.mxu0 0
    %1516 = vmatprep.subr.bf16.mxu0 0
    %1517 = vmatpush1.bf16.msra.mxu0 0
    %1518 = vmatprep.subr.bf16.mxu0 0
    %1519 = vmatpush1.bf16.msra.mxu0 0
    %1520 = vmatprep.subr.bf16.mxu0 0
    %1521 = vmatpush1.bf16.msra.mxu0 0
    %1522 = vmatprep.subr.bf16.mxu0 0
    %1523 = vmatpush1.bf16.msra.mxu0 0
    %1524 = vmatprep.subr.bf16.mxu0 0
    %1525 = vmatpush1.bf16.msra.mxu0 0
    %1526 = vmatprep.subr.bf16.mxu0 0
    %1527 = vmatpush1.bf16.msra.mxu0 0
    %1528 = vmatprep.subr.bf16.mxu0 0
    %1529 = vmatpush1.bf16.msra.mxu0 0
    %1530 = vmatprep.subr.bf16.mxu0 0
    %1531 = vmatpush1.bf16.msra.mxu0 0
    %1532 = vmatprep.subr.bf16.mxu0 0
    %1533 = vmatpush1.bf16.msra.mxu0 0
    %1534 = vmatprep.subr.bf16.mxu0 0
    %1535 = vmatpush1.bf16.msra.mxu0 0
    %1536 = vmatprep.mubr.bf16.mxu0 0
    %1537 = vmatmul.mubr.bf16.gmra.mrb[0].mxu0 %v1499
    %v1538 = vpop.f32.mrb[0].mxu0
    %v1539 = vadd.f32 0.0, %v1538
    %v1540 = vpop.f32.mrb[0].mxu0
    %v1541 = vpop.f32.mrb[0].mxu0
    %v1542 = vpop.f32.mrb[0].mxu0
    %1543 = vdwg.mxu0
    %v1544 = vpack.c.bf16 %v1539, %v1491
    %v1546 = vsel %vm512, %v1544, 0
    %v1549 = vsel %vm636, %v191, 0
    %1551 = vmatprep.subr.bf16.mxu0 0
    %1552 = vmatpush1.bf16.msra.mxu0 %v1549
    %1553 = vmatprep.subr.bf16.mxu0 0
    %1554 = vmatpush1.bf16.msra.mxu0 0
    %1555 = vmatprep.subr.bf16.mxu0 0
    %1556 = vmatpush1.bf16.msra.mxu0 0
    %1557 = vmatprep.subr.bf16.mxu0 0
    %1558 = vmatpush1.bf16.msra.mxu0 0
    %1559 = vmatprep.subr.bf16.mxu0 0
    %1560 = vmatpush1.bf16.msra.mxu0 0
    %1561 = vmatprep.subr.bf16.mxu0 0
    %1562 = vmatpush1.bf16.msra.mxu0 0
    %1563 = vmatprep.subr.bf16.mxu0 0
    %1564 = vmatpush1.bf16.msra.mxu0 0
    %1565 = vmatprep.subr.bf16.mxu0 0
    %1566 = vmatpush1.bf16.msra.mxu0 0
    %1567 = vmatprep.subr.bf16.mxu0 0
    %1568 = vmatpush1.bf16.msra.mxu0 0
    %1569 = vmatprep.subr.bf16.mxu0 0
    %1570 = vmatpush1.bf16.msra.mxu0 0
    %1571 = vmatprep.subr.bf16.mxu0 0
    %1572 = vmatpush1.bf16.msra.mxu0 0
    %1573 = vmatprep.subr.bf16.mxu0 0
    %1574 = vmatpush1.bf16.msra.mxu0 0
    %1575 = vmatprep.subr.bf16.mxu0 0
    %1576 = vmatpush1.bf16.msra.mxu0 0
    %1577 = vmatprep.subr.bf16.mxu0 0
    %1578 = vmatpush1.bf16.msra.mxu0 0
    %1579 = vmatprep.subr.bf16.mxu0 0
    %1580 = vmatpush1.bf16.msra.mxu0 0
    %1581 = vmatprep.subr.bf16.mxu0 0
    %1582 = vmatpush1.bf16.msra.mxu0 0
    %1583 = vmatprep.mubr.bf16.mxu0 0
    %1584 = vmatmul.mubr.bf16.gmra.mrb[0].mxu0 %v1546
    %v1585 = vpop.f32.mrb[0].mxu0
    %v1586 = vadd.f32 0.0, %v1585
    %v1587 = vpop.f32.mrb[0].mxu0
    %v1588 = vpop.f32.mrb[0].mxu0
    %v1589 = vadd.f32 0.0, %v1588
    %v1590 = vpop.f32.mrb[0].mxu0
    %1591 = vdwg.mxu0
    %v1592 = vadd.f32 %v1320, %v1586
    %v1593 = vadd.f32 %v1321, %v1589
    %v1594 = vadd.f32 %v303, %v1592
    %v1595 = vadd.f32 %v306, %v1593
    %v1596 = vmul.f32 %v1594, %v1594
    %v1597 = vmul.f32 %v1595, %v1595
    %v1598 = vsel %vm311, %v1596, 0.0
    %1599 = vadd.xlane.f32.xlu0 %v1598
    %v1600 = vpop.xlane.xlu0 %1599
    %v1601 = vsel %vm311, %v1597, 0.0
    %1602 = vadd.xlane.f32.xlu0 %v1601
    %v1603 = vpop.xlane.xlu0 %1602
    %v1604 = vmul.f32 %v1600, %v318
    %v1605 = vmul.f32 %v1603, %v318
    %v1606 = vadd.f32 %v1604, 1e-06
    %v1607 = vadd.f32 %v1605, 1e-06
    %v1608 = vrsqrt.pop %v1606
    %v1609 = vrsqrt.pop %v1607
    %v1610 = vmul.f32 %v1594, %v1608
    %v1611 = vmul.f32 %v1595, %v1609
    %v1612 = vlaneseq
    %v1613 = vshrl.u32 %v1612, 7
    %v1614 = vsub.s32 0, %v1613
    %v1615 = vrot.slane %v221, %v1614
    %v1616 = vmul.f32 %v1610, %v1615
    %v1617 = vmul.f32 %v1611, %v1615
    %v1618 = vpack.c.bf16 %v1617, %v1616
    %v1623 = vunpack.c.l.b16 %v197
    %v1624 = vunpack.c.l.b16 %v198
    %v1625 = vunpack.c.l.b16 %v199
    %v1626 = vunpack.c.l.b16 %v200
    %v1627 = vpack.c.b16 %v1624, %v1623
    %v1628 = vpack.c.b16 %v1626, %v1625
    %v1632 = vsel %vm311, %v1618, 0
    %1634 = vmatprep.subr.bf16.mxu0 0
    %1635 = vmatpush1.bf16.msra.mxu0 %v1627
    %1636 = vmatprep.subr.bf16.mxu0 0
    %1637 = vmatpush1.bf16.msra.mxu0 %v1628
    %1638 = vmatprep.subr.bf16.mxu0 0
    %1639 = vmatpush1.bf16.msra.mxu0 0
    %1640 = vmatprep.subr.bf16.mxu0 0
    %1641 = vmatpush1.bf16.msra.mxu0 0
    %1642 = vmatprep.subr.bf16.mxu0 0
    %1643 = vmatpush1.bf16.msra.mxu0 0
    %1644 = vmatprep.subr.bf16.mxu0 0
    %1645 = vmatpush1.bf16.msra.mxu0 0
    %1646 = vmatprep.subr.bf16.mxu0 0
    %1647 = vmatpush1.bf16.msra.mxu0 0
    %1648 = vmatprep.subr.bf16.mxu0 0
    %1649 = vmatpush1.bf16.msra.mxu0 0
    %1650 = vmatprep.subr.bf16.mxu0 0
    %1651 = vmatpush1.bf16.msra.mxu0 0
    %1652 = vmatprep.subr.bf16.mxu0 0
    %1653 = vmatpush1.bf16.msra.mxu0 0
    %1654 = vmatprep.subr.bf16.mxu0 0
    %1655 = vmatpush1.bf16.msra.mxu0 0
    %1656 = vmatprep.subr.bf16.mxu0 0
    %1657 = vmatpush1.bf16.msra.mxu0 0
    %1658 = vmatprep.subr.bf16.mxu0 0
    %1659 = vmatpush1.bf16.msra.mxu0 0
    %1660 = vmatprep.subr.bf16.mxu0 0
    %1661 = vmatpush1.bf16.msra.mxu0 0
    %1662 = vmatprep.subr.bf16.mxu0 0
    %1663 = vmatpush1.bf16.msra.mxu0 0
    %1664 = vmatprep.subr.bf16.mxu0 0
    %1665 = vmatpush1.bf16.msra.mxu0 0
    %1666 = vmatprep.mubr.bf16.mxu0 0
    %1667 = vmatmul.mubr.bf16.gmra.mrb[0].mxu0 %v1632
    %v1668 = vpop.f32.mrb[0].mxu0
    %v1669 = vadd.f32 0.0, %v1668
    %v1670 = vpop.f32.mrb[0].mxu0
    %v1671 = vpop.f32.mrb[0].mxu0
    %v1672 = vadd.f32 0.0, %v1671
    %v1673 = vpop.f32.mrb[0].mxu0
    %1674 = vdwg.mxu0
    %v1675 = vmax.f32 %v1669, 0.0
    %v1676 = vmax.f32 %v1672, 0.0
    %v1677 = vpack.c.bf16 %v1676, %v1675
    %v1686 = vunpack.c.l.b16 %v205
    %v1687 = vunpack.c.l.b16 %v206
    %v1688 = vunpack.c.l.b16 %v207
    %v1689 = vunpack.c.l.b16 %v208
    %v1690 = vunpack.c.l.b16 %v209
    %v1691 = vunpack.c.l.b16 %v210
    %v1692 = vunpack.c.l.b16 %v211
    %v1693 = vunpack.c.l.b16 %v212
    %v1694 = vpack.c.b16 %v1687, %v1686
    %v1695 = vpack.c.b16 %v1689, %v1688
    %v1696 = vpack.c.b16 %v1691, %v1690
    %v1697 = vpack.c.b16 %v1693, %v1692
    %v1703 = vsel %vm264, %v1677, 0
    %1705 = vmatprep.subr.bf16.mxu0 0
    %1706 = vmatpush1.bf16.msra.mxu0 %v1694
    %1707 = vmatprep.subr.bf16.mxu0 0
    %1708 = vmatpush1.bf16.msra.mxu0 %v1695
    %1709 = vmatprep.subr.bf16.mxu0 0
    %1710 = vmatpush1.bf16.msra.mxu0 %v1696
    %1711 = vmatprep.subr.bf16.mxu0 0
    %1712 = vmatpush1.bf16.msra.mxu0 %v1697
    %1713 = vmatprep.subr.bf16.mxu0 0
    %1714 = vmatpush1.bf16.msra.mxu0 0
    %1715 = vmatprep.subr.bf16.mxu0 0
    %1716 = vmatpush1.bf16.msra.mxu0 0
    %1717 = vmatprep.subr.bf16.mxu0 0
    %1718 = vmatpush1.bf16.msra.mxu0 0
    %1719 = vmatprep.subr.bf16.mxu0 0
    %1720 = vmatpush1.bf16.msra.mxu0 0
    %1721 = vmatprep.subr.bf16.mxu0 0
    %1722 = vmatpush1.bf16.msra.mxu0 0
    %1723 = vmatprep.subr.bf16.mxu0 0
    %1724 = vmatpush1.bf16.msra.mxu0 0
    %1725 = vmatprep.subr.bf16.mxu0 0
    %1726 = vmatpush1.bf16.msra.mxu0 0
    %1727 = vmatprep.subr.bf16.mxu0 0
    %1728 = vmatpush1.bf16.msra.mxu0 0
    %1729 = vmatprep.subr.bf16.mxu0 0
    %1730 = vmatpush1.bf16.msra.mxu0 0
    %1731 = vmatprep.subr.bf16.mxu0 0
    %1732 = vmatpush1.bf16.msra.mxu0 0
    %1733 = vmatprep.subr.bf16.mxu0 0
    %1734 = vmatpush1.bf16.msra.mxu0 0
    %1735 = vmatprep.subr.bf16.mxu0 0
    %1736 = vmatpush1.bf16.msra.mxu0 0
    %1737 = vmatprep.mubr.bf16.mxu0 0
    %1738 = vmatmul.mubr.bf16.gmra.mrb[0].mxu0 %v1703
    %v1739 = vpop.f32.mrb[0].mxu0
    %v1740 = vadd.f32 0.0, %v1739
    %v1741 = vpop.f32.mrb[0].mxu0
    %v1742 = vpop.f32.mrb[0].mxu0
    %v1743 = vadd.f32 0.0, %v1742
    %v1744 = vpop.f32.mrb[0].mxu0
    %1745 = vdwg.mxu0
    %v1746 = vadd.f32 %v1594, %v1740
    %v1747 = vadd.f32 %v1595, %v1743
    %v1748 = vmul.f32 %v1746, %v1746
    %v1749 = vmul.f32 %v1747, %v1747
    %v1750 = vsel %vm311, %v1748, 0.0
    %1751 = vadd.xlane.f32.xlu0 %v1750
    %v1752 = vpop.xlane.xlu0 %1751
    %v1753 = vsel %vm311, %v1749, 0.0
    %1754 = vadd.xlane.f32.xlu0 %v1753
    %v1755 = vpop.xlane.xlu0 %1754
    %v1756 = vmul.f32 %v1752, %v318
    %v1757 = vmul.f32 %v1755, %v318
    %v1758 = vadd.f32 %v1756, 1e-06
    %v1759 = vadd.f32 %v1757, 1e-06
    %v1760 = vrsqrt.pop %v1758
    %v1761 = vrsqrt.pop %v1759
    %v1762 = vmul.f32 %v1746, %v1760
    %v1763 = vmul.f32 %v1747, %v1761
    %v1764 = vlaneseq
    %v1765 = vshrl.u32 %v1764, 7
    %v1766 = vsub.s32 1, %v1765
    %v1767 = vrot.slane %v196, %v1766
    %v1768 = vmul.f32 %v1762, %v1767
    %v1769 = vmul.f32 %v1763, %v1767
    %v1770 = vpack.c.bf16 %v1769, %v1768
    %v1775 = vunpack.c.l.b16 %v168
    %v1776 = vunpack.c.l.b16 %v169
    %v1777 = vunpack.c.l.b16 %v170
    %v1778 = vunpack.c.l.b16 %v171
    %v1779 = vpack.c.b16 %v1776, %v1775
    %v1780 = vpack.c.b16 %v1778, %v1777
    %v1784 = vsel %vm311, %v1770, 0
    %1786 = vmatprep.subr.bf16.mxu0 0
    %1787 = vmatpush1.bf16.msra.mxu0 %v1779
    %1788 = vmatprep.subr.bf16.mxu0 0
    %1789 = vmatpush1.bf16.msra.mxu0 %v1780
    %1790 = vmatprep.subr.bf16.mxu0 0
    %1791 = vmatpush1.bf16.msra.mxu0 0
    %1792 = vmatprep.subr.bf16.mxu0 0
    %1793 = vmatpush1.bf16.msra.mxu0 0
    %1794 = vmatprep.subr.bf16.mxu0 0
    %1795 = vmatpush1.bf16.msra.mxu0 0
    %1796 = vmatprep.subr.bf16.mxu0 0
    %1797 = vmatpush1.bf16.msra.mxu0 0
    %1798 = vmatprep.subr.bf16.mxu0 0
    %1799 = vmatpush1.bf16.msra.mxu0 0
    %1800 = vmatprep.subr.bf16.mxu0 0
    %1801 = vmatpush1.bf16.msra.mxu0 0
    %1802 = vmatprep.subr.bf16.mxu0 0
    %1803 = vmatpush1.bf16.msra.mxu0 0
    %1804 = vmatprep.subr.bf16.mxu0 0
    %1805 = vmatpush1.bf16.msra.mxu0 0
    %1806 = vmatprep.subr.bf16.mxu0 0
    %1807 = vmatpush1.bf16.msra.mxu0 0
    %1808 = vmatprep.subr.bf16.mxu0 0
    %1809 = vmatpush1.bf16.msra.mxu0 0
    %1810 = vmatprep.subr.bf16.mxu0 0
    %1811 = vmatpush1.bf16.msra.mxu0 0
    %1812 = vmatprep.subr.bf16.mxu0 0
    %1813 = vmatpush1.bf16.msra.mxu0 0
    %1814 = vmatprep.subr.bf16.mxu0 0
    %1815 = vmatpush1.bf16.msra.mxu0 0
    %1816 = vmatprep.subr.bf16.mxu0 0
    %1817 = vmatpush1.bf16.msra.mxu0 0
    %1818 = vmatprep.mubr.bf16.mxu0 0
    %1819 = vmatmul.mubr.bf16.gmra.mrb[0].mxu0 %v1784
    %v1820 = vpop.f32.mrb[0].mxu0
    %v1821 = vadd.f32 0.0, %v1820
    %v1822 = vpop.f32.mrb[0].mxu0
    %v1823 = vpop.f32.mrb[0].mxu0
    %v1824 = vadd.f32 0.0, %v1823
    %v1825 = vpop.f32.mrb[0].mxu0
    %1826 = vdwg.mxu0
    %v1831 = vunpack.c.l.b16 %v176
    %v1832 = vunpack.c.l.b16 %v177
    %v1833 = vunpack.c.l.b16 %v178
    %v1834 = vunpack.c.l.b16 %v179
    %v1835 = vpack.c.b16 %v1832, %v1831
    %v1836 = vpack.c.b16 %v1834, %v1833
    %1839 = vmatprep.subr.bf16.mxu0 0
    %1840 = vmatpush1.bf16.msra.mxu0 %v1835
    %1841 = vmatprep.subr.bf16.mxu0 0
    %1842 = vmatpush1.bf16.msra.mxu0 %v1836
    %1843 = vmatprep.subr.bf16.mxu0 0
    %1844 = vmatpush1.bf16.msra.mxu0 0
    %1845 = vmatprep.subr.bf16.mxu0 0
    %1846 = vmatpush1.bf16.msra.mxu0 0
    %1847 = vmatprep.subr.bf16.mxu0 0
    %1848 = vmatpush1.bf16.msra.mxu0 0
    %1849 = vmatprep.subr.bf16.mxu0 0
    %1850 = vmatpush1.bf16.msra.mxu0 0
    %1851 = vmatprep.subr.bf16.mxu0 0
    %1852 = vmatpush1.bf16.msra.mxu0 0
    %1853 = vmatprep.subr.bf16.mxu0 0
    %1854 = vmatpush1.bf16.msra.mxu0 0
    %1855 = vmatprep.subr.bf16.mxu0 0
    %1856 = vmatpush1.bf16.msra.mxu0 0
    %1857 = vmatprep.subr.bf16.mxu0 0
    %1858 = vmatpush1.bf16.msra.mxu0 0
    %1859 = vmatprep.subr.bf16.mxu0 0
    %1860 = vmatpush1.bf16.msra.mxu0 0
    %1861 = vmatprep.subr.bf16.mxu0 0
    %1862 = vmatpush1.bf16.msra.mxu0 0
    %1863 = vmatprep.subr.bf16.mxu0 0
    %1864 = vmatpush1.bf16.msra.mxu0 0
    %1865 = vmatprep.subr.bf16.mxu0 0
    %1866 = vmatpush1.bf16.msra.mxu0 0
    %1867 = vmatprep.subr.bf16.mxu0 0
    %1868 = vmatpush1.bf16.msra.mxu0 0
    %1869 = vmatprep.subr.bf16.mxu0 0
    %1870 = vmatpush1.bf16.msra.mxu0 0
    %1871 = vmatprep.mubr.bf16.mxu0 0
    %1872 = vmatmul.mubr.bf16.gmra.mrb[0].mxu0 %v1784
    %v1873 = vpop.f32.mrb[0].mxu0
    %v1874 = vadd.f32 0.0, %v1873
    %v1875 = vpop.f32.mrb[0].mxu0
    %v1876 = vpop.f32.mrb[0].mxu0
    %v1877 = vadd.f32 0.0, %v1876
    %v1878 = vpop.f32.mrb[0].mxu0
    %1879 = vdwg.mxu0
    %v1884 = vunpack.c.l.b16 %v184
    %v1885 = vunpack.c.l.b16 %v185
    %v1886 = vunpack.c.l.b16 %v186
    %v1887 = vunpack.c.l.b16 %v187
    %v1888 = vpack.c.b16 %v1885, %v1884
    %v1889 = vpack.c.b16 %v1887, %v1886
    %1892 = vmatprep.subr.bf16.mxu0 0
    %1893 = vmatpush1.bf16.msra.mxu0 %v1888
    %1894 = vmatprep.subr.bf16.mxu0 0
    %1895 = vmatpush1.bf16.msra.mxu0 %v1889
    %1896 = vmatprep.subr.bf16.mxu0 0
    %1897 = vmatpush1.bf16.msra.mxu0 0
    %1898 = vmatprep.subr.bf16.mxu0 0
    %1899 = vmatpush1.bf16.msra.mxu0 0
    %1900 = vmatprep.subr.bf16.mxu0 0
    %1901 = vmatpush1.bf16.msra.mxu0 0
    %1902 = vmatprep.subr.bf16.mxu0 0
    %1903 = vmatpush1.bf16.msra.mxu0 0
    %1904 = vmatprep.subr.bf16.mxu0 0
    %1905 = vmatpush1.bf16.msra.mxu0 0
    %1906 = vmatprep.subr.bf16.mxu0 0
    %1907 = vmatpush1.bf16.msra.mxu0 0
    %1908 = vmatprep.subr.bf16.mxu0 0
    %1909 = vmatpush1.bf16.msra.mxu0 0
    %1910 = vmatprep.subr.bf16.mxu0 0
    %1911 = vmatpush1.bf16.msra.mxu0 0
    %1912 = vmatprep.subr.bf16.mxu0 0
    %1913 = vmatpush1.bf16.msra.mxu0 0
    %1914 = vmatprep.subr.bf16.mxu0 0
    %1915 = vmatpush1.bf16.msra.mxu0 0
    %1916 = vmatprep.subr.bf16.mxu0 0
    %1917 = vmatpush1.bf16.msra.mxu0 0
    %1918 = vmatprep.subr.bf16.mxu0 0
    %1919 = vmatpush1.bf16.msra.mxu0 0
    %1920 = vmatprep.subr.bf16.mxu0 0
    %1921 = vmatpush1.bf16.msra.mxu0 0
    %1922 = vmatprep.subr.bf16.mxu0 0
    %1923 = vmatpush1.bf16.msra.mxu0 0
    %1924 = vmatprep.mubr.bf16.mxu0 0
    %1925 = vmatmul.mubr.bf16.gmra.mrb[0].mxu0 %v1784
    %v1926 = vpop.f32.mrb[0].mxu0
    %v1927 = vadd.f32 0.0, %v1926
    %v1928 = vpop.f32.mrb[0].mxu0
    %v1929 = vpop.f32.mrb[0].mxu0
    %v1930 = vadd.f32 0.0, %v1929
    %v1931 = vpop.f32.mrb[0].mxu0
    %1932 = vdwg.mxu0
    %v1933 = vpack.c.bf16 %v1821, %v1821
    %v1934 = vpack.c.bf16 %v1824, %v1824
    %v1935 = vpack.c.bf16 %v1874, %v1874
    %v1936 = vpack.c.bf16 %v1877, %v1877
    %v1938 = vsel %vm512, %v1933, 0
    %v1941 = vsel %vm512, %v1935, 0
    %1943 = vmatprep.subr.bf16.mxu0 0
    %1944 = vmatpush1.bf16.xpose.msra.mxu0 %v1941
    %1945 = vmatprep.subr.bf16.mxu0 0
    %1946 = vmatpush1.bf16.xpose.msra.mxu0 0
    %1947 = vmatprep.subr.bf16.mxu0 0
    %1948 = vmatpush1.bf16.xpose.msra.mxu0 0
    %1949 = vmatprep.subr.bf16.mxu0 0
    %1950 = vmatpush1.bf16.xpose.msra.mxu0 0
    %1951 = vmatprep.subr.bf16.mxu0 0
    %1952 = vmatpush1.bf16.xpose.msra.mxu0 0
    %1953 = vmatprep.subr.bf16.mxu0 0
    %1954 = vmatpush1.bf16.xpose.msra.mxu0 0
    %1955 = vmatprep.subr.bf16.mxu0 0
    %1956 = vmatpush1.bf16.xpose.msra.mxu0 0
    %1957 = vmatprep.subr.bf16.mxu0 0
    %1958 = vmatpush1.bf16.xpose.msra.mxu0 0
    %1959 = vmatprep.subr.bf16.mxu0 0
    %1960 = vmatpush1.bf16.xpose.msra.mxu0 0
    %1961 = vmatprep.subr.bf16.mxu0 0
    %1962 = vmatpush1.bf16.xpose.msra.mxu0 0
    %1963 = vmatprep.subr.bf16.mxu0 0
    %1964 = vmatpush1.bf16.xpose.msra.mxu0 0
    %1965 = vmatprep.subr.bf16.mxu0 0
    %1966 = vmatpush1.bf16.xpose.msra.mxu0 0
    %1967 = vmatprep.subr.bf16.mxu0 0
    %1968 = vmatpush1.bf16.xpose.msra.mxu0 0
    %1969 = vmatprep.subr.bf16.mxu0 0
    %1970 = vmatpush1.bf16.xpose.msra.mxu0 0
    %1971 = vmatprep.subr.bf16.mxu0 0
    %1972 = vmatpush1.bf16.xpose.msra.mxu0 0
    %1973 = vmatprep.subr.bf16.mxu0 0
    %1974 = vmatpush1.bf16.xpose.msra.mxu0 0
    %1975 = vmatprep.mubr.bf16.mxu0 0
    %1976 = vmatmul.mubr.bf16.gmra.mrb[0].mxu0 %v1938
    %v1977 = vpop.f32.mrb[0].mxu0
    %v1978 = vadd.f32 %v505, %v1977
    %v1979 = vpop.f32.mrb[0].mxu0
    %v1980 = vpop.f32.mrb[0].mxu0
    %v1981 = vpop.f32.mrb[0].mxu0
    %1982 = vdwg.mxu0
    %v1984 = vsel %vm512, %v1934, 0
    %v1987 = vsel %vm512, %v1936, 0
    %1989 = vmatprep.subr.bf16.mxu0 0
    %1990 = vmatpush1.bf16.xpose.msra.mxu0 %v1987
    %1991 = vmatprep.subr.bf16.mxu0 0
    %1992 = vmatpush1.bf16.xpose.msra.mxu0 0
    %1993 = vmatprep.subr.bf16.mxu0 0
    %1994 = vmatpush1.bf16.xpose.msra.mxu0 0
    %1995 = vmatprep.subr.bf16.mxu0 0
    %1996 = vmatpush1.bf16.xpose.msra.mxu0 0
    %1997 = vmatprep.subr.bf16.mxu0 0
    %1998 = vmatpush1.bf16.xpose.msra.mxu0 0
    %1999 = vmatprep.subr.bf16.mxu0 0
    %2000 = vmatpush1.bf16.xpose.msra.mxu0 0
    %2001 = vmatprep.subr.bf16.mxu0 0
    %2002 = vmatpush1.bf16.xpose.msra.mxu0 0
    %2003 = vmatprep.subr.bf16.mxu0 0
    %2004 = vmatpush1.bf16.xpose.msra.mxu0 0
    %2005 = vmatprep.subr.bf16.mxu0 0
    %2006 = vmatpush1.bf16.xpose.msra.mxu0 0
    %2007 = vmatprep.subr.bf16.mxu0 0
    %2008 = vmatpush1.bf16.xpose.msra.mxu0 0
    %2009 = vmatprep.subr.bf16.mxu0 0
    %2010 = vmatpush1.bf16.xpose.msra.mxu0 0
    %2011 = vmatprep.subr.bf16.mxu0 0
    %2012 = vmatpush1.bf16.xpose.msra.mxu0 0
    %2013 = vmatprep.subr.bf16.mxu0 0
    %2014 = vmatpush1.bf16.xpose.msra.mxu0 0
    %2015 = vmatprep.subr.bf16.mxu0 0
    %2016 = vmatpush1.bf16.xpose.msra.mxu0 0
    %2017 = vmatprep.subr.bf16.mxu0 0
    %2018 = vmatpush1.bf16.xpose.msra.mxu0 0
    %2019 = vmatprep.subr.bf16.mxu0 0
    %2020 = vmatpush1.bf16.xpose.msra.mxu0 0
    %2021 = vmatprep.mubr.bf16.mxu0 0
    %2022 = vmatmul.mubr.bf16.gmra.mrb[0].mxu0 %v1984
    %v2023 = vpop.f32.mrb[0].mxu0
    %v2024 = vadd.f32 %v509, %v2023
    %v2025 = vpop.f32.mrb[0].mxu0
    %v2026 = vpop.f32.mrb[0].mxu0
    %v2027 = vpop.f32.mrb[0].mxu0
    %2028 = vdwg.mxu0
    %v2029 = vadd.f32 %v1978, %v152
    %v2030 = vadd.f32 %v2024, %v152
    %v2031 = vsel %vm512, %v2029, -inf
    %2032 = vmax.xlane.f32.xlu0 %v2031
    %v2033 = vpop.xlane.xlu0 %2032
    %v2034 = vsel %vm512, %v2030, -inf
    %2035 = vmax.xlane.f32.xlu0 %v2034
    %v2036 = vpop.xlane.xlu0 %2035
    %v2037 = vsub.f32 %v2029, %v2033
    %v2038 = vsub.f32 %v2030, %v2036
    %v2039 = vmul.f32 %v2037, 1.442695
    %v2040 = vpow.pop %v2039
    %v2041 = vmul.f32 %v2038, 1.442695
    %v2042 = vpow.pop %v2041
    %v2043 = vsel %vm512, %v2040, 0.0
    %2044 = vadd.xlane.f32.xlu0 %v2043
    %v2045 = vpop.xlane.xlu0 %2044
    %v2046 = vsel %vm512, %v2042, 0.0
    %2047 = vadd.xlane.f32.xlu0 %v2046
    %v2048 = vpop.xlane.xlu0 %2047
    %v2049 = vrcp.pop %v2045
    %v2050 = vrcp.pop %v2048
    %v2051 = vmul.f32 %v2040, %v2049
    %v2052 = vmul.f32 %v2042, %v2050
    %v2053 = vpack.c.bf16 %v2051, %v2051
    %v2054 = vpack.c.bf16 %v2052, %v2052
    %v2055 = vpack.c.bf16 %v1927, %v1927
    %v2056 = vpack.c.bf16 %v1930, %v1930
    %v2058 = vsel %vm512, %v2053, 0
    %v2061 = vsel %vm636, %v2055, 0
    %2063 = vmatprep.subr.bf16.mxu0 0
    %2064 = vmatpush1.bf16.msra.mxu0 %v2061
    %2065 = vmatprep.subr.bf16.mxu0 0
    %2066 = vmatpush1.bf16.msra.mxu0 0
    %2067 = vmatprep.subr.bf16.mxu0 0
    %2068 = vmatpush1.bf16.msra.mxu0 0
    %2069 = vmatprep.subr.bf16.mxu0 0
    %2070 = vmatpush1.bf16.msra.mxu0 0
    %2071 = vmatprep.subr.bf16.mxu0 0
    %2072 = vmatpush1.bf16.msra.mxu0 0
    %2073 = vmatprep.subr.bf16.mxu0 0
    %2074 = vmatpush1.bf16.msra.mxu0 0
    %2075 = vmatprep.subr.bf16.mxu0 0
    %2076 = vmatpush1.bf16.msra.mxu0 0
    %2077 = vmatprep.subr.bf16.mxu0 0
    %2078 = vmatpush1.bf16.msra.mxu0 0
    %2079 = vmatprep.subr.bf16.mxu0 0
    %2080 = vmatpush1.bf16.msra.mxu0 0
    %2081 = vmatprep.subr.bf16.mxu0 0
    %2082 = vmatpush1.bf16.msra.mxu0 0
    %2083 = vmatprep.subr.bf16.mxu0 0
    %2084 = vmatpush1.bf16.msra.mxu0 0
    %2085 = vmatprep.subr.bf16.mxu0 0
    %2086 = vmatpush1.bf16.msra.mxu0 0
    %2087 = vmatprep.subr.bf16.mxu0 0
    %2088 = vmatpush1.bf16.msra.mxu0 0
    %2089 = vmatprep.subr.bf16.mxu0 0
    %2090 = vmatpush1.bf16.msra.mxu0 0
    %2091 = vmatprep.subr.bf16.mxu0 0
    %2092 = vmatpush1.bf16.msra.mxu0 0
    %2093 = vmatprep.subr.bf16.mxu0 0
    %2094 = vmatpush1.bf16.msra.mxu0 0
    %2095 = vmatprep.mubr.bf16.mxu0 0
    %2096 = vmatmul.mubr.bf16.gmra.mrb[0].mxu0 %v2058
    %v2097 = vpop.f32.mrb[0].mxu0
    %v2098 = vadd.f32 0.0, %v2097
    %v2099 = vpop.f32.mrb[0].mxu0
    %v2100 = vpop.f32.mrb[0].mxu0
    %v2101 = vpop.f32.mrb[0].mxu0
    %2102 = vdwg.mxu0
    %v2104 = vsel %vm512, %v2054, 0
    %v2107 = vsel %vm636, %v2056, 0
    %2109 = vmatprep.subr.bf16.mxu0 0
    %2110 = vmatpush1.bf16.msra.mxu0 %v2107
    %2111 = vmatprep.subr.bf16.mxu0 0
    %2112 = vmatpush1.bf16.msra.mxu0 0
    %2113 = vmatprep.subr.bf16.mxu0 0
    %2114 = vmatpush1.bf16.msra.mxu0 0
    %2115 = vmatprep.subr.bf16.mxu0 0
    %2116 = vmatpush1.bf16.msra.mxu0 0
    %2117 = vmatprep.subr.bf16.mxu0 0
    %2118 = vmatpush1.bf16.msra.mxu0 0
    %2119 = vmatprep.subr.bf16.mxu0 0
    %2120 = vmatpush1.bf16.msra.mxu0 0
    %2121 = vmatprep.subr.bf16.mxu0 0
    %2122 = vmatpush1.bf16.msra.mxu0 0
    %2123 = vmatprep.subr.bf16.mxu0 0
    %2124 = vmatpush1.bf16.msra.mxu0 0
    %2125 = vmatprep.subr.bf16.mxu0 0
    %2126 = vmatpush1.bf16.msra.mxu0 0
    %2127 = vmatprep.subr.bf16.mxu0 0
    %2128 = vmatpush1.bf16.msra.mxu0 0
    %2129 = vmatprep.subr.bf16.mxu0 0
    %2130 = vmatpush1.bf16.msra.mxu0 0
    %2131 = vmatprep.subr.bf16.mxu0 0
    %2132 = vmatpush1.bf16.msra.mxu0 0
    %2133 = vmatprep.subr.bf16.mxu0 0
    %2134 = vmatpush1.bf16.msra.mxu0 0
    %2135 = vmatprep.subr.bf16.mxu0 0
    %2136 = vmatpush1.bf16.msra.mxu0 0
    %2137 = vmatprep.subr.bf16.mxu0 0
    %2138 = vmatpush1.bf16.msra.mxu0 0
    %2139 = vmatprep.subr.bf16.mxu0 0
    %2140 = vmatpush1.bf16.msra.mxu0 0
    %2141 = vmatprep.mubr.bf16.mxu0 0
    %2142 = vmatmul.mubr.bf16.gmra.mrb[0].mxu0 %v2104
    %v2143 = vpop.f32.mrb[0].mxu0
    %v2144 = vadd.f32 0.0, %v2143
    %v2145 = vpop.f32.mrb[0].mxu0
    %v2146 = vpop.f32.mrb[0].mxu0
    %v2147 = vpop.f32.mrb[0].mxu0
    %2148 = vdwg.mxu0
    %v2149 = vpack.c.bf16 %v2144, %v2098
    %2151 = vrot.lane.b32.xlu0 %v1933, 120
    %v2152 = vpop.permute.xlu0 %2151
    %2154 = vrot.lane.b32.xlu0 %v1935, 120
    %v2155 = vpop.permute.xlu0 %2154
    %v2157 = vsel %vm512, %v2152, 0
    %v2160 = vsel %vm512, %v2155, 0
    %2162 = vmatprep.subr.bf16.mxu0 0
    %2163 = vmatpush1.bf16.xpose.msra.mxu0 %v2160
    %2164 = vmatprep.subr.bf16.mxu0 0
    %2165 = vmatpush1.bf16.xpose.msra.mxu0 0
    %2166 = vmatprep.subr.bf16.mxu0 0
    %2167 = vmatpush1.bf16.xpose.msra.mxu0 0
    %2168 = vmatprep.subr.bf16.mxu0 0
    %2169 = vmatpush1.bf16.xpose.msra.mxu0 0
    %2170 = vmatprep.subr.bf16.mxu0 0
    %2171 = vmatpush1.bf16.xpose.msra.mxu0 0
    %2172 = vmatprep.subr.bf16.mxu0 0
    %2173 = vmatpush1.bf16.xpose.msra.mxu0 0
    %2174 = vmatprep.subr.bf16.mxu0 0
    %2175 = vmatpush1.bf16.xpose.msra.mxu0 0
    %2176 = vmatprep.subr.bf16.mxu0 0
    %2177 = vmatpush1.bf16.xpose.msra.mxu0 0
    %2178 = vmatprep.subr.bf16.mxu0 0
    %2179 = vmatpush1.bf16.xpose.msra.mxu0 0
    %2180 = vmatprep.subr.bf16.mxu0 0
    %2181 = vmatpush1.bf16.xpose.msra.mxu0 0
    %2182 = vmatprep.subr.bf16.mxu0 0
    %2183 = vmatpush1.bf16.xpose.msra.mxu0 0
    %2184 = vmatprep.subr.bf16.mxu0 0
    %2185 = vmatpush1.bf16.xpose.msra.mxu0 0
    %2186 = vmatprep.subr.bf16.mxu0 0
    %2187 = vmatpush1.bf16.xpose.msra.mxu0 0
    %2188 = vmatprep.subr.bf16.mxu0 0
    %2189 = vmatpush1.bf16.xpose.msra.mxu0 0
    %2190 = vmatprep.subr.bf16.mxu0 0
    %2191 = vmatpush1.bf16.xpose.msra.mxu0 0
    %2192 = vmatprep.subr.bf16.mxu0 0
    %2193 = vmatpush1.bf16.xpose.msra.mxu0 0
    %2194 = vmatprep.mubr.bf16.mxu0 0
    %2195 = vmatmul.mubr.bf16.gmra.mrb[0].mxu0 %v2157
    %v2196 = vpop.f32.mrb[0].mxu0
    %v2197 = vadd.f32 %v505, %v2196
    %v2198 = vpop.f32.mrb[0].mxu0
    %v2199 = vpop.f32.mrb[0].mxu0
    %v2200 = vpop.f32.mrb[0].mxu0
    %2201 = vdwg.mxu0
    %2203 = vrot.lane.b32.xlu0 %v1934, 120
    %v2204 = vpop.permute.xlu0 %2203
    %2206 = vrot.lane.b32.xlu0 %v1936, 120
    %v2207 = vpop.permute.xlu0 %2206
    %v2209 = vsel %vm512, %v2204, 0
    %v2212 = vsel %vm512, %v2207, 0
    %2214 = vmatprep.subr.bf16.mxu0 0
    %2215 = vmatpush1.bf16.xpose.msra.mxu0 %v2212
    %2216 = vmatprep.subr.bf16.mxu0 0
    %2217 = vmatpush1.bf16.xpose.msra.mxu0 0
    %2218 = vmatprep.subr.bf16.mxu0 0
    %2219 = vmatpush1.bf16.xpose.msra.mxu0 0
    %2220 = vmatprep.subr.bf16.mxu0 0
    %2221 = vmatpush1.bf16.xpose.msra.mxu0 0
    %2222 = vmatprep.subr.bf16.mxu0 0
    %2223 = vmatpush1.bf16.xpose.msra.mxu0 0
    %2224 = vmatprep.subr.bf16.mxu0 0
    %2225 = vmatpush1.bf16.xpose.msra.mxu0 0
    %2226 = vmatprep.subr.bf16.mxu0 0
    %2227 = vmatpush1.bf16.xpose.msra.mxu0 0
    %2228 = vmatprep.subr.bf16.mxu0 0
    %2229 = vmatpush1.bf16.xpose.msra.mxu0 0
    %2230 = vmatprep.subr.bf16.mxu0 0
    %2231 = vmatpush1.bf16.xpose.msra.mxu0 0
    %2232 = vmatprep.subr.bf16.mxu0 0
    %2233 = vmatpush1.bf16.xpose.msra.mxu0 0
    %2234 = vmatprep.subr.bf16.mxu0 0
    %2235 = vmatpush1.bf16.xpose.msra.mxu0 0
    %2236 = vmatprep.subr.bf16.mxu0 0
    %2237 = vmatpush1.bf16.xpose.msra.mxu0 0
    %2238 = vmatprep.subr.bf16.mxu0 0
    %2239 = vmatpush1.bf16.xpose.msra.mxu0 0
    %2240 = vmatprep.subr.bf16.mxu0 0
    %2241 = vmatpush1.bf16.xpose.msra.mxu0 0
    %2242 = vmatprep.subr.bf16.mxu0 0
    %2243 = vmatpush1.bf16.xpose.msra.mxu0 0
    %2244 = vmatprep.subr.bf16.mxu0 0
    %2245 = vmatpush1.bf16.xpose.msra.mxu0 0
    %2246 = vmatprep.mubr.bf16.mxu0 0
    %2247 = vmatmul.mubr.bf16.gmra.mrb[0].mxu0 %v2209
    %v2248 = vpop.f32.mrb[0].mxu0
    %v2249 = vadd.f32 %v509, %v2248
    %v2250 = vpop.f32.mrb[0].mxu0
    %v2251 = vpop.f32.mrb[0].mxu0
    %v2252 = vpop.f32.mrb[0].mxu0
    %2253 = vdwg.mxu0
    %v2254 = vadd.f32 %v2197, %v153
    %v2255 = vadd.f32 %v2249, %v153
    %v2256 = vsel %vm512, %v2254, -inf
    %2257 = vmax.xlane.f32.xlu0 %v2256
    %v2258 = vpop.xlane.xlu0 %2257
    %v2259 = vsel %vm512, %v2255, -inf
    %2260 = vmax.xlane.f32.xlu0 %v2259
    %v2261 = vpop.xlane.xlu0 %2260
    %v2262 = vsub.f32 %v2254, %v2258
    %v2263 = vsub.f32 %v2255, %v2261
    %v2264 = vmul.f32 %v2262, 1.442695
    %v2265 = vpow.pop %v2264
    %v2266 = vmul.f32 %v2263, 1.442695
    %v2267 = vpow.pop %v2266
    %v2268 = vsel %vm512, %v2265, 0.0
    %2269 = vadd.xlane.f32.xlu0 %v2268
    %v2270 = vpop.xlane.xlu0 %2269
    %v2271 = vsel %vm512, %v2267, 0.0
    %2272 = vadd.xlane.f32.xlu0 %v2271
    %v2273 = vpop.xlane.xlu0 %2272
    %v2274 = vrcp.pop %v2270
    %v2275 = vrcp.pop %v2273
    %v2276 = vmul.f32 %v2265, %v2274
    %v2277 = vmul.f32 %v2267, %v2275
    %v2278 = vpack.c.bf16 %v2276, %v2276
    %v2279 = vpack.c.bf16 %v2277, %v2277
    %2281 = vrot.lane.b32.xlu0 %v2055, 120
    %v2282 = vpop.permute.xlu0 %2281
    %v2284 = vsel %vm512, %v2278, 0
    %v2287 = vsel %vm636, %v2282, 0
    %2289 = vmatprep.subr.bf16.mxu0 0
    %2290 = vmatpush1.bf16.msra.mxu0 %v2287
    %2291 = vmatprep.subr.bf16.mxu0 0
    %2292 = vmatpush1.bf16.msra.mxu0 0
    %2293 = vmatprep.subr.bf16.mxu0 0
    %2294 = vmatpush1.bf16.msra.mxu0 0
    %2295 = vmatprep.subr.bf16.mxu0 0
    %2296 = vmatpush1.bf16.msra.mxu0 0
    %2297 = vmatprep.subr.bf16.mxu0 0
    %2298 = vmatpush1.bf16.msra.mxu0 0
    %2299 = vmatprep.subr.bf16.mxu0 0
    %2300 = vmatpush1.bf16.msra.mxu0 0
    %2301 = vmatprep.subr.bf16.mxu0 0
    %2302 = vmatpush1.bf16.msra.mxu0 0
    %2303 = vmatprep.subr.bf16.mxu0 0
    %2304 = vmatpush1.bf16.msra.mxu0 0
    %2305 = vmatprep.subr.bf16.mxu0 0
    %2306 = vmatpush1.bf16.msra.mxu0 0
    %2307 = vmatprep.subr.bf16.mxu0 0
    %2308 = vmatpush1.bf16.msra.mxu0 0
    %2309 = vmatprep.subr.bf16.mxu0 0
    %2310 = vmatpush1.bf16.msra.mxu0 0
    %2311 = vmatprep.subr.bf16.mxu0 0
    %2312 = vmatpush1.bf16.msra.mxu0 0
    %2313 = vmatprep.subr.bf16.mxu0 0
    %2314 = vmatpush1.bf16.msra.mxu0 0
    %2315 = vmatprep.subr.bf16.mxu0 0
    %2316 = vmatpush1.bf16.msra.mxu0 0
    %2317 = vmatprep.subr.bf16.mxu0 0
    %2318 = vmatpush1.bf16.msra.mxu0 0
    %2319 = vmatprep.subr.bf16.mxu0 0
    %2320 = vmatpush1.bf16.msra.mxu0 0
    %2321 = vmatprep.mubr.bf16.mxu0 0
    %2322 = vmatmul.mubr.bf16.gmra.mrb[0].mxu0 %v2284
    %v2323 = vpop.f32.mrb[0].mxu0
    %v2324 = vadd.f32 0.0, %v2323
    %v2325 = vpop.f32.mrb[0].mxu0
    %v2326 = vpop.f32.mrb[0].mxu0
    %v2327 = vpop.f32.mrb[0].mxu0
    %2328 = vdwg.mxu0
    %2330 = vrot.lane.b32.xlu0 %v2056, 120
    %v2331 = vpop.permute.xlu0 %2330
    %v2333 = vsel %vm512, %v2279, 0
    %v2336 = vsel %vm636, %v2331, 0
    %2338 = vmatprep.subr.bf16.mxu0 0
    %2339 = vmatpush1.bf16.msra.mxu0 %v2336
    %2340 = vmatprep.subr.bf16.mxu0 0
    %2341 = vmatpush1.bf16.msra.mxu0 0
    %2342 = vmatprep.subr.bf16.mxu0 0
    %2343 = vmatpush1.bf16.msra.mxu0 0
    %2344 = vmatprep.subr.bf16.mxu0 0
    %2345 = vmatpush1.bf16.msra.mxu0 0
    %2346 = vmatprep.subr.bf16.mxu0 0
    %2347 = vmatpush1.bf16.msra.mxu0 0
    %2348 = vmatprep.subr.bf16.mxu0 0
    %2349 = vmatpush1.bf16.msra.mxu0 0
    %2350 = vmatprep.subr.bf16.mxu0 0
    %2351 = vmatpush1.bf16.msra.mxu0 0
    %2352 = vmatprep.subr.bf16.mxu0 0
    %2353 = vmatpush1.bf16.msra.mxu0 0
    %2354 = vmatprep.subr.bf16.mxu0 0
    %2355 = vmatpush1.bf16.msra.mxu0 0
    %2356 = vmatprep.subr.bf16.mxu0 0
    %2357 = vmatpush1.bf16.msra.mxu0 0
    %2358 = vmatprep.subr.bf16.mxu0 0
    %2359 = vmatpush1.bf16.msra.mxu0 0
    %2360 = vmatprep.subr.bf16.mxu0 0
    %2361 = vmatpush1.bf16.msra.mxu0 0
    %2362 = vmatprep.subr.bf16.mxu0 0
    %2363 = vmatpush1.bf16.msra.mxu0 0
    %2364 = vmatprep.subr.bf16.mxu0 0
    %2365 = vmatpush1.bf16.msra.mxu0 0
    %2366 = vmatprep.subr.bf16.mxu0 0
    %2367 = vmatpush1.bf16.msra.mxu0 0
    %2368 = vmatprep.subr.bf16.mxu0 0
    %2369 = vmatpush1.bf16.msra.mxu0 0
    %2370 = vmatprep.mubr.bf16.mxu0 0
    %2371 = vmatmul.mubr.bf16.gmra.mrb[0].mxu0 %v2333
    %v2372 = vpop.f32.mrb[0].mxu0
    %v2373 = vadd.f32 0.0, %v2372
    %v2374 = vpop.f32.mrb[0].mxu0
    %v2375 = vpop.f32.mrb[0].mxu0
    %v2376 = vpop.f32.mrb[0].mxu0
    %2377 = vdwg.mxu0
    %v2378 = vpack.c.bf16 %v2373, %v2324
    %v2380 = vsel %vm512, %v2378, 0
    %v2383 = vsel %vm636, %v193, 0
    %2385 = vmatprep.subr.bf16.mxu0 0
    %2386 = vmatpush1.bf16.msra.mxu0 %v2383
    %2387 = vmatprep.subr.bf16.mxu0 0
    %2388 = vmatpush1.bf16.msra.mxu0 0
    %2389 = vmatprep.subr.bf16.mxu0 0
    %2390 = vmatpush1.bf16.msra.mxu0 0
    %2391 = vmatprep.subr.bf16.mxu0 0
    %2392 = vmatpush1.bf16.msra.mxu0 0
    %2393 = vmatprep.subr.bf16.mxu0 0
    %2394 = vmatpush1.bf16.msra.mxu0 0
    %2395 = vmatprep.subr.bf16.mxu0 0
    %2396 = vmatpush1.bf16.msra.mxu0 0
    %2397 = vmatprep.subr.bf16.mxu0 0
    %2398 = vmatpush1.bf16.msra.mxu0 0
    %2399 = vmatprep.subr.bf16.mxu0 0
    %2400 = vmatpush1.bf16.msra.mxu0 0
    %2401 = vmatprep.subr.bf16.mxu0 0
    %2402 = vmatpush1.bf16.msra.mxu0 0
    %2403 = vmatprep.subr.bf16.mxu0 0
    %2404 = vmatpush1.bf16.msra.mxu0 0
    %2405 = vmatprep.subr.bf16.mxu0 0
    %2406 = vmatpush1.bf16.msra.mxu0 0
    %2407 = vmatprep.subr.bf16.mxu0 0
    %2408 = vmatpush1.bf16.msra.mxu0 0
    %2409 = vmatprep.subr.bf16.mxu0 0
    %2410 = vmatpush1.bf16.msra.mxu0 0
    %2411 = vmatprep.subr.bf16.mxu0 0
    %2412 = vmatpush1.bf16.msra.mxu0 0
    %2413 = vmatprep.subr.bf16.mxu0 0
    %2414 = vmatpush1.bf16.msra.mxu0 0
    %2415 = vmatprep.subr.bf16.mxu0 0
    %2416 = vmatpush1.bf16.msra.mxu0 0
    %2417 = vmatprep.mubr.bf16.mxu0 0
    %2418 = vmatmul.mubr.bf16.gmra.mrb[0].mxu0 %v2380
    %v2419 = vpop.f32.mrb[0].mxu0
    %v2420 = vadd.f32 0.0, %v2419
    %v2421 = vpop.f32.mrb[0].mxu0
    %v2422 = vpop.f32.mrb[0].mxu0
    %v2423 = vadd.f32 0.0, %v2422
    %v2424 = vpop.f32.mrb[0].mxu0
    %2425 = vdwg.mxu0
    %v2427 = vsel %vm512, %v2149, 0
    %v2430 = vsel %vm636, %v192, 0
    %2432 = vmatprep.subr.bf16.mxu0 0
    %2433 = vmatpush1.bf16.msra.mxu0 %v2430
    %2434 = vmatprep.subr.bf16.mxu0 0
    %2435 = vmatpush1.bf16.msra.mxu0 0
    %2436 = vmatprep.subr.bf16.mxu0 0
    %2437 = vmatpush1.bf16.msra.mxu0 0
    %2438 = vmatprep.subr.bf16.mxu0 0
    %2439 = vmatpush1.bf16.msra.mxu0 0
    %2440 = vmatprep.subr.bf16.mxu0 0
    %2441 = vmatpush1.bf16.msra.mxu0 0
    %2442 = vmatprep.subr.bf16.mxu0 0
    %2443 = vmatpush1.bf16.msra.mxu0 0
    %2444 = vmatprep.subr.bf16.mxu0 0
    %2445 = vmatpush1.bf16.msra.mxu0 0
    %2446 = vmatprep.subr.bf16.mxu0 0
    %2447 = vmatpush1.bf16.msra.mxu0 0
    %2448 = vmatprep.subr.bf16.mxu0 0
    %2449 = vmatpush1.bf16.msra.mxu0 0
    %2450 = vmatprep.subr.bf16.mxu0 0
    %2451 = vmatpush1.bf16.msra.mxu0 0
    %2452 = vmatprep.subr.bf16.mxu0 0
    %2453 = vmatpush1.bf16.msra.mxu0 0
    %2454 = vmatprep.subr.bf16.mxu0 0
    %2455 = vmatpush1.bf16.msra.mxu0 0
    %2456 = vmatprep.subr.bf16.mxu0 0
    %2457 = vmatpush1.bf16.msra.mxu0 0
    %2458 = vmatprep.subr.bf16.mxu0 0
    %2459 = vmatpush1.bf16.msra.mxu0 0
    %2460 = vmatprep.subr.bf16.mxu0 0
    %2461 = vmatpush1.bf16.msra.mxu0 0
    %2462 = vmatprep.subr.bf16.mxu0 0
    %2463 = vmatpush1.bf16.msra.mxu0 0
    %2464 = vmatprep.mubr.bf16.mxu0 0
    %2465 = vmatmul.mubr.bf16.gmra.mrb[0].mxu0 %v2427
    %v2466 = vpop.f32.mrb[0].mxu0
    %v2467 = vadd.f32 %v2420, %v2466
    %v2468 = vpop.f32.mrb[0].mxu0
    %v2469 = vpop.f32.mrb[0].mxu0
    %v2470 = vadd.f32 %v2423, %v2469
    %v2471 = vpop.f32.mrb[0].mxu0
    %2472 = vdwg.mxu0
    %2473 = vrot.lane.b32.xlu0 %v1933, 112
    %v2474 = vpop.permute.xlu0 %2473
    %2475 = vrot.lane.b32.xlu0 %v1935, 112
    %v2476 = vpop.permute.xlu0 %2475
    %v2478 = vsel %vm512, %v2474, 0
    %v2481 = vsel %vm512, %v2476, 0
    %2483 = vmatprep.subr.bf16.mxu0 0
    %2484 = vmatpush1.bf16.xpose.msra.mxu0 %v2481
    %2485 = vmatprep.subr.bf16.mxu0 0
    %2486 = vmatpush1.bf16.xpose.msra.mxu0 0
    %2487 = vmatprep.subr.bf16.mxu0 0
    %2488 = vmatpush1.bf16.xpose.msra.mxu0 0
    %2489 = vmatprep.subr.bf16.mxu0 0
    %2490 = vmatpush1.bf16.xpose.msra.mxu0 0
    %2491 = vmatprep.subr.bf16.mxu0 0
    %2492 = vmatpush1.bf16.xpose.msra.mxu0 0
    %2493 = vmatprep.subr.bf16.mxu0 0
    %2494 = vmatpush1.bf16.xpose.msra.mxu0 0
    %2495 = vmatprep.subr.bf16.mxu0 0
    %2496 = vmatpush1.bf16.xpose.msra.mxu0 0
    %2497 = vmatprep.subr.bf16.mxu0 0
    %2498 = vmatpush1.bf16.xpose.msra.mxu0 0
    %2499 = vmatprep.subr.bf16.mxu0 0
    %2500 = vmatpush1.bf16.xpose.msra.mxu0 0
    %2501 = vmatprep.subr.bf16.mxu0 0
    %2502 = vmatpush1.bf16.xpose.msra.mxu0 0
    %2503 = vmatprep.subr.bf16.mxu0 0
    %2504 = vmatpush1.bf16.xpose.msra.mxu0 0
    %2505 = vmatprep.subr.bf16.mxu0 0
    %2506 = vmatpush1.bf16.xpose.msra.mxu0 0
    %2507 = vmatprep.subr.bf16.mxu0 0
    %2508 = vmatpush1.bf16.xpose.msra.mxu0 0
    %2509 = vmatprep.subr.bf16.mxu0 0
    %2510 = vmatpush1.bf16.xpose.msra.mxu0 0
    %2511 = vmatprep.subr.bf16.mxu0 0
    %2512 = vmatpush1.bf16.xpose.msra.mxu0 0
    %2513 = vmatprep.subr.bf16.mxu0 0
    %2514 = vmatpush1.bf16.xpose.msra.mxu0 0
    %2515 = vmatprep.mubr.bf16.mxu0 0
    %2516 = vmatmul.mubr.bf16.gmra.mrb[0].mxu0 %v2478
    %v2517 = vpop.f32.mrb[0].mxu0
    %v2518 = vadd.f32 %v505, %v2517
    %v2519 = vpop.f32.mrb[0].mxu0
    %v2520 = vpop.f32.mrb[0].mxu0
    %v2521 = vpop.f32.mrb[0].mxu0
    %2522 = vdwg.mxu0
    %2523 = vrot.lane.b32.xlu0 %v1934, 112
    %v2524 = vpop.permute.xlu0 %2523
    %2525 = vrot.lane.b32.xlu0 %v1936, 112
    %v2526 = vpop.permute.xlu0 %2525
    %v2528 = vsel %vm512, %v2524, 0
    %v2531 = vsel %vm512, %v2526, 0
    %2533 = vmatprep.subr.bf16.mxu0 0
    %2534 = vmatpush1.bf16.xpose.msra.mxu0 %v2531
    %2535 = vmatprep.subr.bf16.mxu0 0
    %2536 = vmatpush1.bf16.xpose.msra.mxu0 0
    %2537 = vmatprep.subr.bf16.mxu0 0
    %2538 = vmatpush1.bf16.xpose.msra.mxu0 0
    %2539 = vmatprep.subr.bf16.mxu0 0
    %2540 = vmatpush1.bf16.xpose.msra.mxu0 0
    %2541 = vmatprep.subr.bf16.mxu0 0
    %2542 = vmatpush1.bf16.xpose.msra.mxu0 0
    %2543 = vmatprep.subr.bf16.mxu0 0
    %2544 = vmatpush1.bf16.xpose.msra.mxu0 0
    %2545 = vmatprep.subr.bf16.mxu0 0
    %2546 = vmatpush1.bf16.xpose.msra.mxu0 0
    %2547 = vmatprep.subr.bf16.mxu0 0
    %2548 = vmatpush1.bf16.xpose.msra.mxu0 0
    %2549 = vmatprep.subr.bf16.mxu0 0
    %2550 = vmatpush1.bf16.xpose.msra.mxu0 0
    %2551 = vmatprep.subr.bf16.mxu0 0
    %2552 = vmatpush1.bf16.xpose.msra.mxu0 0
    %2553 = vmatprep.subr.bf16.mxu0 0
    %2554 = vmatpush1.bf16.xpose.msra.mxu0 0
    %2555 = vmatprep.subr.bf16.mxu0 0
    %2556 = vmatpush1.bf16.xpose.msra.mxu0 0
    %2557 = vmatprep.subr.bf16.mxu0 0
    %2558 = vmatpush1.bf16.xpose.msra.mxu0 0
    %2559 = vmatprep.subr.bf16.mxu0 0
    %2560 = vmatpush1.bf16.xpose.msra.mxu0 0
    %2561 = vmatprep.subr.bf16.mxu0 0
    %2562 = vmatpush1.bf16.xpose.msra.mxu0 0
    %2563 = vmatprep.subr.bf16.mxu0 0
    %2564 = vmatpush1.bf16.xpose.msra.mxu0 0
    %2565 = vmatprep.mubr.bf16.mxu0 0
    %2566 = vmatmul.mubr.bf16.gmra.mrb[0].mxu0 %v2528
    %v2567 = vpop.f32.mrb[0].mxu0
    %v2568 = vadd.f32 %v509, %v2567
    %v2569 = vpop.f32.mrb[0].mxu0
    %v2570 = vpop.f32.mrb[0].mxu0
    %v2571 = vpop.f32.mrb[0].mxu0
    %2572 = vdwg.mxu0
    %v2573 = vadd.f32 %v2518, %v154
    %v2574 = vadd.f32 %v2568, %v154
    %v2575 = vsel %vm512, %v2573, -inf
    %2576 = vmax.xlane.f32.xlu0 %v2575
    %v2577 = vpop.xlane.xlu0 %2576
    %v2578 = vsel %vm512, %v2574, -inf
    %2579 = vmax.xlane.f32.xlu0 %v2578
    %v2580 = vpop.xlane.xlu0 %2579
    %v2581 = vsub.f32 %v2573, %v2577
    %v2582 = vsub.f32 %v2574, %v2580
    %v2583 = vmul.f32 %v2581, 1.442695
    %v2584 = vpow.pop %v2583
    %v2585 = vmul.f32 %v2582, 1.442695
    %v2586 = vpow.pop %v2585
    %v2587 = vsel %vm512, %v2584, 0.0
    %2588 = vadd.xlane.f32.xlu0 %v2587
    %v2589 = vpop.xlane.xlu0 %2588
    %v2590 = vsel %vm512, %v2586, 0.0
    %2591 = vadd.xlane.f32.xlu0 %v2590
    %v2592 = vpop.xlane.xlu0 %2591
    %v2593 = vrcp.pop %v2589
    %v2594 = vrcp.pop %v2592
    %v2595 = vmul.f32 %v2584, %v2593
    %v2596 = vmul.f32 %v2586, %v2594
    %v2597 = vpack.c.bf16 %v2595, %v2595
    %v2598 = vpack.c.bf16 %v2596, %v2596
    %2599 = vrot.lane.b32.xlu0 %v2055, 112
    %v2600 = vpop.permute.xlu0 %2599
    %v2602 = vsel %vm512, %v2597, 0
    %v2605 = vsel %vm636, %v2600, 0
    %2607 = vmatprep.subr.bf16.mxu0 0
    %2608 = vmatpush1.bf16.msra.mxu0 %v2605
    %2609 = vmatprep.subr.bf16.mxu0 0
    %2610 = vmatpush1.bf16.msra.mxu0 0
    %2611 = vmatprep.subr.bf16.mxu0 0
    %2612 = vmatpush1.bf16.msra.mxu0 0
    %2613 = vmatprep.subr.bf16.mxu0 0
    %2614 = vmatpush1.bf16.msra.mxu0 0
    %2615 = vmatprep.subr.bf16.mxu0 0
    %2616 = vmatpush1.bf16.msra.mxu0 0
    %2617 = vmatprep.subr.bf16.mxu0 0
    %2618 = vmatpush1.bf16.msra.mxu0 0
    %2619 = vmatprep.subr.bf16.mxu0 0
    %2620 = vmatpush1.bf16.msra.mxu0 0
    %2621 = vmatprep.subr.bf16.mxu0 0
    %2622 = vmatpush1.bf16.msra.mxu0 0
    %2623 = vmatprep.subr.bf16.mxu0 0
    %2624 = vmatpush1.bf16.msra.mxu0 0
    %2625 = vmatprep.subr.bf16.mxu0 0
    %2626 = vmatpush1.bf16.msra.mxu0 0
    %2627 = vmatprep.subr.bf16.mxu0 0
    %2628 = vmatpush1.bf16.msra.mxu0 0
    %2629 = vmatprep.subr.bf16.mxu0 0
    %2630 = vmatpush1.bf16.msra.mxu0 0
    %2631 = vmatprep.subr.bf16.mxu0 0
    %2632 = vmatpush1.bf16.msra.mxu0 0
    %2633 = vmatprep.subr.bf16.mxu0 0
    %2634 = vmatpush1.bf16.msra.mxu0 0
    %2635 = vmatprep.subr.bf16.mxu0 0
    %2636 = vmatpush1.bf16.msra.mxu0 0
    %2637 = vmatprep.subr.bf16.mxu0 0
    %2638 = vmatpush1.bf16.msra.mxu0 0
    %2639 = vmatprep.mubr.bf16.mxu0 0
    %2640 = vmatmul.mubr.bf16.gmra.mrb[0].mxu0 %v2602
    %v2641 = vpop.f32.mrb[0].mxu0
    %v2642 = vadd.f32 0.0, %v2641
    %v2643 = vpop.f32.mrb[0].mxu0
    %v2644 = vpop.f32.mrb[0].mxu0
    %v2645 = vpop.f32.mrb[0].mxu0
    %2646 = vdwg.mxu0
    %2647 = vrot.lane.b32.xlu0 %v2056, 112
    %v2648 = vpop.permute.xlu0 %2647
    %v2650 = vsel %vm512, %v2598, 0
    %v2653 = vsel %vm636, %v2648, 0
    %2655 = vmatprep.subr.bf16.mxu0 0
    %2656 = vmatpush1.bf16.msra.mxu0 %v2653
    %2657 = vmatprep.subr.bf16.mxu0 0
    %2658 = vmatpush1.bf16.msra.mxu0 0
    %2659 = vmatprep.subr.bf16.mxu0 0
    %2660 = vmatpush1.bf16.msra.mxu0 0
    %2661 = vmatprep.subr.bf16.mxu0 0
    %2662 = vmatpush1.bf16.msra.mxu0 0
    %2663 = vmatprep.subr.bf16.mxu0 0
    %2664 = vmatpush1.bf16.msra.mxu0 0
    %2665 = vmatprep.subr.bf16.mxu0 0
    %2666 = vmatpush1.bf16.msra.mxu0 0
    %2667 = vmatprep.subr.bf16.mxu0 0
    %2668 = vmatpush1.bf16.msra.mxu0 0
    %2669 = vmatprep.subr.bf16.mxu0 0
    %2670 = vmatpush1.bf16.msra.mxu0 0
    %2671 = vmatprep.subr.bf16.mxu0 0
    %2672 = vmatpush1.bf16.msra.mxu0 0
    %2673 = vmatprep.subr.bf16.mxu0 0
    %2674 = vmatpush1.bf16.msra.mxu0 0
    %2675 = vmatprep.subr.bf16.mxu0 0
    %2676 = vmatpush1.bf16.msra.mxu0 0
    %2677 = vmatprep.subr.bf16.mxu0 0
    %2678 = vmatpush1.bf16.msra.mxu0 0
    %2679 = vmatprep.subr.bf16.mxu0 0
    %2680 = vmatpush1.bf16.msra.mxu0 0
    %2681 = vmatprep.subr.bf16.mxu0 0
    %2682 = vmatpush1.bf16.msra.mxu0 0
    %2683 = vmatprep.subr.bf16.mxu0 0
    %2684 = vmatpush1.bf16.msra.mxu0 0
    %2685 = vmatprep.subr.bf16.mxu0 0
    %2686 = vmatpush1.bf16.msra.mxu0 0
    %2687 = vmatprep.mubr.bf16.mxu0 0
    %2688 = vmatmul.mubr.bf16.gmra.mrb[0].mxu0 %v2650
    %v2689 = vpop.f32.mrb[0].mxu0
    %v2690 = vadd.f32 0.0, %v2689
    %v2691 = vpop.f32.mrb[0].mxu0
    %v2692 = vpop.f32.mrb[0].mxu0
    %v2693 = vpop.f32.mrb[0].mxu0
    %2694 = vdwg.mxu0
    %v2695 = vpack.c.bf16 %v2690, %v2642
    %v2697 = vsel %vm512, %v2695, 0
    %v2700 = vsel %vm636, %v194, 0
    %2702 = vmatprep.subr.bf16.mxu0 0
    %2703 = vmatpush1.bf16.msra.mxu0 %v2700
    %2704 = vmatprep.subr.bf16.mxu0 0
    %2705 = vmatpush1.bf16.msra.mxu0 0
    %2706 = vmatprep.subr.bf16.mxu0 0
    %2707 = vmatpush1.bf16.msra.mxu0 0
    %2708 = vmatprep.subr.bf16.mxu0 0
    %2709 = vmatpush1.bf16.msra.mxu0 0
    %2710 = vmatprep.subr.bf16.mxu0 0
    %2711 = vmatpush1.bf16.msra.mxu0 0
    %2712 = vmatprep.subr.bf16.mxu0 0
    %2713 = vmatpush1.bf16.msra.mxu0 0
    %2714 = vmatprep.subr.bf16.mxu0 0
    %2715 = vmatpush1.bf16.msra.mxu0 0
    %2716 = vmatprep.subr.bf16.mxu0 0
    %2717 = vmatpush1.bf16.msra.mxu0 0
    %2718 = vmatprep.subr.bf16.mxu0 0
    %2719 = vmatpush1.bf16.msra.mxu0 0
    %2720 = vmatprep.subr.bf16.mxu0 0
    %2721 = vmatpush1.bf16.msra.mxu0 0
    %2722 = vmatprep.subr.bf16.mxu0 0
    %2723 = vmatpush1.bf16.msra.mxu0 0
    %2724 = vmatprep.subr.bf16.mxu0 0
    %2725 = vmatpush1.bf16.msra.mxu0 0
    %2726 = vmatprep.subr.bf16.mxu0 0
    %2727 = vmatpush1.bf16.msra.mxu0 0
    %2728 = vmatprep.subr.bf16.mxu0 0
    %2729 = vmatpush1.bf16.msra.mxu0 0
    %2730 = vmatprep.subr.bf16.mxu0 0
    %2731 = vmatpush1.bf16.msra.mxu0 0
    %2732 = vmatprep.subr.bf16.mxu0 0
    %2733 = vmatpush1.bf16.msra.mxu0 0
    %2734 = vmatprep.mubr.bf16.mxu0 0
    %2735 = vmatmul.mubr.bf16.gmra.mrb[0].mxu0 %v2697
    %v2736 = vpop.f32.mrb[0].mxu0
    %v2737 = vadd.f32 0.0, %v2736
    %v2738 = vpop.f32.mrb[0].mxu0
    %v2739 = vpop.f32.mrb[0].mxu0
    %v2740 = vadd.f32 0.0, %v2739
    %v2741 = vpop.f32.mrb[0].mxu0
    %2742 = vdwg.mxu0
    %v2743 = vadd.f32 %v2467, %v2737
    %v2744 = vadd.f32 %v2470, %v2740
    %2745 = vrot.lane.b32.xlu0 %v1933, 104
    %v2746 = vpop.permute.xlu0 %2745
    %2747 = vrot.lane.b32.xlu0 %v1935, 104
    %v2748 = vpop.permute.xlu0 %2747
    %v2750 = vsel %vm512, %v2746, 0
    %v2753 = vsel %vm512, %v2748, 0
    %2755 = vmatprep.subr.bf16.mxu0 0
    %2756 = vmatpush1.bf16.xpose.msra.mxu0 %v2753
    %2757 = vmatprep.subr.bf16.mxu0 0
    %2758 = vmatpush1.bf16.xpose.msra.mxu0 0
    %2759 = vmatprep.subr.bf16.mxu0 0
    %2760 = vmatpush1.bf16.xpose.msra.mxu0 0
    %2761 = vmatprep.subr.bf16.mxu0 0
    %2762 = vmatpush1.bf16.xpose.msra.mxu0 0
    %2763 = vmatprep.subr.bf16.mxu0 0
    %2764 = vmatpush1.bf16.xpose.msra.mxu0 0
    %2765 = vmatprep.subr.bf16.mxu0 0
    %2766 = vmatpush1.bf16.xpose.msra.mxu0 0
    %2767 = vmatprep.subr.bf16.mxu0 0
    %2768 = vmatpush1.bf16.xpose.msra.mxu0 0
    %2769 = vmatprep.subr.bf16.mxu0 0
    %2770 = vmatpush1.bf16.xpose.msra.mxu0 0
    %2771 = vmatprep.subr.bf16.mxu0 0
    %2772 = vmatpush1.bf16.xpose.msra.mxu0 0
    %2773 = vmatprep.subr.bf16.mxu0 0
    %2774 = vmatpush1.bf16.xpose.msra.mxu0 0
    %2775 = vmatprep.subr.bf16.mxu0 0
    %2776 = vmatpush1.bf16.xpose.msra.mxu0 0
    %2777 = vmatprep.subr.bf16.mxu0 0
    %2778 = vmatpush1.bf16.xpose.msra.mxu0 0
    %2779 = vmatprep.subr.bf16.mxu0 0
    %2780 = vmatpush1.bf16.xpose.msra.mxu0 0
    %2781 = vmatprep.subr.bf16.mxu0 0
    %2782 = vmatpush1.bf16.xpose.msra.mxu0 0
    %2783 = vmatprep.subr.bf16.mxu0 0
    %2784 = vmatpush1.bf16.xpose.msra.mxu0 0
    %2785 = vmatprep.subr.bf16.mxu0 0
    %2786 = vmatpush1.bf16.xpose.msra.mxu0 0
    %2787 = vmatprep.mubr.bf16.mxu0 0
    %2788 = vmatmul.mubr.bf16.gmra.mrb[0].mxu0 %v2750
    %v2789 = vpop.f32.mrb[0].mxu0
    %v2790 = vadd.f32 %v505, %v2789
    %v2791 = vpop.f32.mrb[0].mxu0
    %v2792 = vpop.f32.mrb[0].mxu0
    %v2793 = vpop.f32.mrb[0].mxu0
    %2794 = vdwg.mxu0
    %2795 = vrot.lane.b32.xlu0 %v1934, 104
    %v2796 = vpop.permute.xlu0 %2795
    %2797 = vrot.lane.b32.xlu0 %v1936, 104
    %v2798 = vpop.permute.xlu0 %2797
    %v2800 = vsel %vm512, %v2796, 0
    %v2803 = vsel %vm512, %v2798, 0
    %2805 = vmatprep.subr.bf16.mxu0 0
    %2806 = vmatpush1.bf16.xpose.msra.mxu0 %v2803
    %2807 = vmatprep.subr.bf16.mxu0 0
    %2808 = vmatpush1.bf16.xpose.msra.mxu0 0
    %2809 = vmatprep.subr.bf16.mxu0 0
    %2810 = vmatpush1.bf16.xpose.msra.mxu0 0
    %2811 = vmatprep.subr.bf16.mxu0 0
    %2812 = vmatpush1.bf16.xpose.msra.mxu0 0
    %2813 = vmatprep.subr.bf16.mxu0 0
    %2814 = vmatpush1.bf16.xpose.msra.mxu0 0
    %2815 = vmatprep.subr.bf16.mxu0 0
    %2816 = vmatpush1.bf16.xpose.msra.mxu0 0
    %2817 = vmatprep.subr.bf16.mxu0 0
    %2818 = vmatpush1.bf16.xpose.msra.mxu0 0
    %2819 = vmatprep.subr.bf16.mxu0 0
    %2820 = vmatpush1.bf16.xpose.msra.mxu0 0
    %2821 = vmatprep.subr.bf16.mxu0 0
    %2822 = vmatpush1.bf16.xpose.msra.mxu0 0
    %2823 = vmatprep.subr.bf16.mxu0 0
    %2824 = vmatpush1.bf16.xpose.msra.mxu0 0
    %2825 = vmatprep.subr.bf16.mxu0 0
    %2826 = vmatpush1.bf16.xpose.msra.mxu0 0
    %2827 = vmatprep.subr.bf16.mxu0 0
    %2828 = vmatpush1.bf16.xpose.msra.mxu0 0
    %2829 = vmatprep.subr.bf16.mxu0 0
    %2830 = vmatpush1.bf16.xpose.msra.mxu0 0
    %2831 = vmatprep.subr.bf16.mxu0 0
    %2832 = vmatpush1.bf16.xpose.msra.mxu0 0
    %2833 = vmatprep.subr.bf16.mxu0 0
    %2834 = vmatpush1.bf16.xpose.msra.mxu0 0
    %2835 = vmatprep.subr.bf16.mxu0 0
    %2836 = vmatpush1.bf16.xpose.msra.mxu0 0
    %2837 = vmatprep.mubr.bf16.mxu0 0
    %2838 = vmatmul.mubr.bf16.gmra.mrb[0].mxu0 %v2800
    %v2839 = vpop.f32.mrb[0].mxu0
    %v2840 = vadd.f32 %v509, %v2839
    %v2841 = vpop.f32.mrb[0].mxu0
    %v2842 = vpop.f32.mrb[0].mxu0
    %v2843 = vpop.f32.mrb[0].mxu0
    %2844 = vdwg.mxu0
    %v2845 = vadd.f32 %v2790, %v155
    %v2846 = vadd.f32 %v2840, %v155
    %v2847 = vsel %vm512, %v2845, -inf
    %2848 = vmax.xlane.f32.xlu0 %v2847
    %v2849 = vpop.xlane.xlu0 %2848
    %v2850 = vsel %vm512, %v2846, -inf
    %2851 = vmax.xlane.f32.xlu0 %v2850
    %v2852 = vpop.xlane.xlu0 %2851
    %v2853 = vsub.f32 %v2845, %v2849
    %v2854 = vsub.f32 %v2846, %v2852
    %v2855 = vmul.f32 %v2853, 1.442695
    %v2856 = vpow.pop %v2855
    %v2857 = vmul.f32 %v2854, 1.442695
    %v2858 = vpow.pop %v2857
    %v2859 = vsel %vm512, %v2856, 0.0
    %2860 = vadd.xlane.f32.xlu0 %v2859
    %v2861 = vpop.xlane.xlu0 %2860
    %v2862 = vsel %vm512, %v2858, 0.0
    %2863 = vadd.xlane.f32.xlu0 %v2862
    %v2864 = vpop.xlane.xlu0 %2863
    %v2865 = vrcp.pop %v2861
    %v2866 = vrcp.pop %v2864
    %v2867 = vmul.f32 %v2856, %v2865
    %v2868 = vmul.f32 %v2858, %v2866
    %v2869 = vpack.c.bf16 %v2867, %v2867
    %v2870 = vpack.c.bf16 %v2868, %v2868
    %2871 = vrot.lane.b32.xlu0 %v2055, 104
    %v2872 = vpop.permute.xlu0 %2871
    %v2874 = vsel %vm512, %v2869, 0
    %v2877 = vsel %vm636, %v2872, 0
    %2879 = vmatprep.subr.bf16.mxu0 0
    %2880 = vmatpush1.bf16.msra.mxu0 %v2877
    %2881 = vmatprep.subr.bf16.mxu0 0
    %2882 = vmatpush1.bf16.msra.mxu0 0
    %2883 = vmatprep.subr.bf16.mxu0 0
    %2884 = vmatpush1.bf16.msra.mxu0 0
    %2885 = vmatprep.subr.bf16.mxu0 0
    %2886 = vmatpush1.bf16.msra.mxu0 0
    %2887 = vmatprep.subr.bf16.mxu0 0
    %2888 = vmatpush1.bf16.msra.mxu0 0
    %2889 = vmatprep.subr.bf16.mxu0 0
    %2890 = vmatpush1.bf16.msra.mxu0 0
    %2891 = vmatprep.subr.bf16.mxu0 0
    %2892 = vmatpush1.bf16.msra.mxu0 0
    %2893 = vmatprep.subr.bf16.mxu0 0
    %2894 = vmatpush1.bf16.msra.mxu0 0
    %2895 = vmatprep.subr.bf16.mxu0 0
    %2896 = vmatpush1.bf16.msra.mxu0 0
    %2897 = vmatprep.subr.bf16.mxu0 0
    %2898 = vmatpush1.bf16.msra.mxu0 0
    %2899 = vmatprep.subr.bf16.mxu0 0
    %2900 = vmatpush1.bf16.msra.mxu0 0
    %2901 = vmatprep.subr.bf16.mxu0 0
    %2902 = vmatpush1.bf16.msra.mxu0 0
    %2903 = vmatprep.subr.bf16.mxu0 0
    %2904 = vmatpush1.bf16.msra.mxu0 0
    %2905 = vmatprep.subr.bf16.mxu0 0
    %2906 = vmatpush1.bf16.msra.mxu0 0
    %2907 = vmatprep.subr.bf16.mxu0 0
    %2908 = vmatpush1.bf16.msra.mxu0 0
    %2909 = vmatprep.subr.bf16.mxu0 0
    %2910 = vmatpush1.bf16.msra.mxu0 0
    %2911 = vmatprep.mubr.bf16.mxu0 0
    %2912 = vmatmul.mubr.bf16.gmra.mrb[0].mxu0 %v2874
    %v2913 = vpop.f32.mrb[0].mxu0
    %v2914 = vadd.f32 0.0, %v2913
    %v2915 = vpop.f32.mrb[0].mxu0
    %v2916 = vpop.f32.mrb[0].mxu0
    %v2917 = vpop.f32.mrb[0].mxu0
    %2918 = vdwg.mxu0
    %2919 = vrot.lane.b32.xlu0 %v2056, 104
    %v2920 = vpop.permute.xlu0 %2919
    %v2922 = vsel %vm512, %v2870, 0
    %v2925 = vsel %vm636, %v2920, 0
    %2927 = vmatprep.subr.bf16.mxu0 0
    %2928 = vmatpush1.bf16.msra.mxu0 %v2925
    %2929 = vmatprep.subr.bf16.mxu0 0
    %2930 = vmatpush1.bf16.msra.mxu0 0
    %2931 = vmatprep.subr.bf16.mxu0 0
    %2932 = vmatpush1.bf16.msra.mxu0 0
    %2933 = vmatprep.subr.bf16.mxu0 0
    %2934 = vmatpush1.bf16.msra.mxu0 0
    %2935 = vmatprep.subr.bf16.mxu0 0
    %2936 = vmatpush1.bf16.msra.mxu0 0
    %2937 = vmatprep.subr.bf16.mxu0 0
    %2938 = vmatpush1.bf16.msra.mxu0 0
    %2939 = vmatprep.subr.bf16.mxu0 0
    %2940 = vmatpush1.bf16.msra.mxu0 0
    %2941 = vmatprep.subr.bf16.mxu0 0
    %2942 = vmatpush1.bf16.msra.mxu0 0
    %2943 = vmatprep.subr.bf16.mxu0 0
    %2944 = vmatpush1.bf16.msra.mxu0 0
    %2945 = vmatprep.subr.bf16.mxu0 0
    %2946 = vmatpush1.bf16.msra.mxu0 0
    %2947 = vmatprep.subr.bf16.mxu0 0
    %2948 = vmatpush1.bf16.msra.mxu0 0
    %2949 = vmatprep.subr.bf16.mxu0 0
    %2950 = vmatpush1.bf16.msra.mxu0 0
    %2951 = vmatprep.subr.bf16.mxu0 0
    %2952 = vmatpush1.bf16.msra.mxu0 0
    %2953 = vmatprep.subr.bf16.mxu0 0
    %2954 = vmatpush1.bf16.msra.mxu0 0
    %2955 = vmatprep.subr.bf16.mxu0 0
    %2956 = vmatpush1.bf16.msra.mxu0 0
    %2957 = vmatprep.subr.bf16.mxu0 0
    %2958 = vmatpush1.bf16.msra.mxu0 0
    %2959 = vmatprep.mubr.bf16.mxu0 0
    %2960 = vmatmul.mubr.bf16.gmra.mrb[0].mxu0 %v2922
    %v2961 = vpop.f32.mrb[0].mxu0
    %v2962 = vadd.f32 0.0, %v2961
    %v2963 = vpop.f32.mrb[0].mxu0
    %v2964 = vpop.f32.mrb[0].mxu0
    %v2965 = vpop.f32.mrb[0].mxu0
    %2966 = vdwg.mxu0
    %v2967 = vpack.c.bf16 %v2962, %v2914
    %v2969 = vsel %vm512, %v2967, 0
    %v2972 = vsel %vm636, %v195, 0
    %2974 = vmatprep.subr.bf16.mxu0 0
    %2975 = vmatpush1.bf16.msra.mxu0 %v2972
    %2976 = vmatprep.subr.bf16.mxu0 0
    %2977 = vmatpush1.bf16.msra.mxu0 0
    %2978 = vmatprep.subr.bf16.mxu0 0
    %2979 = vmatpush1.bf16.msra.mxu0 0
    %2980 = vmatprep.subr.bf16.mxu0 0
    %2981 = vmatpush1.bf16.msra.mxu0 0
    %2982 = vmatprep.subr.bf16.mxu0 0
    %2983 = vmatpush1.bf16.msra.mxu0 0
    %2984 = vmatprep.subr.bf16.mxu0 0
    %2985 = vmatpush1.bf16.msra.mxu0 0
    %2986 = vmatprep.subr.bf16.mxu0 0
    %2987 = vmatpush1.bf16.msra.mxu0 0
    %2988 = vmatprep.subr.bf16.mxu0 0
    %2989 = vmatpush1.bf16.msra.mxu0 0
    %2990 = vmatprep.subr.bf16.mxu0 0
    %2991 = vmatpush1.bf16.msra.mxu0 0
    %2992 = vmatprep.subr.bf16.mxu0 0
    %2993 = vmatpush1.bf16.msra.mxu0 0
    %2994 = vmatprep.subr.bf16.mxu0 0
    %2995 = vmatpush1.bf16.msra.mxu0 0
    %2996 = vmatprep.subr.bf16.mxu0 0
    %2997 = vmatpush1.bf16.msra.mxu0 0
    %2998 = vmatprep.subr.bf16.mxu0 0
    %2999 = vmatpush1.bf16.msra.mxu0 0
    %3000 = vmatprep.subr.bf16.mxu0 0
    %3001 = vmatpush1.bf16.msra.mxu0 0
    %3002 = vmatprep.subr.bf16.mxu0 0
    %3003 = vmatpush1.bf16.msra.mxu0 0
    %3004 = vmatprep.subr.bf16.mxu0 0
    %3005 = vmatpush1.bf16.msra.mxu0 0
    %3006 = vmatprep.mubr.bf16.mxu0 0
    %3007 = vmatmul.mubr.bf16.gmra.mrb[0].mxu0 %v2969
    %v3008 = vpop.f32.mrb[0].mxu0
    %v3009 = vadd.f32 0.0, %v3008
    %v3010 = vpop.f32.mrb[0].mxu0
    %v3011 = vpop.f32.mrb[0].mxu0
    %v3012 = vadd.f32 0.0, %v3011
    %v3013 = vpop.f32.mrb[0].mxu0
    %3014 = vdwg.mxu0
    %v3015 = vadd.f32 %v2743, %v3009
    %v3016 = vadd.f32 %v2744, %v3012
    %v3017 = vadd.f32 %v1746, %v3015
    %v3018 = vadd.f32 %v1747, %v3016
    %v3019 = vmul.f32 %v3017, %v3017
    %v3020 = vmul.f32 %v3018, %v3018
    %v3021 = vsel %vm311, %v3019, 0.0
    %3022 = vadd.xlane.f32.xlu0 %v3021
    %v3023 = vpop.xlane.xlu0 %3022
    %v3024 = vsel %vm311, %v3020, 0.0
    %3025 = vadd.xlane.f32.xlu0 %v3024
    %v3026 = vpop.xlane.xlu0 %3025
    %v3027 = vmul.f32 %v3023, %v318
    %v3028 = vmul.f32 %v3026, %v318
    %v3029 = vadd.f32 %v3027, 1e-06
    %v3030 = vadd.f32 %v3028, 1e-06
    %v3031 = vrsqrt.pop %v3029
    %v3032 = vrsqrt.pop %v3030
    %v3033 = vmul.f32 %v3017, %v3031
    %v3034 = vmul.f32 %v3018, %v3032
    %v3035 = vlaneseq
    %v3036 = vshrl.u32 %v3035, 7
    %v3037 = vsub.s32 1, %v3036
    %v3038 = vrot.slane %v221, %v3037
    %v3039 = vmul.f32 %v3033, %v3038
    %v3040 = vmul.f32 %v3034, %v3038
    %v3041 = vpack.c.bf16 %v3040, %v3039
    %v3046 = vunpack.c.l.b16 %v201
    %v3047 = vunpack.c.l.b16 %v202
    %v3048 = vunpack.c.l.b16 %v203
    %v3049 = vunpack.c.l.b16 %v204
    %v3050 = vpack.c.b16 %v3047, %v3046
    %v3051 = vpack.c.b16 %v3049, %v3048
    %v3055 = vsel %vm311, %v3041, 0
    %3057 = vmatprep.subr.bf16.mxu0 0
    %3058 = vmatpush1.bf16.msra.mxu0 %v3050
    %3059 = vmatprep.subr.bf16.mxu0 0
    %3060 = vmatpush1.bf16.msra.mxu0 %v3051
    %3061 = vmatprep.subr.bf16.mxu0 0
    %3062 = vmatpush1.bf16.msra.mxu0 0
    %3063 = vmatprep.subr.bf16.mxu0 0
    %3064 = vmatpush1.bf16.msra.mxu0 0
    %3065 = vmatprep.subr.bf16.mxu0 0
    %3066 = vmatpush1.bf16.msra.mxu0 0
    %3067 = vmatprep.subr.bf16.mxu0 0
    %3068 = vmatpush1.bf16.msra.mxu0 0
    %3069 = vmatprep.subr.bf16.mxu0 0
    %3070 = vmatpush1.bf16.msra.mxu0 0
    %3071 = vmatprep.subr.bf16.mxu0 0
    %3072 = vmatpush1.bf16.msra.mxu0 0
    %3073 = vmatprep.subr.bf16.mxu0 0
    %3074 = vmatpush1.bf16.msra.mxu0 0
    %3075 = vmatprep.subr.bf16.mxu0 0
    %3076 = vmatpush1.bf16.msra.mxu0 0
    %3077 = vmatprep.subr.bf16.mxu0 0
    %3078 = vmatpush1.bf16.msra.mxu0 0
    %3079 = vmatprep.subr.bf16.mxu0 0
    %3080 = vmatpush1.bf16.msra.mxu0 0
    %3081 = vmatprep.subr.bf16.mxu0 0
    %3082 = vmatpush1.bf16.msra.mxu0 0
    %3083 = vmatprep.subr.bf16.mxu0 0
    %3084 = vmatpush1.bf16.msra.mxu0 0
    %3085 = vmatprep.subr.bf16.mxu0 0
    %3086 = vmatpush1.bf16.msra.mxu0 0
    %3087 = vmatprep.subr.bf16.mxu0 0
    %3088 = vmatpush1.bf16.msra.mxu0 0
    %3089 = vmatprep.mubr.bf16.mxu0 0
    %3090 = vmatmul.mubr.bf16.gmra.mrb[0].mxu0 %v3055
    %v3091 = vpop.f32.mrb[0].mxu0
    %v3092 = vadd.f32 0.0, %v3091
    %v3093 = vpop.f32.mrb[0].mxu0
    %v3094 = vpop.f32.mrb[0].mxu0
    %v3095 = vadd.f32 0.0, %v3094
    %v3096 = vpop.f32.mrb[0].mxu0
    %3097 = vdwg.mxu0
    %v3098 = vmax.f32 %v3092, 0.0
    %v3099 = vmax.f32 %v3095, 0.0
    %v3100 = vpack.c.bf16 %v3099, %v3098
    %v3109 = vunpack.c.l.b16 %v213
    %v3110 = vunpack.c.l.b16 %v214
    %v3111 = vunpack.c.l.b16 %v215
    %v3112 = vunpack.c.l.b16 %v216
    %v3113 = vunpack.c.l.b16 %v217
    %v3114 = vunpack.c.l.b16 %v218
    %v3115 = vunpack.c.l.b16 %v219
    %v3116 = vunpack.c.l.b16 %v220
    %v3117 = vpack.c.b16 %v3110, %v3109
    %v3118 = vpack.c.b16 %v3112, %v3111
    %v3119 = vpack.c.b16 %v3114, %v3113
    %v3120 = vpack.c.b16 %v3116, %v3115
    %v3126 = vsel %vm264, %v3100, 0
    %3128 = vmatprep.subr.bf16.mxu0 0
    %3129 = vmatpush1.bf16.msra.mxu0 %v3117
    %3130 = vmatprep.subr.bf16.mxu0 0
    %3131 = vmatpush1.bf16.msra.mxu0 %v3118
    %3132 = vmatprep.subr.bf16.mxu0 0
    %3133 = vmatpush1.bf16.msra.mxu0 %v3119
    %3134 = vmatprep.subr.bf16.mxu0 0
    %3135 = vmatpush1.bf16.msra.mxu0 %v3120
    %3136 = vmatprep.subr.bf16.mxu0 0
    %3137 = vmatpush1.bf16.msra.mxu0 0
    %3138 = vmatprep.subr.bf16.mxu0 0
    %3139 = vmatpush1.bf16.msra.mxu0 0
    %3140 = vmatprep.subr.bf16.mxu0 0
    %3141 = vmatpush1.bf16.msra.mxu0 0
    %3142 = vmatprep.subr.bf16.mxu0 0
    %3143 = vmatpush1.bf16.msra.mxu0 0
    %3144 = vmatprep.subr.bf16.mxu0 0
    %3145 = vmatpush1.bf16.msra.mxu0 0
    %3146 = vmatprep.subr.bf16.mxu0 0
    %3147 = vmatpush1.bf16.msra.mxu0 0
    %3148 = vmatprep.subr.bf16.mxu0 0
    %3149 = vmatpush1.bf16.msra.mxu0 0
    %3150 = vmatprep.subr.bf16.mxu0 0
    %3151 = vmatpush1.bf16.msra.mxu0 0
    %3152 = vmatprep.subr.bf16.mxu0 0
    %3153 = vmatpush1.bf16.msra.mxu0 0
    %3154 = vmatprep.subr.bf16.mxu0 0
    %3155 = vmatpush1.bf16.msra.mxu0 0
    %3156 = vmatprep.subr.bf16.mxu0 0
    %3157 = vmatpush1.bf16.msra.mxu0 0
    %3158 = vmatprep.subr.bf16.mxu0 0
    %3159 = vmatpush1.bf16.msra.mxu0 0
    %3160 = vmatprep.mubr.bf16.mxu0 0
    %3161 = vmatmul.mubr.bf16.gmra.mrb[0].mxu0 %v3126
    %v3162 = vpop.f32.mrb[0].mxu0
    %v3163 = vadd.f32 0.0, %v3162
    %v3164 = vpop.f32.mrb[0].mxu0
    %v3165 = vpop.f32.mrb[0].mxu0
    %v3166 = vadd.f32 0.0, %v3165
    %v3167 = vpop.f32.mrb[0].mxu0
    %3168 = vdwg.mxu0
    %v3169 = vadd.f32 %v3017, %v3163
    %v3170 = vadd.f32 %v3018, %v3166
    %v3171 = vmul.f32 %v3169, %v3169
    %v3172 = vmul.f32 %v3170, %v3170
    %v3173 = vsel %vm311, %v3171, 0.0
    %3174 = vadd.xlane.f32.xlu0 %v3173
    %v3175 = vpop.xlane.xlu0 %3174
    %v3176 = vsel %vm311, %v3172, 0.0
    %3177 = vadd.xlane.f32.xlu0 %v3176
    %v3178 = vpop.xlane.xlu0 %3177
    %v3179 = vmul.f32 %v3175, %v318
    %v3180 = vmul.f32 %v3178, %v318
    %v3181 = vadd.f32 %v3179, 1e-06
    %v3182 = vadd.f32 %v3180, 1e-06
    %v3183 = vrsqrt.pop %v3181
    %v3184 = vrsqrt.pop %v3182
    %v3185 = vmul.f32 %v3169, %v3183
    %v3186 = vmul.f32 %v3170, %v3184
    %v3188 = vlaneseq
    %v3189 = vshrl.u32 %v3188, 7
    %v3190 = vsub.s32 0, %v3189
    %v3191 = vrot.slane %v222, %v3190
    %v3193 = vmul.f32 %v3185, %v3191
    %v3194 = vmul.f32 %v3186, %v3191
    %v3195 = vld [vmem:[%s37] sm:$0xf]
    %v3196 = vld [vmem:[%s37 + $0x4] sm:$0xf]
    %v3197 = vld [vmem:[%s37 + $0x8] sm:$0xf]
    %v3198 = vld [vmem:[%s37 + $0xc] sm:$0xf]
    %v3199 = vld [vmem:[%s37 + $0x10] sm:$0xf]
    %v3200 = vld [vmem:[%s37 + $0x14] sm:$0xf]
    %v3201 = vld [vmem:[%s37 + $0x18] sm:$0xf]
    %v3202 = vld [vmem:[%s37 + $0x1c] sm:$0xf]
    %v3203 = vld [vmem:[%s39] sm:$0xf]
    %v3204 = vld [vmem:[%s39 + $0x4] sm:$0xf]
    %v3205 = vld [vmem:[%s39 + $0x8] sm:$0xf]
    %v3206 = vld [vmem:[%s39 + $0xc] sm:$0xf]
    %v3207 = vld [vmem:[%s39 + $0x10] sm:$0xf]
    %v3208 = vld [vmem:[%s39 + $0x14] sm:$0xf]
    %v3209 = vld [vmem:[%s39 + $0x18] sm:$0xf]
    %v3210 = vld [vmem:[%s39 + $0x1c] sm:$0xf]
    %v3211 = vld [vmem:[%s41] sm:$0xf]
    %v3212 = vld [vmem:[%s41 + $0x4] sm:$0xf]
    %v3213 = vld [vmem:[%s41 + $0x8] sm:$0xf]
    %v3214 = vld [vmem:[%s41 + $0xc] sm:$0xf]
    %v3215 = vld [vmem:[%s41 + $0x10] sm:$0xf]
    %v3216 = vld [vmem:[%s41 + $0x14] sm:$0xf]
    %v3217 = vld [vmem:[%s41 + $0x18] sm:$0xf]
    %v3218 = vld [vmem:[%s41 + $0x1c] sm:$0xf]
    %v3219 = vld [vmem:[%s43] sm:$0xf]
    %v3220 = vld [vmem:[%s43 + $0x4] sm:$0xf]
    %v3221 = vld [vmem:[%s43 + $0x8] sm:$0xf]
    %v3222 = vld [vmem:[%s43 + $0xc] sm:$0xf]
    %v3223 = vld [vmem:[%s43 + $0x10] sm:$0xf]
    %v3224 = vld [vmem:[%s43 + $0x14] sm:$0xf]
    %v3225 = vld [vmem:[%s43 + $0x18] sm:$0xf]
    %v3226 = vld [vmem:[%s43 + $0x1c] sm:$0xf]
    %v3227 = vld [vmem:[%s47] sm:$0xf]
    %v3228 = vld [vmem:[%s47 + $0x4] sm:$0xf]
    %v3229 = vld [vmem:[%s47 + $0x8] sm:$0xf]
    %v3230 = vld [vmem:[%s47 + $0xc] sm:$0xf]
    %v3231 = vld [vmem:[%s47 + $0x10] sm:$0xf]
    %v3232 = vld [vmem:[%s47 + $0x14] sm:$0xf]
    %v3233 = vld [vmem:[%s47 + $0x18] sm:$0xf]
    %v3234 = vld [vmem:[%s47 + $0x1c] sm:$0xf]
    %v3235 = vld [vmem:[%s49] sm:$0xf]
    %v3236 = vld [vmem:[%s49 + $0x4] sm:$0xf]
    %v3237 = vld [vmem:[%s49 + $0x8] sm:$0xf]
    %v3238 = vld [vmem:[%s49 + $0xc] sm:$0xf]
    %v3239 = vld [vmem:[%s49 + $0x10] sm:$0xf]
    %v3240 = vld [vmem:[%s49 + $0x14] sm:$0xf]
    %v3241 = vld [vmem:[%s49 + $0x18] sm:$0xf]
    %v3242 = vld [vmem:[%s49 + $0x1c] sm:$0xf]
    %v3243 = vld [vmem:[%s51] sm:$0xf]
    %v3244 = vld [vmem:[%s51 + $0x4] sm:$0xf]
    %v3245 = vld [vmem:[%s51 + $0x8] sm:$0xf]
    %v3246 = vld [vmem:[%s51 + $0xc] sm:$0xf]
    %v3247 = vld [vmem:[%s51 + $0x10] sm:$0xf]
    %v3248 = vld [vmem:[%s51 + $0x14] sm:$0xf]
    %v3249 = vld [vmem:[%s51 + $0x18] sm:$0xf]
    %v3250 = vld [vmem:[%s51 + $0x1c] sm:$0xf]
    %v3251 = vld [vmem:[%s53] sm:$0xf]
    %v3252 = vld [vmem:[%s53 + $0x4] sm:$0xf]
    %v3253 = vld [vmem:[%s53 + $0x8] sm:$0xf]
    %v3254 = vld [vmem:[%s53 + $0xc] sm:$0xf]
    %v3255 = vld [vmem:[%s53 + $0x10] sm:$0xf]
    %v3256 = vld [vmem:[%s53 + $0x14] sm:$0xf]
    %v3257 = vld [vmem:[%s53 + $0x18] sm:$0xf]
    %v3258 = vld [vmem:[%s53 + $0x1c] sm:$0xf]
    %v3259 = vld [vmem:[%s45] sm:$0x3]
    %v3260 = vld [vmem:[%s55] sm:$0x3]
    %v3261 = vld [vmem:[%s57] sm:$0xf]
    %v3262 = vld [vmem:[%s57 + $0x4] sm:$0xf]
    %v3263 = vld [vmem:[%s57 + $0x8] sm:$0xf]
    %v3264 = vld [vmem:[%s57 + $0xc] sm:$0xf]
    %v3265 = vld [vmem:[%s57 + $0x10] sm:$0xf]
    %v3266 = vld [vmem:[%s57 + $0x14] sm:$0xf]
    %v3267 = vld [vmem:[%s57 + $0x18] sm:$0xf]
    %v3268 = vld [vmem:[%s57 + $0x1c] sm:$0xf]
    %v3269 = vld [vmem:[%s59] sm:$0xf]
    %v3270 = vld [vmem:[%s59 + $0x4] sm:$0xf]
    %v3271 = vld [vmem:[%s59 + $0x8] sm:$0xf]
    %v3272 = vld [vmem:[%s59 + $0xc] sm:$0xf]
    %v3273 = vld [vmem:[%s59 + $0x10] sm:$0xf]
    %v3274 = vld [vmem:[%s59 + $0x14] sm:$0xf]
    %v3275 = vld [vmem:[%s59 + $0x18] sm:$0xf]
    %v3276 = vld [vmem:[%s59 + $0x1c] sm:$0xf]
    %v3277 = vld [vmem:[%s59 + $0x20] sm:$0xf]
    %v3278 = vld [vmem:[%s59 + $0x24] sm:$0xf]
    %v3279 = vld [vmem:[%s59 + $0x28] sm:$0xf]
    %v3280 = vld [vmem:[%s59 + $0x2c] sm:$0xf]
    %v3281 = vld [vmem:[%s59 + $0x30] sm:$0xf]
    %v3282 = vld [vmem:[%s59 + $0x34] sm:$0xf]
    %v3283 = vld [vmem:[%s59 + $0x38] sm:$0xf]
    %v3284 = vld [vmem:[%s59 + $0x3c] sm:$0xf]
    %v3285 = vld [vmem:[%s61] sm:$0x3]
    %v3286 = vld [vmem:[%s63] sm:$0x1]
    %v3287 = vld [vmem:[%s3] sm:$0xff]
    %v3288 = vld [vmem:[%s3 + $0x8] sm:$0xff]
    %3289 = vset.pattern.permute.xlu0 0
    %3290 = vperm.xlu0 %3289, %v3287
    %v3291 = vpop.permute.xlu0 %3290
    %3292 = vset.pattern.permute.xlu0 0
    %3293 = vperm.xlu0 %3292, %v3288
    %v3294 = vpop.permute.xlu0 %3293
    %vm3295 = vcmp.eq.s32.totalorder %v3291, %v226
    %vm3296 = vcmp.eq.s32.totalorder %v3294, %v226
    %v3297 = vsel %vm3295, 1, 0
    %v3298 = vsel %vm3296, 1, 0
    %v3299 = vcvt.s32.f32 %v3297
    %v3300 = vcvt.s32.f32 %v3298
    %v3301 = vpack.c.bf16 %v3300, %v3299
    %v3303 = vsel %vm264, %v3301, 0
    %3305 = vmatprep.subr.bf16.mxu0 0
    %3306 = vmatpush1.bf16.msra.mxu0 %v256
    %3307 = vmatprep.subr.bf16.mxu0 0
    %3308 = vmatpush1.bf16.msra.mxu0 %v257
    %3309 = vmatprep.subr.bf16.mxu0 0
    %3310 = vmatpush1.bf16.msra.mxu0 %v258
    %3311 = vmatprep.subr.bf16.mxu0 0
    %3312 = vmatpush1.bf16.msra.mxu0 %v259
    %3313 = vmatprep.subr.bf16.mxu0 0
    %3314 = vmatpush1.bf16.msra.mxu0 0
    %3315 = vmatprep.subr.bf16.mxu0 0
    %3316 = vmatpush1.bf16.msra.mxu0 0
    %3317 = vmatprep.subr.bf16.mxu0 0
    %3318 = vmatpush1.bf16.msra.mxu0 0
    %3319 = vmatprep.subr.bf16.mxu0 0
    %3320 = vmatpush1.bf16.msra.mxu0 0
    %3321 = vmatprep.subr.bf16.mxu0 0
    %3322 = vmatpush1.bf16.msra.mxu0 0
    %3323 = vmatprep.subr.bf16.mxu0 0
    %3324 = vmatpush1.bf16.msra.mxu0 0
    %3325 = vmatprep.subr.bf16.mxu0 0
    %3326 = vmatpush1.bf16.msra.mxu0 0
    %3327 = vmatprep.subr.bf16.mxu0 0
    %3328 = vmatpush1.bf16.msra.mxu0 0
    %3329 = vmatprep.subr.bf16.mxu0 0
    %3330 = vmatpush1.bf16.msra.mxu0 0
    %3331 = vmatprep.subr.bf16.mxu0 0
    %3332 = vmatpush1.bf16.msra.mxu0 0
    %3333 = vmatprep.subr.bf16.mxu0 0
    %3334 = vmatpush1.bf16.msra.mxu0 0
    %3335 = vmatprep.subr.bf16.mxu0 0
    %3336 = vmatpush1.bf16.msra.mxu0 0
    %3337 = vmatprep.mubr.bf16.mxu0 0
    %3338 = vmatmul.mubr.bf16.gmra.mrb[0].mxu0 %v3303
    %v3339 = vpop.f32.mrb[0].mxu0
    %v3340 = vadd.f32 0.0, %v3339
    %v3341 = vpop.f32.mrb[0].mxu0
    %v3342 = vpop.f32.mrb[0].mxu0
    %v3343 = vadd.f32 0.0, %v3342
    %v3344 = vpop.f32.mrb[0].mxu0
    %3345 = vdwg.mxu0
    %v3346 = vmul.f32 %v3340, %v3340
    %v3347 = vmul.f32 %v3343, %v3343
    %v3348 = vsel %vm311, %v3346, 0.0
    %3349 = vadd.xlane.f32.xlu0 %v3348
    %v3350 = vpop.xlane.xlu0 %3349
    %v3351 = vsel %vm311, %v3347, 0.0
    %3352 = vadd.xlane.f32.xlu0 %v3351
    %v3353 = vpop.xlane.xlu0 %3352
    %v3354 = vmul.f32 %v3350, %v318
    %v3355 = vmul.f32 %v3353, %v318
    %v3356 = vadd.f32 %v3354, 1e-06
    %v3357 = vadd.f32 %v3355, 1e-06
    %v3358 = vrsqrt.pop %v3356
    %v3359 = vrsqrt.pop %v3357
    %v3360 = vmul.f32 %v3340, %v3358
    %v3361 = vmul.f32 %v3343, %v3359
    %v3362 = vlaneseq
    %v3363 = vshrl.u32 %v3362, 7
    %v3364 = vsub.s32 0, %v3363
    %v3365 = vrot.slane %v3259, %v3364
    %v3366 = vmul.f32 %v3360, %v3365
    %v3367 = vmul.f32 %v3361, %v3365
    %v3368 = vpack.c.bf16 %v3367, %v3366
    %v3373 = vunpack.c.l.b16 %v3195
    %v3374 = vunpack.c.l.b16 %v3196
    %v3375 = vunpack.c.l.b16 %v3197
    %v3376 = vunpack.c.l.b16 %v3198
    %v3377 = vpack.c.b16 %v3374, %v3373
    %v3378 = vpack.c.b16 %v3376, %v3375
    %v3382 = vsel %vm311, %v3368, 0
    %3384 = vmatprep.subr.bf16.mxu0 0
    %3385 = vmatpush1.bf16.msra.mxu0 %v3377
    %3386 = vmatprep.subr.bf16.mxu0 0
    %3387 = vmatpush1.bf16.msra.mxu0 %v3378
    %3388 = vmatprep.subr.bf16.mxu0 0
    %3389 = vmatpush1.bf16.msra.mxu0 0
    %3390 = vmatprep.subr.bf16.mxu0 0
    %3391 = vmatpush1.bf16.msra.mxu0 0
    %3392 = vmatprep.subr.bf16.mxu0 0
    %3393 = vmatpush1.bf16.msra.mxu0 0
    %3394 = vmatprep.subr.bf16.mxu0 0
    %3395 = vmatpush1.bf16.msra.mxu0 0
    %3396 = vmatprep.subr.bf16.mxu0 0
    %3397 = vmatpush1.bf16.msra.mxu0 0
    %3398 = vmatprep.subr.bf16.mxu0 0
    %3399 = vmatpush1.bf16.msra.mxu0 0
    %3400 = vmatprep.subr.bf16.mxu0 0
    %3401 = vmatpush1.bf16.msra.mxu0 0
    %3402 = vmatprep.subr.bf16.mxu0 0
    %3403 = vmatpush1.bf16.msra.mxu0 0
    %3404 = vmatprep.subr.bf16.mxu0 0
    %3405 = vmatpush1.bf16.msra.mxu0 0
    %3406 = vmatprep.subr.bf16.mxu0 0
    %3407 = vmatpush1.bf16.msra.mxu0 0
    %3408 = vmatprep.subr.bf16.mxu0 0
    %3409 = vmatpush1.bf16.msra.mxu0 0
    %3410 = vmatprep.subr.bf16.mxu0 0
    %3411 = vmatpush1.bf16.msra.mxu0 0
    %3412 = vmatprep.subr.bf16.mxu0 0
    %3413 = vmatpush1.bf16.msra.mxu0 0
    %3414 = vmatprep.subr.bf16.mxu0 0
    %3415 = vmatpush1.bf16.msra.mxu0 0
    %3416 = vmatprep.mubr.bf16.mxu0 0
    %3417 = vmatmul.mubr.bf16.gmra.mrb[0].mxu0 %v3382
    %v3418 = vpop.f32.mrb[0].mxu0
    %v3419 = vadd.f32 0.0, %v3418
    %v3420 = vpop.f32.mrb[0].mxu0
    %v3421 = vpop.f32.mrb[0].mxu0
    %v3422 = vadd.f32 0.0, %v3421
    %v3423 = vpop.f32.mrb[0].mxu0
    %3424 = vdwg.mxu0
    %v3429 = vunpack.c.l.b16 %v3203
    %v3430 = vunpack.c.l.b16 %v3204
    %v3431 = vunpack.c.l.b16 %v3205
    %v3432 = vunpack.c.l.b16 %v3206
    %v3433 = vpack.c.b16 %v3430, %v3429
    %v3434 = vpack.c.b16 %v3432, %v3431
    %3437 = vmatprep.subr.bf16.mxu0 0
    %3438 = vmatpush1.bf16.msra.mxu0 %v3433
    %3439 = vmatprep.subr.bf16.mxu0 0
    %3440 = vmatpush1.bf16.msra.mxu0 %v3434
    %3441 = vmatprep.subr.bf16.mxu0 0
    %3442 = vmatpush1.bf16.msra.mxu0 0
    %3443 = vmatprep.subr.bf16.mxu0 0
    %3444 = vmatpush1.bf16.msra.mxu0 0
    %3445 = vmatprep.subr.bf16.mxu0 0
    %3446 = vmatpush1.bf16.msra.mxu0 0
    %3447 = vmatprep.subr.bf16.mxu0 0
    %3448 = vmatpush1.bf16.msra.mxu0 0
    %3449 = vmatprep.subr.bf16.mxu0 0
    %3450 = vmatpush1.bf16.msra.mxu0 0
    %3451 = vmatprep.subr.bf16.mxu0 0
    %3452 = vmatpush1.bf16.msra.mxu0 0
    %3453 = vmatprep.subr.bf16.mxu0 0
    %3454 = vmatpush1.bf16.msra.mxu0 0
    %3455 = vmatprep.subr.bf16.mxu0 0
    %3456 = vmatpush1.bf16.msra.mxu0 0
    %3457 = vmatprep.subr.bf16.mxu0 0
    %3458 = vmatpush1.bf16.msra.mxu0 0
    %3459 = vmatprep.subr.bf16.mxu0 0
    %3460 = vmatpush1.bf16.msra.mxu0 0
    %3461 = vmatprep.subr.bf16.mxu0 0
    %3462 = vmatpush1.bf16.msra.mxu0 0
    %3463 = vmatprep.subr.bf16.mxu0 0
    %3464 = vmatpush1.bf16.msra.mxu0 0
    %3465 = vmatprep.subr.bf16.mxu0 0
    %3466 = vmatpush1.bf16.msra.mxu0 0
    %3467 = vmatprep.subr.bf16.mxu0 0
    %3468 = vmatpush1.bf16.msra.mxu0 0
    %3469 = vmatprep.mubr.bf16.mxu0 0
    %3470 = vmatmul.mubr.bf16.gmra.mrb[0].mxu0 %v3382
    %v3471 = vpop.f32.mrb[0].mxu0
    %v3472 = vadd.f32 0.0, %v3471
    %v3473 = vpop.f32.mrb[0].mxu0
    %v3474 = vpop.f32.mrb[0].mxu0
    %v3475 = vadd.f32 0.0, %v3474
    %v3476 = vpop.f32.mrb[0].mxu0
    %3477 = vdwg.mxu0
    %v3482 = vunpack.c.l.b16 %v3211
    %v3483 = vunpack.c.l.b16 %v3212
    %v3484 = vunpack.c.l.b16 %v3213
    %v3485 = vunpack.c.l.b16 %v3214
    %v3486 = vpack.c.b16 %v3483, %v3482
    %v3487 = vpack.c.b16 %v3485, %v3484
    %3490 = vmatprep.subr.bf16.mxu0 0
    %3491 = vmatpush1.bf16.msra.mxu0 %v3486
    %3492 = vmatprep.subr.bf16.mxu0 0
    %3493 = vmatpush1.bf16.msra.mxu0 %v3487
    %3494 = vmatprep.subr.bf16.mxu0 0
    %3495 = vmatpush1.bf16.msra.mxu0 0
    %3496 = vmatprep.subr.bf16.mxu0 0
    %3497 = vmatpush1.bf16.msra.mxu0 0
    %3498 = vmatprep.subr.bf16.mxu0 0
    %3499 = vmatpush1.bf16.msra.mxu0 0
    %3500 = vmatprep.subr.bf16.mxu0 0
    %3501 = vmatpush1.bf16.msra.mxu0 0
    %3502 = vmatprep.subr.bf16.mxu0 0
    %3503 = vmatpush1.bf16.msra.mxu0 0
    %3504 = vmatprep.subr.bf16.mxu0 0
    %3505 = vmatpush1.bf16.msra.mxu0 0
    %3506 = vmatprep.subr.bf16.mxu0 0
    %3507 = vmatpush1.bf16.msra.mxu0 0
    %3508 = vmatprep.subr.bf16.mxu0 0
    %3509 = vmatpush1.bf16.msra.mxu0 0
    %3510 = vmatprep.subr.bf16.mxu0 0
    %3511 = vmatpush1.bf16.msra.mxu0 0
    %3512 = vmatprep.subr.bf16.mxu0 0
    %3513 = vmatpush1.bf16.msra.mxu0 0
    %3514 = vmatprep.subr.bf16.mxu0 0
    %3515 = vmatpush1.bf16.msra.mxu0 0
    %3516 = vmatprep.subr.bf16.mxu0 0
    %3517 = vmatpush1.bf16.msra.mxu0 0
    %3518 = vmatprep.subr.bf16.mxu0 0
    %3519 = vmatpush1.bf16.msra.mxu0 0
    %3520 = vmatprep.subr.bf16.mxu0 0
    %3521 = vmatpush1.bf16.msra.mxu0 0
    %3522 = vmatprep.mubr.bf16.mxu0 0
    %3523 = vmatmul.mubr.bf16.gmra.mrb[0].mxu0 %v3382
    %v3524 = vpop.f32.mrb[0].mxu0
    %v3525 = vadd.f32 0.0, %v3524
    %v3526 = vpop.f32.mrb[0].mxu0
    %v3527 = vpop.f32.mrb[0].mxu0
    %v3528 = vadd.f32 0.0, %v3527
    %v3529 = vpop.f32.mrb[0].mxu0
    %3530 = vdwg.mxu0
    %v3531 = vpack.c.bf16 %v3419, %v3419
    %v3532 = vpack.c.bf16 %v3422, %v3422
    %v3533 = vpack.c.bf16 %v3472, %v3472
    %v3534 = vpack.c.bf16 %v3475, %v3475
    %v3536 = vsel %vm512, %v3531, 0
    %v3539 = vsel %vm512, %v3533, 0
    %3541 = vmatprep.subr.bf16.mxu0 0
    %3542 = vmatpush1.bf16.xpose.msra.mxu0 %v3539
    %3543 = vmatprep.subr.bf16.mxu0 0
    %3544 = vmatpush1.bf16.xpose.msra.mxu0 0
    %3545 = vmatprep.subr.bf16.mxu0 0
    %3546 = vmatpush1.bf16.xpose.msra.mxu0 0
    %3547 = vmatprep.subr.bf16.mxu0 0
    %3548 = vmatpush1.bf16.xpose.msra.mxu0 0
    %3549 = vmatprep.subr.bf16.mxu0 0
    %3550 = vmatpush1.bf16.xpose.msra.mxu0 0
    %3551 = vmatprep.subr.bf16.mxu0 0
    %3552 = vmatpush1.bf16.xpose.msra.mxu0 0
    %3553 = vmatprep.subr.bf16.mxu0 0
    %3554 = vmatpush1.bf16.xpose.msra.mxu0 0
    %3555 = vmatprep.subr.bf16.mxu0 0
    %3556 = vmatpush1.bf16.xpose.msra.mxu0 0
    %3557 = vmatprep.subr.bf16.mxu0 0
    %3558 = vmatpush1.bf16.xpose.msra.mxu0 0
    %3559 = vmatprep.subr.bf16.mxu0 0
    %3560 = vmatpush1.bf16.xpose.msra.mxu0 0
    %3561 = vmatprep.subr.bf16.mxu0 0
    %3562 = vmatpush1.bf16.xpose.msra.mxu0 0
    %3563 = vmatprep.subr.bf16.mxu0 0
    %3564 = vmatpush1.bf16.xpose.msra.mxu0 0
    %3565 = vmatprep.subr.bf16.mxu0 0
    %3566 = vmatpush1.bf16.xpose.msra.mxu0 0
    %3567 = vmatprep.subr.bf16.mxu0 0
    %3568 = vmatpush1.bf16.xpose.msra.mxu0 0
    %3569 = vmatprep.subr.bf16.mxu0 0
    %3570 = vmatpush1.bf16.xpose.msra.mxu0 0
    %3571 = vmatprep.subr.bf16.mxu0 0
    %3572 = vmatpush1.bf16.xpose.msra.mxu0 0
    %3573 = vmatprep.mubr.bf16.mxu0 0
    %3574 = vmatmul.mubr.bf16.gmra.mrb[0].mxu0 %v3536
    %v3575 = vpop.f32.mrb[0].mxu0
    %v3576 = vadd.f32 %v162, %v3575
    %v3577 = vpop.f32.mrb[0].mxu0
    %v3578 = vpop.f32.mrb[0].mxu0
    %v3579 = vpop.f32.mrb[0].mxu0
    %3580 = vdwg.mxu0
    %v3582 = vsel %vm512, %v3532, 0
    %v3585 = vsel %vm512, %v3534, 0
    %3587 = vmatprep.subr.bf16.mxu0 0
    %3588 = vmatpush1.bf16.xpose.msra.mxu0 %v3585
    %3589 = vmatprep.subr.bf16.mxu0 0
    %3590 = vmatpush1.bf16.xpose.msra.mxu0 0
    %3591 = vmatprep.subr.bf16.mxu0 0
    %3592 = vmatpush1.bf16.xpose.msra.mxu0 0
    %3593 = vmatprep.subr.bf16.mxu0 0
    %3594 = vmatpush1.bf16.xpose.msra.mxu0 0
    %3595 = vmatprep.subr.bf16.mxu0 0
    %3596 = vmatpush1.bf16.xpose.msra.mxu0 0
    %3597 = vmatprep.subr.bf16.mxu0 0
    %3598 = vmatpush1.bf16.xpose.msra.mxu0 0
    %3599 = vmatprep.subr.bf16.mxu0 0
    %3600 = vmatpush1.bf16.xpose.msra.mxu0 0
    %3601 = vmatprep.subr.bf16.mxu0 0
    %3602 = vmatpush1.bf16.xpose.msra.mxu0 0
    %3603 = vmatprep.subr.bf16.mxu0 0
    %3604 = vmatpush1.bf16.xpose.msra.mxu0 0
    %3605 = vmatprep.subr.bf16.mxu0 0
    %3606 = vmatpush1.bf16.xpose.msra.mxu0 0
    %3607 = vmatprep.subr.bf16.mxu0 0
    %3608 = vmatpush1.bf16.xpose.msra.mxu0 0
    %3609 = vmatprep.subr.bf16.mxu0 0
    %3610 = vmatpush1.bf16.xpose.msra.mxu0 0
    %3611 = vmatprep.subr.bf16.mxu0 0
    %3612 = vmatpush1.bf16.xpose.msra.mxu0 0
    %3613 = vmatprep.subr.bf16.mxu0 0
    %3614 = vmatpush1.bf16.xpose.msra.mxu0 0
    %3615 = vmatprep.subr.bf16.mxu0 0
    %3616 = vmatpush1.bf16.xpose.msra.mxu0 0
    %3617 = vmatprep.subr.bf16.mxu0 0
    %3618 = vmatpush1.bf16.xpose.msra.mxu0 0
    %3619 = vmatprep.mubr.bf16.mxu0 0
    %3620 = vmatmul.mubr.bf16.gmra.mrb[0].mxu0 %v3582
    %v3621 = vpop.f32.mrb[0].mxu0
    %v3622 = vadd.f32 %v163, %v3621
    %v3623 = vpop.f32.mrb[0].mxu0
    %v3624 = vpop.f32.mrb[0].mxu0
    %v3625 = vpop.f32.mrb[0].mxu0
    %3626 = vdwg.mxu0
    %v3627 = vadd.f32 %v3576, %v156
    %v3628 = vadd.f32 %v3622, %v156
    %v3629 = vsel %vm512, %v3627, -inf
    %3630 = vmax.xlane.f32.xlu0 %v3629
    %v3631 = vpop.xlane.xlu0 %3630
    %v3632 = vsel %vm512, %v3628, -inf
    %3633 = vmax.xlane.f32.xlu0 %v3632
    %v3634 = vpop.xlane.xlu0 %3633
    %v3635 = vsub.f32 %v3627, %v3631
    %v3636 = vsub.f32 %v3628, %v3634
    %v3637 = vmul.f32 %v3635, 1.442695
    %v3638 = vpow.pop %v3637
    %v3639 = vmul.f32 %v3636, 1.442695
    %v3640 = vpow.pop %v3639
    %v3641 = vsel %vm512, %v3638, 0.0
    %3642 = vadd.xlane.f32.xlu0 %v3641
    %v3643 = vpop.xlane.xlu0 %3642
    %v3644 = vsel %vm512, %v3640, 0.0
    %3645 = vadd.xlane.f32.xlu0 %v3644
    %v3646 = vpop.xlane.xlu0 %3645
    %v3647 = vrcp.pop %v3643
    %v3648 = vrcp.pop %v3646
    %v3649 = vmul.f32 %v3638, %v3647
    %v3650 = vmul.f32 %v3640, %v3648
    %v3651 = vpack.c.bf16 %v3649, %v3649
    %v3652 = vpack.c.bf16 %v3650, %v3650
    %v3653 = vpack.c.bf16 %v3525, %v3525
    %v3654 = vpack.c.bf16 %v3528, %v3528
    %v3656 = vsel %vm512, %v3651, 0
    %v3659 = vsel %vm636, %v3653, 0
    %3661 = vmatprep.subr.bf16.mxu0 0
    %3662 = vmatpush1.bf16.msra.mxu0 %v3659
    %3663 = vmatprep.subr.bf16.mxu0 0
    %3664 = vmatpush1.bf16.msra.mxu0 0
    %3665 = vmatprep.subr.bf16.mxu0 0
    %3666 = vmatpush1.bf16.msra.mxu0 0
    %3667 = vmatprep.subr.bf16.mxu0 0
    %3668 = vmatpush1.bf16.msra.mxu0 0
    %3669 = vmatprep.subr.bf16.mxu0 0
    %3670 = vmatpush1.bf16.msra.mxu0 0
    %3671 = vmatprep.subr.bf16.mxu0 0
    %3672 = vmatpush1.bf16.msra.mxu0 0
    %3673 = vmatprep.subr.bf16.mxu0 0
    %3674 = vmatpush1.bf16.msra.mxu0 0
    %3675 = vmatprep.subr.bf16.mxu0 0
    %3676 = vmatpush1.bf16.msra.mxu0 0
    %3677 = vmatprep.subr.bf16.mxu0 0
    %3678 = vmatpush1.bf16.msra.mxu0 0
    %3679 = vmatprep.subr.bf16.mxu0 0
    %3680 = vmatpush1.bf16.msra.mxu0 0
    %3681 = vmatprep.subr.bf16.mxu0 0
    %3682 = vmatpush1.bf16.msra.mxu0 0
    %3683 = vmatprep.subr.bf16.mxu0 0
    %3684 = vmatpush1.bf16.msra.mxu0 0
    %3685 = vmatprep.subr.bf16.mxu0 0
    %3686 = vmatpush1.bf16.msra.mxu0 0
    %3687 = vmatprep.subr.bf16.mxu0 0
    %3688 = vmatpush1.bf16.msra.mxu0 0
    %3689 = vmatprep.subr.bf16.mxu0 0
    %3690 = vmatpush1.bf16.msra.mxu0 0
    %3691 = vmatprep.subr.bf16.mxu0 0
    %3692 = vmatpush1.bf16.msra.mxu0 0
    %3693 = vmatprep.mubr.bf16.mxu0 0
    %3694 = vmatmul.mubr.bf16.gmra.mrb[0].mxu0 %v3656
    %v3695 = vpop.f32.mrb[0].mxu0
    %v3696 = vadd.f32 0.0, %v3695
    %v3697 = vpop.f32.mrb[0].mxu0
    %v3698 = vpop.f32.mrb[0].mxu0
    %v3699 = vpop.f32.mrb[0].mxu0
    %3700 = vdwg.mxu0
    %v3702 = vsel %vm512, %v3652, 0
    %v3705 = vsel %vm636, %v3654, 0
    %3707 = vmatprep.subr.bf16.mxu0 0
    %3708 = vmatpush1.bf16.msra.mxu0 %v3705
    %3709 = vmatprep.subr.bf16.mxu0 0
    %3710 = vmatpush1.bf16.msra.mxu0 0
    %3711 = vmatprep.subr.bf16.mxu0 0
    %3712 = vmatpush1.bf16.msra.mxu0 0
    %3713 = vmatprep.subr.bf16.mxu0 0
    %3714 = vmatpush1.bf16.msra.mxu0 0
    %3715 = vmatprep.subr.bf16.mxu0 0
    %3716 = vmatpush1.bf16.msra.mxu0 0
    %3717 = vmatprep.subr.bf16.mxu0 0
    %3718 = vmatpush1.bf16.msra.mxu0 0
    %3719 = vmatprep.subr.bf16.mxu0 0
    %3720 = vmatpush1.bf16.msra.mxu0 0
    %3721 = vmatprep.subr.bf16.mxu0 0
    %3722 = vmatpush1.bf16.msra.mxu0 0
    %3723 = vmatprep.subr.bf16.mxu0 0
    %3724 = vmatpush1.bf16.msra.mxu0 0
    %3725 = vmatprep.subr.bf16.mxu0 0
    %3726 = vmatpush1.bf16.msra.mxu0 0
    %3727 = vmatprep.subr.bf16.mxu0 0
    %3728 = vmatpush1.bf16.msra.mxu0 0
    %3729 = vmatprep.subr.bf16.mxu0 0
    %3730 = vmatpush1.bf16.msra.mxu0 0
    %3731 = vmatprep.subr.bf16.mxu0 0
    %3732 = vmatpush1.bf16.msra.mxu0 0
    %3733 = vmatprep.subr.bf16.mxu0 0
    %3734 = vmatpush1.bf16.msra.mxu0 0
    %3735 = vmatprep.subr.bf16.mxu0 0
    %3736 = vmatpush1.bf16.msra.mxu0 0
    %3737 = vmatprep.subr.bf16.mxu0 0
    %3738 = vmatpush1.bf16.msra.mxu0 0
    %3739 = vmatprep.mubr.bf16.mxu0 0
    %3740 = vmatmul.mubr.bf16.gmra.mrb[0].mxu0 %v3702
    %v3741 = vpop.f32.mrb[0].mxu0
    %v3742 = vadd.f32 0.0, %v3741
    %v3743 = vpop.f32.mrb[0].mxu0
    %v3744 = vpop.f32.mrb[0].mxu0
    %v3745 = vpop.f32.mrb[0].mxu0
    %3746 = vdwg.mxu0
    %v3747 = vpack.c.bf16 %v3742, %v3696
    %3749 = vrot.lane.b32.xlu0 %v3531, 120
    %v3750 = vpop.permute.xlu0 %3749
    %3752 = vrot.lane.b32.xlu0 %v3533, 120
    %v3753 = vpop.permute.xlu0 %3752
    %v3755 = vsel %vm512, %v3750, 0
    %v3758 = vsel %vm512, %v3753, 0
    %3760 = vmatprep.subr.bf16.mxu0 0
    %3761 = vmatpush1.bf16.xpose.msra.mxu0 %v3758
    %3762 = vmatprep.subr.bf16.mxu0 0
    %3763 = vmatpush1.bf16.xpose.msra.mxu0 0
    %3764 = vmatprep.subr.bf16.mxu0 0
    %3765 = vmatpush1.bf16.xpose.msra.mxu0 0
    %3766 = vmatprep.subr.bf16.mxu0 0
    %3767 = vmatpush1.bf16.xpose.msra.mxu0 0
    %3768 = vmatprep.subr.bf16.mxu0 0
    %3769 = vmatpush1.bf16.xpose.msra.mxu0 0
    %3770 = vmatprep.subr.bf16.mxu0 0
    %3771 = vmatpush1.bf16.xpose.msra.mxu0 0
    %3772 = vmatprep.subr.bf16.mxu0 0
    %3773 = vmatpush1.bf16.xpose.msra.mxu0 0
    %3774 = vmatprep.subr.bf16.mxu0 0
    %3775 = vmatpush1.bf16.xpose.msra.mxu0 0
    %3776 = vmatprep.subr.bf16.mxu0 0
    %3777 = vmatpush1.bf16.xpose.msra.mxu0 0
    %3778 = vmatprep.subr.bf16.mxu0 0
    %3779 = vmatpush1.bf16.xpose.msra.mxu0 0
    %3780 = vmatprep.subr.bf16.mxu0 0
    %3781 = vmatpush1.bf16.xpose.msra.mxu0 0
    %3782 = vmatprep.subr.bf16.mxu0 0
    %3783 = vmatpush1.bf16.xpose.msra.mxu0 0
    %3784 = vmatprep.subr.bf16.mxu0 0
    %3785 = vmatpush1.bf16.xpose.msra.mxu0 0
    %3786 = vmatprep.subr.bf16.mxu0 0
    %3787 = vmatpush1.bf16.xpose.msra.mxu0 0
    %3788 = vmatprep.subr.bf16.mxu0 0
    %3789 = vmatpush1.bf16.xpose.msra.mxu0 0
    %3790 = vmatprep.subr.bf16.mxu0 0
    %3791 = vmatpush1.bf16.xpose.msra.mxu0 0
    %3792 = vmatprep.mubr.bf16.mxu0 0
    %3793 = vmatmul.mubr.bf16.gmra.mrb[0].mxu0 %v3755
    %v3794 = vpop.f32.mrb[0].mxu0
    %v3795 = vadd.f32 %v162, %v3794
    %v3796 = vpop.f32.mrb[0].mxu0
    %v3797 = vpop.f32.mrb[0].mxu0
    %v3798 = vpop.f32.mrb[0].mxu0
    %3799 = vdwg.mxu0
    %3801 = vrot.lane.b32.xlu0 %v3532, 120
    %v3802 = vpop.permute.xlu0 %3801
    %3804 = vrot.lane.b32.xlu0 %v3534, 120
    %v3805 = vpop.permute.xlu0 %3804
    %v3807 = vsel %vm512, %v3802, 0
    %v3810 = vsel %vm512, %v3805, 0
    %3812 = vmatprep.subr.bf16.mxu0 0
    %3813 = vmatpush1.bf16.xpose.msra.mxu0 %v3810
    %3814 = vmatprep.subr.bf16.mxu0 0
    %3815 = vmatpush1.bf16.xpose.msra.mxu0 0
    %3816 = vmatprep.subr.bf16.mxu0 0
    %3817 = vmatpush1.bf16.xpose.msra.mxu0 0
    %3818 = vmatprep.subr.bf16.mxu0 0
    %3819 = vmatpush1.bf16.xpose.msra.mxu0 0
    %3820 = vmatprep.subr.bf16.mxu0 0
    %3821 = vmatpush1.bf16.xpose.msra.mxu0 0
    %3822 = vmatprep.subr.bf16.mxu0 0
    %3823 = vmatpush1.bf16.xpose.msra.mxu0 0
    %3824 = vmatprep.subr.bf16.mxu0 0
    %3825 = vmatpush1.bf16.xpose.msra.mxu0 0
    %3826 = vmatprep.subr.bf16.mxu0 0
    %3827 = vmatpush1.bf16.xpose.msra.mxu0 0
    %3828 = vmatprep.subr.bf16.mxu0 0
    %3829 = vmatpush1.bf16.xpose.msra.mxu0 0
    %3830 = vmatprep.subr.bf16.mxu0 0
    %3831 = vmatpush1.bf16.xpose.msra.mxu0 0
    %3832 = vmatprep.subr.bf16.mxu0 0
    %3833 = vmatpush1.bf16.xpose.msra.mxu0 0
    %3834 = vmatprep.subr.bf16.mxu0 0
    %3835 = vmatpush1.bf16.xpose.msra.mxu0 0
    %3836 = vmatprep.subr.bf16.mxu0 0
    %3837 = vmatpush1.bf16.xpose.msra.mxu0 0
    %3838 = vmatprep.subr.bf16.mxu0 0
    %3839 = vmatpush1.bf16.xpose.msra.mxu0 0
    %3840 = vmatprep.subr.bf16.mxu0 0
    %3841 = vmatpush1.bf16.xpose.msra.mxu0 0
    %3842 = vmatprep.subr.bf16.mxu0 0
    %3843 = vmatpush1.bf16.xpose.msra.mxu0 0
    %3844 = vmatprep.mubr.bf16.mxu0 0
    %3845 = vmatmul.mubr.bf16.gmra.mrb[0].mxu0 %v3807
    %v3846 = vpop.f32.mrb[0].mxu0
    %v3847 = vadd.f32 %v163, %v3846
    %v3848 = vpop.f32.mrb[0].mxu0
    %v3849 = vpop.f32.mrb[0].mxu0
    %v3850 = vpop.f32.mrb[0].mxu0
    %3851 = vdwg.mxu0
    %v3852 = vadd.f32 %v3795, %v157
    %v3853 = vadd.f32 %v3847, %v157
    %v3854 = vsel %vm512, %v3852, -inf
    %3855 = vmax.xlane.f32.xlu0 %v3854
    %v3856 = vpop.xlane.xlu0 %3855
    %v3857 = vsel %vm512, %v3853, -inf
    %3858 = vmax.xlane.f32.xlu0 %v3857
    %v3859 = vpop.xlane.xlu0 %3858
    %v3860 = vsub.f32 %v3852, %v3856
    %v3861 = vsub.f32 %v3853, %v3859
    %v3862 = vmul.f32 %v3860, 1.442695
    %v3863 = vpow.pop %v3862
    %v3864 = vmul.f32 %v3861, 1.442695
    %v3865 = vpow.pop %v3864
    %v3866 = vsel %vm512, %v3863, 0.0
    %3867 = vadd.xlane.f32.xlu0 %v3866
    %v3868 = vpop.xlane.xlu0 %3867
    %v3869 = vsel %vm512, %v3865, 0.0
    %3870 = vadd.xlane.f32.xlu0 %v3869
    %v3871 = vpop.xlane.xlu0 %3870
    %v3872 = vrcp.pop %v3868
    %v3873 = vrcp.pop %v3871
    %v3874 = vmul.f32 %v3863, %v3872
    %v3875 = vmul.f32 %v3865, %v3873
    %v3876 = vpack.c.bf16 %v3874, %v3874
    %v3877 = vpack.c.bf16 %v3875, %v3875
    %3879 = vrot.lane.b32.xlu0 %v3653, 120
    %v3880 = vpop.permute.xlu0 %3879
    %v3882 = vsel %vm512, %v3876, 0
    %v3885 = vsel %vm636, %v3880, 0
    %3887 = vmatprep.subr.bf16.mxu0 0
    %3888 = vmatpush1.bf16.msra.mxu0 %v3885
    %3889 = vmatprep.subr.bf16.mxu0 0
    %3890 = vmatpush1.bf16.msra.mxu0 0
    %3891 = vmatprep.subr.bf16.mxu0 0
    %3892 = vmatpush1.bf16.msra.mxu0 0
    %3893 = vmatprep.subr.bf16.mxu0 0
    %3894 = vmatpush1.bf16.msra.mxu0 0
    %3895 = vmatprep.subr.bf16.mxu0 0
    %3896 = vmatpush1.bf16.msra.mxu0 0
    %3897 = vmatprep.subr.bf16.mxu0 0
    %3898 = vmatpush1.bf16.msra.mxu0 0
    %3899 = vmatprep.subr.bf16.mxu0 0
    %3900 = vmatpush1.bf16.msra.mxu0 0
    %3901 = vmatprep.subr.bf16.mxu0 0
    %3902 = vmatpush1.bf16.msra.mxu0 0
    %3903 = vmatprep.subr.bf16.mxu0 0
    %3904 = vmatpush1.bf16.msra.mxu0 0
    %3905 = vmatprep.subr.bf16.mxu0 0
    %3906 = vmatpush1.bf16.msra.mxu0 0
    %3907 = vmatprep.subr.bf16.mxu0 0
    %3908 = vmatpush1.bf16.msra.mxu0 0
    %3909 = vmatprep.subr.bf16.mxu0 0
    %3910 = vmatpush1.bf16.msra.mxu0 0
    %3911 = vmatprep.subr.bf16.mxu0 0
    %3912 = vmatpush1.bf16.msra.mxu0 0
    %3913 = vmatprep.subr.bf16.mxu0 0
    %3914 = vmatpush1.bf16.msra.mxu0 0
    %3915 = vmatprep.subr.bf16.mxu0 0
    %3916 = vmatpush1.bf16.msra.mxu0 0
    %3917 = vmatprep.subr.bf16.mxu0 0
    %3918 = vmatpush1.bf16.msra.mxu0 0
    %3919 = vmatprep.mubr.bf16.mxu0 0
    %3920 = vmatmul.mubr.bf16.gmra.mrb[0].mxu0 %v3882
    %v3921 = vpop.f32.mrb[0].mxu0
    %v3922 = vadd.f32 0.0, %v3921
    %v3923 = vpop.f32.mrb[0].mxu0
    %v3924 = vpop.f32.mrb[0].mxu0
    %v3925 = vpop.f32.mrb[0].mxu0
    %3926 = vdwg.mxu0
    %3928 = vrot.lane.b32.xlu0 %v3654, 120
    %v3929 = vpop.permute.xlu0 %3928
    %v3931 = vsel %vm512, %v3877, 0
    %v3934 = vsel %vm636, %v3929, 0
    %3936 = vmatprep.subr.bf16.mxu0 0
    %3937 = vmatpush1.bf16.msra.mxu0 %v3934
    %3938 = vmatprep.subr.bf16.mxu0 0
    %3939 = vmatpush1.bf16.msra.mxu0 0
    %3940 = vmatprep.subr.bf16.mxu0 0
    %3941 = vmatpush1.bf16.msra.mxu0 0
    %3942 = vmatprep.subr.bf16.mxu0 0
    %3943 = vmatpush1.bf16.msra.mxu0 0
    %3944 = vmatprep.subr.bf16.mxu0 0
    %3945 = vmatpush1.bf16.msra.mxu0 0
    %3946 = vmatprep.subr.bf16.mxu0 0
    %3947 = vmatpush1.bf16.msra.mxu0 0
    %3948 = vmatprep.subr.bf16.mxu0 0
    %3949 = vmatpush1.bf16.msra.mxu0 0
    %3950 = vmatprep.subr.bf16.mxu0 0
    %3951 = vmatpush1.bf16.msra.mxu0 0
    %3952 = vmatprep.subr.bf16.mxu0 0
    %3953 = vmatpush1.bf16.msra.mxu0 0
    %3954 = vmatprep.subr.bf16.mxu0 0
    %3955 = vmatpush1.bf16.msra.mxu0 0
    %3956 = vmatprep.subr.bf16.mxu0 0
    %3957 = vmatpush1.bf16.msra.mxu0 0
    %3958 = vmatprep.subr.bf16.mxu0 0
    %3959 = vmatpush1.bf16.msra.mxu0 0
    %3960 = vmatprep.subr.bf16.mxu0 0
    %3961 = vmatpush1.bf16.msra.mxu0 0
    %3962 = vmatprep.subr.bf16.mxu0 0
    %3963 = vmatpush1.bf16.msra.mxu0 0
    %3964 = vmatprep.subr.bf16.mxu0 0
    %3965 = vmatpush1.bf16.msra.mxu0 0
    %3966 = vmatprep.subr.bf16.mxu0 0
    %3967 = vmatpush1.bf16.msra.mxu0 0
    %3968 = vmatprep.mubr.bf16.mxu0 0
    %3969 = vmatmul.mubr.bf16.gmra.mrb[0].mxu0 %v3931
    %v3970 = vpop.f32.mrb[0].mxu0
    %v3971 = vadd.f32 0.0, %v3970
    %v3972 = vpop.f32.mrb[0].mxu0
    %v3973 = vpop.f32.mrb[0].mxu0
    %v3974 = vpop.f32.mrb[0].mxu0
    %3975 = vdwg.mxu0
    %v3976 = vpack.c.bf16 %v3971, %v3922
    %v3978 = vsel %vm512, %v3976, 0
    %v3981 = vsel %vm636, %v3220, 0
    %3983 = vmatprep.subr.bf16.mxu0 0
    %3984 = vmatpush1.bf16.msra.mxu0 %v3981
    %3985 = vmatprep.subr.bf16.mxu0 0
    %3986 = vmatpush1.bf16.msra.mxu0 0
    %3987 = vmatprep.subr.bf16.mxu0 0
    %3988 = vmatpush1.bf16.msra.mxu0 0
    %3989 = vmatprep.subr.bf16.mxu0 0
    %3990 = vmatpush1.bf16.msra.mxu0 0
    %3991 = vmatprep.subr.bf16.mxu0 0
    %3992 = vmatpush1.bf16.msra.mxu0 0
    %3993 = vmatprep.subr.bf16.mxu0 0
    %3994 = vmatpush1.bf16.msra.mxu0 0
    %3995 = vmatprep.subr.bf16.mxu0 0
    %3996 = vmatpush1.bf16.msra.mxu0 0
    %3997 = vmatprep.subr.bf16.mxu0 0
    %3998 = vmatpush1.bf16.msra.mxu0 0
    %3999 = vmatprep.subr.bf16.mxu0 0
    %4000 = vmatpush1.bf16.msra.mxu0 0
    %4001 = vmatprep.subr.bf16.mxu0 0
    %4002 = vmatpush1.bf16.msra.mxu0 0
    %4003 = vmatprep.subr.bf16.mxu0 0
    %4004 = vmatpush1.bf16.msra.mxu0 0
    %4005 = vmatprep.subr.bf16.mxu0 0
    %4006 = vmatpush1.bf16.msra.mxu0 0
    %4007 = vmatprep.subr.bf16.mxu0 0
    %4008 = vmatpush1.bf16.msra.mxu0 0
    %4009 = vmatprep.subr.bf16.mxu0 0
    %4010 = vmatpush1.bf16.msra.mxu0 0
    %4011 = vmatprep.subr.bf16.mxu0 0
    %4012 = vmatpush1.bf16.msra.mxu0 0
    %4013 = vmatprep.subr.bf16.mxu0 0
    %4014 = vmatpush1.bf16.msra.mxu0 0
    %4015 = vmatprep.mubr.bf16.mxu0 0
    %4016 = vmatmul.mubr.bf16.gmra.mrb[0].mxu0 %v3978
    %v4017 = vpop.f32.mrb[0].mxu0
    %v4018 = vadd.f32 0.0, %v4017
    %v4019 = vpop.f32.mrb[0].mxu0
    %v4020 = vpop.f32.mrb[0].mxu0
    %v4021 = vadd.f32 0.0, %v4020
    %v4022 = vpop.f32.mrb[0].mxu0
    %4023 = vdwg.mxu0
    %v4025 = vsel %vm512, %v3747, 0
    %v4028 = vsel %vm636, %v3219, 0
    %4030 = vmatprep.subr.bf16.mxu0 0
    %4031 = vmatpush1.bf16.msra.mxu0 %v4028
    %4032 = vmatprep.subr.bf16.mxu0 0
    %4033 = vmatpush1.bf16.msra.mxu0 0
    %4034 = vmatprep.subr.bf16.mxu0 0
    %4035 = vmatpush1.bf16.msra.mxu0 0
    %4036 = vmatprep.subr.bf16.mxu0 0
    %4037 = vmatpush1.bf16.msra.mxu0 0
    %4038 = vmatprep.subr.bf16.mxu0 0
    %4039 = vmatpush1.bf16.msra.mxu0 0
    %4040 = vmatprep.subr.bf16.mxu0 0
    %4041 = vmatpush1.bf16.msra.mxu0 0
    %4042 = vmatprep.subr.bf16.mxu0 0
    %4043 = vmatpush1.bf16.msra.mxu0 0
    %4044 = vmatprep.subr.bf16.mxu0 0
    %4045 = vmatpush1.bf16.msra.mxu0 0
    %4046 = vmatprep.subr.bf16.mxu0 0
    %4047 = vmatpush1.bf16.msra.mxu0 0
    %4048 = vmatprep.subr.bf16.mxu0 0
    %4049 = vmatpush1.bf16.msra.mxu0 0
    %4050 = vmatprep.subr.bf16.mxu0 0
    %4051 = vmatpush1.bf16.msra.mxu0 0
    %4052 = vmatprep.subr.bf16.mxu0 0
    %4053 = vmatpush1.bf16.msra.mxu0 0
    %4054 = vmatprep.subr.bf16.mxu0 0
    %4055 = vmatpush1.bf16.msra.mxu0 0
    %4056 = vmatprep.subr.bf16.mxu0 0
    %4057 = vmatpush1.bf16.msra.mxu0 0
    %4058 = vmatprep.subr.bf16.mxu0 0
    %4059 = vmatpush1.bf16.msra.mxu0 0
    %4060 = vmatprep.subr.bf16.mxu0 0
    %4061 = vmatpush1.bf16.msra.mxu0 0
    %4062 = vmatprep.mubr.bf16.mxu0 0
    %4063 = vmatmul.mubr.bf16.gmra.mrb[0].mxu0 %v4025
    %v4064 = vpop.f32.mrb[0].mxu0
    %v4065 = vadd.f32 %v4018, %v4064
    %v4066 = vpop.f32.mrb[0].mxu0
    %v4067 = vpop.f32.mrb[0].mxu0
    %v4068 = vadd.f32 %v4021, %v4067
    %v4069 = vpop.f32.mrb[0].mxu0
    %4070 = vdwg.mxu0
    %4071 = vrot.lane.b32.xlu0 %v3531, 112
    %v4072 = vpop.permute.xlu0 %4071
    %4073 = vrot.lane.b32.xlu0 %v3533, 112
    %v4074 = vpop.permute.xlu0 %4073
    %v4076 = vsel %vm512, %v4072, 0
    %v4079 = vsel %vm512, %v4074, 0
    %4081 = vmatprep.subr.bf16.mxu0 0
    %4082 = vmatpush1.bf16.xpose.msra.mxu0 %v4079
    %4083 = vmatprep.subr.bf16.mxu0 0
    %4084 = vmatpush1.bf16.xpose.msra.mxu0 0
    %4085 = vmatprep.subr.bf16.mxu0 0
    %4086 = vmatpush1.bf16.xpose.msra.mxu0 0
    %4087 = vmatprep.subr.bf16.mxu0 0
    %4088 = vmatpush1.bf16.xpose.msra.mxu0 0
    %4089 = vmatprep.subr.bf16.mxu0 0
    %4090 = vmatpush1.bf16.xpose.msra.mxu0 0
    %4091 = vmatprep.subr.bf16.mxu0 0
    %4092 = vmatpush1.bf16.xpose.msra.mxu0 0
    %4093 = vmatprep.subr.bf16.mxu0 0
    %4094 = vmatpush1.bf16.xpose.msra.mxu0 0
    %4095 = vmatprep.subr.bf16.mxu0 0
    %4096 = vmatpush1.bf16.xpose.msra.mxu0 0
    %4097 = vmatprep.subr.bf16.mxu0 0
    %4098 = vmatpush1.bf16.xpose.msra.mxu0 0
    %4099 = vmatprep.subr.bf16.mxu0 0
    %4100 = vmatpush1.bf16.xpose.msra.mxu0 0
    %4101 = vmatprep.subr.bf16.mxu0 0
    %4102 = vmatpush1.bf16.xpose.msra.mxu0 0
    %4103 = vmatprep.subr.bf16.mxu0 0
    %4104 = vmatpush1.bf16.xpose.msra.mxu0 0
    %4105 = vmatprep.subr.bf16.mxu0 0
    %4106 = vmatpush1.bf16.xpose.msra.mxu0 0
    %4107 = vmatprep.subr.bf16.mxu0 0
    %4108 = vmatpush1.bf16.xpose.msra.mxu0 0
    %4109 = vmatprep.subr.bf16.mxu0 0
    %4110 = vmatpush1.bf16.xpose.msra.mxu0 0
    %4111 = vmatprep.subr.bf16.mxu0 0
    %4112 = vmatpush1.bf16.xpose.msra.mxu0 0
    %4113 = vmatprep.mubr.bf16.mxu0 0
    %4114 = vmatmul.mubr.bf16.gmra.mrb[0].mxu0 %v4076
    %v4115 = vpop.f32.mrb[0].mxu0
    %v4116 = vadd.f32 %v162, %v4115
    %v4117 = vpop.f32.mrb[0].mxu0
    %v4118 = vpop.f32.mrb[0].mxu0
    %v4119 = vpop.f32.mrb[0].mxu0
    %4120 = vdwg.mxu0
    %4121 = vrot.lane.b32.xlu0 %v3532, 112
    %v4122 = vpop.permute.xlu0 %4121
    %4123 = vrot.lane.b32.xlu0 %v3534, 112
    %v4124 = vpop.permute.xlu0 %4123
    %v4126 = vsel %vm512, %v4122, 0
    %v4129 = vsel %vm512, %v4124, 0
    %4131 = vmatprep.subr.bf16.mxu0 0
    %4132 = vmatpush1.bf16.xpose.msra.mxu0 %v4129
    %4133 = vmatprep.subr.bf16.mxu0 0
    %4134 = vmatpush1.bf16.xpose.msra.mxu0 0
    %4135 = vmatprep.subr.bf16.mxu0 0
    %4136 = vmatpush1.bf16.xpose.msra.mxu0 0
    %4137 = vmatprep.subr.bf16.mxu0 0
    %4138 = vmatpush1.bf16.xpose.msra.mxu0 0
    %4139 = vmatprep.subr.bf16.mxu0 0
    %4140 = vmatpush1.bf16.xpose.msra.mxu0 0
    %4141 = vmatprep.subr.bf16.mxu0 0
    %4142 = vmatpush1.bf16.xpose.msra.mxu0 0
    %4143 = vmatprep.subr.bf16.mxu0 0
    %4144 = vmatpush1.bf16.xpose.msra.mxu0 0
    %4145 = vmatprep.subr.bf16.mxu0 0
    %4146 = vmatpush1.bf16.xpose.msra.mxu0 0
    %4147 = vmatprep.subr.bf16.mxu0 0
    %4148 = vmatpush1.bf16.xpose.msra.mxu0 0
    %4149 = vmatprep.subr.bf16.mxu0 0
    %4150 = vmatpush1.bf16.xpose.msra.mxu0 0
    %4151 = vmatprep.subr.bf16.mxu0 0
    %4152 = vmatpush1.bf16.xpose.msra.mxu0 0
    %4153 = vmatprep.subr.bf16.mxu0 0
    %4154 = vmatpush1.bf16.xpose.msra.mxu0 0
    %4155 = vmatprep.subr.bf16.mxu0 0
    %4156 = vmatpush1.bf16.xpose.msra.mxu0 0
    %4157 = vmatprep.subr.bf16.mxu0 0
    %4158 = vmatpush1.bf16.xpose.msra.mxu0 0
    %4159 = vmatprep.subr.bf16.mxu0 0
    %4160 = vmatpush1.bf16.xpose.msra.mxu0 0
    %4161 = vmatprep.subr.bf16.mxu0 0
    %4162 = vmatpush1.bf16.xpose.msra.mxu0 0
    %4163 = vmatprep.mubr.bf16.mxu0 0
    %4164 = vmatmul.mubr.bf16.gmra.mrb[0].mxu0 %v4126
    %v4165 = vpop.f32.mrb[0].mxu0
    %v4166 = vadd.f32 %v163, %v4165
    %v4167 = vpop.f32.mrb[0].mxu0
    %v4168 = vpop.f32.mrb[0].mxu0
    %v4169 = vpop.f32.mrb[0].mxu0
    %4170 = vdwg.mxu0
    %v4171 = vadd.f32 %v4116, %v158
    %v4172 = vadd.f32 %v4166, %v158
    %v4173 = vsel %vm512, %v4171, -inf
    %4174 = vmax.xlane.f32.xlu0 %v4173
    %v4175 = vpop.xlane.xlu0 %4174
    %v4176 = vsel %vm512, %v4172, -inf
    %4177 = vmax.xlane.f32.xlu0 %v4176
    %v4178 = vpop.xlane.xlu0 %4177
    %v4179 = vsub.f32 %v4171, %v4175
    %v4180 = vsub.f32 %v4172, %v4178
    %v4181 = vmul.f32 %v4179, 1.442695
    %v4182 = vpow.pop %v4181
    %v4183 = vmul.f32 %v4180, 1.442695
    %v4184 = vpow.pop %v4183
    %v4185 = vsel %vm512, %v4182, 0.0
    %4186 = vadd.xlane.f32.xlu0 %v4185
    %v4187 = vpop.xlane.xlu0 %4186
    %v4188 = vsel %vm512, %v4184, 0.0
    %4189 = vadd.xlane.f32.xlu0 %v4188
    %v4190 = vpop.xlane.xlu0 %4189
    %v4191 = vrcp.pop %v4187
    %v4192 = vrcp.pop %v4190
    %v4193 = vmul.f32 %v4182, %v4191
    %v4194 = vmul.f32 %v4184, %v4192
    %v4195 = vpack.c.bf16 %v4193, %v4193
    %v4196 = vpack.c.bf16 %v4194, %v4194
    %4197 = vrot.lane.b32.xlu0 %v3653, 112
    %v4198 = vpop.permute.xlu0 %4197
    %v4200 = vsel %vm512, %v4195, 0
    %v4203 = vsel %vm636, %v4198, 0
    %4205 = vmatprep.subr.bf16.mxu0 0
    %4206 = vmatpush1.bf16.msra.mxu0 %v4203
    %4207 = vmatprep.subr.bf16.mxu0 0
    %4208 = vmatpush1.bf16.msra.mxu0 0
    %4209 = vmatprep.subr.bf16.mxu0 0
    %4210 = vmatpush1.bf16.msra.mxu0 0
    %4211 = vmatprep.subr.bf16.mxu0 0
    %4212 = vmatpush1.bf16.msra.mxu0 0
    %4213 = vmatprep.subr.bf16.mxu0 0
    %4214 = vmatpush1.bf16.msra.mxu0 0
    %4215 = vmatprep.subr.bf16.mxu0 0
    %4216 = vmatpush1.bf16.msra.mxu0 0
    %4217 = vmatprep.subr.bf16.mxu0 0
    %4218 = vmatpush1.bf16.msra.mxu0 0
    %4219 = vmatprep.subr.bf16.mxu0 0
    %4220 = vmatpush1.bf16.msra.mxu0 0
    %4221 = vmatprep.subr.bf16.mxu0 0
    %4222 = vmatpush1.bf16.msra.mxu0 0
    %4223 = vmatprep.subr.bf16.mxu0 0
    %4224 = vmatpush1.bf16.msra.mxu0 0
    %4225 = vmatprep.subr.bf16.mxu0 0
    %4226 = vmatpush1.bf16.msra.mxu0 0
    %4227 = vmatprep.subr.bf16.mxu0 0
    %4228 = vmatpush1.bf16.msra.mxu0 0
    %4229 = vmatprep.subr.bf16.mxu0 0
    %4230 = vmatpush1.bf16.msra.mxu0 0
    %4231 = vmatprep.subr.bf16.mxu0 0
    %4232 = vmatpush1.bf16.msra.mxu0 0
    %4233 = vmatprep.subr.bf16.mxu0 0
    %4234 = vmatpush1.bf16.msra.mxu0 0
    %4235 = vmatprep.subr.bf16.mxu0 0
    %4236 = vmatpush1.bf16.msra.mxu0 0
    %4237 = vmatprep.mubr.bf16.mxu0 0
    %4238 = vmatmul.mubr.bf16.gmra.mrb[0].mxu0 %v4200
    %v4239 = vpop.f32.mrb[0].mxu0
    %v4240 = vadd.f32 0.0, %v4239
    %v4241 = vpop.f32.mrb[0].mxu0
    %v4242 = vpop.f32.mrb[0].mxu0
    %v4243 = vpop.f32.mrb[0].mxu0
    %4244 = vdwg.mxu0
    %4245 = vrot.lane.b32.xlu0 %v3654, 112
    %v4246 = vpop.permute.xlu0 %4245
    %v4248 = vsel %vm512, %v4196, 0
    %v4251 = vsel %vm636, %v4246, 0
    %4253 = vmatprep.subr.bf16.mxu0 0
    %4254 = vmatpush1.bf16.msra.mxu0 %v4251
    %4255 = vmatprep.subr.bf16.mxu0 0
    %4256 = vmatpush1.bf16.msra.mxu0 0
    %4257 = vmatprep.subr.bf16.mxu0 0
    %4258 = vmatpush1.bf16.msra.mxu0 0
    %4259 = vmatprep.subr.bf16.mxu0 0
    %4260 = vmatpush1.bf16.msra.mxu0 0
    %4261 = vmatprep.subr.bf16.mxu0 0
    %4262 = vmatpush1.bf16.msra.mxu0 0
    %4263 = vmatprep.subr.bf16.mxu0 0
    %4264 = vmatpush1.bf16.msra.mxu0 0
    %4265 = vmatprep.subr.bf16.mxu0 0
    %4266 = vmatpush1.bf16.msra.mxu0 0
    %4267 = vmatprep.subr.bf16.mxu0 0
    %4268 = vmatpush1.bf16.msra.mxu0 0
    %4269 = vmatprep.subr.bf16.mxu0 0
    %4270 = vmatpush1.bf16.msra.mxu0 0
    %4271 = vmatprep.subr.bf16.mxu0 0
    %4272 = vmatpush1.bf16.msra.mxu0 0
    %4273 = vmatprep.subr.bf16.mxu0 0
    %4274 = vmatpush1.bf16.msra.mxu0 0
    %4275 = vmatprep.subr.bf16.mxu0 0
    %4276 = vmatpush1.bf16.msra.mxu0 0
    %4277 = vmatprep.subr.bf16.mxu0 0
    %4278 = vmatpush1.bf16.msra.mxu0 0
    %4279 = vmatprep.subr.bf16.mxu0 0
    %4280 = vmatpush1.bf16.msra.mxu0 0
    %4281 = vmatprep.subr.bf16.mxu0 0
    %4282 = vmatpush1.bf16.msra.mxu0 0
    %4283 = vmatprep.subr.bf16.mxu0 0
    %4284 = vmatpush1.bf16.msra.mxu0 0
    %4285 = vmatprep.mubr.bf16.mxu0 0
    %4286 = vmatmul.mubr.bf16.gmra.mrb[0].mxu0 %v4248
    %v4287 = vpop.f32.mrb[0].mxu0
    %v4288 = vadd.f32 0.0, %v4287
    %v4289 = vpop.f32.mrb[0].mxu0
    %v4290 = vpop.f32.mrb[0].mxu0
    %v4291 = vpop.f32.mrb[0].mxu0
    %4292 = vdwg.mxu0
    %v4293 = vpack.c.bf16 %v4288, %v4240
    %v4295 = vsel %vm512, %v4293, 0
    %v4298 = vsel %vm636, %v3221, 0
    %4300 = vmatprep.subr.bf16.mxu0 0
    %4301 = vmatpush1.bf16.msra.mxu0 %v4298
    %4302 = vmatprep.subr.bf16.mxu0 0
    %4303 = vmatpush1.bf16.msra.mxu0 0
    %4304 = vmatprep.subr.bf16.mxu0 0
    %4305 = vmatpush1.bf16.msra.mxu0 0
    %4306 = vmatprep.subr.bf16.mxu0 0
    %4307 = vmatpush1.bf16.msra.mxu0 0
    %4308 = vmatprep.subr.bf16.mxu0 0
    %4309 = vmatpush1.bf16.msra.mxu0 0
    %4310 = vmatprep.subr.bf16.mxu0 0
    %4311 = vmatpush1.bf16.msra.mxu0 0
    %4312 = vmatprep.subr.bf16.mxu0 0
    %4313 = vmatpush1.bf16.msra.mxu0 0
    %4314 = vmatprep.subr.bf16.mxu0 0
    %4315 = vmatpush1.bf16.msra.mxu0 0
    %4316 = vmatprep.subr.bf16.mxu0 0
    %4317 = vmatpush1.bf16.msra.mxu0 0
    %4318 = vmatprep.subr.bf16.mxu0 0
    %4319 = vmatpush1.bf16.msra.mxu0 0
    %4320 = vmatprep.subr.bf16.mxu0 0
    %4321 = vmatpush1.bf16.msra.mxu0 0
    %4322 = vmatprep.subr.bf16.mxu0 0
    %4323 = vmatpush1.bf16.msra.mxu0 0
    %4324 = vmatprep.subr.bf16.mxu0 0
    %4325 = vmatpush1.bf16.msra.mxu0 0
    %4326 = vmatprep.subr.bf16.mxu0 0
    %4327 = vmatpush1.bf16.msra.mxu0 0
    %4328 = vmatprep.subr.bf16.mxu0 0
    %4329 = vmatpush1.bf16.msra.mxu0 0
    %4330 = vmatprep.subr.bf16.mxu0 0
    %4331 = vmatpush1.bf16.msra.mxu0 0
    %4332 = vmatprep.mubr.bf16.mxu0 0
    %4333 = vmatmul.mubr.bf16.gmra.mrb[0].mxu0 %v4295
    %v4334 = vpop.f32.mrb[0].mxu0
    %v4335 = vadd.f32 0.0, %v4334
    %v4336 = vpop.f32.mrb[0].mxu0
    %v4337 = vpop.f32.mrb[0].mxu0
    %v4338 = vadd.f32 0.0, %v4337
    %v4339 = vpop.f32.mrb[0].mxu0
    %4340 = vdwg.mxu0
    %v4341 = vadd.f32 %v4065, %v4335
    %v4342 = vadd.f32 %v4068, %v4338
    %4343 = vrot.lane.b32.xlu0 %v3531, 104
    %v4344 = vpop.permute.xlu0 %4343
    %4345 = vrot.lane.b32.xlu0 %v3533, 104
    %v4346 = vpop.permute.xlu0 %4345
    %v4348 = vsel %vm512, %v4344, 0
    %v4351 = vsel %vm512, %v4346, 0
    %4353 = vmatprep.subr.bf16.mxu0 0
    %4354 = vmatpush1.bf16.xpose.msra.mxu0 %v4351
    %4355 = vmatprep.subr.bf16.mxu0 0
    %4356 = vmatpush1.bf16.xpose.msra.mxu0 0
    %4357 = vmatprep.subr.bf16.mxu0 0
    %4358 = vmatpush1.bf16.xpose.msra.mxu0 0
    %4359 = vmatprep.subr.bf16.mxu0 0
    %4360 = vmatpush1.bf16.xpose.msra.mxu0 0
    %4361 = vmatprep.subr.bf16.mxu0 0
    %4362 = vmatpush1.bf16.xpose.msra.mxu0 0
    %4363 = vmatprep.subr.bf16.mxu0 0
    %4364 = vmatpush1.bf16.xpose.msra.mxu0 0
    %4365 = vmatprep.subr.bf16.mxu0 0
    %4366 = vmatpush1.bf16.xpose.msra.mxu0 0
    %4367 = vmatprep.subr.bf16.mxu0 0
    %4368 = vmatpush1.bf16.xpose.msra.mxu0 0
    %4369 = vmatprep.subr.bf16.mxu0 0
    %4370 = vmatpush1.bf16.xpose.msra.mxu0 0
    %4371 = vmatprep.subr.bf16.mxu0 0
    %4372 = vmatpush1.bf16.xpose.msra.mxu0 0
    %4373 = vmatprep.subr.bf16.mxu0 0
    %4374 = vmatpush1.bf16.xpose.msra.mxu0 0
    %4375 = vmatprep.subr.bf16.mxu0 0
    %4376 = vmatpush1.bf16.xpose.msra.mxu0 0
    %4377 = vmatprep.subr.bf16.mxu0 0
    %4378 = vmatpush1.bf16.xpose.msra.mxu0 0
    %4379 = vmatprep.subr.bf16.mxu0 0
    %4380 = vmatpush1.bf16.xpose.msra.mxu0 0
    %4381 = vmatprep.subr.bf16.mxu0 0
    %4382 = vmatpush1.bf16.xpose.msra.mxu0 0
    %4383 = vmatprep.subr.bf16.mxu0 0
    %4384 = vmatpush1.bf16.xpose.msra.mxu0 0
    %4385 = vmatprep.mubr.bf16.mxu0 0
    %4386 = vmatmul.mubr.bf16.gmra.mrb[0].mxu0 %v4348
    %v4387 = vpop.f32.mrb[0].mxu0
    %v4388 = vadd.f32 %v162, %v4387
    %v4389 = vpop.f32.mrb[0].mxu0
    %v4390 = vpop.f32.mrb[0].mxu0
    %v4391 = vpop.f32.mrb[0].mxu0
    %4392 = vdwg.mxu0
    %4393 = vrot.lane.b32.xlu0 %v3532, 104
    %v4394 = vpop.permute.xlu0 %4393
    %4395 = vrot.lane.b32.xlu0 %v3534, 104
    %v4396 = vpop.permute.xlu0 %4395
    %v4398 = vsel %vm512, %v4394, 0
    %v4401 = vsel %vm512, %v4396, 0
    %4403 = vmatprep.subr.bf16.mxu0 0
    %4404 = vmatpush1.bf16.xpose.msra.mxu0 %v4401
    %4405 = vmatprep.subr.bf16.mxu0 0
    %4406 = vmatpush1.bf16.xpose.msra.mxu0 0
    %4407 = vmatprep.subr.bf16.mxu0 0
    %4408 = vmatpush1.bf16.xpose.msra.mxu0 0
    %4409 = vmatprep.subr.bf16.mxu0 0
    %4410 = vmatpush1.bf16.xpose.msra.mxu0 0
    %4411 = vmatprep.subr.bf16.mxu0 0
    %4412 = vmatpush1.bf16.xpose.msra.mxu0 0
    %4413 = vmatprep.subr.bf16.mxu0 0
    %4414 = vmatpush1.bf16.xpose.msra.mxu0 0
    %4415 = vmatprep.subr.bf16.mxu0 0
    %4416 = vmatpush1.bf16.xpose.msra.mxu0 0
    %4417 = vmatprep.subr.bf16.mxu0 0
    %4418 = vmatpush1.bf16.xpose.msra.mxu0 0
    %4419 = vmatprep.subr.bf16.mxu0 0
    %4420 = vmatpush1.bf16.xpose.msra.mxu0 0
    %4421 = vmatprep.subr.bf16.mxu0 0
    %4422 = vmatpush1.bf16.xpose.msra.mxu0 0
    %4423 = vmatprep.subr.bf16.mxu0 0
    %4424 = vmatpush1.bf16.xpose.msra.mxu0 0
    %4425 = vmatprep.subr.bf16.mxu0 0
    %4426 = vmatpush1.bf16.xpose.msra.mxu0 0
    %4427 = vmatprep.subr.bf16.mxu0 0
    %4428 = vmatpush1.bf16.xpose.msra.mxu0 0
    %4429 = vmatprep.subr.bf16.mxu0 0
    %4430 = vmatpush1.bf16.xpose.msra.mxu0 0
    %4431 = vmatprep.subr.bf16.mxu0 0
    %4432 = vmatpush1.bf16.xpose.msra.mxu0 0
    %4433 = vmatprep.subr.bf16.mxu0 0
    %4434 = vmatpush1.bf16.xpose.msra.mxu0 0
    %4435 = vmatprep.mubr.bf16.mxu0 0
    %4436 = vmatmul.mubr.bf16.gmra.mrb[0].mxu0 %v4398
    %v4437 = vpop.f32.mrb[0].mxu0
    %v4438 = vadd.f32 %v163, %v4437
    %v4439 = vpop.f32.mrb[0].mxu0
    %v4440 = vpop.f32.mrb[0].mxu0
    %v4441 = vpop.f32.mrb[0].mxu0
    %4442 = vdwg.mxu0
    %v4443 = vadd.f32 %v4388, %v159
    %v4444 = vadd.f32 %v4438, %v159
    %v4445 = vsel %vm512, %v4443, -inf
    %4446 = vmax.xlane.f32.xlu0 %v4445
    %v4447 = vpop.xlane.xlu0 %4446
    %v4448 = vsel %vm512, %v4444, -inf
    %4449 = vmax.xlane.f32.xlu0 %v4448
    %v4450 = vpop.xlane.xlu0 %4449
    %v4451 = vsub.f32 %v4443, %v4447
    %v4452 = vsub.f32 %v4444, %v4450
    %v4453 = vmul.f32 %v4451, 1.442695
    %v4454 = vpow.pop %v4453
    %v4455 = vmul.f32 %v4452, 1.442695
    %v4456 = vpow.pop %v4455
    %v4457 = vsel %vm512, %v4454, 0.0
    %4458 = vadd.xlane.f32.xlu0 %v4457
    %v4459 = vpop.xlane.xlu0 %4458
    %v4460 = vsel %vm512, %v4456, 0.0
    %4461 = vadd.xlane.f32.xlu0 %v4460
    %v4462 = vpop.xlane.xlu0 %4461
    %v4463 = vrcp.pop %v4459
    %v4464 = vrcp.pop %v4462
    %v4465 = vmul.f32 %v4454, %v4463
    %v4466 = vmul.f32 %v4456, %v4464
    %v4467 = vpack.c.bf16 %v4465, %v4465
    %v4468 = vpack.c.bf16 %v4466, %v4466
    %4469 = vrot.lane.b32.xlu0 %v3653, 104
    %v4470 = vpop.permute.xlu0 %4469
    %v4472 = vsel %vm512, %v4467, 0
    %v4475 = vsel %vm636, %v4470, 0
    %4477 = vmatprep.subr.bf16.mxu0 0
    %4478 = vmatpush1.bf16.msra.mxu0 %v4475
    %4479 = vmatprep.subr.bf16.mxu0 0
    %4480 = vmatpush1.bf16.msra.mxu0 0
    %4481 = vmatprep.subr.bf16.mxu0 0
    %4482 = vmatpush1.bf16.msra.mxu0 0
    %4483 = vmatprep.subr.bf16.mxu0 0
    %4484 = vmatpush1.bf16.msra.mxu0 0
    %4485 = vmatprep.subr.bf16.mxu0 0
    %4486 = vmatpush1.bf16.msra.mxu0 0
    %4487 = vmatprep.subr.bf16.mxu0 0
    %4488 = vmatpush1.bf16.msra.mxu0 0
    %4489 = vmatprep.subr.bf16.mxu0 0
    %4490 = vmatpush1.bf16.msra.mxu0 0
    %4491 = vmatprep.subr.bf16.mxu0 0
    %4492 = vmatpush1.bf16.msra.mxu0 0
    %4493 = vmatprep.subr.bf16.mxu0 0
    %4494 = vmatpush1.bf16.msra.mxu0 0
    %4495 = vmatprep.subr.bf16.mxu0 0
    %4496 = vmatpush1.bf16.msra.mxu0 0
    %4497 = vmatprep.subr.bf16.mxu0 0
    %4498 = vmatpush1.bf16.msra.mxu0 0
    %4499 = vmatprep.subr.bf16.mxu0 0
    %4500 = vmatpush1.bf16.msra.mxu0 0
    %4501 = vmatprep.subr.bf16.mxu0 0
    %4502 = vmatpush1.bf16.msra.mxu0 0
    %4503 = vmatprep.subr.bf16.mxu0 0
    %4504 = vmatpush1.bf16.msra.mxu0 0
    %4505 = vmatprep.subr.bf16.mxu0 0
    %4506 = vmatpush1.bf16.msra.mxu0 0
    %4507 = vmatprep.subr.bf16.mxu0 0
    %4508 = vmatpush1.bf16.msra.mxu0 0
    %4509 = vmatprep.mubr.bf16.mxu0 0
    %4510 = vmatmul.mubr.bf16.gmra.mrb[0].mxu0 %v4472
    %v4511 = vpop.f32.mrb[0].mxu0
    %v4512 = vadd.f32 0.0, %v4511
    %v4513 = vpop.f32.mrb[0].mxu0
    %v4514 = vpop.f32.mrb[0].mxu0
    %v4515 = vpop.f32.mrb[0].mxu0
    %4516 = vdwg.mxu0
    %4517 = vrot.lane.b32.xlu0 %v3654, 104
    %v4518 = vpop.permute.xlu0 %4517
    %v4520 = vsel %vm512, %v4468, 0
    %v4523 = vsel %vm636, %v4518, 0
    %4525 = vmatprep.subr.bf16.mxu0 0
    %4526 = vmatpush1.bf16.msra.mxu0 %v4523
    %4527 = vmatprep.subr.bf16.mxu0 0
    %4528 = vmatpush1.bf16.msra.mxu0 0
    %4529 = vmatprep.subr.bf16.mxu0 0
    %4530 = vmatpush1.bf16.msra.mxu0 0
    %4531 = vmatprep.subr.bf16.mxu0 0
    %4532 = vmatpush1.bf16.msra.mxu0 0
    %4533 = vmatprep.subr.bf16.mxu0 0
    %4534 = vmatpush1.bf16.msra.mxu0 0
    %4535 = vmatprep.subr.bf16.mxu0 0
    %4536 = vmatpush1.bf16.msra.mxu0 0
    %4537 = vmatprep.subr.bf16.mxu0 0
    %4538 = vmatpush1.bf16.msra.mxu0 0
    %4539 = vmatprep.subr.bf16.mxu0 0
    %4540 = vmatpush1.bf16.msra.mxu0 0
    %4541 = vmatprep.subr.bf16.mxu0 0
    %4542 = vmatpush1.bf16.msra.mxu0 0
    %4543 = vmatprep.subr.bf16.mxu0 0
    %4544 = vmatpush1.bf16.msra.mxu0 0
    %4545 = vmatprep.subr.bf16.mxu0 0
    %4546 = vmatpush1.bf16.msra.mxu0 0
    %4547 = vmatprep.subr.bf16.mxu0 0
    %4548 = vmatpush1.bf16.msra.mxu0 0
    %4549 = vmatprep.subr.bf16.mxu0 0
    %4550 = vmatpush1.bf16.msra.mxu0 0
    %4551 = vmatprep.subr.bf16.mxu0 0
    %4552 = vmatpush1.bf16.msra.mxu0 0
    %4553 = vmatprep.subr.bf16.mxu0 0
    %4554 = vmatpush1.bf16.msra.mxu0 0
    %4555 = vmatprep.subr.bf16.mxu0 0
    %4556 = vmatpush1.bf16.msra.mxu0 0
    %4557 = vmatprep.mubr.bf16.mxu0 0
    %4558 = vmatmul.mubr.bf16.gmra.mrb[0].mxu0 %v4520
    %v4559 = vpop.f32.mrb[0].mxu0
    %v4560 = vadd.f32 0.0, %v4559
    %v4561 = vpop.f32.mrb[0].mxu0
    %v4562 = vpop.f32.mrb[0].mxu0
    %v4563 = vpop.f32.mrb[0].mxu0
    %4564 = vdwg.mxu0
    %v4565 = vpack.c.bf16 %v4560, %v4512
    %v4567 = vsel %vm512, %v4565, 0
    %v4570 = vsel %vm636, %v3222, 0
    %4572 = vmatprep.subr.bf16.mxu0 0
    %4573 = vmatpush1.bf16.msra.mxu0 %v4570
    %4574 = vmatprep.subr.bf16.mxu0 0
    %4575 = vmatpush1.bf16.msra.mxu0 0
    %4576 = vmatprep.subr.bf16.mxu0 0
    %4577 = vmatpush1.bf16.msra.mxu0 0
    %4578 = vmatprep.subr.bf16.mxu0 0
    %4579 = vmatpush1.bf16.msra.mxu0 0
    %4580 = vmatprep.subr.bf16.mxu0 0
    %4581 = vmatpush1.bf16.msra.mxu0 0
    %4582 = vmatprep.subr.bf16.mxu0 0
    %4583 = vmatpush1.bf16.msra.mxu0 0
    %4584 = vmatprep.subr.bf16.mxu0 0
    %4585 = vmatpush1.bf16.msra.mxu0 0
    %4586 = vmatprep.subr.bf16.mxu0 0
    %4587 = vmatpush1.bf16.msra.mxu0 0
    %4588 = vmatprep.subr.bf16.mxu0 0
    %4589 = vmatpush1.bf16.msra.mxu0 0
    %4590 = vmatprep.subr.bf16.mxu0 0
    %4591 = vmatpush1.bf16.msra.mxu0 0
    %4592 = vmatprep.subr.bf16.mxu0 0
    %4593 = vmatpush1.bf16.msra.mxu0 0
    %4594 = vmatprep.subr.bf16.mxu0 0
    %4595 = vmatpush1.bf16.msra.mxu0 0
    %4596 = vmatprep.subr.bf16.mxu0 0
    %4597 = vmatpush1.bf16.msra.mxu0 0
    %4598 = vmatprep.subr.bf16.mxu0 0
    %4599 = vmatpush1.bf16.msra.mxu0 0
    %4600 = vmatprep.subr.bf16.mxu0 0
    %4601 = vmatpush1.bf16.msra.mxu0 0
    %4602 = vmatprep.subr.bf16.mxu0 0
    %4603 = vmatpush1.bf16.msra.mxu0 0
    %4604 = vmatprep.mubr.bf16.mxu0 0
    %4605 = vmatmul.mubr.bf16.gmra.mrb[0].mxu0 %v4567
    %v4606 = vpop.f32.mrb[0].mxu0
    %v4607 = vadd.f32 0.0, %v4606
    %v4608 = vpop.f32.mrb[0].mxu0
    %v4609 = vpop.f32.mrb[0].mxu0
    %v4610 = vadd.f32 0.0, %v4609
    %v4611 = vpop.f32.mrb[0].mxu0
    %4612 = vdwg.mxu0
    %v4613 = vadd.f32 %v4341, %v4607
    %v4614 = vadd.f32 %v4342, %v4610
    %v4615 = vadd.f32 %v3340, %v4613
    %v4616 = vadd.f32 %v3343, %v4614
    %v4617 = vmul.f32 %v4615, %v4615
    %v4618 = vmul.f32 %v4616, %v4616
    %v4619 = vsel %vm311, %v4617, 0.0
    %4620 = vadd.xlane.f32.xlu0 %v4619
    %v4621 = vpop.xlane.xlu0 %4620
    %v4622 = vsel %vm311, %v4618, 0.0
    %4623 = vadd.xlane.f32.xlu0 %v4622
    %v4624 = vpop.xlane.xlu0 %4623
    %v4625 = vmul.f32 %v4621, %v318
    %v4626 = vmul.f32 %v4624, %v318
    %v4627 = vadd.f32 %v4625, 1e-06
    %v4628 = vadd.f32 %v4626, 1e-06
    %v4629 = vrsqrt.pop %v4627
    %v4630 = vrsqrt.pop %v4628
    %v4631 = vmul.f32 %v4615, %v4629
    %v4632 = vmul.f32 %v4616, %v4630
    %v4633 = vlaneseq
    %v4634 = vshrl.u32 %v4633, 7
    %v4635 = vsub.s32 0, %v4634
    %v4636 = vrot.slane %v3260, %v4635
    %v4637 = vmul.f32 %v4631, %v4636
    %v4638 = vmul.f32 %v4632, %v4636
    %v4639 = vpack.c.bf16 %v4638, %v4637
    %v4644 = vunpack.c.l.b16 %v3227
    %v4645 = vunpack.c.l.b16 %v3228
    %v4646 = vunpack.c.l.b16 %v3229
    %v4647 = vunpack.c.l.b16 %v3230
    %v4648 = vpack.c.b16 %v4645, %v4644
    %v4649 = vpack.c.b16 %v4647, %v4646
    %v4653 = vsel %vm311, %v4639, 0
    %4655 = vmatprep.subr.bf16.mxu0 0
    %4656 = vmatpush1.bf16.msra.mxu0 %v4648
    %4657 = vmatprep.subr.bf16.mxu0 0
    %4658 = vmatpush1.bf16.msra.mxu0 %v4649
    %4659 = vmatprep.subr.bf16.mxu0 0
    %4660 = vmatpush1.bf16.msra.mxu0 0
    %4661 = vmatprep.subr.bf16.mxu0 0
    %4662 = vmatpush1.bf16.msra.mxu0 0
    %4663 = vmatprep.subr.bf16.mxu0 0
    %4664 = vmatpush1.bf16.msra.mxu0 0
    %4665 = vmatprep.subr.bf16.mxu0 0
    %4666 = vmatpush1.bf16.msra.mxu0 0
    %4667 = vmatprep.subr.bf16.mxu0 0
    %4668 = vmatpush1.bf16.msra.mxu0 0
    %4669 = vmatprep.subr.bf16.mxu0 0
    %4670 = vmatpush1.bf16.msra.mxu0 0
    %4671 = vmatprep.subr.bf16.mxu0 0
    %4672 = vmatpush1.bf16.msra.mxu0 0
    %4673 = vmatprep.subr.bf16.mxu0 0
    %4674 = vmatpush1.bf16.msra.mxu0 0
    %4675 = vmatprep.subr.bf16.mxu0 0
    %4676 = vmatpush1.bf16.msra.mxu0 0
    %4677 = vmatprep.subr.bf16.mxu0 0
    %4678 = vmatpush1.bf16.msra.mxu0 0
    %4679 = vmatprep.subr.bf16.mxu0 0
    %4680 = vmatpush1.bf16.msra.mxu0 0
    %4681 = vmatprep.subr.bf16.mxu0 0
    %4682 = vmatpush1.bf16.msra.mxu0 0
    %4683 = vmatprep.subr.bf16.mxu0 0
    %4684 = vmatpush1.bf16.msra.mxu0 0
    %4685 = vmatprep.subr.bf16.mxu0 0
    %4686 = vmatpush1.bf16.msra.mxu0 0
    %4687 = vmatprep.mubr.bf16.mxu0 0
    %4688 = vmatmul.mubr.bf16.gmra.mrb[0].mxu0 %v4653
    %v4689 = vpop.f32.mrb[0].mxu0
    %v4690 = vadd.f32 0.0, %v4689
    %v4691 = vpop.f32.mrb[0].mxu0
    %v4692 = vpop.f32.mrb[0].mxu0
    %v4693 = vadd.f32 0.0, %v4692
    %v4694 = vpop.f32.mrb[0].mxu0
    %4695 = vdwg.mxu0
    %v4696 = vpack.c.bf16 %v3194, %v3193
    %v4701 = vunpack.c.l.b16 %v3235
    %v4702 = vunpack.c.l.b16 %v3236
    %v4703 = vunpack.c.l.b16 %v3237
    %v4704 = vunpack.c.l.b16 %v3238
    %v4705 = vpack.c.b16 %v4702, %v4701
    %v4706 = vpack.c.b16 %v4704, %v4703
    %v4710 = vsel %vm311, %v4696, 0
    %4712 = vmatprep.subr.bf16.mxu0 0
    %4713 = vmatpush1.bf16.msra.mxu0 %v4705
    %4714 = vmatprep.subr.bf16.mxu0 0
    %4715 = vmatpush1.bf16.msra.mxu0 %v4706
    %4716 = vmatprep.subr.bf16.mxu0 0
    %4717 = vmatpush1.bf16.msra.mxu0 0
    %4718 = vmatprep.subr.bf16.mxu0 0
    %4719 = vmatpush1.bf16.msra.mxu0 0
    %4720 = vmatprep.subr.bf16.mxu0 0
    %4721 = vmatpush1.bf16.msra.mxu0 0
    %4722 = vmatprep.subr.bf16.mxu0 0
    %4723 = vmatpush1.bf16.msra.mxu0 0
    %4724 = vmatprep.subr.bf16.mxu0 0
    %4725 = vmatpush1.bf16.msra.mxu0 0
    %4726 = vmatprep.subr.bf16.mxu0 0
    %4727 = vmatpush1.bf16.msra.mxu0 0
    %4728 = vmatprep.subr.bf16.mxu0 0
    %4729 = vmatpush1.bf16.msra.mxu0 0
    %4730 = vmatprep.subr.bf16.mxu0 0
    %4731 = vmatpush1.bf16.msra.mxu0 0
    %4732 = vmatprep.subr.bf16.mxu0 0
    %4733 = vmatpush1.bf16.msra.mxu0 0
    %4734 = vmatprep.subr.bf16.mxu0 0
    %4735 = vmatpush1.bf16.msra.mxu0 0
    %4736 = vmatprep.subr.bf16.mxu0 0
    %4737 = vmatpush1.bf16.msra.mxu0 0
    %4738 = vmatprep.subr.bf16.mxu0 0
    %4739 = vmatpush1.bf16.msra.mxu0 0
    %4740 = vmatprep.subr.bf16.mxu0 0
    %4741 = vmatpush1.bf16.msra.mxu0 0
    %4742 = vmatprep.subr.bf16.mxu0 0
    %4743 = vmatpush1.bf16.msra.mxu0 0
    %4744 = vmatprep.mubr.bf16.mxu0 0
    %4745 = vmatmul.mubr.bf16.gmra.mrb[0].mxu0 %v4710
    %v4746 = vpop.f32.mrb[0].mxu0
    %v4747 = vadd.f32 0.0, %v4746
    %v4748 = vpop.f32.mrb[0].mxu0
    %v4749 = vpop.f32.mrb[0].mxu0
    %v4750 = vadd.f32 0.0, %v4749
    %v4751 = vpop.f32.mrb[0].mxu0
    %4752 = vdwg.mxu0
    %v4757 = vunpack.c.l.b16 %v3243
    %v4758 = vunpack.c.l.b16 %v3244
    %v4759 = vunpack.c.l.b16 %v3245
    %v4760 = vunpack.c.l.b16 %v3246
    %v4761 = vpack.c.b16 %v4758, %v4757
    %v4762 = vpack.c.b16 %v4760, %v4759
    %4765 = vmatprep.subr.bf16.mxu0 0
    %4766 = vmatpush1.bf16.msra.mxu0 %v4761
    %4767 = vmatprep.subr.bf16.mxu0 0
    %4768 = vmatpush1.bf16.msra.mxu0 %v4762
    %4769 = vmatprep.subr.bf16.mxu0 0
    %4770 = vmatpush1.bf16.msra.mxu0 0
    %4771 = vmatprep.subr.bf16.mxu0 0
    %4772 = vmatpush1.bf16.msra.mxu0 0
    %4773 = vmatprep.subr.bf16.mxu0 0
    %4774 = vmatpush1.bf16.msra.mxu0 0
    %4775 = vmatprep.subr.bf16.mxu0 0
    %4776 = vmatpush1.bf16.msra.mxu0 0
    %4777 = vmatprep.subr.bf16.mxu0 0
    %4778 = vmatpush1.bf16.msra.mxu0 0
    %4779 = vmatprep.subr.bf16.mxu0 0
    %4780 = vmatpush1.bf16.msra.mxu0 0
    %4781 = vmatprep.subr.bf16.mxu0 0
    %4782 = vmatpush1.bf16.msra.mxu0 0
    %4783 = vmatprep.subr.bf16.mxu0 0
    %4784 = vmatpush1.bf16.msra.mxu0 0
    %4785 = vmatprep.subr.bf16.mxu0 0
    %4786 = vmatpush1.bf16.msra.mxu0 0
    %4787 = vmatprep.subr.bf16.mxu0 0
    %4788 = vmatpush1.bf16.msra.mxu0 0
    %4789 = vmatprep.subr.bf16.mxu0 0
    %4790 = vmatpush1.bf16.msra.mxu0 0
    %4791 = vmatprep.subr.bf16.mxu0 0
    %4792 = vmatpush1.bf16.msra.mxu0 0
    %4793 = vmatprep.subr.bf16.mxu0 0
    %4794 = vmatpush1.bf16.msra.mxu0 0
    %4795 = vmatprep.subr.bf16.mxu0 0
    %4796 = vmatpush1.bf16.msra.mxu0 0
    %4797 = vmatprep.mubr.bf16.mxu0 0
    %4798 = vmatmul.mubr.bf16.gmra.mrb[0].mxu0 %v4710
    %v4799 = vpop.f32.mrb[0].mxu0
    %v4800 = vadd.f32 0.0, %v4799
    %v4801 = vpop.f32.mrb[0].mxu0
    %v4802 = vpop.f32.mrb[0].mxu0
    %v4803 = vadd.f32 0.0, %v4802
    %v4804 = vpop.f32.mrb[0].mxu0
    %4805 = vdwg.mxu0
    %v4806 = vpack.c.bf16 %v4690, %v4690
    %v4807 = vpack.c.bf16 %v4693, %v4693
    %v4808 = vpack.c.bf16 %v4747, %v4747
    %v4809 = vpack.c.bf16 %v4750, %v4750
    %v4811 = vsel %vm512, %v4806, 0
    %v4814 = vsel %vm512, %v4808, 0
    %4816 = vmatprep.subr.bf16.mxu0 0
    %4817 = vmatpush1.bf16.xpose.msra.mxu0 %v4814
    %4818 = vmatprep.subr.bf16.mxu0 0
    %4819 = vmatpush1.bf16.xpose.msra.mxu0 0
    %4820 = vmatprep.subr.bf16.mxu0 0
    %4821 = vmatpush1.bf16.xpose.msra.mxu0 0
    %4822 = vmatprep.subr.bf16.mxu0 0
    %4823 = vmatpush1.bf16.xpose.msra.mxu0 0
    %4824 = vmatprep.subr.bf16.mxu0 0
    %4825 = vmatpush1.bf16.xpose.msra.mxu0 0
    %4826 = vmatprep.subr.bf16.mxu0 0
    %4827 = vmatpush1.bf16.xpose.msra.mxu0 0
    %4828 = vmatprep.subr.bf16.mxu0 0
    %4829 = vmatpush1.bf16.xpose.msra.mxu0 0
    %4830 = vmatprep.subr.bf16.mxu0 0
    %4831 = vmatpush1.bf16.xpose.msra.mxu0 0
    %4832 = vmatprep.subr.bf16.mxu0 0
    %4833 = vmatpush1.bf16.xpose.msra.mxu0 0
    %4834 = vmatprep.subr.bf16.mxu0 0
    %4835 = vmatpush1.bf16.xpose.msra.mxu0 0
    %4836 = vmatprep.subr.bf16.mxu0 0
    %4837 = vmatpush1.bf16.xpose.msra.mxu0 0
    %4838 = vmatprep.subr.bf16.mxu0 0
    %4839 = vmatpush1.bf16.xpose.msra.mxu0 0
    %4840 = vmatprep.subr.bf16.mxu0 0
    %4841 = vmatpush1.bf16.xpose.msra.mxu0 0
    %4842 = vmatprep.subr.bf16.mxu0 0
    %4843 = vmatpush1.bf16.xpose.msra.mxu0 0
    %4844 = vmatprep.subr.bf16.mxu0 0
    %4845 = vmatpush1.bf16.xpose.msra.mxu0 0
    %4846 = vmatprep.subr.bf16.mxu0 0
    %4847 = vmatpush1.bf16.xpose.msra.mxu0 0
    %4848 = vmatprep.mubr.bf16.mxu0 0
    %4849 = vmatmul.mubr.bf16.gmra.mrb[0].mxu0 %v4811
    %v4850 = vpop.f32.mrb[0].mxu0
    %v4851 = vadd.f32 %v505, %v4850
    %v4852 = vpop.f32.mrb[0].mxu0
    %v4853 = vpop.f32.mrb[0].mxu0
    %v4854 = vpop.f32.mrb[0].mxu0
    %4855 = vdwg.mxu0
    %v4857 = vsel %vm512, %v4807, 0
    %v4860 = vsel %vm512, %v4809, 0
    %4862 = vmatprep.subr.bf16.mxu0 0
    %4863 = vmatpush1.bf16.xpose.msra.mxu0 %v4860
    %4864 = vmatprep.subr.bf16.mxu0 0
    %4865 = vmatpush1.bf16.xpose.msra.mxu0 0
    %4866 = vmatprep.subr.bf16.mxu0 0
    %4867 = vmatpush1.bf16.xpose.msra.mxu0 0
    %4868 = vmatprep.subr.bf16.mxu0 0
    %4869 = vmatpush1.bf16.xpose.msra.mxu0 0
    %4870 = vmatprep.subr.bf16.mxu0 0
    %4871 = vmatpush1.bf16.xpose.msra.mxu0 0
    %4872 = vmatprep.subr.bf16.mxu0 0
    %4873 = vmatpush1.bf16.xpose.msra.mxu0 0
    %4874 = vmatprep.subr.bf16.mxu0 0
    %4875 = vmatpush1.bf16.xpose.msra.mxu0 0
    %4876 = vmatprep.subr.bf16.mxu0 0
    %4877 = vmatpush1.bf16.xpose.msra.mxu0 0
    %4878 = vmatprep.subr.bf16.mxu0 0
    %4879 = vmatpush1.bf16.xpose.msra.mxu0 0
    %4880 = vmatprep.subr.bf16.mxu0 0
    %4881 = vmatpush1.bf16.xpose.msra.mxu0 0
    %4882 = vmatprep.subr.bf16.mxu0 0
    %4883 = vmatpush1.bf16.xpose.msra.mxu0 0
    %4884 = vmatprep.subr.bf16.mxu0 0
    %4885 = vmatpush1.bf16.xpose.msra.mxu0 0
    %4886 = vmatprep.subr.bf16.mxu0 0
    %4887 = vmatpush1.bf16.xpose.msra.mxu0 0
    %4888 = vmatprep.subr.bf16.mxu0 0
    %4889 = vmatpush1.bf16.xpose.msra.mxu0 0
    %4890 = vmatprep.subr.bf16.mxu0 0
    %4891 = vmatpush1.bf16.xpose.msra.mxu0 0
    %4892 = vmatprep.subr.bf16.mxu0 0
    %4893 = vmatpush1.bf16.xpose.msra.mxu0 0
    %4894 = vmatprep.mubr.bf16.mxu0 0
    %4895 = vmatmul.mubr.bf16.gmra.mrb[0].mxu0 %v4857
    %v4896 = vpop.f32.mrb[0].mxu0
    %v4897 = vadd.f32 %v509, %v4896
    %v4898 = vpop.f32.mrb[0].mxu0
    %v4899 = vpop.f32.mrb[0].mxu0
    %v4900 = vpop.f32.mrb[0].mxu0
    %4901 = vdwg.mxu0
    %v4902 = vsel %vm512, %v4851, -inf
    %4903 = vmax.xlane.f32.xlu0 %v4902
    %v4904 = vpop.xlane.xlu0 %4903
    %v4905 = vsel %vm512, %v4897, -inf
    %4906 = vmax.xlane.f32.xlu0 %v4905
    %v4907 = vpop.xlane.xlu0 %4906
    %v4908 = vsub.f32 %v4851, %v4904
    %v4909 = vsub.f32 %v4897, %v4907
    %v4910 = vmul.f32 %v4908, 1.442695
    %v4911 = vpow.pop %v4910
    %v4912 = vmul.f32 %v4909, 1.442695
    %v4913 = vpow.pop %v4912
    %v4914 = vsel %vm512, %v4911, 0.0
    %4915 = vadd.xlane.f32.xlu0 %v4914
    %v4916 = vpop.xlane.xlu0 %4915
    %v4917 = vsel %vm512, %v4913, 0.0
    %4918 = vadd.xlane.f32.xlu0 %v4917
    %v4919 = vpop.xlane.xlu0 %4918
    %v4920 = vrcp.pop %v4916
    %v4921 = vrcp.pop %v4919
    %v4922 = vmul.f32 %v4911, %v4920
    %v4923 = vmul.f32 %v4913, %v4921
    %v4924 = vpack.c.bf16 %v4922, %v4922
    %v4925 = vpack.c.bf16 %v4923, %v4923
    %v4926 = vpack.c.bf16 %v4800, %v4800
    %v4927 = vpack.c.bf16 %v4803, %v4803
    %v4929 = vsel %vm512, %v4924, 0
    %v4932 = vsel %vm636, %v4926, 0
    %4934 = vmatprep.subr.bf16.mxu0 0
    %4935 = vmatpush1.bf16.msra.mxu0 %v4932
    %4936 = vmatprep.subr.bf16.mxu0 0
    %4937 = vmatpush1.bf16.msra.mxu0 0
    %4938 = vmatprep.subr.bf16.mxu0 0
    %4939 = vmatpush1.bf16.msra.mxu0 0
    %4940 = vmatprep.subr.bf16.mxu0 0
    %4941 = vmatpush1.bf16.msra.mxu0 0
    %4942 = vmatprep.subr.bf16.mxu0 0
    %4943 = vmatpush1.bf16.msra.mxu0 0
    %4944 = vmatprep.subr.bf16.mxu0 0
    %4945 = vmatpush1.bf16.msra.mxu0 0
    %4946 = vmatprep.subr.bf16.mxu0 0
    %4947 = vmatpush1.bf16.msra.mxu0 0
    %4948 = vmatprep.subr.bf16.mxu0 0
    %4949 = vmatpush1.bf16.msra.mxu0 0
    %4950 = vmatprep.subr.bf16.mxu0 0
    %4951 = vmatpush1.bf16.msra.mxu0 0
    %4952 = vmatprep.subr.bf16.mxu0 0
    %4953 = vmatpush1.bf16.msra.mxu0 0
    %4954 = vmatprep.subr.bf16.mxu0 0
    %4955 = vmatpush1.bf16.msra.mxu0 0
    %4956 = vmatprep.subr.bf16.mxu0 0
    %4957 = vmatpush1.bf16.msra.mxu0 0
    %4958 = vmatprep.subr.bf16.mxu0 0
    %4959 = vmatpush1.bf16.msra.mxu0 0
    %4960 = vmatprep.subr.bf16.mxu0 0
    %4961 = vmatpush1.bf16.msra.mxu0 0
    %4962 = vmatprep.subr.bf16.mxu0 0
    %4963 = vmatpush1.bf16.msra.mxu0 0
    %4964 = vmatprep.subr.bf16.mxu0 0
    %4965 = vmatpush1.bf16.msra.mxu0 0
    %4966 = vmatprep.mubr.bf16.mxu0 0
    %4967 = vmatmul.mubr.bf16.gmra.mrb[0].mxu0 %v4929
    %v4968 = vpop.f32.mrb[0].mxu0
    %v4969 = vadd.f32 0.0, %v4968
    %v4970 = vpop.f32.mrb[0].mxu0
    %v4971 = vpop.f32.mrb[0].mxu0
    %v4972 = vpop.f32.mrb[0].mxu0
    %4973 = vdwg.mxu0
    %v4975 = vsel %vm512, %v4925, 0
    %v4978 = vsel %vm636, %v4927, 0
    %4980 = vmatprep.subr.bf16.mxu0 0
    %4981 = vmatpush1.bf16.msra.mxu0 %v4978
    %4982 = vmatprep.subr.bf16.mxu0 0
    %4983 = vmatpush1.bf16.msra.mxu0 0
    %4984 = vmatprep.subr.bf16.mxu0 0
    %4985 = vmatpush1.bf16.msra.mxu0 0
    %4986 = vmatprep.subr.bf16.mxu0 0
    %4987 = vmatpush1.bf16.msra.mxu0 0
    %4988 = vmatprep.subr.bf16.mxu0 0
    %4989 = vmatpush1.bf16.msra.mxu0 0
    %4990 = vmatprep.subr.bf16.mxu0 0
    %4991 = vmatpush1.bf16.msra.mxu0 0
    %4992 = vmatprep.subr.bf16.mxu0 0
    %4993 = vmatpush1.bf16.msra.mxu0 0
    %4994 = vmatprep.subr.bf16.mxu0 0
    %4995 = vmatpush1.bf16.msra.mxu0 0
    %4996 = vmatprep.subr.bf16.mxu0 0
    %4997 = vmatpush1.bf16.msra.mxu0 0
    %4998 = vmatprep.subr.bf16.mxu0 0
    %4999 = vmatpush1.bf16.msra.mxu0 0
    %5000 = vmatprep.subr.bf16.mxu0 0
    %5001 = vmatpush1.bf16.msra.mxu0 0
    %5002 = vmatprep.subr.bf16.mxu0 0
    %5003 = vmatpush1.bf16.msra.mxu0 0
    %5004 = vmatprep.subr.bf16.mxu0 0
    %5005 = vmatpush1.bf16.msra.mxu0 0
    %5006 = vmatprep.subr.bf16.mxu0 0
    %5007 = vmatpush1.bf16.msra.mxu0 0
    %5008 = vmatprep.subr.bf16.mxu0 0
    %5009 = vmatpush1.bf16.msra.mxu0 0
    %5010 = vmatprep.subr.bf16.mxu0 0
    %5011 = vmatpush1.bf16.msra.mxu0 0
    %5012 = vmatprep.mubr.bf16.mxu0 0
    %5013 = vmatmul.mubr.bf16.gmra.mrb[0].mxu0 %v4975
    %v5014 = vpop.f32.mrb[0].mxu0
    %v5015 = vadd.f32 0.0, %v5014
    %v5016 = vpop.f32.mrb[0].mxu0
    %v5017 = vpop.f32.mrb[0].mxu0
    %v5018 = vpop.f32.mrb[0].mxu0
    %5019 = vdwg.mxu0
    %v5020 = vpack.c.bf16 %v5015, %v4969
    %5022 = vrot.lane.b32.xlu0 %v4806, 120
    %v5023 = vpop.permute.xlu0 %5022
    %5025 = vrot.lane.b32.xlu0 %v4808, 120
    %v5026 = vpop.permute.xlu0 %5025
    %v5028 = vsel %vm512, %v5023, 0
    %v5031 = vsel %vm512, %v5026, 0
    %5033 = vmatprep.subr.bf16.mxu0 0
    %5034 = vmatpush1.bf16.xpose.msra.mxu0 %v5031
    %5035 = vmatprep.subr.bf16.mxu0 0
    %5036 = vmatpush1.bf16.xpose.msra.mxu0 0
    %5037 = vmatprep.subr.bf16.mxu0 0
    %5038 = vmatpush1.bf16.xpose.msra.mxu0 0
    %5039 = vmatprep.subr.bf16.mxu0 0
    %5040 = vmatpush1.bf16.xpose.msra.mxu0 0
    %5041 = vmatprep.subr.bf16.mxu0 0
    %5042 = vmatpush1.bf16.xpose.msra.mxu0 0
    %5043 = vmatprep.subr.bf16.mxu0 0
    %5044 = vmatpush1.bf16.xpose.msra.mxu0 0
    %5045 = vmatprep.subr.bf16.mxu0 0
    %5046 = vmatpush1.bf16.xpose.msra.mxu0 0
    %5047 = vmatprep.subr.bf16.mxu0 0
    %5048 = vmatpush1.bf16.xpose.msra.mxu0 0
    %5049 = vmatprep.subr.bf16.mxu0 0
    %5050 = vmatpush1.bf16.xpose.msra.mxu0 0
    %5051 = vmatprep.subr.bf16.mxu0 0
    %5052 = vmatpush1.bf16.xpose.msra.mxu0 0
    %5053 = vmatprep.subr.bf16.mxu0 0
    %5054 = vmatpush1.bf16.xpose.msra.mxu0 0
    %5055 = vmatprep.subr.bf16.mxu0 0
    %5056 = vmatpush1.bf16.xpose.msra.mxu0 0
    %5057 = vmatprep.subr.bf16.mxu0 0
    %5058 = vmatpush1.bf16.xpose.msra.mxu0 0
    %5059 = vmatprep.subr.bf16.mxu0 0
    %5060 = vmatpush1.bf16.xpose.msra.mxu0 0
    %5061 = vmatprep.subr.bf16.mxu0 0
    %5062 = vmatpush1.bf16.xpose.msra.mxu0 0
    %5063 = vmatprep.subr.bf16.mxu0 0
    %5064 = vmatpush1.bf16.xpose.msra.mxu0 0
    %5065 = vmatprep.mubr.bf16.mxu0 0
    %5066 = vmatmul.mubr.bf16.gmra.mrb[0].mxu0 %v5028
    %v5067 = vpop.f32.mrb[0].mxu0
    %v5068 = vadd.f32 %v505, %v5067
    %v5069 = vpop.f32.mrb[0].mxu0
    %v5070 = vpop.f32.mrb[0].mxu0
    %v5071 = vpop.f32.mrb[0].mxu0
    %5072 = vdwg.mxu0
    %5074 = vrot.lane.b32.xlu0 %v4807, 120
    %v5075 = vpop.permute.xlu0 %5074
    %5077 = vrot.lane.b32.xlu0 %v4809, 120
    %v5078 = vpop.permute.xlu0 %5077
    %v5080 = vsel %vm512, %v5075, 0
    %v5083 = vsel %vm512, %v5078, 0
    %5085 = vmatprep.subr.bf16.mxu0 0
    %5086 = vmatpush1.bf16.xpose.msra.mxu0 %v5083
    %5087 = vmatprep.subr.bf16.mxu0 0
    %5088 = vmatpush1.bf16.xpose.msra.mxu0 0
    %5089 = vmatprep.subr.bf16.mxu0 0
    %5090 = vmatpush1.bf16.xpose.msra.mxu0 0
    %5091 = vmatprep.subr.bf16.mxu0 0
    %5092 = vmatpush1.bf16.xpose.msra.mxu0 0
    %5093 = vmatprep.subr.bf16.mxu0 0
    %5094 = vmatpush1.bf16.xpose.msra.mxu0 0
    %5095 = vmatprep.subr.bf16.mxu0 0
    %5096 = vmatpush1.bf16.xpose.msra.mxu0 0
    %5097 = vmatprep.subr.bf16.mxu0 0
    %5098 = vmatpush1.bf16.xpose.msra.mxu0 0
    %5099 = vmatprep.subr.bf16.mxu0 0
    %5100 = vmatpush1.bf16.xpose.msra.mxu0 0
    %5101 = vmatprep.subr.bf16.mxu0 0
    %5102 = vmatpush1.bf16.xpose.msra.mxu0 0
    %5103 = vmatprep.subr.bf16.mxu0 0
    %5104 = vmatpush1.bf16.xpose.msra.mxu0 0
    %5105 = vmatprep.subr.bf16.mxu0 0
    %5106 = vmatpush1.bf16.xpose.msra.mxu0 0
    %5107 = vmatprep.subr.bf16.mxu0 0
    %5108 = vmatpush1.bf16.xpose.msra.mxu0 0
    %5109 = vmatprep.subr.bf16.mxu0 0
    %5110 = vmatpush1.bf16.xpose.msra.mxu0 0
    %5111 = vmatprep.subr.bf16.mxu0 0
    %5112 = vmatpush1.bf16.xpose.msra.mxu0 0
    %5113 = vmatprep.subr.bf16.mxu0 0
    %5114 = vmatpush1.bf16.xpose.msra.mxu0 0
    %5115 = vmatprep.subr.bf16.mxu0 0
    %5116 = vmatpush1.bf16.xpose.msra.mxu0 0
    %5117 = vmatprep.mubr.bf16.mxu0 0
    %5118 = vmatmul.mubr.bf16.gmra.mrb[0].mxu0 %v5080
    %v5119 = vpop.f32.mrb[0].mxu0
    %v5120 = vadd.f32 %v509, %v5119
    %v5121 = vpop.f32.mrb[0].mxu0
    %v5122 = vpop.f32.mrb[0].mxu0
    %v5123 = vpop.f32.mrb[0].mxu0
    %5124 = vdwg.mxu0
    %v5125 = vsel %vm512, %v5068, -inf
    %5126 = vmax.xlane.f32.xlu0 %v5125
    %v5127 = vpop.xlane.xlu0 %5126
    %v5128 = vsel %vm512, %v5120, -inf
    %5129 = vmax.xlane.f32.xlu0 %v5128
    %v5130 = vpop.xlane.xlu0 %5129
    %v5131 = vsub.f32 %v5068, %v5127
    %v5132 = vsub.f32 %v5120, %v5130
    %v5133 = vmul.f32 %v5131, 1.442695
    %v5134 = vpow.pop %v5133
    %v5135 = vmul.f32 %v5132, 1.442695
    %v5136 = vpow.pop %v5135
    %v5137 = vsel %vm512, %v5134, 0.0
    %5138 = vadd.xlane.f32.xlu0 %v5137
    %v5139 = vpop.xlane.xlu0 %5138
    %v5140 = vsel %vm512, %v5136, 0.0
    %5141 = vadd.xlane.f32.xlu0 %v5140
    %v5142 = vpop.xlane.xlu0 %5141
    %v5143 = vrcp.pop %v5139
    %v5144 = vrcp.pop %v5142
    %v5145 = vmul.f32 %v5134, %v5143
    %v5146 = vmul.f32 %v5136, %v5144
    %v5147 = vpack.c.bf16 %v5145, %v5145
    %v5148 = vpack.c.bf16 %v5146, %v5146
    %5150 = vrot.lane.b32.xlu0 %v4926, 120
    %v5151 = vpop.permute.xlu0 %5150
    %v5153 = vsel %vm512, %v5147, 0
    %v5156 = vsel %vm636, %v5151, 0
    %5158 = vmatprep.subr.bf16.mxu0 0
    %5159 = vmatpush1.bf16.msra.mxu0 %v5156
    %5160 = vmatprep.subr.bf16.mxu0 0
    %5161 = vmatpush1.bf16.msra.mxu0 0
    %5162 = vmatprep.subr.bf16.mxu0 0
    %5163 = vmatpush1.bf16.msra.mxu0 0
    %5164 = vmatprep.subr.bf16.mxu0 0
    %5165 = vmatpush1.bf16.msra.mxu0 0
    %5166 = vmatprep.subr.bf16.mxu0 0
    %5167 = vmatpush1.bf16.msra.mxu0 0
    %5168 = vmatprep.subr.bf16.mxu0 0
    %5169 = vmatpush1.bf16.msra.mxu0 0
    %5170 = vmatprep.subr.bf16.mxu0 0
    %5171 = vmatpush1.bf16.msra.mxu0 0
    %5172 = vmatprep.subr.bf16.mxu0 0
    %5173 = vmatpush1.bf16.msra.mxu0 0
    %5174 = vmatprep.subr.bf16.mxu0 0
    %5175 = vmatpush1.bf16.msra.mxu0 0
    %5176 = vmatprep.subr.bf16.mxu0 0
    %5177 = vmatpush1.bf16.msra.mxu0 0
    %5178 = vmatprep.subr.bf16.mxu0 0
    %5179 = vmatpush1.bf16.msra.mxu0 0
    %5180 = vmatprep.subr.bf16.mxu0 0
    %5181 = vmatpush1.bf16.msra.mxu0 0
    %5182 = vmatprep.subr.bf16.mxu0 0
    %5183 = vmatpush1.bf16.msra.mxu0 0
    %5184 = vmatprep.subr.bf16.mxu0 0
    %5185 = vmatpush1.bf16.msra.mxu0 0
    %5186 = vmatprep.subr.bf16.mxu0 0
    %5187 = vmatpush1.bf16.msra.mxu0 0
    %5188 = vmatprep.subr.bf16.mxu0 0
    %5189 = vmatpush1.bf16.msra.mxu0 0
    %5190 = vmatprep.mubr.bf16.mxu0 0
    %5191 = vmatmul.mubr.bf16.gmra.mrb[0].mxu0 %v5153
    %v5192 = vpop.f32.mrb[0].mxu0
    %v5193 = vadd.f32 0.0, %v5192
    %v5194 = vpop.f32.mrb[0].mxu0
    %v5195 = vpop.f32.mrb[0].mxu0
    %v5196 = vpop.f32.mrb[0].mxu0
    %5197 = vdwg.mxu0
    %5199 = vrot.lane.b32.xlu0 %v4927, 120
    %v5200 = vpop.permute.xlu0 %5199
    %v5202 = vsel %vm512, %v5148, 0
    %v5205 = vsel %vm636, %v5200, 0
    %5207 = vmatprep.subr.bf16.mxu0 0
    %5208 = vmatpush1.bf16.msra.mxu0 %v5205
    %5209 = vmatprep.subr.bf16.mxu0 0
    %5210 = vmatpush1.bf16.msra.mxu0 0
    %5211 = vmatprep.subr.bf16.mxu0 0
    %5212 = vmatpush1.bf16.msra.mxu0 0
    %5213 = vmatprep.subr.bf16.mxu0 0
    %5214 = vmatpush1.bf16.msra.mxu0 0
    %5215 = vmatprep.subr.bf16.mxu0 0
    %5216 = vmatpush1.bf16.msra.mxu0 0
    %5217 = vmatprep.subr.bf16.mxu0 0
    %5218 = vmatpush1.bf16.msra.mxu0 0
    %5219 = vmatprep.subr.bf16.mxu0 0
    %5220 = vmatpush1.bf16.msra.mxu0 0
    %5221 = vmatprep.subr.bf16.mxu0 0
    %5222 = vmatpush1.bf16.msra.mxu0 0
    %5223 = vmatprep.subr.bf16.mxu0 0
    %5224 = vmatpush1.bf16.msra.mxu0 0
    %5225 = vmatprep.subr.bf16.mxu0 0
    %5226 = vmatpush1.bf16.msra.mxu0 0
    %5227 = vmatprep.subr.bf16.mxu0 0
    %5228 = vmatpush1.bf16.msra.mxu0 0
    %5229 = vmatprep.subr.bf16.mxu0 0
    %5230 = vmatpush1.bf16.msra.mxu0 0
    %5231 = vmatprep.subr.bf16.mxu0 0
    %5232 = vmatpush1.bf16.msra.mxu0 0
    %5233 = vmatprep.subr.bf16.mxu0 0
    %5234 = vmatpush1.bf16.msra.mxu0 0
    %5235 = vmatprep.subr.bf16.mxu0 0
    %5236 = vmatpush1.bf16.msra.mxu0 0
    %5237 = vmatprep.subr.bf16.mxu0 0
    %5238 = vmatpush1.bf16.msra.mxu0 0
    %5239 = vmatprep.mubr.bf16.mxu0 0
    %5240 = vmatmul.mubr.bf16.gmra.mrb[0].mxu0 %v5202
    %v5241 = vpop.f32.mrb[0].mxu0
    %v5242 = vadd.f32 0.0, %v5241
    %v5243 = vpop.f32.mrb[0].mxu0
    %v5244 = vpop.f32.mrb[0].mxu0
    %v5245 = vpop.f32.mrb[0].mxu0
    %5246 = vdwg.mxu0
    %v5247 = vpack.c.bf16 %v5242, %v5193
    %v5249 = vsel %vm512, %v5247, 0
    %v5252 = vsel %vm636, %v3252, 0
    %5254 = vmatprep.subr.bf16.mxu0 0
    %5255 = vmatpush1.bf16.msra.mxu0 %v5252
    %5256 = vmatprep.subr.bf16.mxu0 0
    %5257 = vmatpush1.bf16.msra.mxu0 0
    %5258 = vmatprep.subr.bf16.mxu0 0
    %5259 = vmatpush1.bf16.msra.mxu0 0
    %5260 = vmatprep.subr.bf16.mxu0 0
    %5261 = vmatpush1.bf16.msra.mxu0 0
    %5262 = vmatprep.subr.bf16.mxu0 0
    %5263 = vmatpush1.bf16.msra.mxu0 0
    %5264 = vmatprep.subr.bf16.mxu0 0
    %5265 = vmatpush1.bf16.msra.mxu0 0
    %5266 = vmatprep.subr.bf16.mxu0 0
    %5267 = vmatpush1.bf16.msra.mxu0 0
    %5268 = vmatprep.subr.bf16.mxu0 0
    %5269 = vmatpush1.bf16.msra.mxu0 0
    %5270 = vmatprep.subr.bf16.mxu0 0
    %5271 = vmatpush1.bf16.msra.mxu0 0
    %5272 = vmatprep.subr.bf16.mxu0 0
    %5273 = vmatpush1.bf16.msra.mxu0 0
    %5274 = vmatprep.subr.bf16.mxu0 0
    %5275 = vmatpush1.bf16.msra.mxu0 0
    %5276 = vmatprep.subr.bf16.mxu0 0
    %5277 = vmatpush1.bf16.msra.mxu0 0
    %5278 = vmatprep.subr.bf16.mxu0 0
    %5279 = vmatpush1.bf16.msra.mxu0 0
    %5280 = vmatprep.subr.bf16.mxu0 0
    %5281 = vmatpush1.bf16.msra.mxu0 0
    %5282 = vmatprep.subr.bf16.mxu0 0
    %5283 = vmatpush1.bf16.msra.mxu0 0
    %5284 = vmatprep.subr.bf16.mxu0 0
    %5285 = vmatpush1.bf16.msra.mxu0 0
    %5286 = vmatprep.mubr.bf16.mxu0 0
    %5287 = vmatmul.mubr.bf16.gmra.mrb[0].mxu0 %v5249
    %v5288 = vpop.f32.mrb[0].mxu0
    %v5289 = vadd.f32 0.0, %v5288
    %v5290 = vpop.f32.mrb[0].mxu0
    %v5291 = vpop.f32.mrb[0].mxu0
    %v5292 = vadd.f32 0.0, %v5291
    %v5293 = vpop.f32.mrb[0].mxu0
    %5294 = vdwg.mxu0
    %v5296 = vsel %vm512, %v5020, 0
    %v5299 = vsel %vm636, %v3251, 0
    %5301 = vmatprep.subr.bf16.mxu0 0
    %5302 = vmatpush1.bf16.msra.mxu0 %v5299
    %5303 = vmatprep.subr.bf16.mxu0 0
    %5304 = vmatpush1.bf16.msra.mxu0 0
    %5305 = vmatprep.subr.bf16.mxu0 0
    %5306 = vmatpush1.bf16.msra.mxu0 0
    %5307 = vmatprep.subr.bf16.mxu0 0
    %5308 = vmatpush1.bf16.msra.mxu0 0
    %5309 = vmatprep.subr.bf16.mxu0 0
    %5310 = vmatpush1.bf16.msra.mxu0 0
    %5311 = vmatprep.subr.bf16.mxu0 0
    %5312 = vmatpush1.bf16.msra.mxu0 0
    %5313 = vmatprep.subr.bf16.mxu0 0
    %5314 = vmatpush1.bf16.msra.mxu0 0
    %5315 = vmatprep.subr.bf16.mxu0 0
    %5316 = vmatpush1.bf16.msra.mxu0 0
    %5317 = vmatprep.subr.bf16.mxu0 0
    %5318 = vmatpush1.bf16.msra.mxu0 0
    %5319 = vmatprep.subr.bf16.mxu0 0
    %5320 = vmatpush1.bf16.msra.mxu0 0
    %5321 = vmatprep.subr.bf16.mxu0 0
    %5322 = vmatpush1.bf16.msra.mxu0 0
    %5323 = vmatprep.subr.bf16.mxu0 0
    %5324 = vmatpush1.bf16.msra.mxu0 0
    %5325 = vmatprep.subr.bf16.mxu0 0
    %5326 = vmatpush1.bf16.msra.mxu0 0
    %5327 = vmatprep.subr.bf16.mxu0 0
    %5328 = vmatpush1.bf16.msra.mxu0 0
    %5329 = vmatprep.subr.bf16.mxu0 0
    %5330 = vmatpush1.bf16.msra.mxu0 0
    %5331 = vmatprep.subr.bf16.mxu0 0
    %5332 = vmatpush1.bf16.msra.mxu0 0
    %5333 = vmatprep.mubr.bf16.mxu0 0
    %5334 = vmatmul.mubr.bf16.gmra.mrb[0].mxu0 %v5296
    %v5335 = vpop.f32.mrb[0].mxu0
    %v5336 = vadd.f32 %v5289, %v5335
    %v5337 = vpop.f32.mrb[0].mxu0
    %v5338 = vpop.f32.mrb[0].mxu0
    %v5339 = vadd.f32 %v5292, %v5338
    %v5340 = vpop.f32.mrb[0].mxu0
    %5341 = vdwg.mxu0
    %5342 = vrot.lane.b32.xlu0 %v4806, 112
    %v5343 = vpop.permute.xlu0 %5342
    %5344 = vrot.lane.b32.xlu0 %v4808, 112
    %v5345 = vpop.permute.xlu0 %5344
    %v5347 = vsel %vm512, %v5343, 0
    %v5350 = vsel %vm512, %v5345, 0
    %5352 = vmatprep.subr.bf16.mxu0 0
    %5353 = vmatpush1.bf16.xpose.msra.mxu0 %v5350
    %5354 = vmatprep.subr.bf16.mxu0 0
    %5355 = vmatpush1.bf16.xpose.msra.mxu0 0
    %5356 = vmatprep.subr.bf16.mxu0 0
    %5357 = vmatpush1.bf16.xpose.msra.mxu0 0
    %5358 = vmatprep.subr.bf16.mxu0 0
    %5359 = vmatpush1.bf16.xpose.msra.mxu0 0
    %5360 = vmatprep.subr.bf16.mxu0 0
    %5361 = vmatpush1.bf16.xpose.msra.mxu0 0
    %5362 = vmatprep.subr.bf16.mxu0 0
    %5363 = vmatpush1.bf16.xpose.msra.mxu0 0
    %5364 = vmatprep.subr.bf16.mxu0 0
    %5365 = vmatpush1.bf16.xpose.msra.mxu0 0
    %5366 = vmatprep.subr.bf16.mxu0 0
    %5367 = vmatpush1.bf16.xpose.msra.mxu0 0
    %5368 = vmatprep.subr.bf16.mxu0 0
    %5369 = vmatpush1.bf16.xpose.msra.mxu0 0
    %5370 = vmatprep.subr.bf16.mxu0 0
    %5371 = vmatpush1.bf16.xpose.msra.mxu0 0
    %5372 = vmatprep.subr.bf16.mxu0 0
    %5373 = vmatpush1.bf16.xpose.msra.mxu0 0
    %5374 = vmatprep.subr.bf16.mxu0 0
    %5375 = vmatpush1.bf16.xpose.msra.mxu0 0
    %5376 = vmatprep.subr.bf16.mxu0 0
    %5377 = vmatpush1.bf16.xpose.msra.mxu0 0
    %5378 = vmatprep.subr.bf16.mxu0 0
    %5379 = vmatpush1.bf16.xpose.msra.mxu0 0
    %5380 = vmatprep.subr.bf16.mxu0 0
    %5381 = vmatpush1.bf16.xpose.msra.mxu0 0
    %5382 = vmatprep.subr.bf16.mxu0 0
    %5383 = vmatpush1.bf16.xpose.msra.mxu0 0
    %5384 = vmatprep.mubr.bf16.mxu0 0
    %5385 = vmatmul.mubr.bf16.gmra.mrb[0].mxu0 %v5347
    %v5386 = vpop.f32.mrb[0].mxu0
    %v5387 = vadd.f32 %v505, %v5386
    %v5388 = vpop.f32.mrb[0].mxu0
    %v5389 = vpop.f32.mrb[0].mxu0
    %v5390 = vpop.f32.mrb[0].mxu0
    %5391 = vdwg.mxu0
    %5392 = vrot.lane.b32.xlu0 %v4807, 112
    %v5393 = vpop.permute.xlu0 %5392
    %5394 = vrot.lane.b32.xlu0 %v4809, 112
    %v5395 = vpop.permute.xlu0 %5394
    %v5397 = vsel %vm512, %v5393, 0
    %v5400 = vsel %vm512, %v5395, 0
    %5402 = vmatprep.subr.bf16.mxu0 0
    %5403 = vmatpush1.bf16.xpose.msra.mxu0 %v5400
    %5404 = vmatprep.subr.bf16.mxu0 0
    %5405 = vmatpush1.bf16.xpose.msra.mxu0 0
    %5406 = vmatprep.subr.bf16.mxu0 0
    %5407 = vmatpush1.bf16.xpose.msra.mxu0 0
    %5408 = vmatprep.subr.bf16.mxu0 0
    %5409 = vmatpush1.bf16.xpose.msra.mxu0 0
    %5410 = vmatprep.subr.bf16.mxu0 0
    %5411 = vmatpush1.bf16.xpose.msra.mxu0 0
    %5412 = vmatprep.subr.bf16.mxu0 0
    %5413 = vmatpush1.bf16.xpose.msra.mxu0 0
    %5414 = vmatprep.subr.bf16.mxu0 0
    %5415 = vmatpush1.bf16.xpose.msra.mxu0 0
    %5416 = vmatprep.subr.bf16.mxu0 0
    %5417 = vmatpush1.bf16.xpose.msra.mxu0 0
    %5418 = vmatprep.subr.bf16.mxu0 0
    %5419 = vmatpush1.bf16.xpose.msra.mxu0 0
    %5420 = vmatprep.subr.bf16.mxu0 0
    %5421 = vmatpush1.bf16.xpose.msra.mxu0 0
    %5422 = vmatprep.subr.bf16.mxu0 0
    %5423 = vmatpush1.bf16.xpose.msra.mxu0 0
    %5424 = vmatprep.subr.bf16.mxu0 0
    %5425 = vmatpush1.bf16.xpose.msra.mxu0 0
    %5426 = vmatprep.subr.bf16.mxu0 0
    %5427 = vmatpush1.bf16.xpose.msra.mxu0 0
    %5428 = vmatprep.subr.bf16.mxu0 0
    %5429 = vmatpush1.bf16.xpose.msra.mxu0 0
    %5430 = vmatprep.subr.bf16.mxu0 0
    %5431 = vmatpush1.bf16.xpose.msra.mxu0 0
    %5432 = vmatprep.subr.bf16.mxu0 0
    %5433 = vmatpush1.bf16.xpose.msra.mxu0 0
    %5434 = vmatprep.mubr.bf16.mxu0 0
    %5435 = vmatmul.mubr.bf16.gmra.mrb[0].mxu0 %v5397
    %v5436 = vpop.f32.mrb[0].mxu0
    %v5437 = vadd.f32 %v509, %v5436
    %v5438 = vpop.f32.mrb[0].mxu0
    %v5439 = vpop.f32.mrb[0].mxu0
    %v5440 = vpop.f32.mrb[0].mxu0
    %5441 = vdwg.mxu0
    %v5442 = vsel %vm512, %v5387, -inf
    %5443 = vmax.xlane.f32.xlu0 %v5442
    %v5444 = vpop.xlane.xlu0 %5443
    %v5445 = vsel %vm512, %v5437, -inf
    %5446 = vmax.xlane.f32.xlu0 %v5445
    %v5447 = vpop.xlane.xlu0 %5446
    %v5448 = vsub.f32 %v5387, %v5444
    %v5449 = vsub.f32 %v5437, %v5447
    %v5450 = vmul.f32 %v5448, 1.442695
    %v5451 = vpow.pop %v5450
    %v5452 = vmul.f32 %v5449, 1.442695
    %v5453 = vpow.pop %v5452
    %v5454 = vsel %vm512, %v5451, 0.0
    %5455 = vadd.xlane.f32.xlu0 %v5454
    %v5456 = vpop.xlane.xlu0 %5455
    %v5457 = vsel %vm512, %v5453, 0.0
    %5458 = vadd.xlane.f32.xlu0 %v5457
    %v5459 = vpop.xlane.xlu0 %5458
    %v5460 = vrcp.pop %v5456
    %v5461 = vrcp.pop %v5459
    %v5462 = vmul.f32 %v5451, %v5460
    %v5463 = vmul.f32 %v5453, %v5461
    %v5464 = vpack.c.bf16 %v5462, %v5462
    %v5465 = vpack.c.bf16 %v5463, %v5463
    %5466 = vrot.lane.b32.xlu0 %v4926, 112
    %v5467 = vpop.permute.xlu0 %5466
    %v5469 = vsel %vm512, %v5464, 0
    %v5472 = vsel %vm636, %v5467, 0
    %5474 = vmatprep.subr.bf16.mxu0 0
    %5475 = vmatpush1.bf16.msra.mxu0 %v5472
    %5476 = vmatprep.subr.bf16.mxu0 0
    %5477 = vmatpush1.bf16.msra.mxu0 0
    %5478 = vmatprep.subr.bf16.mxu0 0
    %5479 = vmatpush1.bf16.msra.mxu0 0
    %5480 = vmatprep.subr.bf16.mxu0 0
    %5481 = vmatpush1.bf16.msra.mxu0 0
    %5482 = vmatprep.subr.bf16.mxu0 0
    %5483 = vmatpush1.bf16.msra.mxu0 0
    %5484 = vmatprep.subr.bf16.mxu0 0
    %5485 = vmatpush1.bf16.msra.mxu0 0
    %5486 = vmatprep.subr.bf16.mxu0 0
    %5487 = vmatpush1.bf16.msra.mxu0 0
    %5488 = vmatprep.subr.bf16.mxu0 0
    %5489 = vmatpush1.bf16.msra.mxu0 0
    %5490 = vmatprep.subr.bf16.mxu0 0
    %5491 = vmatpush1.bf16.msra.mxu0 0
    %5492 = vmatprep.subr.bf16.mxu0 0
    %5493 = vmatpush1.bf16.msra.mxu0 0
    %5494 = vmatprep.subr.bf16.mxu0 0
    %5495 = vmatpush1.bf16.msra.mxu0 0
    %5496 = vmatprep.subr.bf16.mxu0 0
    %5497 = vmatpush1.bf16.msra.mxu0 0
    %5498 = vmatprep.subr.bf16.mxu0 0
    %5499 = vmatpush1.bf16.msra.mxu0 0
    %5500 = vmatprep.subr.bf16.mxu0 0
    %5501 = vmatpush1.bf16.msra.mxu0 0
    %5502 = vmatprep.subr.bf16.mxu0 0
    %5503 = vmatpush1.bf16.msra.mxu0 0
    %5504 = vmatprep.subr.bf16.mxu0 0
    %5505 = vmatpush1.bf16.msra.mxu0 0
    %5506 = vmatprep.mubr.bf16.mxu0 0
    %5507 = vmatmul.mubr.bf16.gmra.mrb[0].mxu0 %v5469
    %v5508 = vpop.f32.mrb[0].mxu0
    %v5509 = vadd.f32 0.0, %v5508
    %v5510 = vpop.f32.mrb[0].mxu0
    %v5511 = vpop.f32.mrb[0].mxu0
    %v5512 = vpop.f32.mrb[0].mxu0
    %5513 = vdwg.mxu0
    %5514 = vrot.lane.b32.xlu0 %v4927, 112
    %v5515 = vpop.permute.xlu0 %5514
    %v5517 = vsel %vm512, %v5465, 0
    %v5520 = vsel %vm636, %v5515, 0
    %5522 = vmatprep.subr.bf16.mxu0 0
    %5523 = vmatpush1.bf16.msra.mxu0 %v5520
    %5524 = vmatprep.subr.bf16.mxu0 0
    %5525 = vmatpush1.bf16.msra.mxu0 0
    %5526 = vmatprep.subr.bf16.mxu0 0
    %5527 = vmatpush1.bf16.msra.mxu0 0
    %5528 = vmatprep.subr.bf16.mxu0 0
    %5529 = vmatpush1.bf16.msra.mxu0 0
    %5530 = vmatprep.subr.bf16.mxu0 0
    %5531 = vmatpush1.bf16.msra.mxu0 0
    %5532 = vmatprep.subr.bf16.mxu0 0
    %5533 = vmatpush1.bf16.msra.mxu0 0
    %5534 = vmatprep.subr.bf16.mxu0 0
    %5535 = vmatpush1.bf16.msra.mxu0 0
    %5536 = vmatprep.subr.bf16.mxu0 0
    %5537 = vmatpush1.bf16.msra.mxu0 0
    %5538 = vmatprep.subr.bf16.mxu0 0
    %5539 = vmatpush1.bf16.msra.mxu0 0
    %5540 = vmatprep.subr.bf16.mxu0 0
    %5541 = vmatpush1.bf16.msra.mxu0 0
    %5542 = vmatprep.subr.bf16.mxu0 0
    %5543 = vmatpush1.bf16.msra.mxu0 0
    %5544 = vmatprep.subr.bf16.mxu0 0
    %5545 = vmatpush1.bf16.msra.mxu0 0
    %5546 = vmatprep.subr.bf16.mxu0 0
    %5547 = vmatpush1.bf16.msra.mxu0 0
    %5548 = vmatprep.subr.bf16.mxu0 0
    %5549 = vmatpush1.bf16.msra.mxu0 0
    %5550 = vmatprep.subr.bf16.mxu0 0
    %5551 = vmatpush1.bf16.msra.mxu0 0
    %5552 = vmatprep.subr.bf16.mxu0 0
    %5553 = vmatpush1.bf16.msra.mxu0 0
    %5554 = vmatprep.mubr.bf16.mxu0 0
    %5555 = vmatmul.mubr.bf16.gmra.mrb[0].mxu0 %v5517
    %v5556 = vpop.f32.mrb[0].mxu0
    %v5557 = vadd.f32 0.0, %v5556
    %v5558 = vpop.f32.mrb[0].mxu0
    %v5559 = vpop.f32.mrb[0].mxu0
    %v5560 = vpop.f32.mrb[0].mxu0
    %5561 = vdwg.mxu0
    %v5562 = vpack.c.bf16 %v5557, %v5509
    %v5564 = vsel %vm512, %v5562, 0
    %v5567 = vsel %vm636, %v3253, 0
    %5569 = vmatprep.subr.bf16.mxu0 0
    %5570 = vmatpush1.bf16.msra.mxu0 %v5567
    %5571 = vmatprep.subr.bf16.mxu0 0
    %5572 = vmatpush1.bf16.msra.mxu0 0
    %5573 = vmatprep.subr.bf16.mxu0 0
    %5574 = vmatpush1.bf16.msra.mxu0 0
    %5575 = vmatprep.subr.bf16.mxu0 0
    %5576 = vmatpush1.bf16.msra.mxu0 0
    %5577 = vmatprep.subr.bf16.mxu0 0
    %5578 = vmatpush1.bf16.msra.mxu0 0
    %5579 = vmatprep.subr.bf16.mxu0 0
    %5580 = vmatpush1.bf16.msra.mxu0 0
    %5581 = vmatprep.subr.bf16.mxu0 0
    %5582 = vmatpush1.bf16.msra.mxu0 0
    %5583 = vmatprep.subr.bf16.mxu0 0
    %5584 = vmatpush1.bf16.msra.mxu0 0
    %5585 = vmatprep.subr.bf16.mxu0 0
    %5586 = vmatpush1.bf16.msra.mxu0 0
    %5587 = vmatprep.subr.bf16.mxu0 0
    %5588 = vmatpush1.bf16.msra.mxu0 0
    %5589 = vmatprep.subr.bf16.mxu0 0
    %5590 = vmatpush1.bf16.msra.mxu0 0
    %5591 = vmatprep.subr.bf16.mxu0 0
    %5592 = vmatpush1.bf16.msra.mxu0 0
    %5593 = vmatprep.subr.bf16.mxu0 0
    %5594 = vmatpush1.bf16.msra.mxu0 0
    %5595 = vmatprep.subr.bf16.mxu0 0
    %5596 = vmatpush1.bf16.msra.mxu0 0
    %5597 = vmatprep.subr.bf16.mxu0 0
    %5598 = vmatpush1.bf16.msra.mxu0 0
    %5599 = vmatprep.subr.bf16.mxu0 0
    %5600 = vmatpush1.bf16.msra.mxu0 0
    %5601 = vmatprep.mubr.bf16.mxu0 0
    %5602 = vmatmul.mubr.bf16.gmra.mrb[0].mxu0 %v5564
    %v5603 = vpop.f32.mrb[0].mxu0
    %v5604 = vadd.f32 0.0, %v5603
    %v5605 = vpop.f32.mrb[0].mxu0
    %v5606 = vpop.f32.mrb[0].mxu0
    %v5607 = vadd.f32 0.0, %v5606
    %v5608 = vpop.f32.mrb[0].mxu0
    %5609 = vdwg.mxu0
    %v5610 = vadd.f32 %v5336, %v5604
    %v5611 = vadd.f32 %v5339, %v5607
    %5612 = vrot.lane.b32.xlu0 %v4806, 104
    %v5613 = vpop.permute.xlu0 %5612
    %5614 = vrot.lane.b32.xlu0 %v4808, 104
    %v5615 = vpop.permute.xlu0 %5614
    %v5617 = vsel %vm512, %v5613, 0
    %v5620 = vsel %vm512, %v5615, 0
    %5622 = vmatprep.subr.bf16.mxu0 0
    %5623 = vmatpush1.bf16.xpose.msra.mxu0 %v5620
    %5624 = vmatprep.subr.bf16.mxu0 0
    %5625 = vmatpush1.bf16.xpose.msra.mxu0 0
    %5626 = vmatprep.subr.bf16.mxu0 0
    %5627 = vmatpush1.bf16.xpose.msra.mxu0 0
    %5628 = vmatprep.subr.bf16.mxu0 0
    %5629 = vmatpush1.bf16.xpose.msra.mxu0 0
    %5630 = vmatprep.subr.bf16.mxu0 0
    %5631 = vmatpush1.bf16.xpose.msra.mxu0 0
    %5632 = vmatprep.subr.bf16.mxu0 0
    %5633 = vmatpush1.bf16.xpose.msra.mxu0 0
    %5634 = vmatprep.subr.bf16.mxu0 0
    %5635 = vmatpush1.bf16.xpose.msra.mxu0 0
    %5636 = vmatprep.subr.bf16.mxu0 0
    %5637 = vmatpush1.bf16.xpose.msra.mxu0 0
    %5638 = vmatprep.subr.bf16.mxu0 0
    %5639 = vmatpush1.bf16.xpose.msra.mxu0 0
    %5640 = vmatprep.subr.bf16.mxu0 0
    %5641 = vmatpush1.bf16.xpose.msra.mxu0 0
    %5642 = vmatprep.subr.bf16.mxu0 0
    %5643 = vmatpush1.bf16.xpose.msra.mxu0 0
    %5644 = vmatprep.subr.bf16.mxu0 0
    %5645 = vmatpush1.bf16.xpose.msra.mxu0 0
    %5646 = vmatprep.subr.bf16.mxu0 0
    %5647 = vmatpush1.bf16.xpose.msra.mxu0 0
    %5648 = vmatprep.subr.bf16.mxu0 0
    %5649 = vmatpush1.bf16.xpose.msra.mxu0 0
    %5650 = vmatprep.subr.bf16.mxu0 0
    %5651 = vmatpush1.bf16.xpose.msra.mxu0 0
    %5652 = vmatprep.subr.bf16.mxu0 0
    %5653 = vmatpush1.bf16.xpose.msra.mxu0 0
    %5654 = vmatprep.mubr.bf16.mxu0 0
    %5655 = vmatmul.mubr.bf16.gmra.mrb[0].mxu0 %v5617
    %v5656 = vpop.f32.mrb[0].mxu0
    %v5657 = vadd.f32 %v505, %v5656
    %v5658 = vpop.f32.mrb[0].mxu0
    %v5659 = vpop.f32.mrb[0].mxu0
    %v5660 = vpop.f32.mrb[0].mxu0
    %5661 = vdwg.mxu0
    %5662 = vrot.lane.b32.xlu0 %v4807, 104
    %v5663 = vpop.permute.xlu0 %5662
    %5664 = vrot.lane.b32.xlu0 %v4809, 104
    %v5665 = vpop.permute.xlu0 %5664
    %v5667 = vsel %vm512, %v5663, 0
    %v5670 = vsel %vm512, %v5665, 0
    %5672 = vmatprep.subr.bf16.mxu0 0
    %5673 = vmatpush1.bf16.xpose.msra.mxu0 %v5670
    %5674 = vmatprep.subr.bf16.mxu0 0
    %5675 = vmatpush1.bf16.xpose.msra.mxu0 0
    %5676 = vmatprep.subr.bf16.mxu0 0
    %5677 = vmatpush1.bf16.xpose.msra.mxu0 0
    %5678 = vmatprep.subr.bf16.mxu0 0
    %5679 = vmatpush1.bf16.xpose.msra.mxu0 0
    %5680 = vmatprep.subr.bf16.mxu0 0
    %5681 = vmatpush1.bf16.xpose.msra.mxu0 0
    %5682 = vmatprep.subr.bf16.mxu0 0
    %5683 = vmatpush1.bf16.xpose.msra.mxu0 0
    %5684 = vmatprep.subr.bf16.mxu0 0
    %5685 = vmatpush1.bf16.xpose.msra.mxu0 0
    %5686 = vmatprep.subr.bf16.mxu0 0
    %5687 = vmatpush1.bf16.xpose.msra.mxu0 0
    %5688 = vmatprep.subr.bf16.mxu0 0
    %5689 = vmatpush1.bf16.xpose.msra.mxu0 0
    %5690 = vmatprep.subr.bf16.mxu0 0
    %5691 = vmatpush1.bf16.xpose.msra.mxu0 0
    %5692 = vmatprep.subr.bf16.mxu0 0
    %5693 = vmatpush1.bf16.xpose.msra.mxu0 0
    %5694 = vmatprep.subr.bf16.mxu0 0
    %5695 = vmatpush1.bf16.xpose.msra.mxu0 0
    %5696 = vmatprep.subr.bf16.mxu0 0
    %5697 = vmatpush1.bf16.xpose.msra.mxu0 0
    %5698 = vmatprep.subr.bf16.mxu0 0
    %5699 = vmatpush1.bf16.xpose.msra.mxu0 0
    %5700 = vmatprep.subr.bf16.mxu0 0
    %5701 = vmatpush1.bf16.xpose.msra.mxu0 0
    %5702 = vmatprep.subr.bf16.mxu0 0
    %5703 = vmatpush1.bf16.xpose.msra.mxu0 0
    %5704 = vmatprep.mubr.bf16.mxu0 0
    %5705 = vmatmul.mubr.bf16.gmra.mrb[0].mxu0 %v5667
    %v5706 = vpop.f32.mrb[0].mxu0
    %v5707 = vadd.f32 %v509, %v5706
    %v5708 = vpop.f32.mrb[0].mxu0
    %v5709 = vpop.f32.mrb[0].mxu0
    %v5710 = vpop.f32.mrb[0].mxu0
    %5711 = vdwg.mxu0
    %v5712 = vsel %vm512, %v5657, -inf
    %5713 = vmax.xlane.f32.xlu0 %v5712
    %v5714 = vpop.xlane.xlu0 %5713
    %v5715 = vsel %vm512, %v5707, -inf
    %5716 = vmax.xlane.f32.xlu0 %v5715
    %v5717 = vpop.xlane.xlu0 %5716
    %v5718 = vsub.f32 %v5657, %v5714
    %v5719 = vsub.f32 %v5707, %v5717
    %v5720 = vmul.f32 %v5718, 1.442695
    %v5721 = vpow.pop %v5720
    %v5722 = vmul.f32 %v5719, 1.442695
    %v5723 = vpow.pop %v5722
    %v5724 = vsel %vm512, %v5721, 0.0
    %5725 = vadd.xlane.f32.xlu0 %v5724
    %v5726 = vpop.xlane.xlu0 %5725
    %v5727 = vsel %vm512, %v5723, 0.0
    %5728 = vadd.xlane.f32.xlu0 %v5727
    %v5729 = vpop.xlane.xlu0 %5728
    %v5730 = vrcp.pop %v5726
    %v5731 = vrcp.pop %v5729
    %v5732 = vmul.f32 %v5721, %v5730
    %v5733 = vmul.f32 %v5723, %v5731
    %v5734 = vpack.c.bf16 %v5732, %v5732
    %v5735 = vpack.c.bf16 %v5733, %v5733
    %5736 = vrot.lane.b32.xlu0 %v4926, 104
    %v5737 = vpop.permute.xlu0 %5736
    %v5739 = vsel %vm512, %v5734, 0
    %v5742 = vsel %vm636, %v5737, 0
    %5744 = vmatprep.subr.bf16.mxu0 0
    %5745 = vmatpush1.bf16.msra.mxu0 %v5742
    %5746 = vmatprep.subr.bf16.mxu0 0
    %5747 = vmatpush1.bf16.msra.mxu0 0
    %5748 = vmatprep.subr.bf16.mxu0 0
    %5749 = vmatpush1.bf16.msra.mxu0 0
    %5750 = vmatprep.subr.bf16.mxu0 0
    %5751 = vmatpush1.bf16.msra.mxu0 0
    %5752 = vmatprep.subr.bf16.mxu0 0
    %5753 = vmatpush1.bf16.msra.mxu0 0
    %5754 = vmatprep.subr.bf16.mxu0 0
    %5755 = vmatpush1.bf16.msra.mxu0 0
    %5756 = vmatprep.subr.bf16.mxu0 0
    %5757 = vmatpush1.bf16.msra.mxu0 0
    %5758 = vmatprep.subr.bf16.mxu0 0
    %5759 = vmatpush1.bf16.msra.mxu0 0
    %5760 = vmatprep.subr.bf16.mxu0 0
    %5761 = vmatpush1.bf16.msra.mxu0 0
    %5762 = vmatprep.subr.bf16.mxu0 0
    %5763 = vmatpush1.bf16.msra.mxu0 0
    %5764 = vmatprep.subr.bf16.mxu0 0
    %5765 = vmatpush1.bf16.msra.mxu0 0
    %5766 = vmatprep.subr.bf16.mxu0 0
    %5767 = vmatpush1.bf16.msra.mxu0 0
    %5768 = vmatprep.subr.bf16.mxu0 0
    %5769 = vmatpush1.bf16.msra.mxu0 0
    %5770 = vmatprep.subr.bf16.mxu0 0
    %5771 = vmatpush1.bf16.msra.mxu0 0
    %5772 = vmatprep.subr.bf16.mxu0 0
    %5773 = vmatpush1.bf16.msra.mxu0 0
    %5774 = vmatprep.subr.bf16.mxu0 0
    %5775 = vmatpush1.bf16.msra.mxu0 0
    %5776 = vmatprep.mubr.bf16.mxu0 0
    %5777 = vmatmul.mubr.bf16.gmra.mrb[0].mxu0 %v5739
    %v5778 = vpop.f32.mrb[0].mxu0
    %v5779 = vadd.f32 0.0, %v5778
    %v5780 = vpop.f32.mrb[0].mxu0
    %v5781 = vpop.f32.mrb[0].mxu0
    %v5782 = vpop.f32.mrb[0].mxu0
    %5783 = vdwg.mxu0
    %5784 = vrot.lane.b32.xlu0 %v4927, 104
    %v5785 = vpop.permute.xlu0 %5784
    %v5787 = vsel %vm512, %v5735, 0
    %v5790 = vsel %vm636, %v5785, 0
    %5792 = vmatprep.subr.bf16.mxu0 0
    %5793 = vmatpush1.bf16.msra.mxu0 %v5790
    %5794 = vmatprep.subr.bf16.mxu0 0
    %5795 = vmatpush1.bf16.msra.mxu0 0
    %5796 = vmatprep.subr.bf16.mxu0 0
    %5797 = vmatpush1.bf16.msra.mxu0 0
    %5798 = vmatprep.subr.bf16.mxu0 0
    %5799 = vmatpush1.bf16.msra.mxu0 0
    %5800 = vmatprep.subr.bf16.mxu0 0
    %5801 = vmatpush1.bf16.msra.mxu0 0
    %5802 = vmatprep.subr.bf16.mxu0 0
    %5803 = vmatpush1.bf16.msra.mxu0 0
    %5804 = vmatprep.subr.bf16.mxu0 0
    %5805 = vmatpush1.bf16.msra.mxu0 0
    %5806 = vmatprep.subr.bf16.mxu0 0
    %5807 = vmatpush1.bf16.msra.mxu0 0
    %5808 = vmatprep.subr.bf16.mxu0 0
    %5809 = vmatpush1.bf16.msra.mxu0 0
    %5810 = vmatprep.subr.bf16.mxu0 0
    %5811 = vmatpush1.bf16.msra.mxu0 0
    %5812 = vmatprep.subr.bf16.mxu0 0
    %5813 = vmatpush1.bf16.msra.mxu0 0
    %5814 = vmatprep.subr.bf16.mxu0 0
    %5815 = vmatpush1.bf16.msra.mxu0 0
    %5816 = vmatprep.subr.bf16.mxu0 0
    %5817 = vmatpush1.bf16.msra.mxu0 0
    %5818 = vmatprep.subr.bf16.mxu0 0
    %5819 = vmatpush1.bf16.msra.mxu0 0
    %5820 = vmatprep.subr.bf16.mxu0 0
    %5821 = vmatpush1.bf16.msra.mxu0 0
    %5822 = vmatprep.subr.bf16.mxu0 0
    %5823 = vmatpush1.bf16.msra.mxu0 0
    %5824 = vmatprep.mubr.bf16.mxu0 0
    %5825 = vmatmul.mubr.bf16.gmra.mrb[0].mxu0 %v5787
    %v5826 = vpop.f32.mrb[0].mxu0
    %v5827 = vadd.f32 0.0, %v5826
    %v5828 = vpop.f32.mrb[0].mxu0
    %v5829 = vpop.f32.mrb[0].mxu0
    %v5830 = vpop.f32.mrb[0].mxu0
    %5831 = vdwg.mxu0
    %v5832 = vpack.c.bf16 %v5827, %v5779
    %v5834 = vsel %vm512, %v5832, 0
    %v5837 = vsel %vm636, %v3254, 0
    %5839 = vmatprep.subr.bf16.mxu0 0
    %5840 = vmatpush1.bf16.msra.mxu0 %v5837
    %5841 = vmatprep.subr.bf16.mxu0 0
    %5842 = vmatpush1.bf16.msra.mxu0 0
    %5843 = vmatprep.subr.bf16.mxu0 0
    %5844 = vmatpush1.bf16.msra.mxu0 0
    %5845 = vmatprep.subr.bf16.mxu0 0
    %5846 = vmatpush1.bf16.msra.mxu0 0
    %5847 = vmatprep.subr.bf16.mxu0 0
    %5848 = vmatpush1.bf16.msra.mxu0 0
    %5849 = vmatprep.subr.bf16.mxu0 0
    %5850 = vmatpush1.bf16.msra.mxu0 0
    %5851 = vmatprep.subr.bf16.mxu0 0
    %5852 = vmatpush1.bf16.msra.mxu0 0
    %5853 = vmatprep.subr.bf16.mxu0 0
    %5854 = vmatpush1.bf16.msra.mxu0 0
    %5855 = vmatprep.subr.bf16.mxu0 0
    %5856 = vmatpush1.bf16.msra.mxu0 0
    %5857 = vmatprep.subr.bf16.mxu0 0
    %5858 = vmatpush1.bf16.msra.mxu0 0
    %5859 = vmatprep.subr.bf16.mxu0 0
    %5860 = vmatpush1.bf16.msra.mxu0 0
    %5861 = vmatprep.subr.bf16.mxu0 0
    %5862 = vmatpush1.bf16.msra.mxu0 0
    %5863 = vmatprep.subr.bf16.mxu0 0
    %5864 = vmatpush1.bf16.msra.mxu0 0
    %5865 = vmatprep.subr.bf16.mxu0 0
    %5866 = vmatpush1.bf16.msra.mxu0 0
    %5867 = vmatprep.subr.bf16.mxu0 0
    %5868 = vmatpush1.bf16.msra.mxu0 0
    %5869 = vmatprep.subr.bf16.mxu0 0
    %5870 = vmatpush1.bf16.msra.mxu0 0
    %5871 = vmatprep.mubr.bf16.mxu0 0
    %5872 = vmatmul.mubr.bf16.gmra.mrb[0].mxu0 %v5834
    %v5873 = vpop.f32.mrb[0].mxu0
    %v5874 = vadd.f32 0.0, %v5873
    %v5875 = vpop.f32.mrb[0].mxu0
    %v5876 = vpop.f32.mrb[0].mxu0
    %v5877 = vadd.f32 0.0, %v5876
    %v5878 = vpop.f32.mrb[0].mxu0
    %5879 = vdwg.mxu0
    %v5880 = vadd.f32 %v5610, %v5874
    %v5881 = vadd.f32 %v5611, %v5877
    %v5882 = vadd.f32 %v4615, %v5880
    %v5883 = vadd.f32 %v4616, %v5881
    %v5884 = vmul.f32 %v5882, %v5882
    %v5885 = vmul.f32 %v5883, %v5883
    %v5886 = vsel %vm311, %v5884, 0.0
    %5887 = vadd.xlane.f32.xlu0 %v5886
    %v5888 = vpop.xlane.xlu0 %5887
    %v5889 = vsel %vm311, %v5885, 0.0
    %5890 = vadd.xlane.f32.xlu0 %v5889
    %v5891 = vpop.xlane.xlu0 %5890
    %v5892 = vmul.f32 %v5888, %v318
    %v5893 = vmul.f32 %v5891, %v318
    %v5894 = vadd.f32 %v5892, 1e-06
    %v5895 = vadd.f32 %v5893, 1e-06
    %v5896 = vrsqrt.pop %v5894
    %v5897 = vrsqrt.pop %v5895
    %v5898 = vmul.f32 %v5882, %v5896
    %v5899 = vmul.f32 %v5883, %v5897
    %v5900 = vlaneseq
    %v5901 = vshrl.u32 %v5900, 7
    %v5902 = vsub.s32 0, %v5901
    %v5903 = vrot.slane %v3285, %v5902
    %v5904 = vmul.f32 %v5898, %v5903
    %v5905 = vmul.f32 %v5899, %v5903
    %v5906 = vpack.c.bf16 %v5905, %v5904
    %v5911 = vunpack.c.l.b16 %v3261
    %v5912 = vunpack.c.l.b16 %v3262
    %v5913 = vunpack.c.l.b16 %v3263
    %v5914 = vunpack.c.l.b16 %v3264
    %v5915 = vpack.c.b16 %v5912, %v5911
    %v5916 = vpack.c.b16 %v5914, %v5913
    %v5920 = vsel %vm311, %v5906, 0
    %5922 = vmatprep.subr.bf16.mxu0 0
    %5923 = vmatpush1.bf16.msra.mxu0 %v5915
    %5924 = vmatprep.subr.bf16.mxu0 0
    %5925 = vmatpush1.bf16.msra.mxu0 %v5916
    %5926 = vmatprep.subr.bf16.mxu0 0
    %5927 = vmatpush1.bf16.msra.mxu0 0
    %5928 = vmatprep.subr.bf16.mxu0 0
    %5929 = vmatpush1.bf16.msra.mxu0 0
    %5930 = vmatprep.subr.bf16.mxu0 0
    %5931 = vmatpush1.bf16.msra.mxu0 0
    %5932 = vmatprep.subr.bf16.mxu0 0
    %5933 = vmatpush1.bf16.msra.mxu0 0
    %5934 = vmatprep.subr.bf16.mxu0 0
    %5935 = vmatpush1.bf16.msra.mxu0 0
    %5936 = vmatprep.subr.bf16.mxu0 0
    %5937 = vmatpush1.bf16.msra.mxu0 0
    %5938 = vmatprep.subr.bf16.mxu0 0
    %5939 = vmatpush1.bf16.msra.mxu0 0
    %5940 = vmatprep.subr.bf16.mxu0 0
    %5941 = vmatpush1.bf16.msra.mxu0 0
    %5942 = vmatprep.subr.bf16.mxu0 0
    %5943 = vmatpush1.bf16.msra.mxu0 0
    %5944 = vmatprep.subr.bf16.mxu0 0
    %5945 = vmatpush1.bf16.msra.mxu0 0
    %5946 = vmatprep.subr.bf16.mxu0 0
    %5947 = vmatpush1.bf16.msra.mxu0 0
    %5948 = vmatprep.subr.bf16.mxu0 0
    %5949 = vmatpush1.bf16.msra.mxu0 0
    %5950 = vmatprep.subr.bf16.mxu0 0
    %5951 = vmatpush1.bf16.msra.mxu0 0
    %5952 = vmatprep.subr.bf16.mxu0 0
    %5953 = vmatpush1.bf16.msra.mxu0 0
    %5954 = vmatprep.mubr.bf16.mxu0 0
    %5955 = vmatmul.mubr.bf16.gmra.mrb[0].mxu0 %v5920
    %v5956 = vpop.f32.mrb[0].mxu0
    %v5957 = vadd.f32 0.0, %v5956
    %v5958 = vpop.f32.mrb[0].mxu0
    %v5959 = vpop.f32.mrb[0].mxu0
    %v5960 = vadd.f32 0.0, %v5959
    %v5961 = vpop.f32.mrb[0].mxu0
    %5962 = vdwg.mxu0
    %v5963 = vmax.f32 %v5957, 0.0
    %v5964 = vmax.f32 %v5960, 0.0
    %v5965 = vpack.c.bf16 %v5964, %v5963
    %v5974 = vunpack.c.l.b16 %v3269
    %v5975 = vunpack.c.l.b16 %v3270
    %v5976 = vunpack.c.l.b16 %v3271
    %v5977 = vunpack.c.l.b16 %v3272
    %v5978 = vunpack.c.l.b16 %v3273
    %v5979 = vunpack.c.l.b16 %v3274
    %v5980 = vunpack.c.l.b16 %v3275
    %v5981 = vunpack.c.l.b16 %v3276
    %v5982 = vpack.c.b16 %v5975, %v5974
    %v5983 = vpack.c.b16 %v5977, %v5976
    %v5984 = vpack.c.b16 %v5979, %v5978
    %v5985 = vpack.c.b16 %v5981, %v5980
    %v5991 = vsel %vm264, %v5965, 0
    %5993 = vmatprep.subr.bf16.mxu0 0
    %5994 = vmatpush1.bf16.msra.mxu0 %v5982
    %5995 = vmatprep.subr.bf16.mxu0 0
    %5996 = vmatpush1.bf16.msra.mxu0 %v5983
    %5997 = vmatprep.subr.bf16.mxu0 0
    %5998 = vmatpush1.bf16.msra.mxu0 %v5984
    %5999 = vmatprep.subr.bf16.mxu0 0
    %6000 = vmatpush1.bf16.msra.mxu0 %v5985
    %6001 = vmatprep.subr.bf16.mxu0 0
    %6002 = vmatpush1.bf16.msra.mxu0 0
    %6003 = vmatprep.subr.bf16.mxu0 0
    %6004 = vmatpush1.bf16.msra.mxu0 0
    %6005 = vmatprep.subr.bf16.mxu0 0
    %6006 = vmatpush1.bf16.msra.mxu0 0
    %6007 = vmatprep.subr.bf16.mxu0 0
    %6008 = vmatpush1.bf16.msra.mxu0 0
    %6009 = vmatprep.subr.bf16.mxu0 0
    %6010 = vmatpush1.bf16.msra.mxu0 0
    %6011 = vmatprep.subr.bf16.mxu0 0
    %6012 = vmatpush1.bf16.msra.mxu0 0
    %6013 = vmatprep.subr.bf16.mxu0 0
    %6014 = vmatpush1.bf16.msra.mxu0 0
    %6015 = vmatprep.subr.bf16.mxu0 0
    %6016 = vmatpush1.bf16.msra.mxu0 0
    %6017 = vmatprep.subr.bf16.mxu0 0
    %6018 = vmatpush1.bf16.msra.mxu0 0
    %6019 = vmatprep.subr.bf16.mxu0 0
    %6020 = vmatpush1.bf16.msra.mxu0 0
    %6021 = vmatprep.subr.bf16.mxu0 0
    %6022 = vmatpush1.bf16.msra.mxu0 0
    %6023 = vmatprep.subr.bf16.mxu0 0
    %6024 = vmatpush1.bf16.msra.mxu0 0
    %6025 = vmatprep.mubr.bf16.mxu0 0
    %6026 = vmatmul.mubr.bf16.gmra.mrb[0].mxu0 %v5991
    %v6027 = vpop.f32.mrb[0].mxu0
    %v6028 = vadd.f32 0.0, %v6027
    %v6029 = vpop.f32.mrb[0].mxu0
    %v6030 = vpop.f32.mrb[0].mxu0
    %v6031 = vadd.f32 0.0, %v6030
    %v6032 = vpop.f32.mrb[0].mxu0
    %6033 = vdwg.mxu0
    %v6034 = vadd.f32 %v5882, %v6028
    %v6035 = vadd.f32 %v5883, %v6031
    %v6036 = vmul.f32 %v6034, %v6034
    %v6037 = vmul.f32 %v6035, %v6035
    %v6038 = vsel %vm311, %v6036, 0.0
    %6039 = vadd.xlane.f32.xlu0 %v6038
    %v6040 = vpop.xlane.xlu0 %6039
    %v6041 = vsel %vm311, %v6037, 0.0
    %6042 = vadd.xlane.f32.xlu0 %v6041
    %v6043 = vpop.xlane.xlu0 %6042
    %v6044 = vmul.f32 %v6040, %v318
    %v6045 = vmul.f32 %v6043, %v318
    %v6046 = vadd.f32 %v6044, 1e-06
    %v6047 = vadd.f32 %v6045, 1e-06
    %v6048 = vrsqrt.pop %v6046
    %v6049 = vrsqrt.pop %v6047
    %v6050 = vmul.f32 %v6034, %v6048
    %v6051 = vmul.f32 %v6035, %v6049
    %v6052 = vlaneseq
    %v6053 = vshrl.u32 %v6052, 7
    %v6054 = vsub.s32 1, %v6053
    %v6055 = vrot.slane %v3259, %v6054
    %v6056 = vmul.f32 %v6050, %v6055
    %v6057 = vmul.f32 %v6051, %v6055
    %v6058 = vpack.c.bf16 %v6057, %v6056
    %v6063 = vunpack.c.l.b16 %v3199
    %v6064 = vunpack.c.l.b16 %v3200
    %v6065 = vunpack.c.l.b16 %v3201
    %v6066 = vunpack.c.l.b16 %v3202
    %v6067 = vpack.c.b16 %v6064, %v6063
    %v6068 = vpack.c.b16 %v6066, %v6065
    %v6072 = vsel %vm311, %v6058, 0
    %6074 = vmatprep.subr.bf16.mxu0 0
    %6075 = vmatpush1.bf16.msra.mxu0 %v6067
    %6076 = vmatprep.subr.bf16.mxu0 0
    %6077 = vmatpush1.bf16.msra.mxu0 %v6068
    %6078 = vmatprep.subr.bf16.mxu0 0
    %6079 = vmatpush1.bf16.msra.mxu0 0
    %6080 = vmatprep.subr.bf16.mxu0 0
    %6081 = vmatpush1.bf16.msra.mxu0 0
    %6082 = vmatprep.subr.bf16.mxu0 0
    %6083 = vmatpush1.bf16.msra.mxu0 0
    %6084 = vmatprep.subr.bf16.mxu0 0
    %6085 = vmatpush1.bf16.msra.mxu0 0
    %6086 = vmatprep.subr.bf16.mxu0 0
    %6087 = vmatpush1.bf16.msra.mxu0 0
    %6088 = vmatprep.subr.bf16.mxu0 0
    %6089 = vmatpush1.bf16.msra.mxu0 0
    %6090 = vmatprep.subr.bf16.mxu0 0
    %6091 = vmatpush1.bf16.msra.mxu0 0
    %6092 = vmatprep.subr.bf16.mxu0 0
    %6093 = vmatpush1.bf16.msra.mxu0 0
    %6094 = vmatprep.subr.bf16.mxu0 0
    %6095 = vmatpush1.bf16.msra.mxu0 0
    %6096 = vmatprep.subr.bf16.mxu0 0
    %6097 = vmatpush1.bf16.msra.mxu0 0
    %6098 = vmatprep.subr.bf16.mxu0 0
    %6099 = vmatpush1.bf16.msra.mxu0 0
    %6100 = vmatprep.subr.bf16.mxu0 0
    %6101 = vmatpush1.bf16.msra.mxu0 0
    %6102 = vmatprep.subr.bf16.mxu0 0
    %6103 = vmatpush1.bf16.msra.mxu0 0
    %6104 = vmatprep.subr.bf16.mxu0 0
    %6105 = vmatpush1.bf16.msra.mxu0 0
    %6106 = vmatprep.mubr.bf16.mxu0 0
    %6107 = vmatmul.mubr.bf16.gmra.mrb[0].mxu0 %v6072
    %v6108 = vpop.f32.mrb[0].mxu0
    %v6109 = vadd.f32 0.0, %v6108
    %v6110 = vpop.f32.mrb[0].mxu0
    %v6111 = vpop.f32.mrb[0].mxu0
    %v6112 = vadd.f32 0.0, %v6111
    %v6113 = vpop.f32.mrb[0].mxu0
    %6114 = vdwg.mxu0
    %v6119 = vunpack.c.l.b16 %v3207
    %v6120 = vunpack.c.l.b16 %v3208
    %v6121 = vunpack.c.l.b16 %v3209
    %v6122 = vunpack.c.l.b16 %v3210
    %v6123 = vpack.c.b16 %v6120, %v6119
    %v6124 = vpack.c.b16 %v6122, %v6121
    %6127 = vmatprep.subr.bf16.mxu0 0
    %6128 = vmatpush1.bf16.msra.mxu0 %v6123
    %6129 = vmatprep.subr.bf16.mxu0 0
    %6130 = vmatpush1.bf16.msra.mxu0 %v6124
    %6131 = vmatprep.subr.bf16.mxu0 0
    %6132 = vmatpush1.bf16.msra.mxu0 0
    %6133 = vmatprep.subr.bf16.mxu0 0
    %6134 = vmatpush1.bf16.msra.mxu0 0
    %6135 = vmatprep.subr.bf16.mxu0 0
    %6136 = vmatpush1.bf16.msra.mxu0 0
    %6137 = vmatprep.subr.bf16.mxu0 0
    %6138 = vmatpush1.bf16.msra.mxu0 0
    %6139 = vmatprep.subr.bf16.mxu0 0
    %6140 = vmatpush1.bf16.msra.mxu0 0
    %6141 = vmatprep.subr.bf16.mxu0 0
    %6142 = vmatpush1.bf16.msra.mxu0 0
    %6143 = vmatprep.subr.bf16.mxu0 0
    %6144 = vmatpush1.bf16.msra.mxu0 0
    %6145 = vmatprep.subr.bf16.mxu0 0
    %6146 = vmatpush1.bf16.msra.mxu0 0
    %6147 = vmatprep.subr.bf16.mxu0 0
    %6148 = vmatpush1.bf16.msra.mxu0 0
    %6149 = vmatprep.subr.bf16.mxu0 0
    %6150 = vmatpush1.bf16.msra.mxu0 0
    %6151 = vmatprep.subr.bf16.mxu0 0
    %6152 = vmatpush1.bf16.msra.mxu0 0
    %6153 = vmatprep.subr.bf16.mxu0 0
    %6154 = vmatpush1.bf16.msra.mxu0 0
    %6155 = vmatprep.subr.bf16.mxu0 0
    %6156 = vmatpush1.bf16.msra.mxu0 0
    %6157 = vmatprep.subr.bf16.mxu0 0
    %6158 = vmatpush1.bf16.msra.mxu0 0
    %6159 = vmatprep.mubr.bf16.mxu0 0
    %6160 = vmatmul.mubr.bf16.gmra.mrb[0].mxu0 %v6072
    %v6161 = vpop.f32.mrb[0].mxu0
    %v6162 = vadd.f32 0.0, %v6161
    %v6163 = vpop.f32.mrb[0].mxu0
    %v6164 = vpop.f32.mrb[0].mxu0
    %v6165 = vadd.f32 0.0, %v6164
    %v6166 = vpop.f32.mrb[0].mxu0
    %6167 = vdwg.mxu0
    %v6172 = vunpack.c.l.b16 %v3215
    %v6173 = vunpack.c.l.b16 %v3216
    %v6174 = vunpack.c.l.b16 %v3217
    %v6175 = vunpack.c.l.b16 %v3218
    %v6176 = vpack.c.b16 %v6173, %v6172
    %v6177 = vpack.c.b16 %v6175, %v6174
    %6180 = vmatprep.subr.bf16.mxu0 0
    %6181 = vmatpush1.bf16.msra.mxu0 %v6176
    %6182 = vmatprep.subr.bf16.mxu0 0
    %6183 = vmatpush1.bf16.msra.mxu0 %v6177
    %6184 = vmatprep.subr.bf16.mxu0 0
    %6185 = vmatpush1.bf16.msra.mxu0 0
    %6186 = vmatprep.subr.bf16.mxu0 0
    %6187 = vmatpush1.bf16.msra.mxu0 0
    %6188 = vmatprep.subr.bf16.mxu0 0
    %6189 = vmatpush1.bf16.msra.mxu0 0
    %6190 = vmatprep.subr.bf16.mxu0 0
    %6191 = vmatpush1.bf16.msra.mxu0 0
    %6192 = vmatprep.subr.bf16.mxu0 0
    %6193 = vmatpush1.bf16.msra.mxu0 0
    %6194 = vmatprep.subr.bf16.mxu0 0
    %6195 = vmatpush1.bf16.msra.mxu0 0
    %6196 = vmatprep.subr.bf16.mxu0 0
    %6197 = vmatpush1.bf16.msra.mxu0 0
    %6198 = vmatprep.subr.bf16.mxu0 0
    %6199 = vmatpush1.bf16.msra.mxu0 0
    %6200 = vmatprep.subr.bf16.mxu0 0
    %6201 = vmatpush1.bf16.msra.mxu0 0
    %6202 = vmatprep.subr.bf16.mxu0 0
    %6203 = vmatpush1.bf16.msra.mxu0 0
    %6204 = vmatprep.subr.bf16.mxu0 0
    %6205 = vmatpush1.bf16.msra.mxu0 0
    %6206 = vmatprep.subr.bf16.mxu0 0
    %6207 = vmatpush1.bf16.msra.mxu0 0
    %6208 = vmatprep.subr.bf16.mxu0 0
    %6209 = vmatpush1.bf16.msra.mxu0 0
    %6210 = vmatprep.subr.bf16.mxu0 0
    %6211 = vmatpush1.bf16.msra.mxu0 0
    %6212 = vmatprep.mubr.bf16.mxu0 0
    %6213 = vmatmul.mubr.bf16.gmra.mrb[0].mxu0 %v6072
    %v6214 = vpop.f32.mrb[0].mxu0
    %v6215 = vadd.f32 0.0, %v6214
    %v6216 = vpop.f32.mrb[0].mxu0
    %v6217 = vpop.f32.mrb[0].mxu0
    %v6218 = vadd.f32 0.0, %v6217
    %v6219 = vpop.f32.mrb[0].mxu0
    %6220 = vdwg.mxu0
    %v6221 = vpack.c.bf16 %v6109, %v6109
    %v6222 = vpack.c.bf16 %v6112, %v6112
    %v6223 = vpack.c.bf16 %v6162, %v6162
    %v6224 = vpack.c.bf16 %v6165, %v6165
    %v6226 = vsel %vm512, %v6221, 0
    %v6229 = vsel %vm512, %v6223, 0
    %6231 = vmatprep.subr.bf16.mxu0 0
    %6232 = vmatpush1.bf16.xpose.msra.mxu0 %v6229
    %6233 = vmatprep.subr.bf16.mxu0 0
    %6234 = vmatpush1.bf16.xpose.msra.mxu0 0
    %6235 = vmatprep.subr.bf16.mxu0 0
    %6236 = vmatpush1.bf16.xpose.msra.mxu0 0
    %6237 = vmatprep.subr.bf16.mxu0 0
    %6238 = vmatpush1.bf16.xpose.msra.mxu0 0
    %6239 = vmatprep.subr.bf16.mxu0 0
    %6240 = vmatpush1.bf16.xpose.msra.mxu0 0
    %6241 = vmatprep.subr.bf16.mxu0 0
    %6242 = vmatpush1.bf16.xpose.msra.mxu0 0
    %6243 = vmatprep.subr.bf16.mxu0 0
    %6244 = vmatpush1.bf16.xpose.msra.mxu0 0
    %6245 = vmatprep.subr.bf16.mxu0 0
    %6246 = vmatpush1.bf16.xpose.msra.mxu0 0
    %6247 = vmatprep.subr.bf16.mxu0 0
    %6248 = vmatpush1.bf16.xpose.msra.mxu0 0
    %6249 = vmatprep.subr.bf16.mxu0 0
    %6250 = vmatpush1.bf16.xpose.msra.mxu0 0
    %6251 = vmatprep.subr.bf16.mxu0 0
    %6252 = vmatpush1.bf16.xpose.msra.mxu0 0
    %6253 = vmatprep.subr.bf16.mxu0 0
    %6254 = vmatpush1.bf16.xpose.msra.mxu0 0
    %6255 = vmatprep.subr.bf16.mxu0 0
    %6256 = vmatpush1.bf16.xpose.msra.mxu0 0
    %6257 = vmatprep.subr.bf16.mxu0 0
    %6258 = vmatpush1.bf16.xpose.msra.mxu0 0
    %6259 = vmatprep.subr.bf16.mxu0 0
    %6260 = vmatpush1.bf16.xpose.msra.mxu0 0
    %6261 = vmatprep.subr.bf16.mxu0 0
    %6262 = vmatpush1.bf16.xpose.msra.mxu0 0
    %6263 = vmatprep.mubr.bf16.mxu0 0
    %6264 = vmatmul.mubr.bf16.gmra.mrb[0].mxu0 %v6226
    %v6265 = vpop.f32.mrb[0].mxu0
    %v6266 = vadd.f32 %v162, %v6265
    %v6267 = vpop.f32.mrb[0].mxu0
    %v6268 = vpop.f32.mrb[0].mxu0
    %v6269 = vpop.f32.mrb[0].mxu0
    %6270 = vdwg.mxu0
    %v6272 = vsel %vm512, %v6222, 0
    %v6275 = vsel %vm512, %v6224, 0
    %6277 = vmatprep.subr.bf16.mxu0 0
    %6278 = vmatpush1.bf16.xpose.msra.mxu0 %v6275
    %6279 = vmatprep.subr.bf16.mxu0 0
    %6280 = vmatpush1.bf16.xpose.msra.mxu0 0
    %6281 = vmatprep.subr.bf16.mxu0 0
    %6282 = vmatpush1.bf16.xpose.msra.mxu0 0
    %6283 = vmatprep.subr.bf16.mxu0 0
    %6284 = vmatpush1.bf16.xpose.msra.mxu0 0
    %6285 = vmatprep.subr.bf16.mxu0 0
    %6286 = vmatpush1.bf16.xpose.msra.mxu0 0
    %6287 = vmatprep.subr.bf16.mxu0 0
    %6288 = vmatpush1.bf16.xpose.msra.mxu0 0
    %6289 = vmatprep.subr.bf16.mxu0 0
    %6290 = vmatpush1.bf16.xpose.msra.mxu0 0
    %6291 = vmatprep.subr.bf16.mxu0 0
    %6292 = vmatpush1.bf16.xpose.msra.mxu0 0
    %6293 = vmatprep.subr.bf16.mxu0 0
    %6294 = vmatpush1.bf16.xpose.msra.mxu0 0
    %6295 = vmatprep.subr.bf16.mxu0 0
    %6296 = vmatpush1.bf16.xpose.msra.mxu0 0
    %6297 = vmatprep.subr.bf16.mxu0 0
    %6298 = vmatpush1.bf16.xpose.msra.mxu0 0
    %6299 = vmatprep.subr.bf16.mxu0 0
    %6300 = vmatpush1.bf16.xpose.msra.mxu0 0
    %6301 = vmatprep.subr.bf16.mxu0 0
    %6302 = vmatpush1.bf16.xpose.msra.mxu0 0
    %6303 = vmatprep.subr.bf16.mxu0 0
    %6304 = vmatpush1.bf16.xpose.msra.mxu0 0
    %6305 = vmatprep.subr.bf16.mxu0 0
    %6306 = vmatpush1.bf16.xpose.msra.mxu0 0
    %6307 = vmatprep.subr.bf16.mxu0 0
    %6308 = vmatpush1.bf16.xpose.msra.mxu0 0
    %6309 = vmatprep.mubr.bf16.mxu0 0
    %6310 = vmatmul.mubr.bf16.gmra.mrb[0].mxu0 %v6272
    %v6311 = vpop.f32.mrb[0].mxu0
    %v6312 = vadd.f32 %v163, %v6311
    %v6313 = vpop.f32.mrb[0].mxu0
    %v6314 = vpop.f32.mrb[0].mxu0
    %v6315 = vpop.f32.mrb[0].mxu0
    %6316 = vdwg.mxu0
    %v6317 = vadd.f32 %v6266, %v156
    %v6318 = vadd.f32 %v6312, %v156
    %v6319 = vsel %vm512, %v6317, -inf
    %6320 = vmax.xlane.f32.xlu0 %v6319
    %v6321 = vpop.xlane.xlu0 %6320
    %v6322 = vsel %vm512, %v6318, -inf
    %6323 = vmax.xlane.f32.xlu0 %v6322
    %v6324 = vpop.xlane.xlu0 %6323
    %v6325 = vsub.f32 %v6317, %v6321
    %v6326 = vsub.f32 %v6318, %v6324
    %v6327 = vmul.f32 %v6325, 1.442695
    %v6328 = vpow.pop %v6327
    %v6329 = vmul.f32 %v6326, 1.442695
    %v6330 = vpow.pop %v6329
    %v6331 = vsel %vm512, %v6328, 0.0
    %6332 = vadd.xlane.f32.xlu0 %v6331
    %v6333 = vpop.xlane.xlu0 %6332
    %v6334 = vsel %vm512, %v6330, 0.0
    %6335 = vadd.xlane.f32.xlu0 %v6334
    %v6336 = vpop.xlane.xlu0 %6335
    %v6337 = vrcp.pop %v6333
    %v6338 = vrcp.pop %v6336
    %v6339 = vmul.f32 %v6328, %v6337
    %v6340 = vmul.f32 %v6330, %v6338
    %v6341 = vpack.c.bf16 %v6339, %v6339
    %v6342 = vpack.c.bf16 %v6340, %v6340
    %v6343 = vpack.c.bf16 %v6215, %v6215
    %v6344 = vpack.c.bf16 %v6218, %v6218
    %v6346 = vsel %vm512, %v6341, 0
    %v6349 = vsel %vm636, %v6343, 0
    %6351 = vmatprep.subr.bf16.mxu0 0
    %6352 = vmatpush1.bf16.msra.mxu0 %v6349
    %6353 = vmatprep.subr.bf16.mxu0 0
    %6354 = vmatpush1.bf16.msra.mxu0 0
    %6355 = vmatprep.subr.bf16.mxu0 0
    %6356 = vmatpush1.bf16.msra.mxu0 0
    %6357 = vmatprep.subr.bf16.mxu0 0
    %6358 = vmatpush1.bf16.msra.mxu0 0
    %6359 = vmatprep.subr.bf16.mxu0 0
    %6360 = vmatpush1.bf16.msra.mxu0 0
    %6361 = vmatprep.subr.bf16.mxu0 0
    %6362 = vmatpush1.bf16.msra.mxu0 0
    %6363 = vmatprep.subr.bf16.mxu0 0
    %6364 = vmatpush1.bf16.msra.mxu0 0
    %6365 = vmatprep.subr.bf16.mxu0 0
    %6366 = vmatpush1.bf16.msra.mxu0 0
    %6367 = vmatprep.subr.bf16.mxu0 0
    %6368 = vmatpush1.bf16.msra.mxu0 0
    %6369 = vmatprep.subr.bf16.mxu0 0
    %6370 = vmatpush1.bf16.msra.mxu0 0
    %6371 = vmatprep.subr.bf16.mxu0 0
    %6372 = vmatpush1.bf16.msra.mxu0 0
    %6373 = vmatprep.subr.bf16.mxu0 0
    %6374 = vmatpush1.bf16.msra.mxu0 0
    %6375 = vmatprep.subr.bf16.mxu0 0
    %6376 = vmatpush1.bf16.msra.mxu0 0
    %6377 = vmatprep.subr.bf16.mxu0 0
    %6378 = vmatpush1.bf16.msra.mxu0 0
    %6379 = vmatprep.subr.bf16.mxu0 0
    %6380 = vmatpush1.bf16.msra.mxu0 0
    %6381 = vmatprep.subr.bf16.mxu0 0
    %6382 = vmatpush1.bf16.msra.mxu0 0
    %6383 = vmatprep.mubr.bf16.mxu0 0
    %6384 = vmatmul.mubr.bf16.gmra.mrb[0].mxu0 %v6346
    %v6385 = vpop.f32.mrb[0].mxu0
    %v6386 = vadd.f32 0.0, %v6385
    %v6387 = vpop.f32.mrb[0].mxu0
    %v6388 = vpop.f32.mrb[0].mxu0
    %v6389 = vpop.f32.mrb[0].mxu0
    %6390 = vdwg.mxu0
    %v6392 = vsel %vm512, %v6342, 0
    %v6395 = vsel %vm636, %v6344, 0
    %6397 = vmatprep.subr.bf16.mxu0 0
    %6398 = vmatpush1.bf16.msra.mxu0 %v6395
    %6399 = vmatprep.subr.bf16.mxu0 0
    %6400 = vmatpush1.bf16.msra.mxu0 0
    %6401 = vmatprep.subr.bf16.mxu0 0
    %6402 = vmatpush1.bf16.msra.mxu0 0
    %6403 = vmatprep.subr.bf16.mxu0 0
    %6404 = vmatpush1.bf16.msra.mxu0 0
    %6405 = vmatprep.subr.bf16.mxu0 0
    %6406 = vmatpush1.bf16.msra.mxu0 0
    %6407 = vmatprep.subr.bf16.mxu0 0
    %6408 = vmatpush1.bf16.msra.mxu0 0
    %6409 = vmatprep.subr.bf16.mxu0 0
    %6410 = vmatpush1.bf16.msra.mxu0 0
    %6411 = vmatprep.subr.bf16.mxu0 0
    %6412 = vmatpush1.bf16.msra.mxu0 0
    %6413 = vmatprep.subr.bf16.mxu0 0
    %6414 = vmatpush1.bf16.msra.mxu0 0
    %6415 = vmatprep.subr.bf16.mxu0 0
    %6416 = vmatpush1.bf16.msra.mxu0 0
    %6417 = vmatprep.subr.bf16.mxu0 0
    %6418 = vmatpush1.bf16.msra.mxu0 0
    %6419 = vmatprep.subr.bf16.mxu0 0
    %6420 = vmatpush1.bf16.msra.mxu0 0
    %6421 = vmatprep.subr.bf16.mxu0 0
    %6422 = vmatpush1.bf16.msra.mxu0 0
    %6423 = vmatprep.subr.bf16.mxu0 0
    %6424 = vmatpush1.bf16.msra.mxu0 0
    %6425 = vmatprep.subr.bf16.mxu0 0
    %6426 = vmatpush1.bf16.msra.mxu0 0
    %6427 = vmatprep.subr.bf16.mxu0 0
    %6428 = vmatpush1.bf16.msra.mxu0 0
    %6429 = vmatprep.mubr.bf16.mxu0 0
    %6430 = vmatmul.mubr.bf16.gmra.mrb[0].mxu0 %v6392
    %v6431 = vpop.f32.mrb[0].mxu0
    %v6432 = vadd.f32 0.0, %v6431
    %v6433 = vpop.f32.mrb[0].mxu0
    %v6434 = vpop.f32.mrb[0].mxu0
    %v6435 = vpop.f32.mrb[0].mxu0
    %6436 = vdwg.mxu0
    %v6437 = vpack.c.bf16 %v6432, %v6386
    %6439 = vrot.lane.b32.xlu0 %v6221, 120
    %v6440 = vpop.permute.xlu0 %6439
    %6442 = vrot.lane.b32.xlu0 %v6223, 120
    %v6443 = vpop.permute.xlu0 %6442
    %v6445 = vsel %vm512, %v6440, 0
    %v6448 = vsel %vm512, %v6443, 0
    %6450 = vmatprep.subr.bf16.mxu0 0
    %6451 = vmatpush1.bf16.xpose.msra.mxu0 %v6448
    %6452 = vmatprep.subr.bf16.mxu0 0
    %6453 = vmatpush1.bf16.xpose.msra.mxu0 0
    %6454 = vmatprep.subr.bf16.mxu0 0
    %6455 = vmatpush1.bf16.xpose.msra.mxu0 0
    %6456 = vmatprep.subr.bf16.mxu0 0
    %6457 = vmatpush1.bf16.xpose.msra.mxu0 0
    %6458 = vmatprep.subr.bf16.mxu0 0
    %6459 = vmatpush1.bf16.xpose.msra.mxu0 0
    %6460 = vmatprep.subr.bf16.mxu0 0
    %6461 = vmatpush1.bf16.xpose.msra.mxu0 0
    %6462 = vmatprep.subr.bf16.mxu0 0
    %6463 = vmatpush1.bf16.xpose.msra.mxu0 0
    %6464 = vmatprep.subr.bf16.mxu0 0
    %6465 = vmatpush1.bf16.xpose.msra.mxu0 0
    %6466 = vmatprep.subr.bf16.mxu0 0
    %6467 = vmatpush1.bf16.xpose.msra.mxu0 0
    %6468 = vmatprep.subr.bf16.mxu0 0
    %6469 = vmatpush1.bf16.xpose.msra.mxu0 0
    %6470 = vmatprep.subr.bf16.mxu0 0
    %6471 = vmatpush1.bf16.xpose.msra.mxu0 0
    %6472 = vmatprep.subr.bf16.mxu0 0
    %6473 = vmatpush1.bf16.xpose.msra.mxu0 0
    %6474 = vmatprep.subr.bf16.mxu0 0
    %6475 = vmatpush1.bf16.xpose.msra.mxu0 0
    %6476 = vmatprep.subr.bf16.mxu0 0
    %6477 = vmatpush1.bf16.xpose.msra.mxu0 0
    %6478 = vmatprep.subr.bf16.mxu0 0
    %6479 = vmatpush1.bf16.xpose.msra.mxu0 0
    %6480 = vmatprep.subr.bf16.mxu0 0
    %6481 = vmatpush1.bf16.xpose.msra.mxu0 0
    %6482 = vmatprep.mubr.bf16.mxu0 0
    %6483 = vmatmul.mubr.bf16.gmra.mrb[0].mxu0 %v6445
    %v6484 = vpop.f32.mrb[0].mxu0
    %v6485 = vadd.f32 %v162, %v6484
    %v6486 = vpop.f32.mrb[0].mxu0
    %v6487 = vpop.f32.mrb[0].mxu0
    %v6488 = vpop.f32.mrb[0].mxu0
    %6489 = vdwg.mxu0
    %6491 = vrot.lane.b32.xlu0 %v6222, 120
    %v6492 = vpop.permute.xlu0 %6491
    %6494 = vrot.lane.b32.xlu0 %v6224, 120
    %v6495 = vpop.permute.xlu0 %6494
    %v6497 = vsel %vm512, %v6492, 0
    %v6500 = vsel %vm512, %v6495, 0
    %6502 = vmatprep.subr.bf16.mxu0 0
    %6503 = vmatpush1.bf16.xpose.msra.mxu0 %v6500
    %6504 = vmatprep.subr.bf16.mxu0 0
    %6505 = vmatpush1.bf16.xpose.msra.mxu0 0
    %6506 = vmatprep.subr.bf16.mxu0 0
    %6507 = vmatpush1.bf16.xpose.msra.mxu0 0
    %6508 = vmatprep.subr.bf16.mxu0 0
    %6509 = vmatpush1.bf16.xpose.msra.mxu0 0
    %6510 = vmatprep.subr.bf16.mxu0 0
    %6511 = vmatpush1.bf16.xpose.msra.mxu0 0
    %6512 = vmatprep.subr.bf16.mxu0 0
    %6513 = vmatpush1.bf16.xpose.msra.mxu0 0
    %6514 = vmatprep.subr.bf16.mxu0 0
    %6515 = vmatpush1.bf16.xpose.msra.mxu0 0
    %6516 = vmatprep.subr.bf16.mxu0 0
    %6517 = vmatpush1.bf16.xpose.msra.mxu0 0
    %6518 = vmatprep.subr.bf16.mxu0 0
    %6519 = vmatpush1.bf16.xpose.msra.mxu0 0
    %6520 = vmatprep.subr.bf16.mxu0 0
    %6521 = vmatpush1.bf16.xpose.msra.mxu0 0
    %6522 = vmatprep.subr.bf16.mxu0 0
    %6523 = vmatpush1.bf16.xpose.msra.mxu0 0
    %6524 = vmatprep.subr.bf16.mxu0 0
    %6525 = vmatpush1.bf16.xpose.msra.mxu0 0
    %6526 = vmatprep.subr.bf16.mxu0 0
    %6527 = vmatpush1.bf16.xpose.msra.mxu0 0
    %6528 = vmatprep.subr.bf16.mxu0 0
    %6529 = vmatpush1.bf16.xpose.msra.mxu0 0
    %6530 = vmatprep.subr.bf16.mxu0 0
    %6531 = vmatpush1.bf16.xpose.msra.mxu0 0
    %6532 = vmatprep.subr.bf16.mxu0 0
    %6533 = vmatpush1.bf16.xpose.msra.mxu0 0
    %6534 = vmatprep.mubr.bf16.mxu0 0
    %6535 = vmatmul.mubr.bf16.gmra.mrb[0].mxu0 %v6497
    %v6536 = vpop.f32.mrb[0].mxu0
    %v6537 = vadd.f32 %v163, %v6536
    %v6538 = vpop.f32.mrb[0].mxu0
    %v6539 = vpop.f32.mrb[0].mxu0
    %v6540 = vpop.f32.mrb[0].mxu0
    %6541 = vdwg.mxu0
    %v6542 = vadd.f32 %v6485, %v157
    %v6543 = vadd.f32 %v6537, %v157
    %v6544 = vsel %vm512, %v6542, -inf
    %6545 = vmax.xlane.f32.xlu0 %v6544
    %v6546 = vpop.xlane.xlu0 %6545
    %v6547 = vsel %vm512, %v6543, -inf
    %6548 = vmax.xlane.f32.xlu0 %v6547
    %v6549 = vpop.xlane.xlu0 %6548
    %v6550 = vsub.f32 %v6542, %v6546
    %v6551 = vsub.f32 %v6543, %v6549
    %v6552 = vmul.f32 %v6550, 1.442695
    %v6553 = vpow.pop %v6552
    %v6554 = vmul.f32 %v6551, 1.442695
    %v6555 = vpow.pop %v6554
    %v6556 = vsel %vm512, %v6553, 0.0
    %6557 = vadd.xlane.f32.xlu0 %v6556
    %v6558 = vpop.xlane.xlu0 %6557
    %v6559 = vsel %vm512, %v6555, 0.0
    %6560 = vadd.xlane.f32.xlu0 %v6559
    %v6561 = vpop.xlane.xlu0 %6560
    %v6562 = vrcp.pop %v6558
    %v6563 = vrcp.pop %v6561
    %v6564 = vmul.f32 %v6553, %v6562
    %v6565 = vmul.f32 %v6555, %v6563
    %v6566 = vpack.c.bf16 %v6564, %v6564
    %v6567 = vpack.c.bf16 %v6565, %v6565
    %6569 = vrot.lane.b32.xlu0 %v6343, 120
    %v6570 = vpop.permute.xlu0 %6569
    %v6572 = vsel %vm512, %v6566, 0
    %v6575 = vsel %vm636, %v6570, 0
    %6577 = vmatprep.subr.bf16.mxu0 0
    %6578 = vmatpush1.bf16.msra.mxu0 %v6575
    %6579 = vmatprep.subr.bf16.mxu0 0
    %6580 = vmatpush1.bf16.msra.mxu0 0
    %6581 = vmatprep.subr.bf16.mxu0 0
    %6582 = vmatpush1.bf16.msra.mxu0 0
    %6583 = vmatprep.subr.bf16.mxu0 0
    %6584 = vmatpush1.bf16.msra.mxu0 0
    %6585 = vmatprep.subr.bf16.mxu0 0
    %6586 = vmatpush1.bf16.msra.mxu0 0
    %6587 = vmatprep.subr.bf16.mxu0 0
    %6588 = vmatpush1.bf16.msra.mxu0 0
    %6589 = vmatprep.subr.bf16.mxu0 0
    %6590 = vmatpush1.bf16.msra.mxu0 0
    %6591 = vmatprep.subr.bf16.mxu0 0
    %6592 = vmatpush1.bf16.msra.mxu0 0
    %6593 = vmatprep.subr.bf16.mxu0 0
    %6594 = vmatpush1.bf16.msra.mxu0 0
    %6595 = vmatprep.subr.bf16.mxu0 0
    %6596 = vmatpush1.bf16.msra.mxu0 0
    %6597 = vmatprep.subr.bf16.mxu0 0
    %6598 = vmatpush1.bf16.msra.mxu0 0
    %6599 = vmatprep.subr.bf16.mxu0 0
    %6600 = vmatpush1.bf16.msra.mxu0 0
    %6601 = vmatprep.subr.bf16.mxu0 0
    %6602 = vmatpush1.bf16.msra.mxu0 0
    %6603 = vmatprep.subr.bf16.mxu0 0
    %6604 = vmatpush1.bf16.msra.mxu0 0
    %6605 = vmatprep.subr.bf16.mxu0 0
    %6606 = vmatpush1.bf16.msra.mxu0 0
    %6607 = vmatprep.subr.bf16.mxu0 0
    %6608 = vmatpush1.bf16.msra.mxu0 0
    %6609 = vmatprep.mubr.bf16.mxu0 0
    %6610 = vmatmul.mubr.bf16.gmra.mrb[0].mxu0 %v6572
    %v6611 = vpop.f32.mrb[0].mxu0
    %v6612 = vadd.f32 0.0, %v6611
    %v6613 = vpop.f32.mrb[0].mxu0
    %v6614 = vpop.f32.mrb[0].mxu0
    %v6615 = vpop.f32.mrb[0].mxu0
    %6616 = vdwg.mxu0
    %6618 = vrot.lane.b32.xlu0 %v6344, 120
    %v6619 = vpop.permute.xlu0 %6618
    %v6621 = vsel %vm512, %v6567, 0
    %v6624 = vsel %vm636, %v6619, 0
    %6626 = vmatprep.subr.bf16.mxu0 0
    %6627 = vmatpush1.bf16.msra.mxu0 %v6624
    %6628 = vmatprep.subr.bf16.mxu0 0
    %6629 = vmatpush1.bf16.msra.mxu0 0
    %6630 = vmatprep.subr.bf16.mxu0 0
    %6631 = vmatpush1.bf16.msra.mxu0 0
    %6632 = vmatprep.subr.bf16.mxu0 0
    %6633 = vmatpush1.bf16.msra.mxu0 0
    %6634 = vmatprep.subr.bf16.mxu0 0
    %6635 = vmatpush1.bf16.msra.mxu0 0
    %6636 = vmatprep.subr.bf16.mxu0 0
    %6637 = vmatpush1.bf16.msra.mxu0 0
    %6638 = vmatprep.subr.bf16.mxu0 0
    %6639 = vmatpush1.bf16.msra.mxu0 0
    %6640 = vmatprep.subr.bf16.mxu0 0
    %6641 = vmatpush1.bf16.msra.mxu0 0
    %6642 = vmatprep.subr.bf16.mxu0 0
    %6643 = vmatpush1.bf16.msra.mxu0 0
    %6644 = vmatprep.subr.bf16.mxu0 0
    %6645 = vmatpush1.bf16.msra.mxu0 0
    %6646 = vmatprep.subr.bf16.mxu0 0
    %6647 = vmatpush1.bf16.msra.mxu0 0
    %6648 = vmatprep.subr.bf16.mxu0 0
    %6649 = vmatpush1.bf16.msra.mxu0 0
    %6650 = vmatprep.subr.bf16.mxu0 0
    %6651 = vmatpush1.bf16.msra.mxu0 0
    %6652 = vmatprep.subr.bf16.mxu0 0
    %6653 = vmatpush1.bf16.msra.mxu0 0
    %6654 = vmatprep.subr.bf16.mxu0 0
    %6655 = vmatpush1.bf16.msra.mxu0 0
    %6656 = vmatprep.subr.bf16.mxu0 0
    %6657 = vmatpush1.bf16.msra.mxu0 0
    %6658 = vmatprep.mubr.bf16.mxu0 0
    %6659 = vmatmul.mubr.bf16.gmra.mrb[0].mxu0 %v6621
    %v6660 = vpop.f32.mrb[0].mxu0
    %v6661 = vadd.f32 0.0, %v6660
    %v6662 = vpop.f32.mrb[0].mxu0
    %v6663 = vpop.f32.mrb[0].mxu0
    %v6664 = vpop.f32.mrb[0].mxu0
    %6665 = vdwg.mxu0
    %v6666 = vpack.c.bf16 %v6661, %v6612
    %v6668 = vsel %vm512, %v6666, 0
    %v6671 = vsel %vm636, %v3224, 0
    %6673 = vmatprep.subr.bf16.mxu0 0
    %6674 = vmatpush1.bf16.msra.mxu0 %v6671
    %6675 = vmatprep.subr.bf16.mxu0 0
    %6676 = vmatpush1.bf16.msra.mxu0 0
    %6677 = vmatprep.subr.bf16.mxu0 0
    %6678 = vmatpush1.bf16.msra.mxu0 0
    %6679 = vmatprep.subr.bf16.mxu0 0
    %6680 = vmatpush1.bf16.msra.mxu0 0
    %6681 = vmatprep.subr.bf16.mxu0 0
    %6682 = vmatpush1.bf16.msra.mxu0 0
    %6683 = vmatprep.subr.bf16.mxu0 0
    %6684 = vmatpush1.bf16.msra.mxu0 0
    %6685 = vmatprep.subr.bf16.mxu0 0
    %6686 = vmatpush1.bf16.msra.mxu0 0
    %6687 = vmatprep.subr.bf16.mxu0 0
    %6688 = vmatpush1.bf16.msra.mxu0 0
    %6689 = vmatprep.subr.bf16.mxu0 0
    %6690 = vmatpush1.bf16.msra.mxu0 0
    %6691 = vmatprep.subr.bf16.mxu0 0
    %6692 = vmatpush1.bf16.msra.mxu0 0
    %6693 = vmatprep.subr.bf16.mxu0 0
    %6694 = vmatpush1.bf16.msra.mxu0 0
    %6695 = vmatprep.subr.bf16.mxu0 0
    %6696 = vmatpush1.bf16.msra.mxu0 0
    %6697 = vmatprep.subr.bf16.mxu0 0
    %6698 = vmatpush1.bf16.msra.mxu0 0
    %6699 = vmatprep.subr.bf16.mxu0 0
    %6700 = vmatpush1.bf16.msra.mxu0 0
    %6701 = vmatprep.subr.bf16.mxu0 0
    %6702 = vmatpush1.bf16.msra.mxu0 0
    %6703 = vmatprep.subr.bf16.mxu0 0
    %6704 = vmatpush1.bf16.msra.mxu0 0
    %6705 = vmatprep.mubr.bf16.mxu0 0
    %6706 = vmatmul.mubr.bf16.gmra.mrb[0].mxu0 %v6668
    %v6707 = vpop.f32.mrb[0].mxu0
    %v6708 = vadd.f32 0.0, %v6707
    %v6709 = vpop.f32.mrb[0].mxu0
    %v6710 = vpop.f32.mrb[0].mxu0
    %v6711 = vadd.f32 0.0, %v6710
    %v6712 = vpop.f32.mrb[0].mxu0
    %6713 = vdwg.mxu0
    %v6715 = vsel %vm512, %v6437, 0
    %v6718 = vsel %vm636, %v3223, 0
    %6720 = vmatprep.subr.bf16.mxu0 0
    %6721 = vmatpush1.bf16.msra.mxu0 %v6718
    %6722 = vmatprep.subr.bf16.mxu0 0
    %6723 = vmatpush1.bf16.msra.mxu0 0
    %6724 = vmatprep.subr.bf16.mxu0 0
    %6725 = vmatpush1.bf16.msra.mxu0 0
    %6726 = vmatprep.subr.bf16.mxu0 0
    %6727 = vmatpush1.bf16.msra.mxu0 0
    %6728 = vmatprep.subr.bf16.mxu0 0
    %6729 = vmatpush1.bf16.msra.mxu0 0
    %6730 = vmatprep.subr.bf16.mxu0 0
    %6731 = vmatpush1.bf16.msra.mxu0 0
    %6732 = vmatprep.subr.bf16.mxu0 0
    %6733 = vmatpush1.bf16.msra.mxu0 0
    %6734 = vmatprep.subr.bf16.mxu0 0
    %6735 = vmatpush1.bf16.msra.mxu0 0
    %6736 = vmatprep.subr.bf16.mxu0 0
    %6737 = vmatpush1.bf16.msra.mxu0 0
    %6738 = vmatprep.subr.bf16.mxu0 0
    %6739 = vmatpush1.bf16.msra.mxu0 0
    %6740 = vmatprep.subr.bf16.mxu0 0
    %6741 = vmatpush1.bf16.msra.mxu0 0
    %6742 = vmatprep.subr.bf16.mxu0 0
    %6743 = vmatpush1.bf16.msra.mxu0 0
    %6744 = vmatprep.subr.bf16.mxu0 0
    %6745 = vmatpush1.bf16.msra.mxu0 0
    %6746 = vmatprep.subr.bf16.mxu0 0
    %6747 = vmatpush1.bf16.msra.mxu0 0
    %6748 = vmatprep.subr.bf16.mxu0 0
    %6749 = vmatpush1.bf16.msra.mxu0 0
    %6750 = vmatprep.subr.bf16.mxu0 0
    %6751 = vmatpush1.bf16.msra.mxu0 0
    %6752 = vmatprep.mubr.bf16.mxu0 0
    %6753 = vmatmul.mubr.bf16.gmra.mrb[0].mxu0 %v6715
    %v6754 = vpop.f32.mrb[0].mxu0
    %v6755 = vadd.f32 %v6708, %v6754
    %v6756 = vpop.f32.mrb[0].mxu0
    %v6757 = vpop.f32.mrb[0].mxu0
    %v6758 = vadd.f32 %v6711, %v6757
    %v6759 = vpop.f32.mrb[0].mxu0
    %6760 = vdwg.mxu0
    %6761 = vrot.lane.b32.xlu0 %v6221, 112
    %v6762 = vpop.permute.xlu0 %6761
    %6763 = vrot.lane.b32.xlu0 %v6223, 112
    %v6764 = vpop.permute.xlu0 %6763
    %v6766 = vsel %vm512, %v6762, 0
    %v6769 = vsel %vm512, %v6764, 0
    %6771 = vmatprep.subr.bf16.mxu0 0
    %6772 = vmatpush1.bf16.xpose.msra.mxu0 %v6769
    %6773 = vmatprep.subr.bf16.mxu0 0
    %6774 = vmatpush1.bf16.xpose.msra.mxu0 0
    %6775 = vmatprep.subr.bf16.mxu0 0
    %6776 = vmatpush1.bf16.xpose.msra.mxu0 0
    %6777 = vmatprep.subr.bf16.mxu0 0
    %6778 = vmatpush1.bf16.xpose.msra.mxu0 0
    %6779 = vmatprep.subr.bf16.mxu0 0
    %6780 = vmatpush1.bf16.xpose.msra.mxu0 0
    %6781 = vmatprep.subr.bf16.mxu0 0
    %6782 = vmatpush1.bf16.xpose.msra.mxu0 0
    %6783 = vmatprep.subr.bf16.mxu0 0
    %6784 = vmatpush1.bf16.xpose.msra.mxu0 0
    %6785 = vmatprep.subr.bf16.mxu0 0
    %6786 = vmatpush1.bf16.xpose.msra.mxu0 0
    %6787 = vmatprep.subr.bf16.mxu0 0
    %6788 = vmatpush1.bf16.xpose.msra.mxu0 0
    %6789 = vmatprep.subr.bf16.mxu0 0
    %6790 = vmatpush1.bf16.xpose.msra.mxu0 0
    %6791 = vmatprep.subr.bf16.mxu0 0
    %6792 = vmatpush1.bf16.xpose.msra.mxu0 0
    %6793 = vmatprep.subr.bf16.mxu0 0
    %6794 = vmatpush1.bf16.xpose.msra.mxu0 0
    %6795 = vmatprep.subr.bf16.mxu0 0
    %6796 = vmatpush1.bf16.xpose.msra.mxu0 0
    %6797 = vmatprep.subr.bf16.mxu0 0
    %6798 = vmatpush1.bf16.xpose.msra.mxu0 0
    %6799 = vmatprep.subr.bf16.mxu0 0
    %6800 = vmatpush1.bf16.xpose.msra.mxu0 0
    %6801 = vmatprep.subr.bf16.mxu0 0
    %6802 = vmatpush1.bf16.xpose.msra.mxu0 0
    %6803 = vmatprep.mubr.bf16.mxu0 0
    %6804 = vmatmul.mubr.bf16.gmra.mrb[0].mxu0 %v6766
    %v6805 = vpop.f32.mrb[0].mxu0
    %v6806 = vadd.f32 %v162, %v6805
    %v6807 = vpop.f32.mrb[0].mxu0
    %v6808 = vpop.f32.mrb[0].mxu0
    %v6809 = vpop.f32.mrb[0].mxu0
    %6810 = vdwg.mxu0
    %6811 = vrot.lane.b32.xlu0 %v6222, 112
    %v6812 = vpop.permute.xlu0 %6811
    %6813 = vrot.lane.b32.xlu0 %v6224, 112
    %v6814 = vpop.permute.xlu0 %6813
    %v6816 = vsel %vm512, %v6812, 0
    %v6819 = vsel %vm512, %v6814, 0
    %6821 = vmatprep.subr.bf16.mxu0 0
    %6822 = vmatpush1.bf16.xpose.msra.mxu0 %v6819
    %6823 = vmatprep.subr.bf16.mxu0 0
    %6824 = vmatpush1.bf16.xpose.msra.mxu0 0
    %6825 = vmatprep.subr.bf16.mxu0 0
    %6826 = vmatpush1.bf16.xpose.msra.mxu0 0
    %6827 = vmatprep.subr.bf16.mxu0 0
    %6828 = vmatpush1.bf16.xpose.msra.mxu0 0
    %6829 = vmatprep.subr.bf16.mxu0 0
    %6830 = vmatpush1.bf16.xpose.msra.mxu0 0
    %6831 = vmatprep.subr.bf16.mxu0 0
    %6832 = vmatpush1.bf16.xpose.msra.mxu0 0
    %6833 = vmatprep.subr.bf16.mxu0 0
    %6834 = vmatpush1.bf16.xpose.msra.mxu0 0
    %6835 = vmatprep.subr.bf16.mxu0 0
    %6836 = vmatpush1.bf16.xpose.msra.mxu0 0
    %6837 = vmatprep.subr.bf16.mxu0 0
    %6838 = vmatpush1.bf16.xpose.msra.mxu0 0
    %6839 = vmatprep.subr.bf16.mxu0 0
    %6840 = vmatpush1.bf16.xpose.msra.mxu0 0
    %6841 = vmatprep.subr.bf16.mxu0 0
    %6842 = vmatpush1.bf16.xpose.msra.mxu0 0
    %6843 = vmatprep.subr.bf16.mxu0 0
    %6844 = vmatpush1.bf16.xpose.msra.mxu0 0
    %6845 = vmatprep.subr.bf16.mxu0 0
    %6846 = vmatpush1.bf16.xpose.msra.mxu0 0
    %6847 = vmatprep.subr.bf16.mxu0 0
    %6848 = vmatpush1.bf16.xpose.msra.mxu0 0
    %6849 = vmatprep.subr.bf16.mxu0 0
    %6850 = vmatpush1.bf16.xpose.msra.mxu0 0
    %6851 = vmatprep.subr.bf16.mxu0 0
    %6852 = vmatpush1.bf16.xpose.msra.mxu0 0
    %6853 = vmatprep.mubr.bf16.mxu0 0
    %6854 = vmatmul.mubr.bf16.gmra.mrb[0].mxu0 %v6816
    %v6855 = vpop.f32.mrb[0].mxu0
    %v6856 = vadd.f32 %v163, %v6855
    %v6857 = vpop.f32.mrb[0].mxu0
    %v6858 = vpop.f32.mrb[0].mxu0
    %v6859 = vpop.f32.mrb[0].mxu0
    %6860 = vdwg.mxu0
    %v6861 = vadd.f32 %v6806, %v158
    %v6862 = vadd.f32 %v6856, %v158
    %v6863 = vsel %vm512, %v6861, -inf
    %6864 = vmax.xlane.f32.xlu0 %v6863
    %v6865 = vpop.xlane.xlu0 %6864
    %v6866 = vsel %vm512, %v6862, -inf
    %6867 = vmax.xlane.f32.xlu0 %v6866
    %v6868 = vpop.xlane.xlu0 %6867
    %v6869 = vsub.f32 %v6861, %v6865
    %v6870 = vsub.f32 %v6862, %v6868
    %v6871 = vmul.f32 %v6869, 1.442695
    %v6872 = vpow.pop %v6871
    %v6873 = vmul.f32 %v6870, 1.442695
    %v6874 = vpow.pop %v6873
    %v6875 = vsel %vm512, %v6872, 0.0
    %6876 = vadd.xlane.f32.xlu0 %v6875
    %v6877 = vpop.xlane.xlu0 %6876
    %v6878 = vsel %vm512, %v6874, 0.0
    %6879 = vadd.xlane.f32.xlu0 %v6878
    %v6880 = vpop.xlane.xlu0 %6879
    %v6881 = vrcp.pop %v6877
    %v6882 = vrcp.pop %v6880
    %v6883 = vmul.f32 %v6872, %v6881
    %v6884 = vmul.f32 %v6874, %v6882
    %v6885 = vpack.c.bf16 %v6883, %v6883
    %v6886 = vpack.c.bf16 %v6884, %v6884
    %6887 = vrot.lane.b32.xlu0 %v6343, 112
    %v6888 = vpop.permute.xlu0 %6887
    %v6890 = vsel %vm512, %v6885, 0
    %v6893 = vsel %vm636, %v6888, 0
    %6895 = vmatprep.subr.bf16.mxu0 0
    %6896 = vmatpush1.bf16.msra.mxu0 %v6893
    %6897 = vmatprep.subr.bf16.mxu0 0
    %6898 = vmatpush1.bf16.msra.mxu0 0
    %6899 = vmatprep.subr.bf16.mxu0 0
    %6900 = vmatpush1.bf16.msra.mxu0 0
    %6901 = vmatprep.subr.bf16.mxu0 0
    %6902 = vmatpush1.bf16.msra.mxu0 0
    %6903 = vmatprep.subr.bf16.mxu0 0
    %6904 = vmatpush1.bf16.msra.mxu0 0
    %6905 = vmatprep.subr.bf16.mxu0 0
    %6906 = vmatpush1.bf16.msra.mxu0 0
    %6907 = vmatprep.subr.bf16.mxu0 0
    %6908 = vmatpush1.bf16.msra.mxu0 0
    %6909 = vmatprep.subr.bf16.mxu0 0
    %6910 = vmatpush1.bf16.msra.mxu0 0
    %6911 = vmatprep.subr.bf16.mxu0 0
    %6912 = vmatpush1.bf16.msra.mxu0 0
    %6913 = vmatprep.subr.bf16.mxu0 0
    %6914 = vmatpush1.bf16.msra.mxu0 0
    %6915 = vmatprep.subr.bf16.mxu0 0
    %6916 = vmatpush1.bf16.msra.mxu0 0
    %6917 = vmatprep.subr.bf16.mxu0 0
    %6918 = vmatpush1.bf16.msra.mxu0 0
    %6919 = vmatprep.subr.bf16.mxu0 0
    %6920 = vmatpush1.bf16.msra.mxu0 0
    %6921 = vmatprep.subr.bf16.mxu0 0
    %6922 = vmatpush1.bf16.msra.mxu0 0
    %6923 = vmatprep.subr.bf16.mxu0 0
    %6924 = vmatpush1.bf16.msra.mxu0 0
    %6925 = vmatprep.subr.bf16.mxu0 0
    %6926 = vmatpush1.bf16.msra.mxu0 0
    %6927 = vmatprep.mubr.bf16.mxu0 0
    %6928 = vmatmul.mubr.bf16.gmra.mrb[0].mxu0 %v6890
    %v6929 = vpop.f32.mrb[0].mxu0
    %v6930 = vadd.f32 0.0, %v6929
    %v6931 = vpop.f32.mrb[0].mxu0
    %v6932 = vpop.f32.mrb[0].mxu0
    %v6933 = vpop.f32.mrb[0].mxu0
    %6934 = vdwg.mxu0
    %6935 = vrot.lane.b32.xlu0 %v6344, 112
    %v6936 = vpop.permute.xlu0 %6935
    %v6938 = vsel %vm512, %v6886, 0
    %v6941 = vsel %vm636, %v6936, 0
    %6943 = vmatprep.subr.bf16.mxu0 0
    %6944 = vmatpush1.bf16.msra.mxu0 %v6941
    %6945 = vmatprep.subr.bf16.mxu0 0
    %6946 = vmatpush1.bf16.msra.mxu0 0
    %6947 = vmatprep.subr.bf16.mxu0 0
    %6948 = vmatpush1.bf16.msra.mxu0 0
    %6949 = vmatprep.subr.bf16.mxu0 0
    %6950 = vmatpush1.bf16.msra.mxu0 0
    %6951 = vmatprep.subr.bf16.mxu0 0
    %6952 = vmatpush1.bf16.msra.mxu0 0
    %6953 = vmatprep.subr.bf16.mxu0 0
    %6954 = vmatpush1.bf16.msra.mxu0 0
    %6955 = vmatprep.subr.bf16.mxu0 0
    %6956 = vmatpush1.bf16.msra.mxu0 0
    %6957 = vmatprep.subr.bf16.mxu0 0
    %6958 = vmatpush1.bf16.msra.mxu0 0
    %6959 = vmatprep.subr.bf16.mxu0 0
    %6960 = vmatpush1.bf16.msra.mxu0 0
    %6961 = vmatprep.subr.bf16.mxu0 0
    %6962 = vmatpush1.bf16.msra.mxu0 0
    %6963 = vmatprep.subr.bf16.mxu0 0
    %6964 = vmatpush1.bf16.msra.mxu0 0
    %6965 = vmatprep.subr.bf16.mxu0 0
    %6966 = vmatpush1.bf16.msra.mxu0 0
    %6967 = vmatprep.subr.bf16.mxu0 0
    %6968 = vmatpush1.bf16.msra.mxu0 0
    %6969 = vmatprep.subr.bf16.mxu0 0
    %6970 = vmatpush1.bf16.msra.mxu0 0
    %6971 = vmatprep.subr.bf16.mxu0 0
    %6972 = vmatpush1.bf16.msra.mxu0 0
    %6973 = vmatprep.subr.bf16.mxu0 0
    %6974 = vmatpush1.bf16.msra.mxu0 0
    %6975 = vmatprep.mubr.bf16.mxu0 0
    %6976 = vmatmul.mubr.bf16.gmra.mrb[0].mxu0 %v6938
    %v6977 = vpop.f32.mrb[0].mxu0
    %v6978 = vadd.f32 0.0, %v6977
    %v6979 = vpop.f32.mrb[0].mxu0
    %v6980 = vpop.f32.mrb[0].mxu0
    %v6981 = vpop.f32.mrb[0].mxu0
    %6982 = vdwg.mxu0
    %v6983 = vpack.c.bf16 %v6978, %v6930
    %v6985 = vsel %vm512, %v6983, 0
    %v6988 = vsel %vm636, %v3225, 0
    %6990 = vmatprep.subr.bf16.mxu0 0
    %6991 = vmatpush1.bf16.msra.mxu0 %v6988
    %6992 = vmatprep.subr.bf16.mxu0 0
    %6993 = vmatpush1.bf16.msra.mxu0 0
    %6994 = vmatprep.subr.bf16.mxu0 0
    %6995 = vmatpush1.bf16.msra.mxu0 0
    %6996 = vmatprep.subr.bf16.mxu0 0
    %6997 = vmatpush1.bf16.msra.mxu0 0
    %6998 = vmatprep.subr.bf16.mxu0 0
    %6999 = vmatpush1.bf16.msra.mxu0 0
    %7000 = vmatprep.subr.bf16.mxu0 0
    %7001 = vmatpush1.bf16.msra.mxu0 0
    %7002 = vmatprep.subr.bf16.mxu0 0
    %7003 = vmatpush1.bf16.msra.mxu0 0
    %7004 = vmatprep.subr.bf16.mxu0 0
    %7005 = vmatpush1.bf16.msra.mxu0 0
    %7006 = vmatprep.subr.bf16.mxu0 0
    %7007 = vmatpush1.bf16.msra.mxu0 0
    %7008 = vmatprep.subr.bf16.mxu0 0
    %7009 = vmatpush1.bf16.msra.mxu0 0
    %7010 = vmatprep.subr.bf16.mxu0 0
    %7011 = vmatpush1.bf16.msra.mxu0 0
    %7012 = vmatprep.subr.bf16.mxu0 0
    %7013 = vmatpush1.bf16.msra.mxu0 0
    %7014 = vmatprep.subr.bf16.mxu0 0
    %7015 = vmatpush1.bf16.msra.mxu0 0
    %7016 = vmatprep.subr.bf16.mxu0 0
    %7017 = vmatpush1.bf16.msra.mxu0 0
    %7018 = vmatprep.subr.bf16.mxu0 0
    %7019 = vmatpush1.bf16.msra.mxu0 0
    %7020 = vmatprep.subr.bf16.mxu0 0
    %7021 = vmatpush1.bf16.msra.mxu0 0
    %7022 = vmatprep.mubr.bf16.mxu0 0
    %7023 = vmatmul.mubr.bf16.gmra.mrb[0].mxu0 %v6985
    %v7024 = vpop.f32.mrb[0].mxu0
    %v7025 = vadd.f32 0.0, %v7024
    %v7026 = vpop.f32.mrb[0].mxu0
    %v7027 = vpop.f32.mrb[0].mxu0
    %v7028 = vadd.f32 0.0, %v7027
    %v7029 = vpop.f32.mrb[0].mxu0
    %7030 = vdwg.mxu0
    %v7031 = vadd.f32 %v6755, %v7025
    %v7032 = vadd.f32 %v6758, %v7028
    %7033 = vrot.lane.b32.xlu0 %v6221, 104
    %v7034 = vpop.permute.xlu0 %7033
    %7035 = vrot.lane.b32.xlu0 %v6223, 104
    %v7036 = vpop.permute.xlu0 %7035
    %v7038 = vsel %vm512, %v7034, 0
    %v7041 = vsel %vm512, %v7036, 0
    %7043 = vmatprep.subr.bf16.mxu0 0
    %7044 = vmatpush1.bf16.xpose.msra.mxu0 %v7041
    %7045 = vmatprep.subr.bf16.mxu0 0
    %7046 = vmatpush1.bf16.xpose.msra.mxu0 0
    %7047 = vmatprep.subr.bf16.mxu0 0
    %7048 = vmatpush1.bf16.xpose.msra.mxu0 0
    %7049 = vmatprep.subr.bf16.mxu0 0
    %7050 = vmatpush1.bf16.xpose.msra.mxu0 0
    %7051 = vmatprep.subr.bf16.mxu0 0
    %7052 = vmatpush1.bf16.xpose.msra.mxu0 0
    %7053 = vmatprep.subr.bf16.mxu0 0
    %7054 = vmatpush1.bf16.xpose.msra.mxu0 0
    %7055 = vmatprep.subr.bf16.mxu0 0
    %7056 = vmatpush1.bf16.xpose.msra.mxu0 0
    %7057 = vmatprep.subr.bf16.mxu0 0
    %7058 = vmatpush1.bf16.xpose.msra.mxu0 0
    %7059 = vmatprep.subr.bf16.mxu0 0
    %7060 = vmatpush1.bf16.xpose.msra.mxu0 0
    %7061 = vmatprep.subr.bf16.mxu0 0
    %7062 = vmatpush1.bf16.xpose.msra.mxu0 0
    %7063 = vmatprep.subr.bf16.mxu0 0
    %7064 = vmatpush1.bf16.xpose.msra.mxu0 0
    %7065 = vmatprep.subr.bf16.mxu0 0
    %7066 = vmatpush1.bf16.xpose.msra.mxu0 0
    %7067 = vmatprep.subr.bf16.mxu0 0
    %7068 = vmatpush1.bf16.xpose.msra.mxu0 0
    %7069 = vmatprep.subr.bf16.mxu0 0
    %7070 = vmatpush1.bf16.xpose.msra.mxu0 0
    %7071 = vmatprep.subr.bf16.mxu0 0
    %7072 = vmatpush1.bf16.xpose.msra.mxu0 0
    %7073 = vmatprep.subr.bf16.mxu0 0
    %7074 = vmatpush1.bf16.xpose.msra.mxu0 0
    %7075 = vmatprep.mubr.bf16.mxu0 0
    %7076 = vmatmul.mubr.bf16.gmra.mrb[0].mxu0 %v7038
    %v7077 = vpop.f32.mrb[0].mxu0
    %v7078 = vadd.f32 %v162, %v7077
    %v7079 = vpop.f32.mrb[0].mxu0
    %v7080 = vpop.f32.mrb[0].mxu0
    %v7081 = vpop.f32.mrb[0].mxu0
    %7082 = vdwg.mxu0
    %7083 = vrot.lane.b32.xlu0 %v6222, 104
    %v7084 = vpop.permute.xlu0 %7083
    %7085 = vrot.lane.b32.xlu0 %v6224, 104
    %v7086 = vpop.permute.xlu0 %7085
    %v7088 = vsel %vm512, %v7084, 0
    %v7091 = vsel %vm512, %v7086, 0
    %7093 = vmatprep.subr.bf16.mxu0 0
    %7094 = vmatpush1.bf16.xpose.msra.mxu0 %v7091
    %7095 = vmatprep.subr.bf16.mxu0 0
    %7096 = vmatpush1.bf16.xpose.msra.mxu0 0
    %7097 = vmatprep.subr.bf16.mxu0 0
    %7098 = vmatpush1.bf16.xpose.msra.mxu0 0
    %7099 = vmatprep.subr.bf16.mxu0 0
    %7100 = vmatpush1.bf16.xpose.msra.mxu0 0
    %7101 = vmatprep.subr.bf16.mxu0 0
    %7102 = vmatpush1.bf16.xpose.msra.mxu0 0
    %7103 = vmatprep.subr.bf16.mxu0 0
    %7104 = vmatpush1.bf16.xpose.msra.mxu0 0
    %7105 = vmatprep.subr.bf16.mxu0 0
    %7106 = vmatpush1.bf16.xpose.msra.mxu0 0
    %7107 = vmatprep.subr.bf16.mxu0 0
    %7108 = vmatpush1.bf16.xpose.msra.mxu0 0
    %7109 = vmatprep.subr.bf16.mxu0 0
    %7110 = vmatpush1.bf16.xpose.msra.mxu0 0
    %7111 = vmatprep.subr.bf16.mxu0 0
    %7112 = vmatpush1.bf16.xpose.msra.mxu0 0
    %7113 = vmatprep.subr.bf16.mxu0 0
    %7114 = vmatpush1.bf16.xpose.msra.mxu0 0
    %7115 = vmatprep.subr.bf16.mxu0 0
    %7116 = vmatpush1.bf16.xpose.msra.mxu0 0
    %7117 = vmatprep.subr.bf16.mxu0 0
    %7118 = vmatpush1.bf16.xpose.msra.mxu0 0
    %7119 = vmatprep.subr.bf16.mxu0 0
    %7120 = vmatpush1.bf16.xpose.msra.mxu0 0
    %7121 = vmatprep.subr.bf16.mxu0 0
    %7122 = vmatpush1.bf16.xpose.msra.mxu0 0
    %7123 = vmatprep.subr.bf16.mxu0 0
    %7124 = vmatpush1.bf16.xpose.msra.mxu0 0
    %7125 = vmatprep.mubr.bf16.mxu0 0
    %7126 = vmatmul.mubr.bf16.gmra.mrb[0].mxu0 %v7088
    %v7127 = vpop.f32.mrb[0].mxu0
    %v7128 = vadd.f32 %v163, %v7127
    %v7129 = vpop.f32.mrb[0].mxu0
    %v7130 = vpop.f32.mrb[0].mxu0
    %v7131 = vpop.f32.mrb[0].mxu0
    %7132 = vdwg.mxu0
    %v7133 = vadd.f32 %v7078, %v159
    %v7134 = vadd.f32 %v7128, %v159
    %v7135 = vsel %vm512, %v7133, -inf
    %7136 = vmax.xlane.f32.xlu0 %v7135
    %v7137 = vpop.xlane.xlu0 %7136
    %v7138 = vsel %vm512, %v7134, -inf
    %7139 = vmax.xlane.f32.xlu0 %v7138
    %v7140 = vpop.xlane.xlu0 %7139
    %v7141 = vsub.f32 %v7133, %v7137
    %v7142 = vsub.f32 %v7134, %v7140
    %v7143 = vmul.f32 %v7141, 1.442695
    %v7144 = vpow.pop %v7143
    %v7145 = vmul.f32 %v7142, 1.442695
    %v7146 = vpow.pop %v7145
    %v7147 = vsel %vm512, %v7144, 0.0
    %7148 = vadd.xlane.f32.xlu0 %v7147
    %v7149 = vpop.xlane.xlu0 %7148
    %v7150 = vsel %vm512, %v7146, 0.0
    %7151 = vadd.xlane.f32.xlu0 %v7150
    %v7152 = vpop.xlane.xlu0 %7151
    %v7153 = vrcp.pop %v7149
    %v7154 = vrcp.pop %v7152
    %v7155 = vmul.f32 %v7144, %v7153
    %v7156 = vmul.f32 %v7146, %v7154
    %v7157 = vpack.c.bf16 %v7155, %v7155
    %v7158 = vpack.c.bf16 %v7156, %v7156
    %7159 = vrot.lane.b32.xlu0 %v6343, 104
    %v7160 = vpop.permute.xlu0 %7159
    %v7162 = vsel %vm512, %v7157, 0
    %v7165 = vsel %vm636, %v7160, 0
    %7167 = vmatprep.subr.bf16.mxu0 0
    %7168 = vmatpush1.bf16.msra.mxu0 %v7165
    %7169 = vmatprep.subr.bf16.mxu0 0
    %7170 = vmatpush1.bf16.msra.mxu0 0
    %7171 = vmatprep.subr.bf16.mxu0 0
    %7172 = vmatpush1.bf16.msra.mxu0 0
    %7173 = vmatprep.subr.bf16.mxu0 0
    %7174 = vmatpush1.bf16.msra.mxu0 0
    %7175 = vmatprep.subr.bf16.mxu0 0
    %7176 = vmatpush1.bf16.msra.mxu0 0
    %7177 = vmatprep.subr.bf16.mxu0 0
    %7178 = vmatpush1.bf16.msra.mxu0 0
    %7179 = vmatprep.subr.bf16.mxu0 0
    %7180 = vmatpush1.bf16.msra.mxu0 0
    %7181 = vmatprep.subr.bf16.mxu0 0
    %7182 = vmatpush1.bf16.msra.mxu0 0
    %7183 = vmatprep.subr.bf16.mxu0 0
    %7184 = vmatpush1.bf16.msra.mxu0 0
    %7185 = vmatprep.subr.bf16.mxu0 0
    %7186 = vmatpush1.bf16.msra.mxu0 0
    %7187 = vmatprep.subr.bf16.mxu0 0
    %7188 = vmatpush1.bf16.msra.mxu0 0
    %7189 = vmatprep.subr.bf16.mxu0 0
    %7190 = vmatpush1.bf16.msra.mxu0 0
    %7191 = vmatprep.subr.bf16.mxu0 0
    %7192 = vmatpush1.bf16.msra.mxu0 0
    %7193 = vmatprep.subr.bf16.mxu0 0
    %7194 = vmatpush1.bf16.msra.mxu0 0
    %7195 = vmatprep.subr.bf16.mxu0 0
    %7196 = vmatpush1.bf16.msra.mxu0 0
    %7197 = vmatprep.subr.bf16.mxu0 0
    %7198 = vmatpush1.bf16.msra.mxu0 0
    %7199 = vmatprep.mubr.bf16.mxu0 0
    %7200 = vmatmul.mubr.bf16.gmra.mrb[0].mxu0 %v7162
    %v7201 = vpop.f32.mrb[0].mxu0
    %v7202 = vadd.f32 0.0, %v7201
    %v7203 = vpop.f32.mrb[0].mxu0
    %v7204 = vpop.f32.mrb[0].mxu0
    %v7205 = vpop.f32.mrb[0].mxu0
    %7206 = vdwg.mxu0
    %7207 = vrot.lane.b32.xlu0 %v6344, 104
    %v7208 = vpop.permute.xlu0 %7207
    %v7210 = vsel %vm512, %v7158, 0
    %v7213 = vsel %vm636, %v7208, 0
    %7215 = vmatprep.subr.bf16.mxu0 0
    %7216 = vmatpush1.bf16.msra.mxu0 %v7213
    %7217 = vmatprep.subr.bf16.mxu0 0
    %7218 = vmatpush1.bf16.msra.mxu0 0
    %7219 = vmatprep.subr.bf16.mxu0 0
    %7220 = vmatpush1.bf16.msra.mxu0 0
    %7221 = vmatprep.subr.bf16.mxu0 0
    %7222 = vmatpush1.bf16.msra.mxu0 0
    %7223 = vmatprep.subr.bf16.mxu0 0
    %7224 = vmatpush1.bf16.msra.mxu0 0
    %7225 = vmatprep.subr.bf16.mxu0 0
    %7226 = vmatpush1.bf16.msra.mxu0 0
    %7227 = vmatprep.subr.bf16.mxu0 0
    %7228 = vmatpush1.bf16.msra.mxu0 0
    %7229 = vmatprep.subr.bf16.mxu0 0
    %7230 = vmatpush1.bf16.msra.mxu0 0
    %7231 = vmatprep.subr.bf16.mxu0 0
    %7232 = vmatpush1.bf16.msra.mxu0 0
    %7233 = vmatprep.subr.bf16.mxu0 0
    %7234 = vmatpush1.bf16.msra.mxu0 0
    %7235 = vmatprep.subr.bf16.mxu0 0
    %7236 = vmatpush1.bf16.msra.mxu0 0
    %7237 = vmatprep.subr.bf16.mxu0 0
    %7238 = vmatpush1.bf16.msra.mxu0 0
    %7239 = vmatprep.subr.bf16.mxu0 0
    %7240 = vmatpush1.bf16.msra.mxu0 0
    %7241 = vmatprep.subr.bf16.mxu0 0
    %7242 = vmatpush1.bf16.msra.mxu0 0
    %7243 = vmatprep.subr.bf16.mxu0 0
    %7244 = vmatpush1.bf16.msra.mxu0 0
    %7245 = vmatprep.subr.bf16.mxu0 0
    %7246 = vmatpush1.bf16.msra.mxu0 0
    %7247 = vmatprep.mubr.bf16.mxu0 0
    %7248 = vmatmul.mubr.bf16.gmra.mrb[0].mxu0 %v7210
    %v7249 = vpop.f32.mrb[0].mxu0
    %v7250 = vadd.f32 0.0, %v7249
    %v7251 = vpop.f32.mrb[0].mxu0
    %v7252 = vpop.f32.mrb[0].mxu0
    %v7253 = vpop.f32.mrb[0].mxu0
    %7254 = vdwg.mxu0
    %v7255 = vpack.c.bf16 %v7250, %v7202
    %v7257 = vsel %vm512, %v7255, 0
    %v7260 = vsel %vm636, %v3226, 0
    %7262 = vmatprep.subr.bf16.mxu0 0
    %7263 = vmatpush1.bf16.msra.mxu0 %v7260
    %7264 = vmatprep.subr.bf16.mxu0 0
    %7265 = vmatpush1.bf16.msra.mxu0 0
    %7266 = vmatprep.subr.bf16.mxu0 0
    %7267 = vmatpush1.bf16.msra.mxu0 0
    %7268 = vmatprep.subr.bf16.mxu0 0
    %7269 = vmatpush1.bf16.msra.mxu0 0
    %7270 = vmatprep.subr.bf16.mxu0 0
    %7271 = vmatpush1.bf16.msra.mxu0 0
    %7272 = vmatprep.subr.bf16.mxu0 0
    %7273 = vmatpush1.bf16.msra.mxu0 0
    %7274 = vmatprep.subr.bf16.mxu0 0
    %7275 = vmatpush1.bf16.msra.mxu0 0
    %7276 = vmatprep.subr.bf16.mxu0 0
    %7277 = vmatpush1.bf16.msra.mxu0 0
    %7278 = vmatprep.subr.bf16.mxu0 0
    %7279 = vmatpush1.bf16.msra.mxu0 0
    %7280 = vmatprep.subr.bf16.mxu0 0
    %7281 = vmatpush1.bf16.msra.mxu0 0
    %7282 = vmatprep.subr.bf16.mxu0 0
    %7283 = vmatpush1.bf16.msra.mxu0 0
    %7284 = vmatprep.subr.bf16.mxu0 0
    %7285 = vmatpush1.bf16.msra.mxu0 0
    %7286 = vmatprep.subr.bf16.mxu0 0
    %7287 = vmatpush1.bf16.msra.mxu0 0
    %7288 = vmatprep.subr.bf16.mxu0 0
    %7289 = vmatpush1.bf16.msra.mxu0 0
    %7290 = vmatprep.subr.bf16.mxu0 0
    %7291 = vmatpush1.bf16.msra.mxu0 0
    %7292 = vmatprep.subr.bf16.mxu0 0
    %7293 = vmatpush1.bf16.msra.mxu0 0
    %7294 = vmatprep.mubr.bf16.mxu0 0
    %7295 = vmatmul.mubr.bf16.gmra.mrb[0].mxu0 %v7257
    %v7296 = vpop.f32.mrb[0].mxu0
    %v7297 = vadd.f32 0.0, %v7296
    %v7298 = vpop.f32.mrb[0].mxu0
    %v7299 = vpop.f32.mrb[0].mxu0
    %v7300 = vadd.f32 0.0, %v7299
    %v7301 = vpop.f32.mrb[0].mxu0
    %7302 = vdwg.mxu0
    %v7303 = vadd.f32 %v7031, %v7297
    %v7304 = vadd.f32 %v7032, %v7300
    %v7305 = vadd.f32 %v6034, %v7303
    %v7306 = vadd.f32 %v6035, %v7304
    %v7307 = vmul.f32 %v7305, %v7305
    %v7308 = vmul.f32 %v7306, %v7306
    %v7309 = vsel %vm311, %v7307, 0.0
    %7310 = vadd.xlane.f32.xlu0 %v7309
    %v7311 = vpop.xlane.xlu0 %7310
    %v7312 = vsel %vm311, %v7308, 0.0
    %7313 = vadd.xlane.f32.xlu0 %v7312
    %v7314 = vpop.xlane.xlu0 %7313
    %v7315 = vmul.f32 %v7311, %v318
    %v7316 = vmul.f32 %v7314, %v318
    %v7317 = vadd.f32 %v7315, 1e-06
    %v7318 = vadd.f32 %v7316, 1e-06
    %v7319 = vrsqrt.pop %v7317
    %v7320 = vrsqrt.pop %v7318
    %v7321 = vmul.f32 %v7305, %v7319
    %v7322 = vmul.f32 %v7306, %v7320
    %v7323 = vlaneseq
    %v7324 = vshrl.u32 %v7323, 7
    %v7325 = vsub.s32 1, %v7324
    %v7326 = vrot.slane %v3260, %v7325
    %v7327 = vmul.f32 %v7321, %v7326
    %v7328 = vmul.f32 %v7322, %v7326
    %v7329 = vpack.c.bf16 %v7328, %v7327
    %v7334 = vunpack.c.l.b16 %v3231
    %v7335 = vunpack.c.l.b16 %v3232
    %v7336 = vunpack.c.l.b16 %v3233
    %v7337 = vunpack.c.l.b16 %v3234
    %v7338 = vpack.c.b16 %v7335, %v7334
    %v7339 = vpack.c.b16 %v7337, %v7336
    %v7343 = vsel %vm311, %v7329, 0
    %7345 = vmatprep.subr.bf16.mxu0 0
    %7346 = vmatpush1.bf16.msra.mxu0 %v7338
    %7347 = vmatprep.subr.bf16.mxu0 0
    %7348 = vmatpush1.bf16.msra.mxu0 %v7339
    %7349 = vmatprep.subr.bf16.mxu0 0
    %7350 = vmatpush1.bf16.msra.mxu0 0
    %7351 = vmatprep.subr.bf16.mxu0 0
    %7352 = vmatpush1.bf16.msra.mxu0 0
    %7353 = vmatprep.subr.bf16.mxu0 0
    %7354 = vmatpush1.bf16.msra.mxu0 0
    %7355 = vmatprep.subr.bf16.mxu0 0
    %7356 = vmatpush1.bf16.msra.mxu0 0
    %7357 = vmatprep.subr.bf16.mxu0 0
    %7358 = vmatpush1.bf16.msra.mxu0 0
    %7359 = vmatprep.subr.bf16.mxu0 0
    %7360 = vmatpush1.bf16.msra.mxu0 0
    %7361 = vmatprep.subr.bf16.mxu0 0
    %7362 = vmatpush1.bf16.msra.mxu0 0
    %7363 = vmatprep.subr.bf16.mxu0 0
    %7364 = vmatpush1.bf16.msra.mxu0 0
    %7365 = vmatprep.subr.bf16.mxu0 0
    %7366 = vmatpush1.bf16.msra.mxu0 0
    %7367 = vmatprep.subr.bf16.mxu0 0
    %7368 = vmatpush1.bf16.msra.mxu0 0
    %7369 = vmatprep.subr.bf16.mxu0 0
    %7370 = vmatpush1.bf16.msra.mxu0 0
    %7371 = vmatprep.subr.bf16.mxu0 0
    %7372 = vmatpush1.bf16.msra.mxu0 0
    %7373 = vmatprep.subr.bf16.mxu0 0
    %7374 = vmatpush1.bf16.msra.mxu0 0
    %7375 = vmatprep.subr.bf16.mxu0 0
    %7376 = vmatpush1.bf16.msra.mxu0 0
    %7377 = vmatprep.mubr.bf16.mxu0 0
    %7378 = vmatmul.mubr.bf16.gmra.mrb[0].mxu0 %v7343
    %v7379 = vpop.f32.mrb[0].mxu0
    %v7380 = vadd.f32 0.0, %v7379
    %v7381 = vpop.f32.mrb[0].mxu0
    %v7382 = vpop.f32.mrb[0].mxu0
    %v7383 = vadd.f32 0.0, %v7382
    %v7384 = vpop.f32.mrb[0].mxu0
    %7385 = vdwg.mxu0
    %v7390 = vunpack.c.l.b16 %v3239
    %v7391 = vunpack.c.l.b16 %v3240
    %v7392 = vunpack.c.l.b16 %v3241
    %v7393 = vunpack.c.l.b16 %v3242
    %v7394 = vpack.c.b16 %v7391, %v7390
    %v7395 = vpack.c.b16 %v7393, %v7392
    %7398 = vmatprep.subr.bf16.mxu0 0
    %7399 = vmatpush1.bf16.msra.mxu0 %v7394
    %7400 = vmatprep.subr.bf16.mxu0 0
    %7401 = vmatpush1.bf16.msra.mxu0 %v7395
    %7402 = vmatprep.subr.bf16.mxu0 0
    %7403 = vmatpush1.bf16.msra.mxu0 0
    %7404 = vmatprep.subr.bf16.mxu0 0
    %7405 = vmatpush1.bf16.msra.mxu0 0
    %7406 = vmatprep.subr.bf16.mxu0 0
    %7407 = vmatpush1.bf16.msra.mxu0 0
    %7408 = vmatprep.subr.bf16.mxu0 0
    %7409 = vmatpush1.bf16.msra.mxu0 0
    %7410 = vmatprep.subr.bf16.mxu0 0
    %7411 = vmatpush1.bf16.msra.mxu0 0
    %7412 = vmatprep.subr.bf16.mxu0 0
    %7413 = vmatpush1.bf16.msra.mxu0 0
    %7414 = vmatprep.subr.bf16.mxu0 0
    %7415 = vmatpush1.bf16.msra.mxu0 0
    %7416 = vmatprep.subr.bf16.mxu0 0
    %7417 = vmatpush1.bf16.msra.mxu0 0
    %7418 = vmatprep.subr.bf16.mxu0 0
    %7419 = vmatpush1.bf16.msra.mxu0 0
    %7420 = vmatprep.subr.bf16.mxu0 0
    %7421 = vmatpush1.bf16.msra.mxu0 0
    %7422 = vmatprep.subr.bf16.mxu0 0
    %7423 = vmatpush1.bf16.msra.mxu0 0
    %7424 = vmatprep.subr.bf16.mxu0 0
    %7425 = vmatpush1.bf16.msra.mxu0 0
    %7426 = vmatprep.subr.bf16.mxu0 0
    %7427 = vmatpush1.bf16.msra.mxu0 0
    %7428 = vmatprep.subr.bf16.mxu0 0
    %7429 = vmatpush1.bf16.msra.mxu0 0
    %7430 = vmatprep.mubr.bf16.mxu0 0
    %7431 = vmatmul.mubr.bf16.gmra.mrb[0].mxu0 %v4710
    %v7432 = vpop.f32.mrb[0].mxu0
    %v7433 = vadd.f32 0.0, %v7432
    %v7434 = vpop.f32.mrb[0].mxu0
    %v7435 = vpop.f32.mrb[0].mxu0
    %v7436 = vadd.f32 0.0, %v7435
    %v7437 = vpop.f32.mrb[0].mxu0
    %7438 = vdwg.mxu0
    %v7443 = vunpack.c.l.b16 %v3247
    %v7444 = vunpack.c.l.b16 %v3248
    %v7445 = vunpack.c.l.b16 %v3249
    %v7446 = vunpack.c.l.b16 %v3250
    %v7447 = vpack.c.b16 %v7444, %v7443
    %v7448 = vpack.c.b16 %v7446, %v7445
    %7451 = vmatprep.subr.bf16.mxu0 0
    %7452 = vmatpush1.bf16.msra.mxu0 %v7447
    %7453 = vmatprep.subr.bf16.mxu0 0
    %7454 = vmatpush1.bf16.msra.mxu0 %v7448
    %7455 = vmatprep.subr.bf16.mxu0 0
    %7456 = vmatpush1.bf16.msra.mxu0 0
    %7457 = vmatprep.subr.bf16.mxu0 0
    %7458 = vmatpush1.bf16.msra.mxu0 0
    %7459 = vmatprep.subr.bf16.mxu0 0
    %7460 = vmatpush1.bf16.msra.mxu0 0
    %7461 = vmatprep.subr.bf16.mxu0 0
    %7462 = vmatpush1.bf16.msra.mxu0 0
    %7463 = vmatprep.subr.bf16.mxu0 0
    %7464 = vmatpush1.bf16.msra.mxu0 0
    %7465 = vmatprep.subr.bf16.mxu0 0
    %7466 = vmatpush1.bf16.msra.mxu0 0
    %7467 = vmatprep.subr.bf16.mxu0 0
    %7468 = vmatpush1.bf16.msra.mxu0 0
    %7469 = vmatprep.subr.bf16.mxu0 0
    %7470 = vmatpush1.bf16.msra.mxu0 0
    %7471 = vmatprep.subr.bf16.mxu0 0
    %7472 = vmatpush1.bf16.msra.mxu0 0
    %7473 = vmatprep.subr.bf16.mxu0 0
    %7474 = vmatpush1.bf16.msra.mxu0 0
    %7475 = vmatprep.subr.bf16.mxu0 0
    %7476 = vmatpush1.bf16.msra.mxu0 0
    %7477 = vmatprep.subr.bf16.mxu0 0
    %7478 = vmatpush1.bf16.msra.mxu0 0
    %7479 = vmatprep.subr.bf16.mxu0 0
    %7480 = vmatpush1.bf16.msra.mxu0 0
    %7481 = vmatprep.subr.bf16.mxu0 0
    %7482 = vmatpush1.bf16.msra.mxu0 0
    %7483 = vmatprep.mubr.bf16.mxu0 0
    %7484 = vmatmul.mubr.bf16.gmra.mrb[0].mxu0 %v4710
    %v7485 = vpop.f32.mrb[0].mxu0
    %v7486 = vadd.f32 0.0, %v7485
    %v7487 = vpop.f32.mrb[0].mxu0
    %v7488 = vpop.f32.mrb[0].mxu0
    %v7489 = vadd.f32 0.0, %v7488
    %v7490 = vpop.f32.mrb[0].mxu0
    %7491 = vdwg.mxu0
    %v7492 = vpack.c.bf16 %v7380, %v7380
    %v7493 = vpack.c.bf16 %v7383, %v7383
    %v7494 = vpack.c.bf16 %v7433, %v7433
    %v7495 = vpack.c.bf16 %v7436, %v7436
    %v7497 = vsel %vm512, %v7492, 0
    %v7500 = vsel %vm512, %v7494, 0
    %7502 = vmatprep.subr.bf16.mxu0 0
    %7503 = vmatpush1.bf16.xpose.msra.mxu0 %v7500
    %7504 = vmatprep.subr.bf16.mxu0 0
    %7505 = vmatpush1.bf16.xpose.msra.mxu0 0
    %7506 = vmatprep.subr.bf16.mxu0 0
    %7507 = vmatpush1.bf16.xpose.msra.mxu0 0
    %7508 = vmatprep.subr.bf16.mxu0 0
    %7509 = vmatpush1.bf16.xpose.msra.mxu0 0
    %7510 = vmatprep.subr.bf16.mxu0 0
    %7511 = vmatpush1.bf16.xpose.msra.mxu0 0
    %7512 = vmatprep.subr.bf16.mxu0 0
    %7513 = vmatpush1.bf16.xpose.msra.mxu0 0
    %7514 = vmatprep.subr.bf16.mxu0 0
    %7515 = vmatpush1.bf16.xpose.msra.mxu0 0
    %7516 = vmatprep.subr.bf16.mxu0 0
    %7517 = vmatpush1.bf16.xpose.msra.mxu0 0
    %7518 = vmatprep.subr.bf16.mxu0 0
    %7519 = vmatpush1.bf16.xpose.msra.mxu0 0
    %7520 = vmatprep.subr.bf16.mxu0 0
    %7521 = vmatpush1.bf16.xpose.msra.mxu0 0
    %7522 = vmatprep.subr.bf16.mxu0 0
    %7523 = vmatpush1.bf16.xpose.msra.mxu0 0
    %7524 = vmatprep.subr.bf16.mxu0 0
    %7525 = vmatpush1.bf16.xpose.msra.mxu0 0
    %7526 = vmatprep.subr.bf16.mxu0 0
    %7527 = vmatpush1.bf16.xpose.msra.mxu0 0
    %7528 = vmatprep.subr.bf16.mxu0 0
    %7529 = vmatpush1.bf16.xpose.msra.mxu0 0
    %7530 = vmatprep.subr.bf16.mxu0 0
    %7531 = vmatpush1.bf16.xpose.msra.mxu0 0
    %7532 = vmatprep.subr.bf16.mxu0 0
    %7533 = vmatpush1.bf16.xpose.msra.mxu0 0
    %7534 = vmatprep.mubr.bf16.mxu0 0
    %7535 = vmatmul.mubr.bf16.gmra.mrb[0].mxu0 %v7497
    %v7536 = vpop.f32.mrb[0].mxu0
    %v7537 = vadd.f32 %v505, %v7536
    %v7538 = vpop.f32.mrb[0].mxu0
    %v7539 = vpop.f32.mrb[0].mxu0
    %v7540 = vpop.f32.mrb[0].mxu0
    %7541 = vdwg.mxu0
    %v7543 = vsel %vm512, %v7493, 0
    %v7546 = vsel %vm512, %v7495, 0
    %7548 = vmatprep.subr.bf16.mxu0 0
    %7549 = vmatpush1.bf16.xpose.msra.mxu0 %v7546
    %7550 = vmatprep.subr.bf16.mxu0 0
    %7551 = vmatpush1.bf16.xpose.msra.mxu0 0
    %7552 = vmatprep.subr.bf16.mxu0 0
    %7553 = vmatpush1.bf16.xpose.msra.mxu0 0
    %7554 = vmatprep.subr.bf16.mxu0 0
    %7555 = vmatpush1.bf16.xpose.msra.mxu0 0
    %7556 = vmatprep.subr.bf16.mxu0 0
    %7557 = vmatpush1.bf16.xpose.msra.mxu0 0
    %7558 = vmatprep.subr.bf16.mxu0 0
    %7559 = vmatpush1.bf16.xpose.msra.mxu0 0
    %7560 = vmatprep.subr.bf16.mxu0 0
    %7561 = vmatpush1.bf16.xpose.msra.mxu0 0
    %7562 = vmatprep.subr.bf16.mxu0 0
    %7563 = vmatpush1.bf16.xpose.msra.mxu0 0
    %7564 = vmatprep.subr.bf16.mxu0 0
    %7565 = vmatpush1.bf16.xpose.msra.mxu0 0
    %7566 = vmatprep.subr.bf16.mxu0 0
    %7567 = vmatpush1.bf16.xpose.msra.mxu0 0
    %7568 = vmatprep.subr.bf16.mxu0 0
    %7569 = vmatpush1.bf16.xpose.msra.mxu0 0
    %7570 = vmatprep.subr.bf16.mxu0 0
    %7571 = vmatpush1.bf16.xpose.msra.mxu0 0
    %7572 = vmatprep.subr.bf16.mxu0 0
    %7573 = vmatpush1.bf16.xpose.msra.mxu0 0
    %7574 = vmatprep.subr.bf16.mxu0 0
    %7575 = vmatpush1.bf16.xpose.msra.mxu0 0
    %7576 = vmatprep.subr.bf16.mxu0 0
    %7577 = vmatpush1.bf16.xpose.msra.mxu0 0
    %7578 = vmatprep.subr.bf16.mxu0 0
    %7579 = vmatpush1.bf16.xpose.msra.mxu0 0
    %7580 = vmatprep.mubr.bf16.mxu0 0
    %7581 = vmatmul.mubr.bf16.gmra.mrb[0].mxu0 %v7543
    %v7582 = vpop.f32.mrb[0].mxu0
    %v7583 = vadd.f32 %v509, %v7582
    %v7584 = vpop.f32.mrb[0].mxu0
    %v7585 = vpop.f32.mrb[0].mxu0
    %v7586 = vpop.f32.mrb[0].mxu0
    %7587 = vdwg.mxu0
    %v7588 = vsel %vm512, %v7537, -inf
    %7589 = vmax.xlane.f32.xlu0 %v7588
    %v7590 = vpop.xlane.xlu0 %7589
    %v7591 = vsel %vm512, %v7583, -inf
    %7592 = vmax.xlane.f32.xlu0 %v7591
    %v7593 = vpop.xlane.xlu0 %7592
    %v7594 = vsub.f32 %v7537, %v7590
    %v7595 = vsub.f32 %v7583, %v7593
    %v7596 = vmul.f32 %v7594, 1.442695
    %v7597 = vpow.pop %v7596
    %v7598 = vmul.f32 %v7595, 1.442695
    %v7599 = vpow.pop %v7598
    %v7600 = vsel %vm512, %v7597, 0.0
    %7601 = vadd.xlane.f32.xlu0 %v7600
    %v7602 = vpop.xlane.xlu0 %7601
    %v7603 = vsel %vm512, %v7599, 0.0
    %7604 = vadd.xlane.f32.xlu0 %v7603
    %v7605 = vpop.xlane.xlu0 %7604
    %v7606 = vrcp.pop %v7602
    %v7607 = vrcp.pop %v7605
    %v7608 = vmul.f32 %v7597, %v7606
    %v7609 = vmul.f32 %v7599, %v7607
    %v7610 = vpack.c.bf16 %v7608, %v7608
    %v7611 = vpack.c.bf16 %v7609, %v7609
    %v7612 = vpack.c.bf16 %v7486, %v7486
    %v7613 = vpack.c.bf16 %v7489, %v7489
    %v7615 = vsel %vm512, %v7610, 0
    %v7618 = vsel %vm636, %v7612, 0
    %7620 = vmatprep.subr.bf16.mxu0 0
    %7621 = vmatpush1.bf16.msra.mxu0 %v7618
    %7622 = vmatprep.subr.bf16.mxu0 0
    %7623 = vmatpush1.bf16.msra.mxu0 0
    %7624 = vmatprep.subr.bf16.mxu0 0
    %7625 = vmatpush1.bf16.msra.mxu0 0
    %7626 = vmatprep.subr.bf16.mxu0 0
    %7627 = vmatpush1.bf16.msra.mxu0 0
    %7628 = vmatprep.subr.bf16.mxu0 0
    %7629 = vmatpush1.bf16.msra.mxu0 0
    %7630 = vmatprep.subr.bf16.mxu0 0
    %7631 = vmatpush1.bf16.msra.mxu0 0
    %7632 = vmatprep.subr.bf16.mxu0 0
    %7633 = vmatpush1.bf16.msra.mxu0 0
    %7634 = vmatprep.subr.bf16.mxu0 0
    %7635 = vmatpush1.bf16.msra.mxu0 0
    %7636 = vmatprep.subr.bf16.mxu0 0
    %7637 = vmatpush1.bf16.msra.mxu0 0
    %7638 = vmatprep.subr.bf16.mxu0 0
    %7639 = vmatpush1.bf16.msra.mxu0 0
    %7640 = vmatprep.subr.bf16.mxu0 0
    %7641 = vmatpush1.bf16.msra.mxu0 0
    %7642 = vmatprep.subr.bf16.mxu0 0
    %7643 = vmatpush1.bf16.msra.mxu0 0
    %7644 = vmatprep.subr.bf16.mxu0 0
    %7645 = vmatpush1.bf16.msra.mxu0 0
    %7646 = vmatprep.subr.bf16.mxu0 0
    %7647 = vmatpush1.bf16.msra.mxu0 0
    %7648 = vmatprep.subr.bf16.mxu0 0
    %7649 = vmatpush1.bf16.msra.mxu0 0
    %7650 = vmatprep.subr.bf16.mxu0 0
    %7651 = vmatpush1.bf16.msra.mxu0 0
    %7652 = vmatprep.mubr.bf16.mxu0 0
    %7653 = vmatmul.mubr.bf16.gmra.mrb[0].mxu0 %v7615
    %v7654 = vpop.f32.mrb[0].mxu0
    %v7655 = vadd.f32 0.0, %v7654
    %v7656 = vpop.f32.mrb[0].mxu0
    %v7657 = vpop.f32.mrb[0].mxu0
    %v7658 = vpop.f32.mrb[0].mxu0
    %7659 = vdwg.mxu0
    %v7661 = vsel %vm512, %v7611, 0
    %v7664 = vsel %vm636, %v7613, 0
    %7666 = vmatprep.subr.bf16.mxu0 0
    %7667 = vmatpush1.bf16.msra.mxu0 %v7664
    %7668 = vmatprep.subr.bf16.mxu0 0
    %7669 = vmatpush1.bf16.msra.mxu0 0
    %7670 = vmatprep.subr.bf16.mxu0 0
    %7671 = vmatpush1.bf16.msra.mxu0 0
    %7672 = vmatprep.subr.bf16.mxu0 0
    %7673 = vmatpush1.bf16.msra.mxu0 0
    %7674 = vmatprep.subr.bf16.mxu0 0
    %7675 = vmatpush1.bf16.msra.mxu0 0
    %7676 = vmatprep.subr.bf16.mxu0 0
    %7677 = vmatpush1.bf16.msra.mxu0 0
    %7678 = vmatprep.subr.bf16.mxu0 0
    %7679 = vmatpush1.bf16.msra.mxu0 0
    %7680 = vmatprep.subr.bf16.mxu0 0
    %7681 = vmatpush1.bf16.msra.mxu0 0
    %7682 = vmatprep.subr.bf16.mxu0 0
    %7683 = vmatpush1.bf16.msra.mxu0 0
    %7684 = vmatprep.subr.bf16.mxu0 0
    %7685 = vmatpush1.bf16.msra.mxu0 0
    %7686 = vmatprep.subr.bf16.mxu0 0
    %7687 = vmatpush1.bf16.msra.mxu0 0
    %7688 = vmatprep.subr.bf16.mxu0 0
    %7689 = vmatpush1.bf16.msra.mxu0 0
    %7690 = vmatprep.subr.bf16.mxu0 0
    %7691 = vmatpush1.bf16.msra.mxu0 0
    %7692 = vmatprep.subr.bf16.mxu0 0
    %7693 = vmatpush1.bf16.msra.mxu0 0
    %7694 = vmatprep.subr.bf16.mxu0 0
    %7695 = vmatpush1.bf16.msra.mxu0 0
    %7696 = vmatprep.subr.bf16.mxu0 0
    %7697 = vmatpush1.bf16.msra.mxu0 0
    %7698 = vmatprep.mubr.bf16.mxu0 0
    %7699 = vmatmul.mubr.bf16.gmra.mrb[0].mxu0 %v7661
    %v7700 = vpop.f32.mrb[0].mxu0
    %v7701 = vadd.f32 0.0, %v7700
    %v7702 = vpop.f32.mrb[0].mxu0
    %v7703 = vpop.f32.mrb[0].mxu0
    %v7704 = vpop.f32.mrb[0].mxu0
    %7705 = vdwg.mxu0
    %v7706 = vpack.c.bf16 %v7701, %v7655
    %7708 = vrot.lane.b32.xlu0 %v7492, 120
    %v7709 = vpop.permute.xlu0 %7708
    %7711 = vrot.lane.b32.xlu0 %v7494, 120
    %v7712 = vpop.permute.xlu0 %7711
    %v7714 = vsel %vm512, %v7709, 0
    %v7717 = vsel %vm512, %v7712, 0
    %7719 = vmatprep.subr.bf16.mxu0 0
    %7720 = vmatpush1.bf16.xpose.msra.mxu0 %v7717
    %7721 = vmatprep.subr.bf16.mxu0 0
    %7722 = vmatpush1.bf16.xpose.msra.mxu0 0
    %7723 = vmatprep.subr.bf16.mxu0 0
    %7724 = vmatpush1.bf16.xpose.msra.mxu0 0
    %7725 = vmatprep.subr.bf16.mxu0 0
    %7726 = vmatpush1.bf16.xpose.msra.mxu0 0
    %7727 = vmatprep.subr.bf16.mxu0 0
    %7728 = vmatpush1.bf16.xpose.msra.mxu0 0
    %7729 = vmatprep.subr.bf16.mxu0 0
    %7730 = vmatpush1.bf16.xpose.msra.mxu0 0
    %7731 = vmatprep.subr.bf16.mxu0 0
    %7732 = vmatpush1.bf16.xpose.msra.mxu0 0
    %7733 = vmatprep.subr.bf16.mxu0 0
    %7734 = vmatpush1.bf16.xpose.msra.mxu0 0
    %7735 = vmatprep.subr.bf16.mxu0 0
    %7736 = vmatpush1.bf16.xpose.msra.mxu0 0
    %7737 = vmatprep.subr.bf16.mxu0 0
    %7738 = vmatpush1.bf16.xpose.msra.mxu0 0
    %7739 = vmatprep.subr.bf16.mxu0 0
    %7740 = vmatpush1.bf16.xpose.msra.mxu0 0
    %7741 = vmatprep.subr.bf16.mxu0 0
    %7742 = vmatpush1.bf16.xpose.msra.mxu0 0
    %7743 = vmatprep.subr.bf16.mxu0 0
    %7744 = vmatpush1.bf16.xpose.msra.mxu0 0
    %7745 = vmatprep.subr.bf16.mxu0 0
    %7746 = vmatpush1.bf16.xpose.msra.mxu0 0
    %7747 = vmatprep.subr.bf16.mxu0 0
    %7748 = vmatpush1.bf16.xpose.msra.mxu0 0
    %7749 = vmatprep.subr.bf16.mxu0 0
    %7750 = vmatpush1.bf16.xpose.msra.mxu0 0
    %7751 = vmatprep.mubr.bf16.mxu0 0
    %7752 = vmatmul.mubr.bf16.gmra.mrb[0].mxu0 %v7714
    %v7753 = vpop.f32.mrb[0].mxu0
    %v7754 = vadd.f32 %v505, %v7753
    %v7755 = vpop.f32.mrb[0].mxu0
    %v7756 = vpop.f32.mrb[0].mxu0
    %v7757 = vpop.f32.mrb[0].mxu0
    %7758 = vdwg.mxu0
    %7760 = vrot.lane.b32.xlu0 %v7493, 120
    %v7761 = vpop.permute.xlu0 %7760
    %7763 = vrot.lane.b32.xlu0 %v7495, 120
    %v7764 = vpop.permute.xlu0 %7763
    %v7766 = vsel %vm512, %v7761, 0
    %v7769 = vsel %vm512, %v7764, 0
    %7771 = vmatprep.subr.bf16.mxu0 0
    %7772 = vmatpush1.bf16.xpose.msra.mxu0 %v7769
    %7773 = vmatprep.subr.bf16.mxu0 0
    %7774 = vmatpush1.bf16.xpose.msra.mxu0 0
    %7775 = vmatprep.subr.bf16.mxu0 0
    %7776 = vmatpush1.bf16.xpose.msra.mxu0 0
    %7777 = vmatprep.subr.bf16.mxu0 0
    %7778 = vmatpush1.bf16.xpose.msra.mxu0 0
    %7779 = vmatprep.subr.bf16.mxu0 0
    %7780 = vmatpush1.bf16.xpose.msra.mxu0 0
    %7781 = vmatprep.subr.bf16.mxu0 0
    %7782 = vmatpush1.bf16.xpose.msra.mxu0 0
    %7783 = vmatprep.subr.bf16.mxu0 0
    %7784 = vmatpush1.bf16.xpose.msra.mxu0 0
    %7785 = vmatprep.subr.bf16.mxu0 0
    %7786 = vmatpush1.bf16.xpose.msra.mxu0 0
    %7787 = vmatprep.subr.bf16.mxu0 0
    %7788 = vmatpush1.bf16.xpose.msra.mxu0 0
    %7789 = vmatprep.subr.bf16.mxu0 0
    %7790 = vmatpush1.bf16.xpose.msra.mxu0 0
    %7791 = vmatprep.subr.bf16.mxu0 0
    %7792 = vmatpush1.bf16.xpose.msra.mxu0 0
    %7793 = vmatprep.subr.bf16.mxu0 0
    %7794 = vmatpush1.bf16.xpose.msra.mxu0 0
    %7795 = vmatprep.subr.bf16.mxu0 0
    %7796 = vmatpush1.bf16.xpose.msra.mxu0 0
    %7797 = vmatprep.subr.bf16.mxu0 0
    %7798 = vmatpush1.bf16.xpose.msra.mxu0 0
    %7799 = vmatprep.subr.bf16.mxu0 0
    %7800 = vmatpush1.bf16.xpose.msra.mxu0 0
    %7801 = vmatprep.subr.bf16.mxu0 0
    %7802 = vmatpush1.bf16.xpose.msra.mxu0 0
    %7803 = vmatprep.mubr.bf16.mxu0 0
    %7804 = vmatmul.mubr.bf16.gmra.mrb[0].mxu0 %v7766
    %v7805 = vpop.f32.mrb[0].mxu0
    %v7806 = vadd.f32 %v509, %v7805
    %v7807 = vpop.f32.mrb[0].mxu0
    %v7808 = vpop.f32.mrb[0].mxu0
    %v7809 = vpop.f32.mrb[0].mxu0
    %7810 = vdwg.mxu0
    %v7811 = vsel %vm512, %v7754, -inf
    %7812 = vmax.xlane.f32.xlu0 %v7811
    %v7813 = vpop.xlane.xlu0 %7812
    %v7814 = vsel %vm512, %v7806, -inf
    %7815 = vmax.xlane.f32.xlu0 %v7814
    %v7816 = vpop.xlane.xlu0 %7815
    %v7817 = vsub.f32 %v7754, %v7813
    %v7818 = vsub.f32 %v7806, %v7816
    %v7819 = vmul.f32 %v7817, 1.442695
    %v7820 = vpow.pop %v7819
    %v7821 = vmul.f32 %v7818, 1.442695
    %v7822 = vpow.pop %v7821
    %v7823 = vsel %vm512, %v7820, 0.0
    %7824 = vadd.xlane.f32.xlu0 %v7823
    %v7825 = vpop.xlane.xlu0 %7824
    %v7826 = vsel %vm512, %v7822, 0.0
    %7827 = vadd.xlane.f32.xlu0 %v7826
    %v7828 = vpop.xlane.xlu0 %7827
    %v7829 = vrcp.pop %v7825
    %v7830 = vrcp.pop %v7828
    %v7831 = vmul.f32 %v7820, %v7829
    %v7832 = vmul.f32 %v7822, %v7830
    %v7833 = vpack.c.bf16 %v7831, %v7831
    %v7834 = vpack.c.bf16 %v7832, %v7832
    %7836 = vrot.lane.b32.xlu0 %v7612, 120
    %v7837 = vpop.permute.xlu0 %7836
    %v7839 = vsel %vm512, %v7833, 0
    %v7842 = vsel %vm636, %v7837, 0
    %7844 = vmatprep.subr.bf16.mxu0 0
    %7845 = vmatpush1.bf16.msra.mxu0 %v7842
    %7846 = vmatprep.subr.bf16.mxu0 0
    %7847 = vmatpush1.bf16.msra.mxu0 0
    %7848 = vmatprep.subr.bf16.mxu0 0
    %7849 = vmatpush1.bf16.msra.mxu0 0
    %7850 = vmatprep.subr.bf16.mxu0 0
    %7851 = vmatpush1.bf16.msra.mxu0 0
    %7852 = vmatprep.subr.bf16.mxu0 0
    %7853 = vmatpush1.bf16.msra.mxu0 0
    %7854 = vmatprep.subr.bf16.mxu0 0
    %7855 = vmatpush1.bf16.msra.mxu0 0
    %7856 = vmatprep.subr.bf16.mxu0 0
    %7857 = vmatpush1.bf16.msra.mxu0 0
    %7858 = vmatprep.subr.bf16.mxu0 0
    %7859 = vmatpush1.bf16.msra.mxu0 0
    %7860 = vmatprep.subr.bf16.mxu0 0
    %7861 = vmatpush1.bf16.msra.mxu0 0
    %7862 = vmatprep.subr.bf16.mxu0 0
    %7863 = vmatpush1.bf16.msra.mxu0 0
    %7864 = vmatprep.subr.bf16.mxu0 0
    %7865 = vmatpush1.bf16.msra.mxu0 0
    %7866 = vmatprep.subr.bf16.mxu0 0
    %7867 = vmatpush1.bf16.msra.mxu0 0
    %7868 = vmatprep.subr.bf16.mxu0 0
    %7869 = vmatpush1.bf16.msra.mxu0 0
    %7870 = vmatprep.subr.bf16.mxu0 0
    %7871 = vmatpush1.bf16.msra.mxu0 0
    %7872 = vmatprep.subr.bf16.mxu0 0
    %7873 = vmatpush1.bf16.msra.mxu0 0
    %7874 = vmatprep.subr.bf16.mxu0 0
    %7875 = vmatpush1.bf16.msra.mxu0 0
    %7876 = vmatprep.mubr.bf16.mxu0 0
    %7877 = vmatmul.mubr.bf16.gmra.mrb[0].mxu0 %v7839
    %v7878 = vpop.f32.mrb[0].mxu0
    %v7879 = vadd.f32 0.0, %v7878
    %v7880 = vpop.f32.mrb[0].mxu0
    %v7881 = vpop.f32.mrb[0].mxu0
    %v7882 = vpop.f32.mrb[0].mxu0
    %7883 = vdwg.mxu0
    %7885 = vrot.lane.b32.xlu0 %v7613, 120
    %v7886 = vpop.permute.xlu0 %7885
    %v7888 = vsel %vm512, %v7834, 0
    %v7891 = vsel %vm636, %v7886, 0
    %7893 = vmatprep.subr.bf16.mxu0 0
    %7894 = vmatpush1.bf16.msra.mxu0 %v7891
    %7895 = vmatprep.subr.bf16.mxu0 0
    %7896 = vmatpush1.bf16.msra.mxu0 0
    %7897 = vmatprep.subr.bf16.mxu0 0
    %7898 = vmatpush1.bf16.msra.mxu0 0
    %7899 = vmatprep.subr.bf16.mxu0 0
    %7900 = vmatpush1.bf16.msra.mxu0 0
    %7901 = vmatprep.subr.bf16.mxu0 0
    %7902 = vmatpush1.bf16.msra.mxu0 0
    %7903 = vmatprep.subr.bf16.mxu0 0
    %7904 = vmatpush1.bf16.msra.mxu0 0
    %7905 = vmatprep.subr.bf16.mxu0 0
    %7906 = vmatpush1.bf16.msra.mxu0 0
    %7907 = vmatprep.subr.bf16.mxu0 0
    %7908 = vmatpush1.bf16.msra.mxu0 0
    %7909 = vmatprep.subr.bf16.mxu0 0
    %7910 = vmatpush1.bf16.msra.mxu0 0
    %7911 = vmatprep.subr.bf16.mxu0 0
    %7912 = vmatpush1.bf16.msra.mxu0 0
    %7913 = vmatprep.subr.bf16.mxu0 0
    %7914 = vmatpush1.bf16.msra.mxu0 0
    %7915 = vmatprep.subr.bf16.mxu0 0
    %7916 = vmatpush1.bf16.msra.mxu0 0
    %7917 = vmatprep.subr.bf16.mxu0 0
    %7918 = vmatpush1.bf16.msra.mxu0 0
    %7919 = vmatprep.subr.bf16.mxu0 0
    %7920 = vmatpush1.bf16.msra.mxu0 0
    %7921 = vmatprep.subr.bf16.mxu0 0
    %7922 = vmatpush1.bf16.msra.mxu0 0
    %7923 = vmatprep.subr.bf16.mxu0 0
    %7924 = vmatpush1.bf16.msra.mxu0 0
    %7925 = vmatprep.mubr.bf16.mxu0 0
    %7926 = vmatmul.mubr.bf16.gmra.mrb[0].mxu0 %v7888
    %v7927 = vpop.f32.mrb[0].mxu0
    %v7928 = vadd.f32 0.0, %v7927
    %v7929 = vpop.f32.mrb[0].mxu0
    %v7930 = vpop.f32.mrb[0].mxu0
    %v7931 = vpop.f32.mrb[0].mxu0
    %7932 = vdwg.mxu0
    %v7933 = vpack.c.bf16 %v7928, %v7879
    %v7935 = vsel %vm512, %v7933, 0
    %v7938 = vsel %vm636, %v3256, 0
    %7940 = vmatprep.subr.bf16.mxu0 0
    %7941 = vmatpush1.bf16.msra.mxu0 %v7938
    %7942 = vmatprep.subr.bf16.mxu0 0
    %7943 = vmatpush1.bf16.msra.mxu0 0
    %7944 = vmatprep.subr.bf16.mxu0 0
    %7945 = vmatpush1.bf16.msra.mxu0 0
    %7946 = vmatprep.subr.bf16.mxu0 0
    %7947 = vmatpush1.bf16.msra.mxu0 0
    %7948 = vmatprep.subr.bf16.mxu0 0
    %7949 = vmatpush1.bf16.msra.mxu0 0
    %7950 = vmatprep.subr.bf16.mxu0 0
    %7951 = vmatpush1.bf16.msra.mxu0 0
    %7952 = vmatprep.subr.bf16.mxu0 0
    %7953 = vmatpush1.bf16.msra.mxu0 0
    %7954 = vmatprep.subr.bf16.mxu0 0
    %7955 = vmatpush1.bf16.msra.mxu0 0
    %7956 = vmatprep.subr.bf16.mxu0 0
    %7957 = vmatpush1.bf16.msra.mxu0 0
    %7958 = vmatprep.subr.bf16.mxu0 0
    %7959 = vmatpush1.bf16.msra.mxu0 0
    %7960 = vmatprep.subr.bf16.mxu0 0
    %7961 = vmatpush1.bf16.msra.mxu0 0
    %7962 = vmatprep.subr.bf16.mxu0 0
    %7963 = vmatpush1.bf16.msra.mxu0 0
    %7964 = vmatprep.subr.bf16.mxu0 0
    %7965 = vmatpush1.bf16.msra.mxu0 0
    %7966 = vmatprep.subr.bf16.mxu0 0
    %7967 = vmatpush1.bf16.msra.mxu0 0
    %7968 = vmatprep.subr.bf16.mxu0 0
    %7969 = vmatpush1.bf16.msra.mxu0 0
    %7970 = vmatprep.subr.bf16.mxu0 0
    %7971 = vmatpush1.bf16.msra.mxu0 0
    %7972 = vmatprep.mubr.bf16.mxu0 0
    %7973 = vmatmul.mubr.bf16.gmra.mrb[0].mxu0 %v7935
    %v7974 = vpop.f32.mrb[0].mxu0
    %v7975 = vadd.f32 0.0, %v7974
    %v7976 = vpop.f32.mrb[0].mxu0
    %v7977 = vpop.f32.mrb[0].mxu0
    %v7978 = vadd.f32 0.0, %v7977
    %v7979 = vpop.f32.mrb[0].mxu0
    %7980 = vdwg.mxu0
    %v7982 = vsel %vm512, %v7706, 0
    %v7985 = vsel %vm636, %v3255, 0
    %7987 = vmatprep.subr.bf16.mxu0 0
    %7988 = vmatpush1.bf16.msra.mxu0 %v7985
    %7989 = vmatprep.subr.bf16.mxu0 0
    %7990 = vmatpush1.bf16.msra.mxu0 0
    %7991 = vmatprep.subr.bf16.mxu0 0
    %7992 = vmatpush1.bf16.msra.mxu0 0
    %7993 = vmatprep.subr.bf16.mxu0 0
    %7994 = vmatpush1.bf16.msra.mxu0 0
    %7995 = vmatprep.subr.bf16.mxu0 0
    %7996 = vmatpush1.bf16.msra.mxu0 0
    %7997 = vmatprep.subr.bf16.mxu0 0
    %7998 = vmatpush1.bf16.msra.mxu0 0
    %7999 = vmatprep.subr.bf16.mxu0 0
    %8000 = vmatpush1.bf16.msra.mxu0 0
    %8001 = vmatprep.subr.bf16.mxu0 0
    %8002 = vmatpush1.bf16.msra.mxu0 0
    %8003 = vmatprep.subr.bf16.mxu0 0
    %8004 = vmatpush1.bf16.msra.mxu0 0
    %8005 = vmatprep.subr.bf16.mxu0 0
    %8006 = vmatpush1.bf16.msra.mxu0 0
    %8007 = vmatprep.subr.bf16.mxu0 0
    %8008 = vmatpush1.bf16.msra.mxu0 0
    %8009 = vmatprep.subr.bf16.mxu0 0
    %8010 = vmatpush1.bf16.msra.mxu0 0
    %8011 = vmatprep.subr.bf16.mxu0 0
    %8012 = vmatpush1.bf16.msra.mxu0 0
    %8013 = vmatprep.subr.bf16.mxu0 0
    %8014 = vmatpush1.bf16.msra.mxu0 0
    %8015 = vmatprep.subr.bf16.mxu0 0
    %8016 = vmatpush1.bf16.msra.mxu0 0
    %8017 = vmatprep.subr.bf16.mxu0 0
    %8018 = vmatpush1.bf16.msra.mxu0 0
    %8019 = vmatprep.mubr.bf16.mxu0 0
    %8020 = vmatmul.mubr.bf16.gmra.mrb[0].mxu0 %v7982
    %v8021 = vpop.f32.mrb[0].mxu0
    %v8022 = vadd.f32 %v7975, %v8021
    %v8023 = vpop.f32.mrb[0].mxu0
    %v8024 = vpop.f32.mrb[0].mxu0
    %v8025 = vadd.f32 %v7978, %v8024
    %v8026 = vpop.f32.mrb[0].mxu0
    %8027 = vdwg.mxu0
    %8028 = vrot.lane.b32.xlu0 %v7492, 112
    %v8029 = vpop.permute.xlu0 %8028
    %8030 = vrot.lane.b32.xlu0 %v7494, 112
    %v8031 = vpop.permute.xlu0 %8030
    %v8033 = vsel %vm512, %v8029, 0
    %v8036 = vsel %vm512, %v8031, 0
    %8038 = vmatprep.subr.bf16.mxu0 0
    %8039 = vmatpush1.bf16.xpose.msra.mxu0 %v8036
    %8040 = vmatprep.subr.bf16.mxu0 0
    %8041 = vmatpush1.bf16.xpose.msra.mxu0 0
    %8042 = vmatprep.subr.bf16.mxu0 0
    %8043 = vmatpush1.bf16.xpose.msra.mxu0 0
    %8044 = vmatprep.subr.bf16.mxu0 0
    %8045 = vmatpush1.bf16.xpose.msra.mxu0 0
    %8046 = vmatprep.subr.bf16.mxu0 0
    %8047 = vmatpush1.bf16.xpose.msra.mxu0 0
    %8048 = vmatprep.subr.bf16.mxu0 0
    %8049 = vmatpush1.bf16.xpose.msra.mxu0 0
    %8050 = vmatprep.subr.bf16.mxu0 0
    %8051 = vmatpush1.bf16.xpose.msra.mxu0 0
    %8052 = vmatprep.subr.bf16.mxu0 0
    %8053 = vmatpush1.bf16.xpose.msra.mxu0 0
    %8054 = vmatprep.subr.bf16.mxu0 0
    %8055 = vmatpush1.bf16.xpose.msra.mxu0 0
    %8056 = vmatprep.subr.bf16.mxu0 0
    %8057 = vmatpush1.bf16.xpose.msra.mxu0 0
    %8058 = vmatprep.subr.bf16.mxu0 0
    %8059 = vmatpush1.bf16.xpose.msra.mxu0 0
    %8060 = vmatprep.subr.bf16.mxu0 0
    %8061 = vmatpush1.bf16.xpose.msra.mxu0 0
    %8062 = vmatprep.subr.bf16.mxu0 0
    %8063 = vmatpush1.bf16.xpose.msra.mxu0 0
    %8064 = vmatprep.subr.bf16.mxu0 0
    %8065 = vmatpush1.bf16.xpose.msra.mxu0 0
    %8066 = vmatprep.subr.bf16.mxu0 0
    %8067 = vmatpush1.bf16.xpose.msra.mxu0 0
    %8068 = vmatprep.subr.bf16.mxu0 0
    %8069 = vmatpush1.bf16.xpose.msra.mxu0 0
    %8070 = vmatprep.mubr.bf16.mxu0 0
    %8071 = vmatmul.mubr.bf16.gmra.mrb[0].mxu0 %v8033
    %v8072 = vpop.f32.mrb[0].mxu0
    %v8073 = vadd.f32 %v505, %v8072
    %v8074 = vpop.f32.mrb[0].mxu0
    %v8075 = vpop.f32.mrb[0].mxu0
    %v8076 = vpop.f32.mrb[0].mxu0
    %8077 = vdwg.mxu0
    %8078 = vrot.lane.b32.xlu0 %v7493, 112
    %v8079 = vpop.permute.xlu0 %8078
    %8080 = vrot.lane.b32.xlu0 %v7495, 112
    %v8081 = vpop.permute.xlu0 %8080
    %v8083 = vsel %vm512, %v8079, 0
    %v8086 = vsel %vm512, %v8081, 0
    %8088 = vmatprep.subr.bf16.mxu0 0
    %8089 = vmatpush1.bf16.xpose.msra.mxu0 %v8086
    %8090 = vmatprep.subr.bf16.mxu0 0
    %8091 = vmatpush1.bf16.xpose.msra.mxu0 0
    %8092 = vmatprep.subr.bf16.mxu0 0
    %8093 = vmatpush1.bf16.xpose.msra.mxu0 0
    %8094 = vmatprep.subr.bf16.mxu0 0
    %8095 = vmatpush1.bf16.xpose.msra.mxu0 0
    %8096 = vmatprep.subr.bf16.mxu0 0
    %8097 = vmatpush1.bf16.xpose.msra.mxu0 0
    %8098 = vmatprep.subr.bf16.mxu0 0
    %8099 = vmatpush1.bf16.xpose.msra.mxu0 0
    %8100 = vmatprep.subr.bf16.mxu0 0
    %8101 = vmatpush1.bf16.xpose.msra.mxu0 0
    %8102 = vmatprep.subr.bf16.mxu0 0
    %8103 = vmatpush1.bf16.xpose.msra.mxu0 0
    %8104 = vmatprep.subr.bf16.mxu0 0
    %8105 = vmatpush1.bf16.xpose.msra.mxu0 0
    %8106 = vmatprep.subr.bf16.mxu0 0
    %8107 = vmatpush1.bf16.xpose.msra.mxu0 0
    %8108 = vmatprep.subr.bf16.mxu0 0
    %8109 = vmatpush1.bf16.xpose.msra.mxu0 0
    %8110 = vmatprep.subr.bf16.mxu0 0
    %8111 = vmatpush1.bf16.xpose.msra.mxu0 0
    %8112 = vmatprep.subr.bf16.mxu0 0
    %8113 = vmatpush1.bf16.xpose.msra.mxu0 0
    %8114 = vmatprep.subr.bf16.mxu0 0
    %8115 = vmatpush1.bf16.xpose.msra.mxu0 0
    %8116 = vmatprep.subr.bf16.mxu0 0
    %8117 = vmatpush1.bf16.xpose.msra.mxu0 0
    %8118 = vmatprep.subr.bf16.mxu0 0
    %8119 = vmatpush1.bf16.xpose.msra.mxu0 0
    %8120 = vmatprep.mubr.bf16.mxu0 0
    %8121 = vmatmul.mubr.bf16.gmra.mrb[0].mxu0 %v8083
    %v8122 = vpop.f32.mrb[0].mxu0
    %v8123 = vadd.f32 %v509, %v8122
    %v8124 = vpop.f32.mrb[0].mxu0
    %v8125 = vpop.f32.mrb[0].mxu0
    %v8126 = vpop.f32.mrb[0].mxu0
    %8127 = vdwg.mxu0
    %v8128 = vsel %vm512, %v8073, -inf
    %8129 = vmax.xlane.f32.xlu0 %v8128
    %v8130 = vpop.xlane.xlu0 %8129
    %v8131 = vsel %vm512, %v8123, -inf
    %8132 = vmax.xlane.f32.xlu0 %v8131
    %v8133 = vpop.xlane.xlu0 %8132
    %v8134 = vsub.f32 %v8073, %v8130
    %v8135 = vsub.f32 %v8123, %v8133
    %v8136 = vmul.f32 %v8134, 1.442695
    %v8137 = vpow.pop %v8136
    %v8138 = vmul.f32 %v8135, 1.442695
    %v8139 = vpow.pop %v8138
    %v8140 = vsel %vm512, %v8137, 0.0
    %8141 = vadd.xlane.f32.xlu0 %v8140
    %v8142 = vpop.xlane.xlu0 %8141
    %v8143 = vsel %vm512, %v8139, 0.0
    %8144 = vadd.xlane.f32.xlu0 %v8143
    %v8145 = vpop.xlane.xlu0 %8144
    %v8146 = vrcp.pop %v8142
    %v8147 = vrcp.pop %v8145
    %v8148 = vmul.f32 %v8137, %v8146
    %v8149 = vmul.f32 %v8139, %v8147
    %v8150 = vpack.c.bf16 %v8148, %v8148
    %v8151 = vpack.c.bf16 %v8149, %v8149
    %8152 = vrot.lane.b32.xlu0 %v7612, 112
    %v8153 = vpop.permute.xlu0 %8152
    %v8155 = vsel %vm512, %v8150, 0
    %v8158 = vsel %vm636, %v8153, 0
    %8160 = vmatprep.subr.bf16.mxu0 0
    %8161 = vmatpush1.bf16.msra.mxu0 %v8158
    %8162 = vmatprep.subr.bf16.mxu0 0
    %8163 = vmatpush1.bf16.msra.mxu0 0
    %8164 = vmatprep.subr.bf16.mxu0 0
    %8165 = vmatpush1.bf16.msra.mxu0 0
    %8166 = vmatprep.subr.bf16.mxu0 0
    %8167 = vmatpush1.bf16.msra.mxu0 0
    %8168 = vmatprep.subr.bf16.mxu0 0
    %8169 = vmatpush1.bf16.msra.mxu0 0
    %8170 = vmatprep.subr.bf16.mxu0 0
    %8171 = vmatpush1.bf16.msra.mxu0 0
    %8172 = vmatprep.subr.bf16.mxu0 0
    %8173 = vmatpush1.bf16.msra.mxu0 0
    %8174 = vmatprep.subr.bf16.mxu0 0
    %8175 = vmatpush1.bf16.msra.mxu0 0
    %8176 = vmatprep.subr.bf16.mxu0 0
    %8177 = vmatpush1.bf16.msra.mxu0 0
    %8178 = vmatprep.subr.bf16.mxu0 0
    %8179 = vmatpush1.bf16.msra.mxu0 0
    %8180 = vmatprep.subr.bf16.mxu0 0
    %8181 = vmatpush1.bf16.msra.mxu0 0
    %8182 = vmatprep.subr.bf16.mxu0 0
    %8183 = vmatpush1.bf16.msra.mxu0 0
    %8184 = vmatprep.subr.bf16.mxu0 0
    %8185 = vmatpush1.bf16.msra.mxu0 0
    %8186 = vmatprep.subr.bf16.mxu0 0
    %8187 = vmatpush1.bf16.msra.mxu0 0
    %8188 = vmatprep.subr.bf16.mxu0 0
    %8189 = vmatpush1.bf16.msra.mxu0 0
    %8190 = vmatprep.subr.bf16.mxu0 0
    %8191 = vmatpush1.bf16.msra.mxu0 0
    %8192 = vmatprep.mubr.bf16.mxu0 0
    %8193 = vmatmul.mubr.bf16.gmra.mrb[0].mxu0 %v8155
    %v8194 = vpop.f32.mrb[0].mxu0
    %v8195 = vadd.f32 0.0, %v8194
    %v8196 = vpop.f32.mrb[0].mxu0
    %v8197 = vpop.f32.mrb[0].mxu0
    %v8198 = vpop.f32.mrb[0].mxu0
    %8199 = vdwg.mxu0
    %8200 = vrot.lane.b32.xlu0 %v7613, 112
    %v8201 = vpop.permute.xlu0 %8200
    %v8203 = vsel %vm512, %v8151, 0
    %v8206 = vsel %vm636, %v8201, 0
    %8208 = vmatprep.subr.bf16.mxu0 0
    %8209 = vmatpush1.bf16.msra.mxu0 %v8206
    %8210 = vmatprep.subr.bf16.mxu0 0
    %8211 = vmatpush1.bf16.msra.mxu0 0
    %8212 = vmatprep.subr.bf16.mxu0 0
    %8213 = vmatpush1.bf16.msra.mxu0 0
    %8214 = vmatprep.subr.bf16.mxu0 0
    %8215 = vmatpush1.bf16.msra.mxu0 0
    %8216 = vmatprep.subr.bf16.mxu0 0
    %8217 = vmatpush1.bf16.msra.mxu0 0
    %8218 = vmatprep.subr.bf16.mxu0 0
    %8219 = vmatpush1.bf16.msra.mxu0 0
    %8220 = vmatprep.subr.bf16.mxu0 0
    %8221 = vmatpush1.bf16.msra.mxu0 0
    %8222 = vmatprep.subr.bf16.mxu0 0
    %8223 = vmatpush1.bf16.msra.mxu0 0
    %8224 = vmatprep.subr.bf16.mxu0 0
    %8225 = vmatpush1.bf16.msra.mxu0 0
    %8226 = vmatprep.subr.bf16.mxu0 0
    %8227 = vmatpush1.bf16.msra.mxu0 0
    %8228 = vmatprep.subr.bf16.mxu0 0
    %8229 = vmatpush1.bf16.msra.mxu0 0
    %8230 = vmatprep.subr.bf16.mxu0 0
    %8231 = vmatpush1.bf16.msra.mxu0 0
    %8232 = vmatprep.subr.bf16.mxu0 0
    %8233 = vmatpush1.bf16.msra.mxu0 0
    %8234 = vmatprep.subr.bf16.mxu0 0
    %8235 = vmatpush1.bf16.msra.mxu0 0
    %8236 = vmatprep.subr.bf16.mxu0 0
    %8237 = vmatpush1.bf16.msra.mxu0 0
    %8238 = vmatprep.subr.bf16.mxu0 0
    %8239 = vmatpush1.bf16.msra.mxu0 0
    %8240 = vmatprep.mubr.bf16.mxu0 0
    %8241 = vmatmul.mubr.bf16.gmra.mrb[0].mxu0 %v8203
    %v8242 = vpop.f32.mrb[0].mxu0
    %v8243 = vadd.f32 0.0, %v8242
    %v8244 = vpop.f32.mrb[0].mxu0
    %v8245 = vpop.f32.mrb[0].mxu0
    %v8246 = vpop.f32.mrb[0].mxu0
    %8247 = vdwg.mxu0
    %v8248 = vpack.c.bf16 %v8243, %v8195
    %v8250 = vsel %vm512, %v8248, 0
    %v8253 = vsel %vm636, %v3257, 0
    %8255 = vmatprep.subr.bf16.mxu0 0
    %8256 = vmatpush1.bf16.msra.mxu0 %v8253
    %8257 = vmatprep.subr.bf16.mxu0 0
    %8258 = vmatpush1.bf16.msra.mxu0 0
    %8259 = vmatprep.subr.bf16.mxu0 0
    %8260 = vmatpush1.bf16.msra.mxu0 0
    %8261 = vmatprep.subr.bf16.mxu0 0
    %8262 = vmatpush1.bf16.msra.mxu0 0
    %8263 = vmatprep.subr.bf16.mxu0 0
    %8264 = vmatpush1.bf16.msra.mxu0 0
    %8265 = vmatprep.subr.bf16.mxu0 0
    %8266 = vmatpush1.bf16.msra.mxu0 0
    %8267 = vmatprep.subr.bf16.mxu0 0
    %8268 = vmatpush1.bf16.msra.mxu0 0
    %8269 = vmatprep.subr.bf16.mxu0 0
    %8270 = vmatpush1.bf16.msra.mxu0 0
    %8271 = vmatprep.subr.bf16.mxu0 0
    %8272 = vmatpush1.bf16.msra.mxu0 0
    %8273 = vmatprep.subr.bf16.mxu0 0
    %8274 = vmatpush1.bf16.msra.mxu0 0
    %8275 = vmatprep.subr.bf16.mxu0 0
    %8276 = vmatpush1.bf16.msra.mxu0 0
    %8277 = vmatprep.subr.bf16.mxu0 0
    %8278 = vmatpush1.bf16.msra.mxu0 0
    %8279 = vmatprep.subr.bf16.mxu0 0
    %8280 = vmatpush1.bf16.msra.mxu0 0
    %8281 = vmatprep.subr.bf16.mxu0 0
    %8282 = vmatpush1.bf16.msra.mxu0 0
    %8283 = vmatprep.subr.bf16.mxu0 0
    %8284 = vmatpush1.bf16.msra.mxu0 0
    %8285 = vmatprep.subr.bf16.mxu0 0
    %8286 = vmatpush1.bf16.msra.mxu0 0
    %8287 = vmatprep.mubr.bf16.mxu0 0
    %8288 = vmatmul.mubr.bf16.gmra.mrb[0].mxu0 %v8250
    %v8289 = vpop.f32.mrb[0].mxu0
    %v8290 = vadd.f32 0.0, %v8289
    %v8291 = vpop.f32.mrb[0].mxu0
    %v8292 = vpop.f32.mrb[0].mxu0
    %v8293 = vadd.f32 0.0, %v8292
    %v8294 = vpop.f32.mrb[0].mxu0
    %8295 = vdwg.mxu0
    %v8296 = vadd.f32 %v8022, %v8290
    %v8297 = vadd.f32 %v8025, %v8293
    %8298 = vrot.lane.b32.xlu0 %v7492, 104
    %v8299 = vpop.permute.xlu0 %8298
    %8300 = vrot.lane.b32.xlu0 %v7494, 104
    %v8301 = vpop.permute.xlu0 %8300
    %v8303 = vsel %vm512, %v8299, 0
    %v8306 = vsel %vm512, %v8301, 0
    %8308 = vmatprep.subr.bf16.mxu0 0
    %8309 = vmatpush1.bf16.xpose.msra.mxu0 %v8306
    %8310 = vmatprep.subr.bf16.mxu0 0
    %8311 = vmatpush1.bf16.xpose.msra.mxu0 0
    %8312 = vmatprep.subr.bf16.mxu0 0
    %8313 = vmatpush1.bf16.xpose.msra.mxu0 0
    %8314 = vmatprep.subr.bf16.mxu0 0
    %8315 = vmatpush1.bf16.xpose.msra.mxu0 0
    %8316 = vmatprep.subr.bf16.mxu0 0
    %8317 = vmatpush1.bf16.xpose.msra.mxu0 0
    %8318 = vmatprep.subr.bf16.mxu0 0
    %8319 = vmatpush1.bf16.xpose.msra.mxu0 0
    %8320 = vmatprep.subr.bf16.mxu0 0
    %8321 = vmatpush1.bf16.xpose.msra.mxu0 0
    %8322 = vmatprep.subr.bf16.mxu0 0
    %8323 = vmatpush1.bf16.xpose.msra.mxu0 0
    %8324 = vmatprep.subr.bf16.mxu0 0
    %8325 = vmatpush1.bf16.xpose.msra.mxu0 0
    %8326 = vmatprep.subr.bf16.mxu0 0
    %8327 = vmatpush1.bf16.xpose.msra.mxu0 0
    %8328 = vmatprep.subr.bf16.mxu0 0
    %8329 = vmatpush1.bf16.xpose.msra.mxu0 0
    %8330 = vmatprep.subr.bf16.mxu0 0
    %8331 = vmatpush1.bf16.xpose.msra.mxu0 0
    %8332 = vmatprep.subr.bf16.mxu0 0
    %8333 = vmatpush1.bf16.xpose.msra.mxu0 0
    %8334 = vmatprep.subr.bf16.mxu0 0
    %8335 = vmatpush1.bf16.xpose.msra.mxu0 0
    %8336 = vmatprep.subr.bf16.mxu0 0
    %8337 = vmatpush1.bf16.xpose.msra.mxu0 0
    %8338 = vmatprep.subr.bf16.mxu0 0
    %8339 = vmatpush1.bf16.xpose.msra.mxu0 0
    %8340 = vmatprep.mubr.bf16.mxu0 0
    %8341 = vmatmul.mubr.bf16.gmra.mrb[0].mxu0 %v8303
    %v8342 = vpop.f32.mrb[0].mxu0
    %v8343 = vadd.f32 %v505, %v8342
    %v8344 = vpop.f32.mrb[0].mxu0
    %v8345 = vpop.f32.mrb[0].mxu0
    %v8346 = vpop.f32.mrb[0].mxu0
    %8347 = vdwg.mxu0
    %8348 = vrot.lane.b32.xlu0 %v7493, 104
    %v8349 = vpop.permute.xlu0 %8348
    %8350 = vrot.lane.b32.xlu0 %v7495, 104
    %v8351 = vpop.permute.xlu0 %8350
    %v8353 = vsel %vm512, %v8349, 0
    %v8356 = vsel %vm512, %v8351, 0
    %8358 = vmatprep.subr.bf16.mxu0 0
    %8359 = vmatpush1.bf16.xpose.msra.mxu0 %v8356
    %8360 = vmatprep.subr.bf16.mxu0 0
    %8361 = vmatpush1.bf16.xpose.msra.mxu0 0
    %8362 = vmatprep.subr.bf16.mxu0 0
    %8363 = vmatpush1.bf16.xpose.msra.mxu0 0
    %8364 = vmatprep.subr.bf16.mxu0 0
    %8365 = vmatpush1.bf16.xpose.msra.mxu0 0
    %8366 = vmatprep.subr.bf16.mxu0 0
    %8367 = vmatpush1.bf16.xpose.msra.mxu0 0
    %8368 = vmatprep.subr.bf16.mxu0 0
    %8369 = vmatpush1.bf16.xpose.msra.mxu0 0
    %8370 = vmatprep.subr.bf16.mxu0 0
    %8371 = vmatpush1.bf16.xpose.msra.mxu0 0
    %8372 = vmatprep.subr.bf16.mxu0 0
    %8373 = vmatpush1.bf16.xpose.msra.mxu0 0
    %8374 = vmatprep.subr.bf16.mxu0 0
    %8375 = vmatpush1.bf16.xpose.msra.mxu0 0
    %8376 = vmatprep.subr.bf16.mxu0 0
    %8377 = vmatpush1.bf16.xpose.msra.mxu0 0
    %8378 = vmatprep.subr.bf16.mxu0 0
    %8379 = vmatpush1.bf16.xpose.msra.mxu0 0
    %8380 = vmatprep.subr.bf16.mxu0 0
    %8381 = vmatpush1.bf16.xpose.msra.mxu0 0
    %8382 = vmatprep.subr.bf16.mxu0 0
    %8383 = vmatpush1.bf16.xpose.msra.mxu0 0
    %8384 = vmatprep.subr.bf16.mxu0 0
    %8385 = vmatpush1.bf16.xpose.msra.mxu0 0
    %8386 = vmatprep.subr.bf16.mxu0 0
    %8387 = vmatpush1.bf16.xpose.msra.mxu0 0
    %8388 = vmatprep.subr.bf16.mxu0 0
    %8389 = vmatpush1.bf16.xpose.msra.mxu0 0
    %8390 = vmatprep.mubr.bf16.mxu0 0
    %8391 = vmatmul.mubr.bf16.gmra.mrb[0].mxu0 %v8353
    %v8392 = vpop.f32.mrb[0].mxu0
    %v8393 = vadd.f32 %v509, %v8392
    %v8394 = vpop.f32.mrb[0].mxu0
    %v8395 = vpop.f32.mrb[0].mxu0
    %v8396 = vpop.f32.mrb[0].mxu0
    %8397 = vdwg.mxu0
    %v8398 = vsel %vm512, %v8343, -inf
    %8399 = vmax.xlane.f32.xlu0 %v8398
    %v8400 = vpop.xlane.xlu0 %8399
    %v8401 = vsel %vm512, %v8393, -inf
    %8402 = vmax.xlane.f32.xlu0 %v8401
    %v8403 = vpop.xlane.xlu0 %8402
    %v8404 = vsub.f32 %v8343, %v8400
    %v8405 = vsub.f32 %v8393, %v8403
    %v8406 = vmul.f32 %v8404, 1.442695
    %v8407 = vpow.pop %v8406
    %v8408 = vmul.f32 %v8405, 1.442695
    %v8409 = vpow.pop %v8408
    %v8410 = vsel %vm512, %v8407, 0.0
    %8411 = vadd.xlane.f32.xlu0 %v8410
    %v8412 = vpop.xlane.xlu0 %8411
    %v8413 = vsel %vm512, %v8409, 0.0
    %8414 = vadd.xlane.f32.xlu0 %v8413
    %v8415 = vpop.xlane.xlu0 %8414
    %v8416 = vrcp.pop %v8412
    %v8417 = vrcp.pop %v8415
    %v8418 = vmul.f32 %v8407, %v8416
    %v8419 = vmul.f32 %v8409, %v8417
    %v8420 = vpack.c.bf16 %v8418, %v8418
    %v8421 = vpack.c.bf16 %v8419, %v8419
    %8422 = vrot.lane.b32.xlu0 %v7612, 104
    %v8423 = vpop.permute.xlu0 %8422
    %v8425 = vsel %vm512, %v8420, 0
    %v8428 = vsel %vm636, %v8423, 0
    %8430 = vmatprep.subr.bf16.mxu0 0
    %8431 = vmatpush1.bf16.msra.mxu0 %v8428
    %8432 = vmatprep.subr.bf16.mxu0 0
    %8433 = vmatpush1.bf16.msra.mxu0 0
    %8434 = vmatprep.subr.bf16.mxu0 0
    %8435 = vmatpush1.bf16.msra.mxu0 0
    %8436 = vmatprep.subr.bf16.mxu0 0
    %8437 = vmatpush1.bf16.msra.mxu0 0
    %8438 = vmatprep.subr.bf16.mxu0 0
    %8439 = vmatpush1.bf16.msra.mxu0 0
    %8440 = vmatprep.subr.bf16.mxu0 0
    %8441 = vmatpush1.bf16.msra.mxu0 0
    %8442 = vmatprep.subr.bf16.mxu0 0
    %8443 = vmatpush1.bf16.msra.mxu0 0
    %8444 = vmatprep.subr.bf16.mxu0 0
    %8445 = vmatpush1.bf16.msra.mxu0 0
    %8446 = vmatprep.subr.bf16.mxu0 0
    %8447 = vmatpush1.bf16.msra.mxu0 0
    %8448 = vmatprep.subr.bf16.mxu0 0
    %8449 = vmatpush1.bf16.msra.mxu0 0
    %8450 = vmatprep.subr.bf16.mxu0 0
    %8451 = vmatpush1.bf16.msra.mxu0 0
    %8452 = vmatprep.subr.bf16.mxu0 0
    %8453 = vmatpush1.bf16.msra.mxu0 0
    %8454 = vmatprep.subr.bf16.mxu0 0
    %8455 = vmatpush1.bf16.msra.mxu0 0
    %8456 = vmatprep.subr.bf16.mxu0 0
    %8457 = vmatpush1.bf16.msra.mxu0 0
    %8458 = vmatprep.subr.bf16.mxu0 0
    %8459 = vmatpush1.bf16.msra.mxu0 0
    %8460 = vmatprep.subr.bf16.mxu0 0
    %8461 = vmatpush1.bf16.msra.mxu0 0
    %8462 = vmatprep.mubr.bf16.mxu0 0
    %8463 = vmatmul.mubr.bf16.gmra.mrb[0].mxu0 %v8425
    %v8464 = vpop.f32.mrb[0].mxu0
    %v8465 = vadd.f32 0.0, %v8464
    %v8466 = vpop.f32.mrb[0].mxu0
    %v8467 = vpop.f32.mrb[0].mxu0
    %v8468 = vpop.f32.mrb[0].mxu0
    %8469 = vdwg.mxu0
    %8470 = vrot.lane.b32.xlu0 %v7613, 104
    %v8471 = vpop.permute.xlu0 %8470
    %v8473 = vsel %vm512, %v8421, 0
    %v8476 = vsel %vm636, %v8471, 0
    %8478 = vmatprep.subr.bf16.mxu0 0
    %8479 = vmatpush1.bf16.msra.mxu0 %v8476
    %8480 = vmatprep.subr.bf16.mxu0 0
    %8481 = vmatpush1.bf16.msra.mxu0 0
    %8482 = vmatprep.subr.bf16.mxu0 0
    %8483 = vmatpush1.bf16.msra.mxu0 0
    %8484 = vmatprep.subr.bf16.mxu0 0
    %8485 = vmatpush1.bf16.msra.mxu0 0
    %8486 = vmatprep.subr.bf16.mxu0 0
    %8487 = vmatpush1.bf16.msra.mxu0 0
    %8488 = vmatprep.subr.bf16.mxu0 0
    %8489 = vmatpush1.bf16.msra.mxu0 0
    %8490 = vmatprep.subr.bf16.mxu0 0
    %8491 = vmatpush1.bf16.msra.mxu0 0
    %8492 = vmatprep.subr.bf16.mxu0 0
    %8493 = vmatpush1.bf16.msra.mxu0 0
    %8494 = vmatprep.subr.bf16.mxu0 0
    %8495 = vmatpush1.bf16.msra.mxu0 0
    %8496 = vmatprep.subr.bf16.mxu0 0
    %8497 = vmatpush1.bf16.msra.mxu0 0
    %8498 = vmatprep.subr.bf16.mxu0 0
    %8499 = vmatpush1.bf16.msra.mxu0 0
    %8500 = vmatprep.subr.bf16.mxu0 0
    %8501 = vmatpush1.bf16.msra.mxu0 0
    %8502 = vmatprep.subr.bf16.mxu0 0
    %8503 = vmatpush1.bf16.msra.mxu0 0
    %8504 = vmatprep.subr.bf16.mxu0 0
    %8505 = vmatpush1.bf16.msra.mxu0 0
    %8506 = vmatprep.subr.bf16.mxu0 0
    %8507 = vmatpush1.bf16.msra.mxu0 0
    %8508 = vmatprep.subr.bf16.mxu0 0
    %8509 = vmatpush1.bf16.msra.mxu0 0
    %8510 = vmatprep.mubr.bf16.mxu0 0
    %8511 = vmatmul.mubr.bf16.gmra.mrb[0].mxu0 %v8473
    %v8512 = vpop.f32.mrb[0].mxu0
    %v8513 = vadd.f32 0.0, %v8512
    %v8514 = vpop.f32.mrb[0].mxu0
    %v8515 = vpop.f32.mrb[0].mxu0
    %v8516 = vpop.f32.mrb[0].mxu0
    %8517 = vdwg.mxu0
    %v8518 = vpack.c.bf16 %v8513, %v8465
    %v8520 = vsel %vm512, %v8518, 0
    %v8523 = vsel %vm636, %v3258, 0
    %8525 = vmatprep.subr.bf16.mxu0 0
    %8526 = vmatpush1.bf16.msra.mxu0 %v8523
    %8527 = vmatprep.subr.bf16.mxu0 0
    %8528 = vmatpush1.bf16.msra.mxu0 0
    %8529 = vmatprep.subr.bf16.mxu0 0
    %8530 = vmatpush1.bf16.msra.mxu0 0
    %8531 = vmatprep.subr.bf16.mxu0 0
    %8532 = vmatpush1.bf16.msra.mxu0 0
    %8533 = vmatprep.subr.bf16.mxu0 0
    %8534 = vmatpush1.bf16.msra.mxu0 0
    %8535 = vmatprep.subr.bf16.mxu0 0
    %8536 = vmatpush1.bf16.msra.mxu0 0
    %8537 = vmatprep.subr.bf16.mxu0 0
    %8538 = vmatpush1.bf16.msra.mxu0 0
    %8539 = vmatprep.subr.bf16.mxu0 0
    %8540 = vmatpush1.bf16.msra.mxu0 0
    %8541 = vmatprep.subr.bf16.mxu0 0
    %8542 = vmatpush1.bf16.msra.mxu0 0
    %8543 = vmatprep.subr.bf16.mxu0 0
    %8544 = vmatpush1.bf16.msra.mxu0 0
    %8545 = vmatprep.subr.bf16.mxu0 0
    %8546 = vmatpush1.bf16.msra.mxu0 0
    %8547 = vmatprep.subr.bf16.mxu0 0
    %8548 = vmatpush1.bf16.msra.mxu0 0
    %8549 = vmatprep.subr.bf16.mxu0 0
    %8550 = vmatpush1.bf16.msra.mxu0 0
    %8551 = vmatprep.subr.bf16.mxu0 0
    %8552 = vmatpush1.bf16.msra.mxu0 0
    %8553 = vmatprep.subr.bf16.mxu0 0
    %8554 = vmatpush1.bf16.msra.mxu0 0
    %8555 = vmatprep.subr.bf16.mxu0 0
    %8556 = vmatpush1.bf16.msra.mxu0 0
    %8557 = vmatprep.mubr.bf16.mxu0 0
    %8558 = vmatmul.mubr.bf16.gmra.mrb[0].mxu0 %v8520
    %v8559 = vpop.f32.mrb[0].mxu0
    %v8560 = vadd.f32 0.0, %v8559
    %v8561 = vpop.f32.mrb[0].mxu0
    %v8562 = vpop.f32.mrb[0].mxu0
    %v8563 = vadd.f32 0.0, %v8562
    %v8564 = vpop.f32.mrb[0].mxu0
    %8565 = vdwg.mxu0
    %v8566 = vadd.f32 %v8296, %v8560
    %v8567 = vadd.f32 %v8297, %v8563
    %v8568 = vadd.f32 %v7305, %v8566
    %v8569 = vadd.f32 %v7306, %v8567
    %v8570 = vmul.f32 %v8568, %v8568
    %v8571 = vmul.f32 %v8569, %v8569
    %v8572 = vsel %vm311, %v8570, 0.0
    %8573 = vadd.xlane.f32.xlu0 %v8572
    %v8574 = vpop.xlane.xlu0 %8573
    %v8575 = vsel %vm311, %v8571, 0.0
    %8576 = vadd.xlane.f32.xlu0 %v8575
    %v8577 = vpop.xlane.xlu0 %8576
    %v8578 = vmul.f32 %v8574, %v318
    %v8579 = vmul.f32 %v8577, %v318
    %v8580 = vadd.f32 %v8578, 1e-06
    %v8581 = vadd.f32 %v8579, 1e-06
    %v8582 = vrsqrt.pop %v8580
    %v8583 = vrsqrt.pop %v8581
    %v8584 = vmul.f32 %v8568, %v8582
    %v8585 = vmul.f32 %v8569, %v8583
    %v8586 = vlaneseq
    %v8587 = vshrl.u32 %v8586, 7
    %v8588 = vsub.s32 1, %v8587
    %v8589 = vrot.slane %v3285, %v8588
    %v8590 = vmul.f32 %v8584, %v8589
    %v8591 = vmul.f32 %v8585, %v8589
    %v8592 = vpack.c.bf16 %v8591, %v8590
    %v8597 = vunpack.c.l.b16 %v3265
    %v8598 = vunpack.c.l.b16 %v3266
    %v8599 = vunpack.c.l.b16 %v3267
    %v8600 = vunpack.c.l.b16 %v3268
    %v8601 = vpack.c.b16 %v8598, %v8597
    %v8602 = vpack.c.b16 %v8600, %v8599
    %v8606 = vsel %vm311, %v8592, 0
    %8608 = vmatprep.subr.bf16.mxu0 0
    %8609 = vmatpush1.bf16.msra.mxu0 %v8601
    %8610 = vmatprep.subr.bf16.mxu0 0
    %8611 = vmatpush1.bf16.msra.mxu0 %v8602
    %8612 = vmatprep.subr.bf16.mxu0 0
    %8613 = vmatpush1.bf16.msra.mxu0 0
    %8614 = vmatprep.subr.bf16.mxu0 0
    %8615 = vmatpush1.bf16.msra.mxu0 0
    %8616 = vmatprep.subr.bf16.mxu0 0
    %8617 = vmatpush1.bf16.msra.mxu0 0
    %8618 = vmatprep.subr.bf16.mxu0 0
    %8619 = vmatpush1.bf16.msra.mxu0 0
    %8620 = vmatprep.subr.bf16.mxu0 0
    %8621 = vmatpush1.bf16.msra.mxu0 0
    %8622 = vmatprep.subr.bf16.mxu0 0
    %8623 = vmatpush1.bf16.msra.mxu0 0
    %8624 = vmatprep.subr.bf16.mxu0 0
    %8625 = vmatpush1.bf16.msra.mxu0 0
    %8626 = vmatprep.subr.bf16.mxu0 0
    %8627 = vmatpush1.bf16.msra.mxu0 0
    %8628 = vmatprep.subr.bf16.mxu0 0
    %8629 = vmatpush1.bf16.msra.mxu0 0
    %8630 = vmatprep.subr.bf16.mxu0 0
    %8631 = vmatpush1.bf16.msra.mxu0 0
    %8632 = vmatprep.subr.bf16.mxu0 0
    %8633 = vmatpush1.bf16.msra.mxu0 0
    %8634 = vmatprep.subr.bf16.mxu0 0
    %8635 = vmatpush1.bf16.msra.mxu0 0
    %8636 = vmatprep.subr.bf16.mxu0 0
    %8637 = vmatpush1.bf16.msra.mxu0 0
    %8638 = vmatprep.subr.bf16.mxu0 0
    %8639 = vmatpush1.bf16.msra.mxu0 0
    %8640 = vmatprep.mubr.bf16.mxu0 0
    %8641 = vmatmul.mubr.bf16.gmra.mrb[0].mxu0 %v8606
    %v8642 = vpop.f32.mrb[0].mxu0
    %v8643 = vadd.f32 0.0, %v8642
    %v8644 = vpop.f32.mrb[0].mxu0
    %v8645 = vpop.f32.mrb[0].mxu0
    %v8646 = vadd.f32 0.0, %v8645
    %v8647 = vpop.f32.mrb[0].mxu0
    %8648 = vdwg.mxu0
    %v8649 = vmax.f32 %v8643, 0.0
    %v8650 = vmax.f32 %v8646, 0.0
    %v8651 = vpack.c.bf16 %v8650, %v8649
    %v8660 = vunpack.c.l.b16 %v3277
    %v8661 = vunpack.c.l.b16 %v3278
    %v8662 = vunpack.c.l.b16 %v3279
    %v8663 = vunpack.c.l.b16 %v3280
    %v8664 = vunpack.c.l.b16 %v3281
    %v8665 = vunpack.c.l.b16 %v3282
    %v8666 = vunpack.c.l.b16 %v3283
    %v8667 = vunpack.c.l.b16 %v3284
    %v8668 = vpack.c.b16 %v8661, %v8660
    %v8669 = vpack.c.b16 %v8663, %v8662
    %v8670 = vpack.c.b16 %v8665, %v8664
    %v8671 = vpack.c.b16 %v8667, %v8666
    %v8677 = vsel %vm264, %v8651, 0
    %8679 = vmatprep.subr.bf16.mxu0 0
    %8680 = vmatpush1.bf16.msra.mxu0 %v8668
    %8681 = vmatprep.subr.bf16.mxu0 0
    %8682 = vmatpush1.bf16.msra.mxu0 %v8669
    %8683 = vmatprep.subr.bf16.mxu0 0
    %8684 = vmatpush1.bf16.msra.mxu0 %v8670
    %8685 = vmatprep.subr.bf16.mxu0 0
    %8686 = vmatpush1.bf16.msra.mxu0 %v8671
    %8687 = vmatprep.subr.bf16.mxu0 0
    %8688 = vmatpush1.bf16.msra.mxu0 0
    %8689 = vmatprep.subr.bf16.mxu0 0
    %8690 = vmatpush1.bf16.msra.mxu0 0
    %8691 = vmatprep.subr.bf16.mxu0 0
    %8692 = vmatpush1.bf16.msra.mxu0 0
    %8693 = vmatprep.subr.bf16.mxu0 0
    %8694 = vmatpush1.bf16.msra.mxu0 0
    %8695 = vmatprep.subr.bf16.mxu0 0
    %8696 = vmatpush1.bf16.msra.mxu0 0
    %8697 = vmatprep.subr.bf16.mxu0 0
    %8698 = vmatpush1.bf16.msra.mxu0 0
    %8699 = vmatprep.subr.bf16.mxu0 0
    %8700 = vmatpush1.bf16.msra.mxu0 0
    %8701 = vmatprep.subr.bf16.mxu0 0
    %8702 = vmatpush1.bf16.msra.mxu0 0
    %8703 = vmatprep.subr.bf16.mxu0 0
    %8704 = vmatpush1.bf16.msra.mxu0 0
    %8705 = vmatprep.subr.bf16.mxu0 0
    %8706 = vmatpush1.bf16.msra.mxu0 0
    %8707 = vmatprep.subr.bf16.mxu0 0
    %8708 = vmatpush1.bf16.msra.mxu0 0
    %8709 = vmatprep.subr.bf16.mxu0 0
    %8710 = vmatpush1.bf16.msra.mxu0 0
    %8711 = vmatprep.mubr.bf16.mxu0 0
    %8712 = vmatmul.mubr.bf16.gmra.mrb[0].mxu0 %v8677
    %v8713 = vpop.f32.mrb[0].mxu0
    %v8714 = vadd.f32 0.0, %v8713
    %v8715 = vpop.f32.mrb[0].mxu0
    %v8716 = vpop.f32.mrb[0].mxu0
    %v8717 = vadd.f32 0.0, %v8716
    %v8718 = vpop.f32.mrb[0].mxu0
    %8719 = vdwg.mxu0
    %v8720 = vadd.f32 %v8568, %v8714
    %v8721 = vadd.f32 %v8569, %v8717
    %v8722 = vmul.f32 %v8720, %v8720
    %v8723 = vmul.f32 %v8721, %v8721
    %v8724 = vsel %vm311, %v8722, 0.0
    %8725 = vadd.xlane.f32.xlu0 %v8724
    %v8726 = vpop.xlane.xlu0 %8725
    %v8727 = vsel %vm311, %v8723, 0.0
    %8728 = vadd.xlane.f32.xlu0 %v8727
    %v8729 = vpop.xlane.xlu0 %8728
    %v8730 = vmul.f32 %v8726, %v318
    %v8731 = vmul.f32 %v8729, %v318
    %v8732 = vadd.f32 %v8730, 1e-06
    %v8733 = vadd.f32 %v8731, 1e-06
    %v8734 = vrsqrt.pop %v8732
    %v8735 = vrsqrt.pop %v8733
    %v8736 = vmul.f32 %v8720, %v8734
    %v8737 = vmul.f32 %v8721, %v8735
    %v8739 = vlaneseq
    %v8740 = vshrl.u32 %v8739, 7
    %v8741 = vsub.s32 0, %v8740
    %v8742 = vrot.slane %v3286, %v8741
    %v8744 = vmul.f32 %v8736, %v8742
    %v8745 = vmul.f32 %v8737, %v8742
    %v8746 = vmul.f32 %v8744, 0.17677669
    %v8747 = vmul.f32 %v8745, 0.17677669
    %v8748 = vpack.c.bf16 %v8747, %v8746
    %v8753 = vunpack.c.l.b16 %v148
    %v8754 = vunpack.c.l.b16 %v149
    %v8755 = vunpack.c.l.b16 %v150
    %v8756 = vunpack.c.l.b16 %v151
    %v8757 = vpack.c.b16 %v8754, %v8753
    %v8758 = vpack.c.b16 %v8756, %v8755
    %v8762 = vsel %vm311, %v8748, 0
    %8764 = vmatprep.subr.bf16.mxu0 0
    %8765 = vmatpush1.bf16.msra.mxu0 %v8757
    %8766 = vmatprep.subr.bf16.mxu0 0
    %8767 = vmatpush1.bf16.msra.mxu0 %v8758
    %8768 = vmatprep.subr.bf16.mxu0 0
    %8769 = vmatpush1.bf16.msra.mxu0 0
    %8770 = vmatprep.subr.bf16.mxu0 0
    %8771 = vmatpush1.bf16.msra.mxu0 0
    %8772 = vmatprep.subr.bf16.mxu0 0
    %8773 = vmatpush1.bf16.msra.mxu0 0
    %8774 = vmatprep.subr.bf16.mxu0 0
    %8775 = vmatpush1.bf16.msra.mxu0 0
    %8776 = vmatprep.subr.bf16.mxu0 0
    %8777 = vmatpush1.bf16.msra.mxu0 0
    %8778 = vmatprep.subr.bf16.mxu0 0
    %8779 = vmatpush1.bf16.msra.mxu0 0
    %8780 = vmatprep.subr.bf16.mxu0 0
    %8781 = vmatpush1.bf16.msra.mxu0 0
    %8782 = vmatprep.subr.bf16.mxu0 0
    %8783 = vmatpush1.bf16.msra.mxu0 0
    %8784 = vmatprep.subr.bf16.mxu0 0
    %8785 = vmatpush1.bf16.msra.mxu0 0
    %8786 = vmatprep.subr.bf16.mxu0 0
    %8787 = vmatpush1.bf16.msra.mxu0 0
    %8788 = vmatprep.subr.bf16.mxu0 0
    %8789 = vmatpush1.bf16.msra.mxu0 0
    %8790 = vmatprep.subr.bf16.mxu0 0
    %8791 = vmatpush1.bf16.msra.mxu0 0
    %8792 = vmatprep.subr.bf16.mxu0 0
    %8793 = vmatpush1.bf16.msra.mxu0 0
    %8794 = vmatprep.subr.bf16.mxu0 0
    %8795 = vmatpush1.bf16.msra.mxu0 0
    %8796 = vmatprep.mubr.bf16.mxu0 0
    %8797 = vmatmul.mubr.bf16.gmra.mrb[0].mxu0 %v8762
    %v8798 = vpop.f32.mrb[0].mxu0
    %v8799 = vadd.f32 0.0, %v8798
    %v8800 = vpop.f32.mrb[0].mxu0
    %v8801 = vpop.f32.mrb[0].mxu0
    %v8802 = vadd.f32 0.0, %v8801
    %v8803 = vpop.f32.mrb[0].mxu0
    %8804 = vdwg.mxu0
    %8805 = vst.msk [vmem:[#allocation4] sm:$0xff] %vm264, %v8799
    %8806 = vst.msk [vmem:[#allocation4 + $0x8] sm:$0xff] %vm264, %v8802
    %v8807 = vld [vmem:[%s5] sm:$0xff]
    %v8808 = vld [vmem:[%s5 + $0x8] sm:$0xff]
    %vm8809 = vcmp.ne.s32.totalorder %v8807, 4294967196
    %vm8810 = vcmp.ne.s32.totalorder %v8808, 4294967196
    %v8811 = vsel %vm8809, 1, 0
    %v8812 = vsel %vm8810, 1, 0
    %v8813 = vcvt.s32.f32 %v8811
    %v8814 = vcvt.s32.f32 %v8812
    %v8815 = vsel %vm264, %v8799, -inf
    %8816 = vmax.xlane.f32.xlu0 %v8815
    %v8817 = vpop.xlane.xlu0 %8816
    %v8818 = vsel %vm264, %v8802, -inf
    %8819 = vmax.xlane.f32.xlu0 %v8818
    %v8820 = vpop.xlane.xlu0 %8819
    %v8821 = vsub.f32 %v8799, %v8817
    %v8822 = vsub.f32 %v8802, %v8820
    %v8823 = vmul.f32 %v8821, 1.442695
    %v8824 = vpow.pop %v8823
    %v8825 = vmul.f32 %v8822, 1.442695
    %v8826 = vpow.pop %v8825
    %v8827 = vsel %vm264, %v8824, 0.0
    %8828 = vadd.xlane.f32.xlu0 %v8827
    %v8829 = vpop.xlane.xlu0 %8828
    %v8830 = vsel %vm264, %v8826, 0.0
    %8831 = vadd.xlane.f32.xlu0 %v8830
    %v8832 = vpop.xlane.xlu0 %8831
    %v8833 = vlog2.pop %v8829
    %v8834 = vmul.f32 %v8833, 0.6931472
    %v8835 = vlog2.pop %v8832
    %v8836 = vmul.f32 %v8835, 0.6931472
    %v8837 = vadd.f32 %v8834, %v8817
    %v8838 = vadd.f32 %v8836, %v8820
    %8839 = vset.pattern.permute.xlu0 0
    %8840 = vperm.xlu0 %8839, %v8807
    %v8841 = vpop.permute.xlu0 %8840
    %8842 = vset.pattern.permute.xlu0 0
    %8843 = vperm.xlu0 %8842, %v8808
    %v8844 = vpop.permute.xlu0 %8843
    %vm8845 = vcmp.eq.s32.totalorder %v8841, %v226
    %vm8846 = vcmp.eq.s32.totalorder %v8844, %v226
    %v8847 = vsel %vm8845, %v8799, 0.0
    %v8848 = vsel %vm8846, %v8802, 0.0
    %v8849 = vsel %vm264, %v8847, 0.0
    %8850 = vadd.xlane.f32.xlu0 %v8849
    %v8851 = vpop.xlane.xlu0 %8850
    %v8852 = vsel %vm264, %v8848, 0.0
    %8853 = vadd.xlane.f32.xlu0 %v8852
    %v8854 = vpop.xlane.xlu0 %8853
    %v8855 = vsub.f32 %v8837, %v8851
    %v8856 = vsub.f32 %v8838, %v8854
    %v8857 = vmul.f32 %v8855, %v8813
    %v8858 = vmul.f32 %v8856, %v8814
    %vm8859 = vcmask 7168
    %v8860 = vsel %vm8859, %v8857, 0.0
    %v8861 = vsel %vm8859, %v8858, 0.0
    %v8862 = vadd.f32 %v8860, %v8861
    %8863 = vadd.xlane.f32.xlu0 %v8862
    %v8864 = vpop.xlane.xlu0 %8863
    %v8865 = vrot.slane %v8864, 4
    %v8866 = vadd.f32 %v8864, %v8865
    %v8867 = vrot.slane %v8866, 2
    %v8868 = vadd.f32 %v8866, %v8867
    %v8869 = vrot.slane %v8868, 1
    %v8870 = vadd.f32 %v8868, %v8869
    %s8871 = vtos %v8870
    %v8872 = vstv %s8871
    %v8873 = vsel %vm8859, %v8813, 0.0
    %v8874 = vsel %vm8859, %v8814, 0.0
    %v8875 = vadd.f32 %v8873, %v8874
    %8876 = vadd.xlane.f32.xlu0 %v8875
    %v8877 = vpop.xlane.xlu0 %8876
    %v8878 = vrot.slane %v8877, 4
    %v8879 = vadd.f32 %v8877, %v8878
    %v8880 = vrot.slane %v8879, 2
    %v8881 = vadd.f32 %v8879, %v8880
    %v8882 = vrot.slane %v8881, 1
    %v8883 = vadd.f32 %v8881, %v8882
    %s8884 = vtos %v8883
    %v8885 = vstv %s8884
    %v8886 = vmax.f32 %v8885, 1.0
    %v8887 = vrcp.pop %v8886
    %v8888 = vmul.f32 %v8872, %v8887
    %vm8889 = vcmask 0
    %8890 = vst.msk [vmem:[#allocation2] sm:$0x1] %vm8889, %v8888
    // Predicated region
    $region130: #{t5_forward.1} parent=1 // pred_check
      _
    $region131: #{t5_forward.1} parent=1 // pred_check_branch
      %8892 = sbr.rel (0) target = $region133
    $region132: #{t5_forward.1} parent=1 // pred_region
      %s8894 = ssub.s32 16, 16
      %8895 = vsyncadd [#allocation3], %s8894
      %s8897 = sshll.u32 [#allocation2], 4
      %s8898 = int_to_ptr.vmem [resolvable:$true] %s8897
      %8900 = dma.vmem_to_hbm [thread:$0]  %s8898, 16, %s65, [#allocation3]
    $region133: #{t5_forward.1} parent=1 // pred_fallthru
      _
    // Predicated region
    $region134: #{t5_forward.1} parent=1 // pred_check
      _
    $region135: #{t5_forward.1} parent=1 // pred_check_branch
      %8902 = sbr.rel (0) target = $region137
    $region136: #{t5_forward.1} parent=1 // pred_region
      %s8904 = ssub.s32 256, 256
      %8905 = vsyncadd [#allocation5], %s8904
      %s8906 = sshll.u32 [#allocation4], 4
      %s8907 = int_to_ptr.vmem [resolvable:$true] %s8906
      %8912 = dma.vmem_to_hbm [thread:$0]  %s8907, 256, %s67, [#allocation5], 128, 128, 8
    $region137: #{t5_forward.1} parent=1 // pred_fallthru
      _
    // Predicated region
    $region138: #{t5_forward.1} parent=1 // pred_check
      _
    $region139: #{t5_forward.1} parent=1 // pred_check_branch
      %8914 = sbr.rel (0) target = $region141
    $region140: #{t5_forward.1} parent=1 // pred_region
      %8915 = dma.done [#allocation3], 16
    $region141: #{t5_forward.1} parent=1 // pred_fallthru
      _
    // Predicated region
    $region142: #{t5_forward.1} parent=1 // pred_check
      _
    $region143: #{t5_forward.1} parent=1 // pred_check_branch
      %8917 = sbr.rel (0) target = $region145
    $region144: #{t5_forward.1} parent=1 // pred_region
      %8918 = dma.done [#allocation5], 256
    $region145: #{t5_forward.1} parent=1 // pred_fallthru
      _
    %8919 = vsyncpa [#allocation3], 1
    %8920 = vsyncpa [#allocation5], 1

</llo_original>
